<compile_context>
chip_gen: v6e
topology: v6e:2x2x1
jax: 0.10.0
libtpu: 0.0.40
codegen_flags: <defaults>
</compile_context>

<pallas_src>
import math

import jax
import jax.numpy as jnp
from jax.experimental import pallas as pl
from jax.experimental.pallas import tpu as pltpu


_VMEM_LIMIT = 32 * 1024 * 1024     # safe scoped limit on v5e/v6e/v7x


# ----------------------------------------------------------------------------
# Fused kernel: conv1 -> conv2 -> conv3 -> fc -> critic/cluster/softmax/mu head
# ----------------------------------------------------------------------------
def _cnn_fused_kernel(x_ref, w1_ref, b1_ref, w2_ref, b2_ref, w3_ref, b3_ref,
                      wf_ref, bf_ref, wc_ref, bc_ref, wcl_ref, bcl_ref,
                      wmu_ref, bmu_ref,
                      val_ref, feat_ref,
                      p1, a1, p2, a2, p3, a3, flat):
    B = x_ref.shape[0]
    cell = x_ref.shape[3]          # 32 * c_in  (one 4h x 8w input cell)
    half = cell // 2

    # ---- conv1 (8x8, stride 4) im2col: blocked input -> p1 (B, 225, 2*cell).
    # Input layout: x[b, Hb, Wb, ws*4c + hs*c + c] with h = 4*Hb + hs,
    # w = 8*Wb + ws, so every piece below is a contiguous slice copy.
    # Patch rows are ordered r1 = 15*oh + (ow % 2)*8 + ow//2 (w-parity grouped)
    # which also makes conv2's stride-2 reads contiguous.
    for oh in range(15):
        r0 = 15 * oh
        for kb in range(2):
            c0 = kb * cell
            hb = oh + kb
            # even output columns (ow = 2m): one full cell per patch row
            p1[:, r0:r0 + 8, c0:c0 + cell] = x_ref[:, hb, 0:8, :]
            # odd output columns (ow = 2m+1): two half cells
            p1[:, r0 + 8:r0 + 15, c0:c0 + half] = x_ref[:, hb, 0:7, half:cell]
            p1[:, r0 + 8:r0 + 15, c0 + half:c0 + cell] = x_ref[:, hb, 1:8, 0:half]

    w1 = w1_ref[...]
    b1 = b1_ref[...]
    for b in range(B):
        acc = jnp.dot(p1[b], w1, preferred_element_type=jnp.float32)
        a1[b] = jnp.maximum(acc + b1, 0.0).astype(a1.dtype)

    # ---- conv2 (4x4, stride 2) im2col: a1 (parity-grouped rows) -> p2 (B,36,512)
    for oh in range(6):
        for ki in range(4):
            base = 15 * (2 * oh + ki)
            for kj in range(4):
                src = base + (kj % 2) * 8 + kj // 2
                c0 = (4 * ki + kj) * 32
                p2[:, 6 * oh:6 * oh + 6, c0:c0 + 32] = a1[:, src:src + 6, :]

    w2 = w2_ref[...]
    b2 = b2_ref[...]
    for b in range(B):
        acc = jnp.dot(p2[b], w2, preferred_element_type=jnp.float32)
        a2[b] = jnp.maximum(acc + b2, 0.0).astype(a2.dtype)

    # ---- conv3 (3x3, stride 1) im2col: a2 (rows = 6*h + w) -> p3 (B, 16, 576)
    for oh in range(4):
        for ki in range(3):
            for kj in range(3):
                src = 6 * (oh + ki) + kj
                c0 = (3 * ki + kj) * 64
                p3[:, 4 * oh:4 * oh + 4, c0:c0 + 64] = a2[:, src:src + 4, :]

    w3 = w3_ref[...]
    b3 = b3_ref[...]
    for b in range(B):
        acc = jnp.dot(p3[b], w3, preferred_element_type=jnp.float32)
        a3[b] = jnp.maximum(acc + b3, 0.0).astype(a3.dtype)

    # ---- flatten in (h, w, c) order (fc weights are folded to match)
    for r in range(16):
        flat[:, 32 * r:32 * r + 32] = a3[:, r, :]

    # ---- fc + head (batched over the whole block, never leaves VMEM)
    feat = jnp.dot(flat[...], wf_ref[...], preferred_element_type=jnp.float32)
    feat = jnp.maximum(feat + bf_ref[...], 0.0)
    feat_ref[:, 0, :] = feat.astype(feat_ref.dtype)

    y = jnp.dot(feat.astype(jnp.bfloat16), wc_ref[...],
                preferred_element_type=jnp.float32) + bc_ref[...]
    yb = y.astype(jnp.bfloat16)
    logits = jnp.dot(yb, wcl_ref[...],
                     preferred_element_type=jnp.float32) + bcl_ref[...]
    mu = jnp.dot(yb, wmu_ref[...],
                 preferred_element_type=jnp.float32) + bmu_ref[...]
    logits = logits - jnp.max(logits, axis=-1, keepdims=True)
    e = jnp.exp(logits)
    val = (jnp.sum(e * mu, axis=-1, keepdims=True) /
           jnp.sum(e, axis=-1, keepdims=True))
    val_ref[:, 0, :] = val.astype(val_ref.dtype)


# ----------------------------------------------------------------------------
# Wrapper: batch blocking + pallas_call
# ----------------------------------------------------------------------------
def _pick_block_n(n):
    """Largest block size <= 8 dividing n, preferring >= 2 grid steps (v7x)."""
    divisors = [b for b in range(1, min(8, n) + 1) if n % b == 0]
    two_step = [b for b in divisors if n // b >= 2]
    return max(two_step) if two_step else max(divisors)


def _block_input(x_nchw):
    """NCHW frames -> (N, 16, 8, 32*C) bf16 cells: h = 4*Hb + hs, w = 8*Wb + ws,
    in-cell lane order (ws, hs, c)."""
    n, c, h, w = x_nchw.shape
    assert h == 64 and w == 64, "Linear(32*4*4) implies a 64x64 spatial input"
    x = x_nchw.reshape(n, c, 16, 4, 8, 8)           # [n, c, Hb, hs, Wb, ws]
    x = jnp.transpose(x, (0, 2, 4, 5, 3, 1))        # [n, Hb, Wb, ws, hs, c]
    return x.reshape(n, 16, 8, 32 * c).astype(jnp.bfloat16)


def cnn_base_forward(params, inputs, block_n=None):
    """inputs: (N, C, 64, 64) frames in [0, 255] (the /255 is folded into conv1)."""
    n, cin = inputs.shape[0], inputs.shape[1]
    hidden = params["fc_w"].shape[1]
    cell = 32 * cin

    x = _block_input(inputs)
    bn = block_n if block_n is not None else _pick_block_n(n)
    grid = (n // bn,)

    def full(arr):
        return pl.BlockSpec(arr.shape, lambda i: (0,) * arr.ndim)

    value, feat = pl.pallas_call(
        _cnn_fused_kernel,
        out_shape=(jax.ShapeDtypeStruct((n, 1, 1), jnp.float32),
                   jax.ShapeDtypeStruct((n, 1, hidden), jnp.float32)),
        grid_spec=pltpu.PrefetchScalarGridSpec(
            num_scalar_prefetch=0,
            grid=grid,
            in_specs=[
                pl.BlockSpec((bn, 16, 8, cell), lambda i: (i, 0, 0, 0)),
                full(params["c1_w"]), full(params["c1_b"]),
                full(params["c2_w"]), full(params["c2_b"]),
                full(params["c3_w"]), full(params["c3_b"]),
                full(params["fc_w"]), full(params["fc_b"]),
                full(params["wc"]), full(params["bc"]),
                full(params["wcl"]), full(params["bcl"]),
                full(params["wmu"]), full(params["bmu"]),
            ],
            out_specs=[
                pl.BlockSpec((bn, 1, 1), lambda i: (i, 0, 0)),
                pl.BlockSpec((bn, 1, hidden), lambda i: (i, 0, 0)),
            ],
            scratch_shapes=[
                pltpu.VMEM((bn, 225, 2 * cell), jnp.bfloat16),   # conv1 patches
                pltpu.VMEM((bn, 225, 32), jnp.bfloat16),         # conv1 act
                pltpu.VMEM((bn, 36, 512), jnp.bfloat16),         # conv2 patches
                pltpu.VMEM((bn, 36, 64), jnp.bfloat16),          # conv2 act
                pltpu.VMEM((bn, 16, 576), jnp.bfloat16),         # conv3 patches
                pltpu.VMEM((bn, 16, 32), jnp.bfloat16),          # conv3 act
                pltpu.VMEM((bn, 512), jnp.bfloat16),             # flattened
            ]),
        compiler_params=pltpu.CompilerParams(
            dimension_semantics=("parallel",),
            vmem_limit_bytes=_VMEM_LIMIT),
    )(x, params["c1_w"], params["c1_b"], params["c2_w"], params["c2_b"],
      params["c3_w"], params["c3_b"], params["fc_w"], params["fc_b"],
      params["wc"], params["bc"], params["wcl"], params["bcl"],
      params["wmu"], params["bmu"])

    return value.reshape(n, 1), feat.reshape(n, hidden)


# ----------------------------------------------------------------------------
# Parameters (deterministic orthogonal init mirroring init_fn) + kernel folding
# ----------------------------------------------------------------------------
def _orthogonal(key, shape, gain=1.0):
    out = shape[0]
    rest = 1
    for s in shape[1:]:
        rest *= s
    rows, cols = max(out, rest), min(out, rest)
    a = jax.random.normal(key, (rows, cols), dtype=jnp.float32)
    q, r = jnp.linalg.qr(a)
    q = q * jnp.sign(jnp.diagonal(r))
    if out < rest:
        q = q.T
    return (gain * q[:out, :rest]).reshape(shape).astype(jnp.float32)


def make_params(key, num_inputs, hidden_size=512, nb=50):
    """Torch-layout f32 parameters, mirroring CNNBase.__init__ + init_fn."""
    relu_gain = math.sqrt(2.0)              # nn.init.calculate_gain('relu')
    ks = jax.random.split(key, 7)
    z = lambda m: jnp.zeros((m,), jnp.float32)
    return {
        "conv1_w": _orthogonal(ks[0], (32, num_inputs, 8, 8), relu_gain),
        "conv1_b": z(32),
        "conv2_w": _orthogonal(ks[1], (64, 32, 4, 4), relu_gain),
        "conv2_b": z(64),
        "conv3_w": _orthogonal(ks[2], (32, 64, 3, 3), relu_gain),
        "conv3_b": z(32),
        "fc_w": _orthogonal(ks[3], (hidden_size, 32 * 4 * 4), relu_gain),
        "fc_b": z(hidden_size),
        "critic_w": _orthogonal(ks[4], (nb, hidden_size), 1.0),
        "critic_b": z(nb),
        "cluster_w": _orthogonal(ks[5], (nb, nb), 1.0),
        "cluster_b": z(nb),
        "mu_w": _orthogonal(ks[6], (nb, nb), 1.0),
        "mu_b": z(nb),
    }


def prepare_params(tp, hidden_size=512):
    """One-time folding of torch-layout weights into kernel bf16 layouts."""
    bf = jnp.bfloat16
    row = lambda b: b.reshape(1, -1).astype(jnp.float32)
    cin = tp["conv1_w"].shape[1]

    # conv1 columns: (kb, kj, hs, c) with ki = 4*kb + hs;  /255 folded in.
    w1 = (tp["conv1_w"] / 255.0).reshape(32, cin, 2, 4, 8)   # [o, c, kb, hs, kj]
    w1 = jnp.transpose(w1, (2, 4, 3, 1, 0)).reshape(64 * cin, 32)

    # conv2/conv3 columns: standard (ki, kj, c).
    w2 = jnp.transpose(tp["conv2_w"], (2, 3, 1, 0)).reshape(512, 64)
    w3 = jnp.transpose(tp["conv3_w"], (2, 3, 1, 0)).reshape(576, 32)

    # fc: fold the (h, w, c) flatten order used by the kernel.
    fc_w = tp["fc_w"].reshape(hidden_size, 32, 4, 4)
    fc_w = jnp.transpose(fc_w, (0, 2, 3, 1)).reshape(hidden_size, 512).T

    return {
        "c1_w": w1.astype(bf), "c1_b": row(tp["conv1_b"]),
        "c2_w": w2.astype(bf), "c2_b": row(tp["conv2_b"]),
        "c3_w": w3.astype(bf), "c3_b": row(tp["conv3_b"]),
        "fc_w": fc_w.astype(bf), "fc_b": row(tp["fc_b"]),
        "wc": tp["critic_w"].T.astype(bf), "bc": row(tp["critic_b"]),
        "wcl": tp["cluster_w"].T.astype(bf), "bcl": row(tp["cluster_b"]),
        "wmu": tp["mu_w"].T.astype(bf), "bmu": row(tp["mu_b"]),
    }


if __name__ == "__main__":
    key = jax.random.PRNGKey(0)
    pkey, xkey = jax.random.split(key)

    num_inputs, hidden_size, nb = 4, 512, 50
    batch, spatial = 2, 64                   # 64x64 -> 15 -> 6 -> 4x4

    torch_params = make_params(pkey, num_inputs, hidden_size, nb)
    params = prepare_params(torch_params, hidden_size)

    inputs = jax.random.uniform(
        xkey, (batch, num_inputs, spatial, spatial),
        minval=0.0, maxval=255.0, dtype=jnp.float32)

    fwd = jax.jit(cnn_base_forward)
    value, feat = fwd(params, inputs)
    value = jax.block_until_ready(value)
    feat = jax.block_until_ready(feat)

    assert value.shape == (batch, 1)
    assert feat.shape == (batch, hidden_size)
    assert bool(jnp.all(jnp.isfinite(value))) and bool(jnp.all(jnp.isfinite(feat)))
    print("KERNEL_OK")
</pallas_src>

<mosaic_0001>
module attributes {stable_mosaic.version = 11 : i64} {
  func.func @_cnn_fused_kernel(%arg0: i32, %arg1: memref<1x16x8x128xbf16, #tpu.memory_space<vmem>>, %arg2: memref<256x32xbf16, #tpu.memory_space<vmem>>, %arg3: memref<1x32xf32, #tpu.memory_space<vmem>>, %arg4: memref<512x64xbf16, #tpu.memory_space<vmem>>, %arg5: memref<1x64xf32, #tpu.memory_space<vmem>>, %arg6: memref<576x32xbf16, #tpu.memory_space<vmem>>, %arg7: memref<1x32xf32, #tpu.memory_space<vmem>>, %arg8: memref<512x512xbf16, #tpu.memory_space<vmem>>, %arg9: memref<1x512xf32, #tpu.memory_space<vmem>>, %arg10: memref<512x50xbf16, #tpu.memory_space<vmem>>, %arg11: memref<1x50xf32, #tpu.memory_space<vmem>>, %arg12: memref<50x50xbf16, #tpu.memory_space<vmem>>, %arg13: memref<1x50xf32, #tpu.memory_space<vmem>>, %arg14: memref<50x50xbf16, #tpu.memory_space<vmem>>, %arg15: memref<1x50xf32, #tpu.memory_space<vmem>>, %arg16: memref<1x1x1xf32, #tpu.memory_space<vmem>>, %arg17: memref<1x1x512xf32, #tpu.memory_space<vmem>>, %arg18: memref<1x225x256xbf16, #tpu.memory_space<vmem>>, %arg19: memref<1x225x32xbf16, #tpu.memory_space<vmem>>, %arg20: memref<1x36x512xbf16, #tpu.memory_space<vmem>>, %arg21: memref<1x36x64xbf16, #tpu.memory_space<vmem>>, %arg22: memref<1x16x576xbf16, #tpu.memory_space<vmem>>, %arg23: memref<1x16x32xbf16, #tpu.memory_space<vmem>>, %arg24: memref<1x512xbf16, #tpu.memory_space<vmem>>) attributes {dimension_semantics = [#tpu.dimension_semantics<parallel>], iteration_bounds = array<i64: 2>, scalar_prefetch = 0 : i64, scratch_operands = 7 : i64, tpu.core_type = #tpu.core_type<tc>, window_params = [{transform_indices = @transform_0, window_bounds = array<i64: 1, 16, 8, 128>}, {pipeline_mode = #tpu.pipeline_mode<synchronous>, transform_indices = @transform_1, window_bounds = array<i64: 256, 32>}, {pipeline_mode = #tpu.pipeline_mode<synchronous>, transform_indices = @transform_2, window_bounds = array<i64: 1, 32>}, {pipeline_mode = #tpu.pipeline_mode<synchronous>, transform_indices = @transform_3, window_bounds = array<i64: 512, 64>}, {pipeline_mode = #tpu.pipeline_mode<synchronous>, transform_indices = @transform_4, window_bounds = array<i64: 1, 64>}, {pipeline_mode = #tpu.pipeline_mode<synchronous>, transform_indices = @transform_5, window_bounds = array<i64: 576, 32>}, {pipeline_mode = #tpu.pipeline_mode<synchronous>, transform_indices = @transform_6, window_bounds = array<i64: 1, 32>}, {pipeline_mode = #tpu.pipeline_mode<synchronous>, transform_indices = @transform_7, window_bounds = array<i64: 512, 512>}, {pipeline_mode = #tpu.pipeline_mode<synchronous>, transform_indices = @transform_8, window_bounds = array<i64: 1, 512>}, {pipeline_mode = #tpu.pipeline_mode<synchronous>, transform_indices = @transform_9, window_bounds = array<i64: 512, 50>}, {pipeline_mode = #tpu.pipeline_mode<synchronous>, transform_indices = @transform_10, window_bounds = array<i64: 1, 50>}, {pipeline_mode = #tpu.pipeline_mode<synchronous>, transform_indices = @transform_11, window_bounds = array<i64: 50, 50>}, {pipeline_mode = #tpu.pipeline_mode<synchronous>, transform_indices = @transform_12, window_bounds = array<i64: 1, 50>}, {pipeline_mode = #tpu.pipeline_mode<synchronous>, transform_indices = @transform_13, window_bounds = array<i64: 50, 50>}, {pipeline_mode = #tpu.pipeline_mode<synchronous>, transform_indices = @transform_14, window_bounds = array<i64: 1, 50>}, {transform_indices = @transform_15, window_bounds = array<i64: 1, 1, 1>}, {transform_indices = @transform_16, window_bounds = array<i64: 1, 1, 512>}]} {
    %c0 = arith.constant 0 : index
    %c0_0 = arith.constant 0 : index
    %c0_1 = arith.constant 0 : index
    %c0_2 = arith.constant 0 : index
    %0 = vector.load %arg1[%c0, %c0_0, %c0_1, %c0_2] : memref<1x16x8x128xbf16, #tpu.memory_space<vmem>>, vector<1x1x8x128xbf16>
    %1 = vector.shape_cast %0 : vector<1x1x8x128xbf16> to vector<1x8x128xbf16>
    %c0_3 = arith.constant 0 : index
    %c0_4 = arith.constant 0 : index
    %c0_5 = arith.constant 0 : index
    %2 = vector.load %arg18[%c0_3, %c0_4, %c0_5] : memref<1x225x256xbf16, #tpu.memory_space<vmem>>, vector<1x8x128xbf16>
    tpu.vector_store %arg18[%c0_3, %c0_4, %c0_5], %1 {strides = array<i32>} : memref<1x225x256xbf16, #tpu.memory_space<vmem>>, vector<1x8x128xbf16>,
    %c0_6 = arith.constant 0 : index
    %c0_7 = arith.constant 0 : index
    %c0_8 = arith.constant 0 : index
    %c64 = arith.constant 64 : index
    %3 = vector.load %arg1[%c0_6, %c0_7, %c0_8, %c64] : memref<1x16x8x128xbf16, #tpu.memory_space<vmem>>, vector<1x1x7x64xbf16>
    %4 = vector.shape_cast %3 : vector<1x1x7x64xbf16> to vector<1x7x64xbf16>
    %c0_9 = arith.constant 0 : index
    %c8 = arith.constant 8 : index
    %c0_10 = arith.constant 0 : index
    %5 = vector.load %arg18[%c0_9, %c8, %c0_10] : memref<1x225x256xbf16, #tpu.memory_space<vmem>>, vector<1x7x64xbf16>
    tpu.vector_store %arg18[%c0_9, %c8, %c0_10], %4 {strides = array<i32>} : memref<1x225x256xbf16, #tpu.memory_space<vmem>>, vector<1x7x64xbf16>,
    %c0_11 = arith.constant 0 : index
    %c0_12 = arith.constant 0 : index
    %c1 = arith.constant 1 : index
    %c0_13 = arith.constant 0 : index
    %6 = vector.load %arg1[%c0_11, %c0_12, %c1, %c0_13] : memref<1x16x8x128xbf16, #tpu.memory_space<vmem>>, vector<1x1x7x64xbf16>
    %7 = vector.shape_cast %6 : vector<1x1x7x64xbf16> to vector<1x7x64xbf16>
    %c0_14 = arith.constant 0 : index
    %c8_15 = arith.constant 8 : index
    %c64_16 = arith.constant 64 : index
    %8 = vector.load %arg18[%c0_14, %c8_15, %c64_16] : memref<1x225x256xbf16, #tpu.memory_space<vmem>>, vector<1x7x64xbf16>
    tpu.vector_store %arg18[%c0_14, %c8_15, %c64_16], %7 {strides = array<i32>} : memref<1x225x256xbf16, #tpu.memory_space<vmem>>, vector<1x7x64xbf16>,
    %c0_17 = arith.constant 0 : index
    %c1_18 = arith.constant 1 : index
    %c0_19 = arith.constant 0 : index
    %c0_20 = arith.constant 0 : index
    %9 = vector.load %arg1[%c0_17, %c1_18, %c0_19, %c0_20] : memref<1x16x8x128xbf16, #tpu.memory_space<vmem>>, vector<1x1x8x128xbf16>
    %10 = vector.shape_cast %9 : vector<1x1x8x128xbf16> to vector<1x8x128xbf16>
    %c0_21 = arith.constant 0 : index
    %c0_22 = arith.constant 0 : index
    %c128 = arith.constant 128 : index
    %11 = vector.load %arg18[%c0_21, %c0_22, %c128] : memref<1x225x256xbf16, #tpu.memory_space<vmem>>, vector<1x8x128xbf16>
    tpu.vector_store %arg18[%c0_21, %c0_22, %c128], %10 {strides = array<i32>} : memref<1x225x256xbf16, #tpu.memory_space<vmem>>, vector<1x8x128xbf16>,
    %c0_23 = arith.constant 0 : index
    %c1_24 = arith.constant 1 : index
    %c0_25 = arith.constant 0 : index
    %c64_26 = arith.constant 64 : index
    %12 = vector.load %arg1[%c0_23, %c1_24, %c0_25, %c64_26] : memref<1x16x8x128xbf16, #tpu.memory_space<vmem>>, vector<1x1x7x64xbf16>
    %13 = vector.shape_cast %12 : vector<1x1x7x64xbf16> to vector<1x7x64xbf16>
    %c0_27 = arith.constant 0 : index
    %c8_28 = arith.constant 8 : index
    %c128_29 = arith.constant 128 : index
    %14 = vector.load %arg18[%c0_27, %c8_28, %c128_29] : memref<1x225x256xbf16, #tpu.memory_space<vmem>>, vector<1x7x64xbf16>
    tpu.vector_store %arg18[%c0_27, %c8_28, %c128_29], %13 {strides = array<i32>} : memref<1x225x256xbf16, #tpu.memory_space<vmem>>, vector<1x7x64xbf16>,
    %c0_30 = arith.constant 0 : index
    %c1_31 = arith.constant 1 : index
    %c1_32 = arith.constant 1 : index
    %c0_33 = arith.constant 0 : index
    %15 = vector.load %arg1[%c0_30, %c1_31, %c1_32, %c0_33] : memref<1x16x8x128xbf16, #tpu.memory_space<vmem>>, vector<1x1x7x64xbf16>
    %16 = vector.shape_cast %15 : vector<1x1x7x64xbf16> to vector<1x7x64xbf16>
    %c0_34 = arith.constant 0 : index
    %c8_35 = arith.constant 8 : index
    %c192 = arith.constant 192 : index
    %17 = vector.load %arg18[%c0_34, %c8_35, %c192] : memref<1x225x256xbf16, #tpu.memory_space<vmem>>, vector<1x7x64xbf16>
    tpu.vector_store %arg18[%c0_34, %c8_35, %c192], %16 {strides = array<i32>} : memref<1x225x256xbf16, #tpu.memory_space<vmem>>, vector<1x7x64xbf16>,
    %c0_36 = arith.constant 0 : index
    %c1_37 = arith.constant 1 : index
    %c0_38 = arith.constant 0 : index
    %c0_39 = arith.constant 0 : index
    %18 = vector.load %arg1[%c0_36, %c1_37, %c0_38, %c0_39] : memref<1x16x8x128xbf16, #tpu.memory_space<vmem>>, vector<1x1x8x128xbf16>
    %19 = vector.shape_cast %18 : vector<1x1x8x128xbf16> to vector<1x8x128xbf16>
    %c0_40 = arith.constant 0 : index
    %c15 = arith.constant 15 : index
    %c0_41 = arith.constant 0 : index
    %20 = vector.load %arg18[%c0_40, %c15, %c0_41] : memref<1x225x256xbf16, #tpu.memory_space<vmem>>, vector<1x8x128xbf16>
    tpu.vector_store %arg18[%c0_40, %c15, %c0_41], %19 {strides = array<i32>} : memref<1x225x256xbf16, #tpu.memory_space<vmem>>, vector<1x8x128xbf16>,
    %c0_42 = arith.constant 0 : index
    %c1_43 = arith.constant 1 : index
    %c0_44 = arith.constant 0 : index
    %c64_45 = arith.constant 64 : index
    %21 = vector.load %arg1[%c0_42, %c1_43, %c0_44, %c64_45] : memref<1x16x8x128xbf16, #tpu.memory_space<vmem>>, vector<1x1x7x64xbf16>
    %22 = vector.shape_cast %21 : vector<1x1x7x64xbf16> to vector<1x7x64xbf16>
    %c0_46 = arith.constant 0 : index
    %c23 = arith.constant 23 : index
    %c0_47 = arith.constant 0 : index
    %23 = vector.load %arg18[%c0_46, %c23, %c0_47] : memref<1x225x256xbf16, #tpu.memory_space<vmem>>, vector<1x7x64xbf16>
    tpu.vector_store %arg18[%c0_46, %c23, %c0_47], %22 {strides = array<i32>} : memref<1x225x256xbf16, #tpu.memory_space<vmem>>, vector<1x7x64xbf16>,
    %c0_48 = arith.constant 0 : index
    %c1_49 = arith.constant 1 : index
    %c1_50 = arith.constant 1 : index
    %c0_51 = arith.constant 0 : index
    %24 = vector.load %arg1[%c0_48, %c1_49, %c1_50, %c0_51] : memref<1x16x8x128xbf16, #tpu.memory_space<vmem>>, vector<1x1x7x64xbf16>
    %25 = vector.shape_cast %24 : vector<1x1x7x64xbf16> to vector<1x7x64xbf16>
    %c0_52 = arith.constant 0 : index
    %c23_53 = arith.constant 23 : index
    %c64_54 = arith.constant 64 : index
    %26 = vector.load %arg18[%c0_52, %c23_53, %c64_54] : memref<1x225x256xbf16, #tpu.memory_space<vmem>>, vector<1x7x64xbf16>
    tpu.vector_store %arg18[%c0_52, %c23_53, %c64_54], %25 {strides = array<i32>} : memref<1x225x256xbf16, #tpu.memory_space<vmem>>, vector<1x7x64xbf16>,
    %c0_55 = arith.constant 0 : index
    %c2 = arith.constant 2 : index
    %c0_56 = arith.constant 0 : index
    %c0_57 = arith.constant 0 : index
    %27 = vector.load %arg1[%c0_55, %c2, %c0_56, %c0_57] : memref<1x16x8x128xbf16, #tpu.memory_space<vmem>>, vector<1x1x8x128xbf16>
    %28 = vector.shape_cast %27 : vector<1x1x8x128xbf16> to vector<1x8x128xbf16>
    %c0_58 = arith.constant 0 : index
    %c15_59 = arith.constant 15 : index
    %c128_60 = arith.constant 128 : index
    %29 = vector.load %arg18[%c0_58, %c15_59, %c128_60] : memref<1x225x256xbf16, #tpu.memory_space<vmem>>, vector<1x8x128xbf16>
    tpu.vector_store %arg18[%c0_58, %c15_59, %c128_60], %28 {strides = array<i32>} : memref<1x225x256xbf16, #tpu.memory_space<vmem>>, vector<1x8x128xbf16>,
    %c0_61 = arith.constant 0 : index
    %c2_62 = arith.constant 2 : index
    %c0_63 = arith.constant 0 : index
    %c64_64 = arith.constant 64 : index
    %30 = vector.load %arg1[%c0_61, %c2_62, %c0_63, %c64_64] : memref<1x16x8x128xbf16, #tpu.memory_space<vmem>>, vector<1x1x7x64xbf16>
    %31 = vector.shape_cast %30 : vector<1x1x7x64xbf16> to vector<1x7x64xbf16>
    %c0_65 = arith.constant 0 : index
    %c23_66 = arith.constant 23 : index
    %c128_67 = arith.constant 128 : index
    %32 = vector.load %arg18[%c0_65, %c23_66, %c128_67] : memref<1x225x256xbf16, #tpu.memory_space<vmem>>, vector<1x7x64xbf16>
    tpu.vector_store %arg18[%c0_65, %c23_66, %c128_67], %31 {strides = array<i32>} : memref<1x225x256xbf16, #tpu.memory_space<vmem>>, vector<1x7x64xbf16>,
    %c0_68 = arith.constant 0 : index
    %c2_69 = arith.constant 2 : index
    %c1_70 = arith.constant 1 : index
    %c0_71 = arith.constant 0 : index
    %33 = vector.load %arg1[%c0_68, %c2_69, %c1_70, %c0_71] : memref<1x16x8x128xbf16, #tpu.memory_space<vmem>>, vector<1x1x7x64xbf16>
    %34 = vector.shape_cast %33 : vector<1x1x7x64xbf16> to vector<1x7x64xbf16>
    %c0_72 = arith.constant 0 : index
    %c23_73 = arith.constant 23 : index
    %c192_74 = arith.constant 192 : index
    %35 = vector.load %arg18[%c0_72, %c23_73, %c192_74] : memref<1x225x256xbf16, #tpu.memory_space<vmem>>, vector<1x7x64xbf16>
    tpu.vector_store %arg18[%c0_72, %c23_73, %c192_74], %34 {strides = array<i32>} : memref<1x225x256xbf16, #tpu.memory_space<vmem>>, vector<1x7x64xbf16>,
    %c0_75 = arith.constant 0 : index
    %c2_76 = arith.constant 2 : index
    %c0_77 = arith.constant 0 : index
    %c0_78 = arith.constant 0 : index
    %36 = vector.load %arg1[%c0_75, %c2_76, %c0_77, %c0_78] : memref<1x16x8x128xbf16, #tpu.memory_space<vmem>>, vector<1x1x8x128xbf16>
    %37 = vector.shape_cast %36 : vector<1x1x8x128xbf16> to vector<1x8x128xbf16>
    %c0_79 = arith.constant 0 : index
    %c30 = arith.constant 30 : index
    %c0_80 = arith.constant 0 : index
    %38 = vector.load %arg18[%c0_79, %c30, %c0_80] : memref<1x225x256xbf16, #tpu.memory_space<vmem>>, vector<1x8x128xbf16>
    tpu.vector_store %arg18[%c0_79, %c30, %c0_80], %37 {strides = array<i32>} : memref<1x225x256xbf16, #tpu.memory_space<vmem>>, vector<1x8x128xbf16>,
    %c0_81 = arith.constant 0 : index
    %c2_82 = arith.constant 2 : index
    %c0_83 = arith.constant 0 : index
    %c64_84 = arith.constant 64 : index
    %39 = vector.load %arg1[%c0_81, %c2_82, %c0_83, %c64_84] : memref<1x16x8x128xbf16, #tpu.memory_space<vmem>>, vector<1x1x7x64xbf16>
    %40 = vector.shape_cast %39 : vector<1x1x7x64xbf16> to vector<1x7x64xbf16>
    %c0_85 = arith.constant 0 : index
    %c38 = arith.constant 38 : index
    %c0_86 = arith.constant 0 : index
    %41 = vector.load %arg18[%c0_85, %c38, %c0_86] : memref<1x225x256xbf16, #tpu.memory_space<vmem>>, vector<1x7x64xbf16>
    tpu.vector_store %arg18[%c0_85, %c38, %c0_86], %40 {strides = array<i32>} : memref<1x225x256xbf16, #tpu.memory_space<vmem>>, vector<1x7x64xbf16>,
    %c0_87 = arith.constant 0 : index
    %c2_88 = arith.constant 2 : index
    %c1_89 = arith.constant 1 : index
    %c0_90 = arith.constant 0 : index
    %42 = vector.load %arg1[%c0_87, %c2_88, %c1_89, %c0_90] : memref<1x16x8x128xbf16, #tpu.memory_space<vmem>>, vector<1x1x7x64xbf16>
    %43 = vector.shape_cast %42 : vector<1x1x7x64xbf16> to vector<1x7x64xbf16>
    %c0_91 = arith.constant 0 : index
    %c38_92 = arith.constant 38 : index
    %c64_93 = arith.constant 64 : index
    %44 = vector.load %arg18[%c0_91, %c38_92, %c64_93] : memref<1x225x256xbf16, #tpu.memory_space<vmem>>, vector<1x7x64xbf16>
    tpu.vector_store %arg18[%c0_91, %c38_92, %c64_93], %43 {strides = array<i32>} : memref<1x225x256xbf16, #tpu.memory_space<vmem>>, vector<1x7x64xbf16>,
    %c0_94 = arith.constant 0 : index
    %c3 = arith.constant 3 : index
    %c0_95 = arith.constant 0 : index
    %c0_96 = arith.constant 0 : index
    %45 = vector.load %arg1[%c0_94, %c3, %c0_95, %c0_96] : memref<1x16x8x128xbf16, #tpu.memory_space<vmem>>, vector<1x1x8x128xbf16>
    %46 = vector.shape_cast %45 : vector<1x1x8x128xbf16> to vector<1x8x128xbf16>
    %c0_97 = arith.constant 0 : index
    %c30_98 = arith.constant 30 : index
    %c128_99 = arith.constant 128 : index
    %47 = vector.load %arg18[%c0_97, %c30_98, %c128_99] : memref<1x225x256xbf16, #tpu.memory_space<vmem>>, vector<1x8x128xbf16>
    tpu.vector_store %arg18[%c0_97, %c30_98, %c128_99], %46 {strides = array<i32>} : memref<1x225x256xbf16, #tpu.memory_space<vmem>>, vector<1x8x128xbf16>,
    %c0_100 = arith.constant 0 : index
    %c3_101 = arith.constant 3 : index
    %c0_102 = arith.constant 0 : index
    %c64_103 = arith.constant 64 : index
    %48 = vector.load %arg1[%c0_100, %c3_101, %c0_102, %c64_103] : memref<1x16x8x128xbf16, #tpu.memory_space<vmem>>, vector<1x1x7x64xbf16>
    %49 = vector.shape_cast %48 : vector<1x1x7x64xbf16> to vector<1x7x64xbf16>
    %c0_104 = arith.constant 0 : index
    %c38_105 = arith.constant 38 : index
    %c128_106 = arith.constant 128 : index
    %50 = vector.load %arg18[%c0_104, %c38_105, %c128_106] : memref<1x225x256xbf16, #tpu.memory_space<vmem>>, vector<1x7x64xbf16>
    tpu.vector_store %arg18[%c0_104, %c38_105, %c128_106], %49 {strides = array<i32>} : memref<1x225x256xbf16, #tpu.memory_space<vmem>>, vector<1x7x64xbf16>,
    %c0_107 = arith.constant 0 : index
    %c3_108 = arith.constant 3 : index
    %c1_109 = arith.constant 1 : index
    %c0_110 = arith.constant 0 : index
    %51 = vector.load %arg1[%c0_107, %c3_108, %c1_109, %c0_110] : memref<1x16x8x128xbf16, #tpu.memory_space<vmem>>, vector<1x1x7x64xbf16>
    %52 = vector.shape_cast %51 : vector<1x1x7x64xbf16> to vector<1x7x64xbf16>
    %c0_111 = arith.constant 0 : index
    %c38_112 = arith.constant 38 : index
    %c192_113 = arith.constant 192 : index
    %53 = vector.load %arg18[%c0_111, %c38_112, %c192_113] : memref<1x225x256xbf16, #tpu.memory_space<vmem>>, vector<1x7x64xbf16>
    tpu.vector_store %arg18[%c0_111, %c38_112, %c192_113], %52 {strides = array<i32>} : memref<1x225x256xbf16, #tpu.memory_space<vmem>>, vector<1x7x64xbf16>,
    %c0_114 = arith.constant 0 : index
    %c3_115 = arith.constant 3 : index
    %c0_116 = arith.constant 0 : index
    %c0_117 = arith.constant 0 : index
    %54 = vector.load %arg1[%c0_114, %c3_115, %c0_116, %c0_117] : memref<1x16x8x128xbf16, #tpu.memory_space<vmem>>, vector<1x1x8x128xbf16>
    %55 = vector.shape_cast %54 : vector<1x1x8x128xbf16> to vector<1x8x128xbf16>
    %c0_118 = arith.constant 0 : index
    %c45 = arith.constant 45 : index
    %c0_119 = arith.constant 0 : index
    %56 = vector.load %arg18[%c0_118, %c45, %c0_119] : memref<1x225x256xbf16, #tpu.memory_space<vmem>>, vector<1x8x128xbf16>
    tpu.vector_store %arg18[%c0_118, %c45, %c0_119], %55 {strides = array<i32>} : memref<1x225x256xbf16, #tpu.memory_space<vmem>>, vector<1x8x128xbf16>,
    %c0_120 = arith.constant 0 : index
    %c3_121 = arith.constant 3 : index
    %c0_122 = arith.constant 0 : index
    %c64_123 = arith.constant 64 : index
    %57 = vector.load %arg1[%c0_120, %c3_121, %c0_122, %c64_123] : memref<1x16x8x128xbf16, #tpu.memory_space<vmem>>, vector<1x1x7x64xbf16>
    %58 = vector.shape_cast %57 : vector<1x1x7x64xbf16> to vector<1x7x64xbf16>
    %c0_124 = arith.constant 0 : index
    %c53 = arith.constant 53 : index
    %c0_125 = arith.constant 0 : index
    %59 = vector.load %arg18[%c0_124, %c53, %c0_125] : memref<1x225x256xbf16, #tpu.memory_space<vmem>>, vector<1x7x64xbf16>
    tpu.vector_store %arg18[%c0_124, %c53, %c0_125], %58 {strides = array<i32>} : memref<1x225x256xbf16, #tpu.memory_space<vmem>>, vector<1x7x64xbf16>,
    %c0_126 = arith.constant 0 : index
    %c3_127 = arith.constant 3 : index
    %c1_128 = arith.constant 1 : index
    %c0_129 = arith.constant 0 : index
    %60 = vector.load %arg1[%c0_126, %c3_127, %c1_128, %c0_129] : memref<1x16x8x128xbf16, #tpu.memory_space<vmem>>, vector<1x1x7x64xbf16>
    %61 = vector.shape_cast %60 : vector<1x1x7x64xbf16> to vector<1x7x64xbf16>
    %c0_130 = arith.constant 0 : index
    %c53_131 = arith.constant 53 : index
    %c64_132 = arith.constant 64 : index
    %62 = vector.load %arg18[%c0_130, %c53_131, %c64_132] : memref<1x225x256xbf16, #tpu.memory_space<vmem>>, vector<1x7x64xbf16>
    tpu.vector_store %arg18[%c0_130, %c53_131, %c64_132], %61 {strides = array<i32>} : memref<1x225x256xbf16, #tpu.memory_space<vmem>>, vector<1x7x64xbf16>,
    %c0_133 = arith.constant 0 : index
    %c4 = arith.constant 4 : index
    %c0_134 = arith.constant 0 : index
    %c0_135 = arith.constant 0 : index
    %63 = vector.load %arg1[%c0_133, %c4, %c0_134, %c0_135] : memref<1x16x8x128xbf16, #tpu.memory_space<vmem>>, vector<1x1x8x128xbf16>
    %64 = vector.shape_cast %63 : vector<1x1x8x128xbf16> to vector<1x8x128xbf16>
    %c0_136 = arith.constant 0 : index
    %c45_137 = arith.constant 45 : index
    %c128_138 = arith.constant 128 : index
    %65 = vector.load %arg18[%c0_136, %c45_137, %c128_138] : memref<1x225x256xbf16, #tpu.memory_space<vmem>>, vector<1x8x128xbf16>
    tpu.vector_store %arg18[%c0_136, %c45_137, %c128_138], %64 {strides = array<i32>} : memref<1x225x256xbf16, #tpu.memory_space<vmem>>, vector<1x8x128xbf16>,
    %c0_139 = arith.constant 0 : index
    %c4_140 = arith.constant 4 : index
    %c0_141 = arith.constant 0 : index
    %c64_142 = arith.constant 64 : index
    %66 = vector.load %arg1[%c0_139, %c4_140, %c0_141, %c64_142] : memref<1x16x8x128xbf16, #tpu.memory_space<vmem>>, vector<1x1x7x64xbf16>
    %67 = vector.shape_cast %66 : vector<1x1x7x64xbf16> to vector<1x7x64xbf16>
    %c0_143 = arith.constant 0 : index
    %c53_144 = arith.constant 53 : index
    %c128_145 = arith.constant 128 : index
    %68 = vector.load %arg18[%c0_143, %c53_144, %c128_145] : memref<1x225x256xbf16, #tpu.memory_space<vmem>>, vector<1x7x64xbf16>
    tpu.vector_store %arg18[%c0_143, %c53_144, %c128_145], %67 {strides = array<i32>} : memref<1x225x256xbf16, #tpu.memory_space<vmem>>, vector<1x7x64xbf16>,
    %c0_146 = arith.constant 0 : index
    %c4_147 = arith.constant 4 : index
    %c1_148 = arith.constant 1 : index
    %c0_149 = arith.constant 0 : index
    %69 = vector.load %arg1[%c0_146, %c4_147, %c1_148, %c0_149] : memref<1x16x8x128xbf16, #tpu.memory_space<vmem>>, vector<1x1x7x64xbf16>
    %70 = vector.shape_cast %69 : vector<1x1x7x64xbf16> to vector<1x7x64xbf16>
    %c0_150 = arith.constant 0 : index
    %c53_151 = arith.constant 53 : index
    %c192_152 = arith.constant 192 : index
    %71 = vector.load %arg18[%c0_150, %c53_151, %c192_152] : memref<1x225x256xbf16, #tpu.memory_space<vmem>>, vector<1x7x64xbf16>
    tpu.vector_store %arg18[%c0_150, %c53_151, %c192_152], %70 {strides = array<i32>} : memref<1x225x256xbf16, #tpu.memory_space<vmem>>, vector<1x7x64xbf16>,
    %c0_153 = arith.constant 0 : index
    %c4_154 = arith.constant 4 : index
    %c0_155 = arith.constant 0 : index
    %c0_156 = arith.constant 0 : index
    %72 = vector.load %arg1[%c0_153, %c4_154, %c0_155, %c0_156] : memref<1x16x8x128xbf16, #tpu.memory_space<vmem>>, vector<1x1x8x128xbf16>
    %73 = vector.shape_cast %72 : vector<1x1x8x128xbf16> to vector<1x8x128xbf16>
    %c0_157 = arith.constant 0 : index
    %c60 = arith.constant 60 : index
    %c0_158 = arith.constant 0 : index
    %74 = vector.load %arg18[%c0_157, %c60, %c0_158] : memref<1x225x256xbf16, #tpu.memory_space<vmem>>, vector<1x8x128xbf16>
    tpu.vector_store %arg18[%c0_157, %c60, %c0_158], %73 {strides = array<i32>} : memref<1x225x256xbf16, #tpu.memory_space<vmem>>, vector<1x8x128xbf16>,
    %c0_159 = arith.constant 0 : index
    %c4_160 = arith.constant 4 : index
    %c0_161 = arith.constant 0 : index
    %c64_162 = arith.constant 64 : index
    %75 = vector.load %arg1[%c0_159, %c4_160, %c0_161, %c64_162] : memref<1x16x8x128xbf16, #tpu.memory_space<vmem>>, vector<1x1x7x64xbf16>
    %76 = vector.shape_cast %75 : vector<1x1x7x64xbf16> to vector<1x7x64xbf16>
    %c0_163 = arith.constant 0 : index
    %c68 = arith.constant 68 : index
    %c0_164 = arith.constant 0 : index
    %77 = vector.load %arg18[%c0_163, %c68, %c0_164] : memref<1x225x256xbf16, #tpu.memory_space<vmem>>, vector<1x7x64xbf16>
    tpu.vector_store %arg18[%c0_163, %c68, %c0_164], %76 {strides = array<i32>} : memref<1x225x256xbf16, #tpu.memory_space<vmem>>, vector<1x7x64xbf16>,
    %c0_165 = arith.constant 0 : index
    %c4_166 = arith.constant 4 : index
    %c1_167 = arith.constant 1 : index
    %c0_168 = arith.constant 0 : index
    %78 = vector.load %arg1[%c0_165, %c4_166, %c1_167, %c0_168] : memref<1x16x8x128xbf16, #tpu.memory_space<vmem>>, vector<1x1x7x64xbf16>
    %79 = vector.shape_cast %78 : vector<1x1x7x64xbf16> to vector<1x7x64xbf16>
    %c0_169 = arith.constant 0 : index
    %c68_170 = arith.constant 68 : index
    %c64_171 = arith.constant 64 : index
    %80 = vector.load %arg18[%c0_169, %c68_170, %c64_171] : memref<1x225x256xbf16, #tpu.memory_space<vmem>>, vector<1x7x64xbf16>
    tpu.vector_store %arg18[%c0_169, %c68_170, %c64_171], %79 {strides = array<i32>} : memref<1x225x256xbf16, #tpu.memory_space<vmem>>, vector<1x7x64xbf16>,
    %c0_172 = arith.constant 0 : index
    %c5 = arith.constant 5 : index
    %c0_173 = arith.constant 0 : index
    %c0_174 = arith.constant 0 : index
    %81 = vector.load %arg1[%c0_172, %c5, %c0_173, %c0_174] : memref<1x16x8x128xbf16, #tpu.memory_space<vmem>>, vector<1x1x8x128xbf16>
    %82 = vector.shape_cast %81 : vector<1x1x8x128xbf16> to vector<1x8x128xbf16>
    %c0_175 = arith.constant 0 : index
    %c60_176 = arith.constant 60 : index
    %c128_177 = arith.constant 128 : index
    %83 = vector.load %arg18[%c0_175, %c60_176, %c128_177] : memref<1x225x256xbf16, #tpu.memory_space<vmem>>, vector<1x8x128xbf16>
    tpu.vector_store %arg18[%c0_175, %c60_176, %c128_177], %82 {strides = array<i32>} : memref<1x225x256xbf16, #tpu.memory_space<vmem>>, vector<1x8x128xbf16>,
    %c0_178 = arith.constant 0 : index
    %c5_179 = arith.constant 5 : index
    %c0_180 = arith.constant 0 : index
    %c64_181 = arith.constant 64 : index
    %84 = vector.load %arg1[%c0_178, %c5_179, %c0_180, %c64_181] : memref<1x16x8x128xbf16, #tpu.memory_space<vmem>>, vector<1x1x7x64xbf16>
    %85 = vector.shape_cast %84 : vector<1x1x7x64xbf16> to vector<1x7x64xbf16>
    %c0_182 = arith.constant 0 : index
    %c68_183 = arith.constant 68 : index
    %c128_184 = arith.constant 128 : index
    %86 = vector.load %arg18[%c0_182, %c68_183, %c128_184] : memref<1x225x256xbf16, #tpu.memory_space<vmem>>, vector<1x7x64xbf16>
    tpu.vector_store %arg18[%c0_182, %c68_183, %c128_184], %85 {strides = array<i32>} : memref<1x225x256xbf16, #tpu.memory_space<vmem>>, vector<1x7x64xbf16>,
    %c0_185 = arith.constant 0 : index
    %c5_186 = arith.constant 5 : index
    %c1_187 = arith.constant 1 : index
    %c0_188 = arith.constant 0 : index
    %87 = vector.load %arg1[%c0_185, %c5_186, %c1_187, %c0_188] : memref<1x16x8x128xbf16, #tpu.memory_space<vmem>>, vector<1x1x7x64xbf16>
    %88 = vector.shape_cast %87 : vector<1x1x7x64xbf16> to vector<1x7x64xbf16>
    %c0_189 = arith.constant 0 : index
    %c68_190 = arith.constant 68 : index
    %c192_191 = arith.constant 192 : index
    %89 = vector.load %arg18[%c0_189, %c68_190, %c192_191] : memref<1x225x256xbf16, #tpu.memory_space<vmem>>, vector<1x7x64xbf16>
    tpu.vector_store %arg18[%c0_189, %c68_190, %c192_191], %88 {strides = array<i32>} : memref<1x225x256xbf16, #tpu.memory_space<vmem>>, vector<1x7x64xbf16>,
    %c0_192 = arith.constant 0 : index
    %c5_193 = arith.constant 5 : index
    %c0_194 = arith.constant 0 : index
    %c0_195 = arith.constant 0 : index
    %90 = vector.load %arg1[%c0_192, %c5_193, %c0_194, %c0_195] : memref<1x16x8x128xbf16, #tpu.memory_space<vmem>>, vector<1x1x8x128xbf16>
    %91 = vector.shape_cast %90 : vector<1x1x8x128xbf16> to vector<1x8x128xbf16>
    %c0_196 = arith.constant 0 : index
    %c75 = arith.constant 75 : index
    %c0_197 = arith.constant 0 : index
    %92 = vector.load %arg18[%c0_196, %c75, %c0_197] : memref<1x225x256xbf16, #tpu.memory_space<vmem>>, vector<1x8x128xbf16>
    tpu.vector_store %arg18[%c0_196, %c75, %c0_197], %91 {strides = array<i32>} : memref<1x225x256xbf16, #tpu.memory_space<vmem>>, vector<1x8x128xbf16>,
    %c0_198 = arith.constant 0 : index
    %c5_199 = arith.constant 5 : index
    %c0_200 = arith.constant 0 : index
    %c64_201 = arith.constant 64 : index
    %93 = vector.load %arg1[%c0_198, %c5_199, %c0_200, %c64_201] : memref<1x16x8x128xbf16, #tpu.memory_space<vmem>>, vector<1x1x7x64xbf16>
    %94 = vector.shape_cast %93 : vector<1x1x7x64xbf16> to vector<1x7x64xbf16>
    %c0_202 = arith.constant 0 : index
    %c83 = arith.constant 83 : index
    %c0_203 = arith.constant 0 : index
    %95 = vector.load %arg18[%c0_202, %c83, %c0_203] : memref<1x225x256xbf16, #tpu.memory_space<vmem>>, vector<1x7x64xbf16>
    tpu.vector_store %arg18[%c0_202, %c83, %c0_203], %94 {strides = array<i32>} : memref<1x225x256xbf16, #tpu.memory_space<vmem>>, vector<1x7x64xbf16>,
    %c0_204 = arith.constant 0 : index
    %c5_205 = arith.constant 5 : index
    %c1_206 = arith.constant 1 : index
    %c0_207 = arith.constant 0 : index
    %96 = vector.load %arg1[%c0_204, %c5_205, %c1_206, %c0_207] : memref<1x16x8x128xbf16, #tpu.memory_space<vmem>>, vector<1x1x7x64xbf16>
    %97 = vector.shape_cast %96 : vector<1x1x7x64xbf16> to vector<1x7x64xbf16>
    %c0_208 = arith.constant 0 : index
    %c83_209 = arith.constant 83 : index
    %c64_210 = arith.constant 64 : index
    %98 = vector.load %arg18[%c0_208, %c83_209, %c64_210] : memref<1x225x256xbf16, #tpu.memory_space<vmem>>, vector<1x7x64xbf16>
    tpu.vector_store %arg18[%c0_208, %c83_209, %c64_210], %97 {strides = array<i32>} : memref<1x225x256xbf16, #tpu.memory_space<vmem>>, vector<1x7x64xbf16>,
    %c0_211 = arith.constant 0 : index
    %c6 = arith.constant 6 : index
    %c0_212 = arith.constant 0 : index
    %c0_213 = arith.constant 0 : index
    %99 = vector.load %arg1[%c0_211, %c6, %c0_212, %c0_213] : memref<1x16x8x128xbf16, #tpu.memory_space<vmem>>, vector<1x1x8x128xbf16>
    %100 = vector.shape_cast %99 : vector<1x1x8x128xbf16> to vector<1x8x128xbf16>
    %c0_214 = arith.constant 0 : index
    %c75_215 = arith.constant 75 : index
    %c128_216 = arith.constant 128 : index
    %101 = vector.load %arg18[%c0_214, %c75_215, %c128_216] : memref<1x225x256xbf16, #tpu.memory_space<vmem>>, vector<1x8x128xbf16>
    tpu.vector_store %arg18[%c0_214, %c75_215, %c128_216], %100 {strides = array<i32>} : memref<1x225x256xbf16, #tpu.memory_space<vmem>>, vector<1x8x128xbf16>,
    %c0_217 = arith.constant 0 : index
    %c6_218 = arith.constant 6 : index
    %c0_219 = arith.constant 0 : index
    %c64_220 = arith.constant 64 : index
    %102 = vector.load %arg1[%c0_217, %c6_218, %c0_219, %c64_220] : memref<1x16x8x128xbf16, #tpu.memory_space<vmem>>, vector<1x1x7x64xbf16>
    %103 = vector.shape_cast %102 : vector<1x1x7x64xbf16> to vector<1x7x64xbf16>
    %c0_221 = arith.constant 0 : index
    %c83_222 = arith.constant 83 : index
    %c128_223 = arith.constant 128 : index
    %104 = vector.load %arg18[%c0_221, %c83_222, %c128_223] : memref<1x225x256xbf16, #tpu.memory_space<vmem>>, vector<1x7x64xbf16>
    tpu.vector_store %arg18[%c0_221, %c83_222, %c128_223], %103 {strides = array<i32>} : memref<1x225x256xbf16, #tpu.memory_space<vmem>>, vector<1x7x64xbf16>,
    %c0_224 = arith.constant 0 : index
    %c6_225 = arith.constant 6 : index
    %c1_226 = arith.constant 1 : index
    %c0_227 = arith.constant 0 : index
    %105 = vector.load %arg1[%c0_224, %c6_225, %c1_226, %c0_227] : memref<1x16x8x128xbf16, #tpu.memory_space<vmem>>, vector<1x1x7x64xbf16>
    %106 = vector.shape_cast %105 : vector<1x1x7x64xbf16> to vector<1x7x64xbf16>
    %c0_228 = arith.constant 0 : index
    %c83_229 = arith.constant 83 : index
    %c192_230 = arith.constant 192 : index
    %107 = vector.load %arg18[%c0_228, %c83_229, %c192_230] : memref<1x225x256xbf16, #tpu.memory_space<vmem>>, vector<1x7x64xbf16>
    tpu.vector_store %arg18[%c0_228, %c83_229, %c192_230], %106 {strides = array<i32>} : memref<1x225x256xbf16, #tpu.memory_space<vmem>>, vector<1x7x64xbf16>,
    %c0_231 = arith.constant 0 : index
    %c6_232 = arith.constant 6 : index
    %c0_233 = arith.constant 0 : index
    %c0_234 = arith.constant 0 : index
    %108 = vector.load %arg1[%c0_231, %c6_232, %c0_233, %c0_234] : memref<1x16x8x128xbf16, #tpu.memory_space<vmem>>, vector<1x1x8x128xbf16>
    %109 = vector.shape_cast %108 : vector<1x1x8x128xbf16> to vector<1x8x128xbf16>
    %c0_235 = arith.constant 0 : index
    %c90 = arith.constant 90 : index
    %c0_236 = arith.constant 0 : index
    %110 = vector.load %arg18[%c0_235, %c90, %c0_236] : memref<1x225x256xbf16, #tpu.memory_space<vmem>>, vector<1x8x128xbf16>
    tpu.vector_store %arg18[%c0_235, %c90, %c0_236], %109 {strides = array<i32>} : memref<1x225x256xbf16, #tpu.memory_space<vmem>>, vector<1x8x128xbf16>,
    %c0_237 = arith.constant 0 : index
    %c6_238 = arith.constant 6 : index
    %c0_239 = arith.constant 0 : index
    %c64_240 = arith.constant 64 : index
    %111 = vector.load %arg1[%c0_237, %c6_238, %c0_239, %c64_240] : memref<1x16x8x128xbf16, #tpu.memory_space<vmem>>, vector<1x1x7x64xbf16>
    %112 = vector.shape_cast %111 : vector<1x1x7x64xbf16> to vector<1x7x64xbf16>
    %c0_241 = arith.constant 0 : index
    %c98 = arith.constant 98 : index
    %c0_242 = arith.constant 0 : index
    %113 = vector.load %arg18[%c0_241, %c98, %c0_242] : memref<1x225x256xbf16, #tpu.memory_space<vmem>>, vector<1x7x64xbf16>
    tpu.vector_store %arg18[%c0_241, %c98, %c0_242], %112 {strides = array<i32>} : memref<1x225x256xbf16, #tpu.memory_space<vmem>>, vector<1x7x64xbf16>,
    %c0_243 = arith.constant 0 : index
    %c6_244 = arith.constant 6 : index
    %c1_245 = arith.constant 1 : index
    %c0_246 = arith.constant 0 : index
    %114 = vector.load %arg1[%c0_243, %c6_244, %c1_245, %c0_246] : memref<1x16x8x128xbf16, #tpu.memory_space<vmem>>, vector<1x1x7x64xbf16>
    %115 = vector.shape_cast %114 : vector<1x1x7x64xbf16> to vector<1x7x64xbf16>
    %c0_247 = arith.constant 0 : index
    %c98_248 = arith.constant 98 : index
    %c64_249 = arith.constant 64 : index
    %116 = vector.load %arg18[%c0_247, %c98_248, %c64_249] : memref<1x225x256xbf16, #tpu.memory_space<vmem>>, vector<1x7x64xbf16>
    tpu.vector_store %arg18[%c0_247, %c98_248, %c64_249], %115 {strides = array<i32>} : memref<1x225x256xbf16, #tpu.memory_space<vmem>>, vector<1x7x64xbf16>,
    %c0_250 = arith.constant 0 : index
    %c7 = arith.constant 7 : index
    %c0_251 = arith.constant 0 : index
    %c0_252 = arith.constant 0 : index
    %117 = vector.load %arg1[%c0_250, %c7, %c0_251, %c0_252] : memref<1x16x8x128xbf16, #tpu.memory_space<vmem>>, vector<1x1x8x128xbf16>
    %118 = vector.shape_cast %117 : vector<1x1x8x128xbf16> to vector<1x8x128xbf16>
    %c0_253 = arith.constant 0 : index
    %c90_254 = arith.constant 90 : index
    %c128_255 = arith.constant 128 : index
    %119 = vector.load %arg18[%c0_253, %c90_254, %c128_255] : memref<1x225x256xbf16, #tpu.memory_space<vmem>>, vector<1x8x128xbf16>
    tpu.vector_store %arg18[%c0_253, %c90_254, %c128_255], %118 {strides = array<i32>} : memref<1x225x256xbf16, #tpu.memory_space<vmem>>, vector<1x8x128xbf16>,
    %c0_256 = arith.constant 0 : index
    %c7_257 = arith.constant 7 : index
    %c0_258 = arith.constant 0 : index
    %c64_259 = arith.constant 64 : index
    %120 = vector.load %arg1[%c0_256, %c7_257, %c0_258, %c64_259] : memref<1x16x8x128xbf16, #tpu.memory_space<vmem>>, vector<1x1x7x64xbf16>
    %121 = vector.shape_cast %120 : vector<1x1x7x64xbf16> to vector<1x7x64xbf16>
    %c0_260 = arith.constant 0 : index
    %c98_261 = arith.constant 98 : index
    %c128_262 = arith.constant 128 : index
    %122 = vector.load %arg18[%c0_260, %c98_261, %c128_262] : memref<1x225x256xbf16, #tpu.memory_space<vmem>>, vector<1x7x64xbf16>
    tpu.vector_store %arg18[%c0_260, %c98_261, %c128_262], %121 {strides = array<i32>} : memref<1x225x256xbf16, #tpu.memory_space<vmem>>, vector<1x7x64xbf16>,
    %c0_263 = arith.constant 0 : index
    %c7_264 = arith.constant 7 : index
    %c1_265 = arith.constant 1 : index
    %c0_266 = arith.constant 0 : index
    %123 = vector.load %arg1[%c0_263, %c7_264, %c1_265, %c0_266] : memref<1x16x8x128xbf16, #tpu.memory_space<vmem>>, vector<1x1x7x64xbf16>
    %124 = vector.shape_cast %123 : vector<1x1x7x64xbf16> to vector<1x7x64xbf16>
    %c0_267 = arith.constant 0 : index
    %c98_268 = arith.constant 98 : index
    %c192_269 = arith.constant 192 : index
    %125 = vector.load %arg18[%c0_267, %c98_268, %c192_269] : memref<1x225x256xbf16, #tpu.memory_space<vmem>>, vector<1x7x64xbf16>
    tpu.vector_store %arg18[%c0_267, %c98_268, %c192_269], %124 {strides = array<i32>} : memref<1x225x256xbf16, #tpu.memory_space<vmem>>, vector<1x7x64xbf16>,
    %c0_270 = arith.constant 0 : index
    %c7_271 = arith.constant 7 : index
    %c0_272 = arith.constant 0 : index
    %c0_273 = arith.constant 0 : index
    %126 = vector.load %arg1[%c0_270, %c7_271, %c0_272, %c0_273] : memref<1x16x8x128xbf16, #tpu.memory_space<vmem>>, vector<1x1x8x128xbf16>
    %127 = vector.shape_cast %126 : vector<1x1x8x128xbf16> to vector<1x8x128xbf16>
    %c0_274 = arith.constant 0 : index
    %c105 = arith.constant 105 : index
    %c0_275 = arith.constant 0 : index
    %128 = vector.load %arg18[%c0_274, %c105, %c0_275] : memref<1x225x256xbf16, #tpu.memory_space<vmem>>, vector<1x8x128xbf16>
    tpu.vector_store %arg18[%c0_274, %c105, %c0_275], %127 {strides = array<i32>} : memref<1x225x256xbf16, #tpu.memory_space<vmem>>, vector<1x8x128xbf16>,
    %c0_276 = arith.constant 0 : index
    %c7_277 = arith.constant 7 : index
    %c0_278 = arith.constant 0 : index
    %c64_279 = arith.constant 64 : index
    %129 = vector.load %arg1[%c0_276, %c7_277, %c0_278, %c64_279] : memref<1x16x8x128xbf16, #tpu.memory_space<vmem>>, vector<1x1x7x64xbf16>
    %130 = vector.shape_cast %129 : vector<1x1x7x64xbf16> to vector<1x7x64xbf16>
    %c0_280 = arith.constant 0 : index
    %c113 = arith.constant 113 : index
    %c0_281 = arith.constant 0 : index
    %131 = vector.load %arg18[%c0_280, %c113, %c0_281] : memref<1x225x256xbf16, #tpu.memory_space<vmem>>, vector<1x7x64xbf16>
    tpu.vector_store %arg18[%c0_280, %c113, %c0_281], %130 {strides = array<i32>} : memref<1x225x256xbf16, #tpu.memory_space<vmem>>, vector<1x7x64xbf16>,
    %c0_282 = arith.constant 0 : index
    %c7_283 = arith.constant 7 : index
    %c1_284 = arith.constant 1 : index
    %c0_285 = arith.constant 0 : index
    %132 = vector.load %arg1[%c0_282, %c7_283, %c1_284, %c0_285] : memref<1x16x8x128xbf16, #tpu.memory_space<vmem>>, vector<1x1x7x64xbf16>
    %133 = vector.shape_cast %132 : vector<1x1x7x64xbf16> to vector<1x7x64xbf16>
    %c0_286 = arith.constant 0 : index
    %c113_287 = arith.constant 113 : index
    %c64_288 = arith.constant 64 : index
    %134 = vector.load %arg18[%c0_286, %c113_287, %c64_288] : memref<1x225x256xbf16, #tpu.memory_space<vmem>>, vector<1x7x64xbf16>
    tpu.vector_store %arg18[%c0_286, %c113_287, %c64_288], %133 {strides = array<i32>} : memref<1x225x256xbf16, #tpu.memory_space<vmem>>, vector<1x7x64xbf16>,
    %c0_289 = arith.constant 0 : index
    %c8_290 = arith.constant 8 : index
    %c0_291 = arith.constant 0 : index
    %c0_292 = arith.constant 0 : index
    %135 = vector.load %arg1[%c0_289, %c8_290, %c0_291, %c0_292] : memref<1x16x8x128xbf16, #tpu.memory_space<vmem>>, vector<1x1x8x128xbf16>
    %136 = vector.shape_cast %135 : vector<1x1x8x128xbf16> to vector<1x8x128xbf16>
    %c0_293 = arith.constant 0 : index
    %c105_294 = arith.constant 105 : index
    %c128_295 = arith.constant 128 : index
    %137 = vector.load %arg18[%c0_293, %c105_294, %c128_295] : memref<1x225x256xbf16, #tpu.memory_space<vmem>>, vector<1x8x128xbf16>
    tpu.vector_store %arg18[%c0_293, %c105_294, %c128_295], %136 {strides = array<i32>} : memref<1x225x256xbf16, #tpu.memory_space<vmem>>, vector<1x8x128xbf16>,
    %c0_296 = arith.constant 0 : index
    %c8_297 = arith.constant 8 : index
    %c0_298 = arith.constant 0 : index
    %c64_299 = arith.constant 64 : index
    %138 = vector.load %arg1[%c0_296, %c8_297, %c0_298, %c64_299] : memref<1x16x8x128xbf16, #tpu.memory_space<vmem>>, vector<1x1x7x64xbf16>
    %139 = vector.shape_cast %138 : vector<1x1x7x64xbf16> to vector<1x7x64xbf16>
    %c0_300 = arith.constant 0 : index
    %c113_301 = arith.constant 113 : index
    %c128_302 = arith.constant 128 : index
    %140 = vector.load %arg18[%c0_300, %c113_301, %c128_302] : memref<1x225x256xbf16, #tpu.memory_space<vmem>>, vector<1x7x64xbf16>
    tpu.vector_store %arg18[%c0_300, %c113_301, %c128_302], %139 {strides = array<i32>} : memref<1x225x256xbf16, #tpu.memory_space<vmem>>, vector<1x7x64xbf16>,
    %c0_303 = arith.constant 0 : index
    %c8_304 = arith.constant 8 : index
    %c1_305 = arith.constant 1 : index
    %c0_306 = arith.constant 0 : index
    %141 = vector.load %arg1[%c0_303, %c8_304, %c1_305, %c0_306] : memref<1x16x8x128xbf16, #tpu.memory_space<vmem>>, vector<1x1x7x64xbf16>
    %142 = vector.shape_cast %141 : vector<1x1x7x64xbf16> to vector<1x7x64xbf16>
    %c0_307 = arith.constant 0 : index
    %c113_308 = arith.constant 113 : index
    %c192_309 = arith.constant 192 : index
    %143 = vector.load %arg18[%c0_307, %c113_308, %c192_309] : memref<1x225x256xbf16, #tpu.memory_space<vmem>>, vector<1x7x64xbf16>
    tpu.vector_store %arg18[%c0_307, %c113_308, %c192_309], %142 {strides = array<i32>} : memref<1x225x256xbf16, #tpu.memory_space<vmem>>, vector<1x7x64xbf16>,
    %c0_310 = arith.constant 0 : index
    %c8_311 = arith.constant 8 : index
    %c0_312 = arith.constant 0 : index
    %c0_313 = arith.constant 0 : index
    %144 = vector.load %arg1[%c0_310, %c8_311, %c0_312, %c0_313] : memref<1x16x8x128xbf16, #tpu.memory_space<vmem>>, vector<1x1x8x128xbf16>
    %145 = vector.shape_cast %144 : vector<1x1x8x128xbf16> to vector<1x8x128xbf16>
    %c0_314 = arith.constant 0 : index
    %c120 = arith.constant 120 : index
    %c0_315 = arith.constant 0 : index
    %146 = vector.load %arg18[%c0_314, %c120, %c0_315] : memref<1x225x256xbf16, #tpu.memory_space<vmem>>, vector<1x8x128xbf16>
    tpu.vector_store %arg18[%c0_314, %c120, %c0_315], %145 {strides = array<i32>} : memref<1x225x256xbf16, #tpu.memory_space<vmem>>, vector<1x8x128xbf16>,
    %c0_316 = arith.constant 0 : index
    %c8_317 = arith.constant 8 : index
    %c0_318 = arith.constant 0 : index
    %c64_319 = arith.constant 64 : index
    %147 = vector.load %arg1[%c0_316, %c8_317, %c0_318, %c64_319] : memref<1x16x8x128xbf16, #tpu.memory_space<vmem>>, vector<1x1x7x64xbf16>
    %148 = vector.shape_cast %147 : vector<1x1x7x64xbf16> to vector<1x7x64xbf16>
    %c0_320 = arith.constant 0 : index
    %c128_321 = arith.constant 128 : index
    %c0_322 = arith.constant 0 : index
    %149 = vector.load %arg18[%c0_320, %c128_321, %c0_322] : memref<1x225x256xbf16, #tpu.memory_space<vmem>>, vector<1x7x64xbf16>
    tpu.vector_store %arg18[%c0_320, %c128_321, %c0_322], %148 {strides = array<i32>} : memref<1x225x256xbf16, #tpu.memory_space<vmem>>, vector<1x7x64xbf16>,
    %c0_323 = arith.constant 0 : index
    %c8_324 = arith.constant 8 : index
    %c1_325 = arith.constant 1 : index
    %c0_326 = arith.constant 0 : index
    %150 = vector.load %arg1[%c0_323, %c8_324, %c1_325, %c0_326] : memref<1x16x8x128xbf16, #tpu.memory_space<vmem>>, vector<1x1x7x64xbf16>
    %151 = vector.shape_cast %150 : vector<1x1x7x64xbf16> to vector<1x7x64xbf16>
    %c0_327 = arith.constant 0 : index
    %c128_328 = arith.constant 128 : index
    %c64_329 = arith.constant 64 : index
    %152 = vector.load %arg18[%c0_327, %c128_328, %c64_329] : memref<1x225x256xbf16, #tpu.memory_space<vmem>>, vector<1x7x64xbf16>
    tpu.vector_store %arg18[%c0_327, %c128_328, %c64_329], %151 {strides = array<i32>} : memref<1x225x256xbf16, #tpu.memory_space<vmem>>, vector<1x7x64xbf16>,
    %c0_330 = arith.constant 0 : index
    %c9 = arith.constant 9 : index
    %c0_331 = arith.constant 0 : index
    %c0_332 = arith.constant 0 : index
    %153 = vector.load %arg1[%c0_330, %c9, %c0_331, %c0_332] : memref<1x16x8x128xbf16, #tpu.memory_space<vmem>>, vector<1x1x8x128xbf16>
    %154 = vector.shape_cast %153 : vector<1x1x8x128xbf16> to vector<1x8x128xbf16>
    %c0_333 = arith.constant 0 : index
    %c120_334 = arith.constant 120 : index
    %c128_335 = arith.constant 128 : index
    %155 = vector.load %arg18[%c0_333, %c120_334, %c128_335] : memref<1x225x256xbf16, #tpu.memory_space<vmem>>, vector<1x8x128xbf16>
    tpu.vector_store %arg18[%c0_333, %c120_334, %c128_335], %154 {strides = array<i32>} : memref<1x225x256xbf16, #tpu.memory_space<vmem>>, vector<1x8x128xbf16>,
    %c0_336 = arith.constant 0 : index
    %c9_337 = arith.constant 9 : index
    %c0_338 = arith.constant 0 : index
    %c64_339 = arith.constant 64 : index
    %156 = vector.load %arg1[%c0_336, %c9_337, %c0_338, %c64_339] : memref<1x16x8x128xbf16, #tpu.memory_space<vmem>>, vector<1x1x7x64xbf16>
    %157 = vector.shape_cast %156 : vector<1x1x7x64xbf16> to vector<1x7x64xbf16>
    %c0_340 = arith.constant 0 : index
    %c128_341 = arith.constant 128 : index
    %c128_342 = arith.constant 128 : index
    %158 = vector.load %arg18[%c0_340, %c128_341, %c128_342] : memref<1x225x256xbf16, #tpu.memory_space<vmem>>, vector<1x7x64xbf16>
    tpu.vector_store %arg18[%c0_340, %c128_341, %c128_342], %157 {strides = array<i32>} : memref<1x225x256xbf16, #tpu.memory_space<vmem>>, vector<1x7x64xbf16>,
    %c0_343 = arith.constant 0 : index
    %c9_344 = arith.constant 9 : index
    %c1_345 = arith.constant 1 : index
    %c0_346 = arith.constant 0 : index
    %159 = vector.load %arg1[%c0_343, %c9_344, %c1_345, %c0_346] : memref<1x16x8x128xbf16, #tpu.memory_space<vmem>>, vector<1x1x7x64xbf16>
    %160 = vector.shape_cast %159 : vector<1x1x7x64xbf16> to vector<1x7x64xbf16>
    %c0_347 = arith.constant 0 : index
    %c128_348 = arith.constant 128 : index
    %c192_349 = arith.constant 192 : index
    %161 = vector.load %arg18[%c0_347, %c128_348, %c192_349] : memref<1x225x256xbf16, #tpu.memory_space<vmem>>, vector<1x7x64xbf16>
    tpu.vector_store %arg18[%c0_347, %c128_348, %c192_349], %160 {strides = array<i32>} : memref<1x225x256xbf16, #tpu.memory_space<vmem>>, vector<1x7x64xbf16>,
    %c0_350 = arith.constant 0 : index
    %c9_351 = arith.constant 9 : index
    %c0_352 = arith.constant 0 : index
    %c0_353 = arith.constant 0 : index
    %162 = vector.load %arg1[%c0_350, %c9_351, %c0_352, %c0_353] : memref<1x16x8x128xbf16, #tpu.memory_space<vmem>>, vector<1x1x8x128xbf16>
    %163 = vector.shape_cast %162 : vector<1x1x8x128xbf16> to vector<1x8x128xbf16>
    %c0_354 = arith.constant 0 : index
    %c135 = arith.constant 135 : index
    %c0_355 = arith.constant 0 : index
    %164 = vector.load %arg18[%c0_354, %c135, %c0_355] : memref<1x225x256xbf16, #tpu.memory_space<vmem>>, vector<1x8x128xbf16>
    tpu.vector_store %arg18[%c0_354, %c135, %c0_355], %163 {strides = array<i32>} : memref<1x225x256xbf16, #tpu.memory_space<vmem>>, vector<1x8x128xbf16>,
    %c0_356 = arith.constant 0 : index
    %c9_357 = arith.constant 9 : index
    %c0_358 = arith.constant 0 : index
    %c64_359 = arith.constant 64 : index
    %165 = vector.load %arg1[%c0_356, %c9_357, %c0_358, %c64_359] : memref<1x16x8x128xbf16, #tpu.memory_space<vmem>>, vector<1x1x7x64xbf16>
    %166 = vector.shape_cast %165 : vector<1x1x7x64xbf16> to vector<1x7x64xbf16>
    %c0_360 = arith.constant 0 : index
    %c143 = arith.constant 143 : index
    %c0_361 = arith.constant 0 : index
    %167 = vector.load %arg18[%c0_360, %c143, %c0_361] : memref<1x225x256xbf16, #tpu.memory_space<vmem>>, vector<1x7x64xbf16>
    tpu.vector_store %arg18[%c0_360, %c143, %c0_361], %166 {strides = array<i32>} : memref<1x225x256xbf16, #tpu.memory_space<vmem>>, vector<1x7x64xbf16>,
    %c0_362 = arith.constant 0 : index
    %c9_363 = arith.constant 9 : index
    %c1_364 = arith.constant 1 : index
    %c0_365 = arith.constant 0 : index
    %168 = vector.load %arg1[%c0_362, %c9_363, %c1_364, %c0_365] : memref<1x16x8x128xbf16, #tpu.memory_space<vmem>>, vector<1x1x7x64xbf16>
    %169 = vector.shape_cast %168 : vector<1x1x7x64xbf16> to vector<1x7x64xbf16>
    %c0_366 = arith.constant 0 : index
    %c143_367 = arith.constant 143 : index
    %c64_368 = arith.constant 64 : index
    %170 = vector.load %arg18[%c0_366, %c143_367, %c64_368] : memref<1x225x256xbf16, #tpu.memory_space<vmem>>, vector<1x7x64xbf16>
    tpu.vector_store %arg18[%c0_366, %c143_367, %c64_368], %169 {strides = array<i32>} : memref<1x225x256xbf16, #tpu.memory_space<vmem>>, vector<1x7x64xbf16>,
    %c0_369 = arith.constant 0 : index
    %c10 = arith.constant 10 : index
    %c0_370 = arith.constant 0 : index
    %c0_371 = arith.constant 0 : index
    %171 = vector.load %arg1[%c0_369, %c10, %c0_370, %c0_371] : memref<1x16x8x128xbf16, #tpu.memory_space<vmem>>, vector<1x1x8x128xbf16>
    %172 = vector.shape_cast %171 : vector<1x1x8x128xbf16> to vector<1x8x128xbf16>
    %c0_372 = arith.constant 0 : index
    %c135_373 = arith.constant 135 : index
    %c128_374 = arith.constant 128 : index
    %173 = vector.load %arg18[%c0_372, %c135_373, %c128_374] : memref<1x225x256xbf16, #tpu.memory_space<vmem>>, vector<1x8x128xbf16>
    tpu.vector_store %arg18[%c0_372, %c135_373, %c128_374], %172 {strides = array<i32>} : memref<1x225x256xbf16, #tpu.memory_space<vmem>>, vector<1x8x128xbf16>,
    %c0_375 = arith.constant 0 : index
    %c10_376 = arith.constant 10 : index
    %c0_377 = arith.constant 0 : index
    %c64_378 = arith.constant 64 : index
    %174 = vector.load %arg1[%c0_375, %c10_376, %c0_377, %c64_378] : memref<1x16x8x128xbf16, #tpu.memory_space<vmem>>, vector<1x1x7x64xbf16>
    %175 = vector.shape_cast %174 : vector<1x1x7x64xbf16> to vector<1x7x64xbf16>
    %c0_379 = arith.constant 0 : index
    %c143_380 = arith.constant 143 : index
    %c128_381 = arith.constant 128 : index
    %176 = vector.load %arg18[%c0_379, %c143_380, %c128_381] : memref<1x225x256xbf16, #tpu.memory_space<vmem>>, vector<1x7x64xbf16>
    tpu.vector_store %arg18[%c0_379, %c143_380, %c128_381], %175 {strides = array<i32>} : memref<1x225x256xbf16, #tpu.memory_space<vmem>>, vector<1x7x64xbf16>,
    %c0_382 = arith.constant 0 : index
    %c10_383 = arith.constant 10 : index
    %c1_384 = arith.constant 1 : index
    %c0_385 = arith.constant 0 : index
    %177 = vector.load %arg1[%c0_382, %c10_383, %c1_384, %c0_385] : memref<1x16x8x128xbf16, #tpu.memory_space<vmem>>, vector<1x1x7x64xbf16>
    %178 = vector.shape_cast %177 : vector<1x1x7x64xbf16> to vector<1x7x64xbf16>
    %c0_386 = arith.constant 0 : index
    %c143_387 = arith.constant 143 : index
    %c192_388 = arith.constant 192 : index
    %179 = vector.load %arg18[%c0_386, %c143_387, %c192_388] : memref<1x225x256xbf16, #tpu.memory_space<vmem>>, vector<1x7x64xbf16>
    tpu.vector_store %arg18[%c0_386, %c143_387, %c192_388], %178 {strides = array<i32>} : memref<1x225x256xbf16, #tpu.memory_space<vmem>>, vector<1x7x64xbf16>,
    %c0_389 = arith.constant 0 : index
    %c10_390 = arith.constant 10 : index
    %c0_391 = arith.constant 0 : index
    %c0_392 = arith.constant 0 : index
    %180 = vector.load %arg1[%c0_389, %c10_390, %c0_391, %c0_392] : memref<1x16x8x128xbf16, #tpu.memory_space<vmem>>, vector<1x1x8x128xbf16>
    %181 = vector.shape_cast %180 : vector<1x1x8x128xbf16> to vector<1x8x128xbf16>
    %c0_393 = arith.constant 0 : index
    %c150 = arith.constant 150 : index
    %c0_394 = arith.constant 0 : index
    %182 = vector.load %arg18[%c0_393, %c150, %c0_394] : memref<1x225x256xbf16, #tpu.memory_space<vmem>>, vector<1x8x128xbf16>
    tpu.vector_store %arg18[%c0_393, %c150, %c0_394], %181 {strides = array<i32>} : memref<1x225x256xbf16, #tpu.memory_space<vmem>>, vector<1x8x128xbf16>,
    %c0_395 = arith.constant 0 : index
    %c10_396 = arith.constant 10 : index
    %c0_397 = arith.constant 0 : index
    %c64_398 = arith.constant 64 : index
    %183 = vector.load %arg1[%c0_395, %c10_396, %c0_397, %c64_398] : memref<1x16x8x128xbf16, #tpu.memory_space<vmem>>, vector<1x1x7x64xbf16>
    %184 = vector.shape_cast %183 : vector<1x1x7x64xbf16> to vector<1x7x64xbf16>
    %c0_399 = arith.constant 0 : index
    %c158 = arith.constant 158 : index
    %c0_400 = arith.constant 0 : index
    %185 = vector.load %arg18[%c0_399, %c158, %c0_400] : memref<1x225x256xbf16, #tpu.memory_space<vmem>>, vector<1x7x64xbf16>
    tpu.vector_store %arg18[%c0_399, %c158, %c0_400], %184 {strides = array<i32>} : memref<1x225x256xbf16, #tpu.memory_space<vmem>>, vector<1x7x64xbf16>,
    %c0_401 = arith.constant 0 : index
    %c10_402 = arith.constant 10 : index
    %c1_403 = arith.constant 1 : index
    %c0_404 = arith.constant 0 : index
    %186 = vector.load %arg1[%c0_401, %c10_402, %c1_403, %c0_404] : memref<1x16x8x128xbf16, #tpu.memory_space<vmem>>, vector<1x1x7x64xbf16>
    %187 = vector.shape_cast %186 : vector<1x1x7x64xbf16> to vector<1x7x64xbf16>
    %c0_405 = arith.constant 0 : index
    %c158_406 = arith.constant 158 : index
    %c64_407 = arith.constant 64 : index
    %188 = vector.load %arg18[%c0_405, %c158_406, %c64_407] : memref<1x225x256xbf16, #tpu.memory_space<vmem>>, vector<1x7x64xbf16>
    tpu.vector_store %arg18[%c0_405, %c158_406, %c64_407], %187 {strides = array<i32>} : memref<1x225x256xbf16, #tpu.memory_space<vmem>>, vector<1x7x64xbf16>,
    %c0_408 = arith.constant 0 : index
    %c11 = arith.constant 11 : index
    %c0_409 = arith.constant 0 : index
    %c0_410 = arith.constant 0 : index
    %189 = vector.load %arg1[%c0_408, %c11, %c0_409, %c0_410] : memref<1x16x8x128xbf16, #tpu.memory_space<vmem>>, vector<1x1x8x128xbf16>
    %190 = vector.shape_cast %189 : vector<1x1x8x128xbf16> to vector<1x8x128xbf16>
    %c0_411 = arith.constant 0 : index
    %c150_412 = arith.constant 150 : index
    %c128_413 = arith.constant 128 : index
    %191 = vector.load %arg18[%c0_411, %c150_412, %c128_413] : memref<1x225x256xbf16, #tpu.memory_space<vmem>>, vector<1x8x128xbf16>
    tpu.vector_store %arg18[%c0_411, %c150_412, %c128_413], %190 {strides = array<i32>} : memref<1x225x256xbf16, #tpu.memory_space<vmem>>, vector<1x8x128xbf16>,
    %c0_414 = arith.constant 0 : index
    %c11_415 = arith.constant 11 : index
    %c0_416 = arith.constant 0 : index
    %c64_417 = arith.constant 64 : index
    %192 = vector.load %arg1[%c0_414, %c11_415, %c0_416, %c64_417] : memref<1x16x8x128xbf16, #tpu.memory_space<vmem>>, vector<1x1x7x64xbf16>
    %193 = vector.shape_cast %192 : vector<1x1x7x64xbf16> to vector<1x7x64xbf16>
    %c0_418 = arith.constant 0 : index
    %c158_419 = arith.constant 158 : index
    %c128_420 = arith.constant 128 : index
    %194 = vector.load %arg18[%c0_418, %c158_419, %c128_420] : memref<1x225x256xbf16, #tpu.memory_space<vmem>>, vector<1x7x64xbf16>
    tpu.vector_store %arg18[%c0_418, %c158_419, %c128_420], %193 {strides = array<i32>} : memref<1x225x256xbf16, #tpu.memory_space<vmem>>, vector<1x7x64xbf16>,
    %c0_421 = arith.constant 0 : index
    %c11_422 = arith.constant 11 : index
    %c1_423 = arith.constant 1 : index
    %c0_424 = arith.constant 0 : index
    %195 = vector.load %arg1[%c0_421, %c11_422, %c1_423, %c0_424] : memref<1x16x8x128xbf16, #tpu.memory_space<vmem>>, vector<1x1x7x64xbf16>
    %196 = vector.shape_cast %195 : vector<1x1x7x64xbf16> to vector<1x7x64xbf16>
    %c0_425 = arith.constant 0 : index
    %c158_426 = arith.constant 158 : index
    %c192_427 = arith.constant 192 : index
    %197 = vector.load %arg18[%c0_425, %c158_426, %c192_427] : memref<1x225x256xbf16, #tpu.memory_space<vmem>>, vector<1x7x64xbf16>
    tpu.vector_store %arg18[%c0_425, %c158_426, %c192_427], %196 {strides = array<i32>} : memref<1x225x256xbf16, #tpu.memory_space<vmem>>, vector<1x7x64xbf16>,
    %c0_428 = arith.constant 0 : index
    %c11_429 = arith.constant 11 : index
    %c0_430 = arith.constant 0 : index
    %c0_431 = arith.constant 0 : index
    %198 = vector.load %arg1[%c0_428, %c11_429, %c0_430, %c0_431] : memref<1x16x8x128xbf16, #tpu.memory_space<vmem>>, vector<1x1x8x128xbf16>
    %199 = vector.shape_cast %198 : vector<1x1x8x128xbf16> to vector<1x8x128xbf16>
    %c0_432 = arith.constant 0 : index
    %c165 = arith.constant 165 : index
    %c0_433 = arith.constant 0 : index
    %200 = vector.load %arg18[%c0_432, %c165, %c0_433] : memref<1x225x256xbf16, #tpu.memory_space<vmem>>, vector<1x8x128xbf16>
    tpu.vector_store %arg18[%c0_432, %c165, %c0_433], %199 {strides = array<i32>} : memref<1x225x256xbf16, #tpu.memory_space<vmem>>, vector<1x8x128xbf16>,
    %c0_434 = arith.constant 0 : index
    %c11_435 = arith.constant 11 : index
    %c0_436 = arith.constant 0 : index
    %c64_437 = arith.constant 64 : index
    %201 = vector.load %arg1[%c0_434, %c11_435, %c0_436, %c64_437] : memref<1x16x8x128xbf16, #tpu.memory_space<vmem>>, vector<1x1x7x64xbf16>
    %202 = vector.shape_cast %201 : vector<1x1x7x64xbf16> to vector<1x7x64xbf16>
    %c0_438 = arith.constant 0 : index
    %c173 = arith.constant 173 : index
    %c0_439 = arith.constant 0 : index
    %203 = vector.load %arg18[%c0_438, %c173, %c0_439] : memref<1x225x256xbf16, #tpu.memory_space<vmem>>, vector<1x7x64xbf16>
    tpu.vector_store %arg18[%c0_438, %c173, %c0_439], %202 {strides = array<i32>} : memref<1x225x256xbf16, #tpu.memory_space<vmem>>, vector<1x7x64xbf16>,
    %c0_440 = arith.constant 0 : index
    %c11_441 = arith.constant 11 : index
    %c1_442 = arith.constant 1 : index
    %c0_443 = arith.constant 0 : index
    %204 = vector.load %arg1[%c0_440, %c11_441, %c1_442, %c0_443] : memref<1x16x8x128xbf16, #tpu.memory_space<vmem>>, vector<1x1x7x64xbf16>
    %205 = vector.shape_cast %204 : vector<1x1x7x64xbf16> to vector<1x7x64xbf16>
    %c0_444 = arith.constant 0 : index
    %c173_445 = arith.constant 173 : index
    %c64_446 = arith.constant 64 : index
    %206 = vector.load %arg18[%c0_444, %c173_445, %c64_446] : memref<1x225x256xbf16, #tpu.memory_space<vmem>>, vector<1x7x64xbf16>
    tpu.vector_store %arg18[%c0_444, %c173_445, %c64_446], %205 {strides = array<i32>} : memref<1x225x256xbf16, #tpu.memory_space<vmem>>, vector<1x7x64xbf16>,
    %c0_447 = arith.constant 0 : index
    %c12 = arith.constant 12 : index
    %c0_448 = arith.constant 0 : index
    %c0_449 = arith.constant 0 : index
    %207 = vector.load %arg1[%c0_447, %c12, %c0_448, %c0_449] : memref<1x16x8x128xbf16, #tpu.memory_space<vmem>>, vector<1x1x8x128xbf16>
    %208 = vector.shape_cast %207 : vector<1x1x8x128xbf16> to vector<1x8x128xbf16>
    %c0_450 = arith.constant 0 : index
    %c165_451 = arith.constant 165 : index
    %c128_452 = arith.constant 128 : index
    %209 = vector.load %arg18[%c0_450, %c165_451, %c128_452] : memref<1x225x256xbf16, #tpu.memory_space<vmem>>, vector<1x8x128xbf16>
    tpu.vector_store %arg18[%c0_450, %c165_451, %c128_452], %208 {strides = array<i32>} : memref<1x225x256xbf16, #tpu.memory_space<vmem>>, vector<1x8x128xbf16>,
    %c0_453 = arith.constant 0 : index
    %c12_454 = arith.constant 12 : index
    %c0_455 = arith.constant 0 : index
    %c64_456 = arith.constant 64 : index
    %210 = vector.load %arg1[%c0_453, %c12_454, %c0_455, %c64_456] : memref<1x16x8x128xbf16, #tpu.memory_space<vmem>>, vector<1x1x7x64xbf16>
    %211 = vector.shape_cast %210 : vector<1x1x7x64xbf16> to vector<1x7x64xbf16>
    %c0_457 = arith.constant 0 : index
    %c173_458 = arith.constant 173 : index
    %c128_459 = arith.constant 128 : index
    %212 = vector.load %arg18[%c0_457, %c173_458, %c128_459] : memref<1x225x256xbf16, #tpu.memory_space<vmem>>, vector<1x7x64xbf16>
    tpu.vector_store %arg18[%c0_457, %c173_458, %c128_459], %211 {strides = array<i32>} : memref<1x225x256xbf16, #tpu.memory_space<vmem>>, vector<1x7x64xbf16>,
    %c0_460 = arith.constant 0 : index
    %c12_461 = arith.constant 12 : index
    %c1_462 = arith.constant 1 : index
    %c0_463 = arith.constant 0 : index
    %213 = vector.load %arg1[%c0_460, %c12_461, %c1_462, %c0_463] : memref<1x16x8x128xbf16, #tpu.memory_space<vmem>>, vector<1x1x7x64xbf16>
    %214 = vector.shape_cast %213 : vector<1x1x7x64xbf16> to vector<1x7x64xbf16>
    %c0_464 = arith.constant 0 : index
    %c173_465 = arith.constant 173 : index
    %c192_466 = arith.constant 192 : index
    %215 = vector.load %arg18[%c0_464, %c173_465, %c192_466] : memref<1x225x256xbf16, #tpu.memory_space<vmem>>, vector<1x7x64xbf16>
    tpu.vector_store %arg18[%c0_464, %c173_465, %c192_466], %214 {strides = array<i32>} : memref<1x225x256xbf16, #tpu.memory_space<vmem>>, vector<1x7x64xbf16>,
    %c0_467 = arith.constant 0 : index
    %c12_468 = arith.constant 12 : index
    %c0_469 = arith.constant 0 : index
    %c0_470 = arith.constant 0 : index
    %216 = vector.load %arg1[%c0_467, %c12_468, %c0_469, %c0_470] : memref<1x16x8x128xbf16, #tpu.memory_space<vmem>>, vector<1x1x8x128xbf16>
    %217 = vector.shape_cast %216 : vector<1x1x8x128xbf16> to vector<1x8x128xbf16>
    %c0_471 = arith.constant 0 : index
    %c180 = arith.constant 180 : index
    %c0_472 = arith.constant 0 : index
    %218 = vector.load %arg18[%c0_471, %c180, %c0_472] : memref<1x225x256xbf16, #tpu.memory_space<vmem>>, vector<1x8x128xbf16>
    tpu.vector_store %arg18[%c0_471, %c180, %c0_472], %217 {strides = array<i32>} : memref<1x225x256xbf16, #tpu.memory_space<vmem>>, vector<1x8x128xbf16>,
    %c0_473 = arith.constant 0 : index
    %c12_474 = arith.constant 12 : index
    %c0_475 = arith.constant 0 : index
    %c64_476 = arith.constant 64 : index
    %219 = vector.load %arg1[%c0_473, %c12_474, %c0_475, %c64_476] : memref<1x16x8x128xbf16, #tpu.memory_space<vmem>>, vector<1x1x7x64xbf16>
    %220 = vector.shape_cast %219 : vector<1x1x7x64xbf16> to vector<1x7x64xbf16>
    %c0_477 = arith.constant 0 : index
    %c188 = arith.constant 188 : index
    %c0_478 = arith.constant 0 : index
    %221 = vector.load %arg18[%c0_477, %c188, %c0_478] : memref<1x225x256xbf16, #tpu.memory_space<vmem>>, vector<1x7x64xbf16>
    tpu.vector_store %arg18[%c0_477, %c188, %c0_478], %220 {strides = array<i32>} : memref<1x225x256xbf16, #tpu.memory_space<vmem>>, vector<1x7x64xbf16>,
    %c0_479 = arith.constant 0 : index
    %c12_480 = arith.constant 12 : index
    %c1_481 = arith.constant 1 : index
    %c0_482 = arith.constant 0 : index
    %222 = vector.load %arg1[%c0_479, %c12_480, %c1_481, %c0_482] : memref<1x16x8x128xbf16, #tpu.memory_space<vmem>>, vector<1x1x7x64xbf16>
    %223 = vector.shape_cast %222 : vector<1x1x7x64xbf16> to vector<1x7x64xbf16>
    %c0_483 = arith.constant 0 : index
    %c188_484 = arith.constant 188 : index
    %c64_485 = arith.constant 64 : index
    %224 = vector.load %arg18[%c0_483, %c188_484, %c64_485] : memref<1x225x256xbf16, #tpu.memory_space<vmem>>, vector<1x7x64xbf16>
    tpu.vector_store %arg18[%c0_483, %c188_484, %c64_485], %223 {strides = array<i32>} : memref<1x225x256xbf16, #tpu.memory_space<vmem>>, vector<1x7x64xbf16>,
    %c0_486 = arith.constant 0 : index
    %c13 = arith.constant 13 : index
    %c0_487 = arith.constant 0 : index
    %c0_488 = arith.constant 0 : index
    %225 = vector.load %arg1[%c0_486, %c13, %c0_487, %c0_488] : memref<1x16x8x128xbf16, #tpu.memory_space<vmem>>, vector<1x1x8x128xbf16>
    %226 = vector.shape_cast %225 : vector<1x1x8x128xbf16> to vector<1x8x128xbf16>
    %c0_489 = arith.constant 0 : index
    %c180_490 = arith.constant 180 : index
    %c128_491 = arith.constant 128 : index
    %227 = vector.load %arg18[%c0_489, %c180_490, %c128_491] : memref<1x225x256xbf16, #tpu.memory_space<vmem>>, vector<1x8x128xbf16>
    tpu.vector_store %arg18[%c0_489, %c180_490, %c128_491], %226 {strides = array<i32>} : memref<1x225x256xbf16, #tpu.memory_space<vmem>>, vector<1x8x128xbf16>,
    %c0_492 = arith.constant 0 : index
    %c13_493 = arith.constant 13 : index
    %c0_494 = arith.constant 0 : index
    %c64_495 = arith.constant 64 : index
    %228 = vector.load %arg1[%c0_492, %c13_493, %c0_494, %c64_495] : memref<1x16x8x128xbf16, #tpu.memory_space<vmem>>, vector<1x1x7x64xbf16>
    %229 = vector.shape_cast %228 : vector<1x1x7x64xbf16> to vector<1x7x64xbf16>
    %c0_496 = arith.constant 0 : index
    %c188_497 = arith.constant 188 : index
    %c128_498 = arith.constant 128 : index
    %230 = vector.load %arg18[%c0_496, %c188_497, %c128_498] : memref<1x225x256xbf16, #tpu.memory_space<vmem>>, vector<1x7x64xbf16>
    tpu.vector_store %arg18[%c0_496, %c188_497, %c128_498], %229 {strides = array<i32>} : memref<1x225x256xbf16, #tpu.memory_space<vmem>>, vector<1x7x64xbf16>,
    %c0_499 = arith.constant 0 : index
    %c13_500 = arith.constant 13 : index
    %c1_501 = arith.constant 1 : index
    %c0_502 = arith.constant 0 : index
    %231 = vector.load %arg1[%c0_499, %c13_500, %c1_501, %c0_502] : memref<1x16x8x128xbf16, #tpu.memory_space<vmem>>, vector<1x1x7x64xbf16>
    %232 = vector.shape_cast %231 : vector<1x1x7x64xbf16> to vector<1x7x64xbf16>
    %c0_503 = arith.constant 0 : index
    %c188_504 = arith.constant 188 : index
    %c192_505 = arith.constant 192 : index
    %233 = vector.load %arg18[%c0_503, %c188_504, %c192_505] : memref<1x225x256xbf16, #tpu.memory_space<vmem>>, vector<1x7x64xbf16>
    tpu.vector_store %arg18[%c0_503, %c188_504, %c192_505], %232 {strides = array<i32>} : memref<1x225x256xbf16, #tpu.memory_space<vmem>>, vector<1x7x64xbf16>,
    %c0_506 = arith.constant 0 : index
    %c13_507 = arith.constant 13 : index
    %c0_508 = arith.constant 0 : index
    %c0_509 = arith.constant 0 : index
    %234 = vector.load %arg1[%c0_506, %c13_507, %c0_508, %c0_509] : memref<1x16x8x128xbf16, #tpu.memory_space<vmem>>, vector<1x1x8x128xbf16>
    %235 = vector.shape_cast %234 : vector<1x1x8x128xbf16> to vector<1x8x128xbf16>
    %c0_510 = arith.constant 0 : index
    %c195 = arith.constant 195 : index
    %c0_511 = arith.constant 0 : index
    %236 = vector.load %arg18[%c0_510, %c195, %c0_511] : memref<1x225x256xbf16, #tpu.memory_space<vmem>>, vector<1x8x128xbf16>
    tpu.vector_store %arg18[%c0_510, %c195, %c0_511], %235 {strides = array<i32>} : memref<1x225x256xbf16, #tpu.memory_space<vmem>>, vector<1x8x128xbf16>,
    %c0_512 = arith.constant 0 : index
    %c13_513 = arith.constant 13 : index
    %c0_514 = arith.constant 0 : index
    %c64_515 = arith.constant 64 : index
    %237 = vector.load %arg1[%c0_512, %c13_513, %c0_514, %c64_515] : memref<1x16x8x128xbf16, #tpu.memory_space<vmem>>, vector<1x1x7x64xbf16>
    %238 = vector.shape_cast %237 : vector<1x1x7x64xbf16> to vector<1x7x64xbf16>
    %c0_516 = arith.constant 0 : index
    %c203 = arith.constant 203 : index
    %c0_517 = arith.constant 0 : index
    %239 = vector.load %arg18[%c0_516, %c203, %c0_517] : memref<1x225x256xbf16, #tpu.memory_space<vmem>>, vector<1x7x64xbf16>
    tpu.vector_store %arg18[%c0_516, %c203, %c0_517], %238 {strides = array<i32>} : memref<1x225x256xbf16, #tpu.memory_space<vmem>>, vector<1x7x64xbf16>,
    %c0_518 = arith.constant 0 : index
    %c13_519 = arith.constant 13 : index
    %c1_520 = arith.constant 1 : index
    %c0_521 = arith.constant 0 : index
    %240 = vector.load %arg1[%c0_518, %c13_519, %c1_520, %c0_521] : memref<1x16x8x128xbf16, #tpu.memory_space<vmem>>, vector<1x1x7x64xbf16>
    %241 = vector.shape_cast %240 : vector<1x1x7x64xbf16> to vector<1x7x64xbf16>
    %c0_522 = arith.constant 0 : index
    %c203_523 = arith.constant 203 : index
    %c64_524 = arith.constant 64 : index
    %242 = vector.load %arg18[%c0_522, %c203_523, %c64_524] : memref<1x225x256xbf16, #tpu.memory_space<vmem>>, vector<1x7x64xbf16>
    tpu.vector_store %arg18[%c0_522, %c203_523, %c64_524], %241 {strides = array<i32>} : memref<1x225x256xbf16, #tpu.memory_space<vmem>>, vector<1x7x64xbf16>,
    %c0_525 = arith.constant 0 : index
    %c14 = arith.constant 14 : index
    %c0_526 = arith.constant 0 : index
    %c0_527 = arith.constant 0 : index
    %243 = vector.load %arg1[%c0_525, %c14, %c0_526, %c0_527] : memref<1x16x8x128xbf16, #tpu.memory_space<vmem>>, vector<1x1x8x128xbf16>
    %244 = vector.shape_cast %243 : vector<1x1x8x128xbf16> to vector<1x8x128xbf16>
    %c0_528 = arith.constant 0 : index
    %c195_529 = arith.constant 195 : index
    %c128_530 = arith.constant 128 : index
    %245 = vector.load %arg18[%c0_528, %c195_529, %c128_530] : memref<1x225x256xbf16, #tpu.memory_space<vmem>>, vector<1x8x128xbf16>
    tpu.vector_store %arg18[%c0_528, %c195_529, %c128_530], %244 {strides = array<i32>} : memref<1x225x256xbf16, #tpu.memory_space<vmem>>, vector<1x8x128xbf16>,
    %c0_531 = arith.constant 0 : index
    %c14_532 = arith.constant 14 : index
    %c0_533 = arith.constant 0 : index
    %c64_534 = arith.constant 64 : index
    %246 = vector.load %arg1[%c0_531, %c14_532, %c0_533, %c64_534] : memref<1x16x8x128xbf16, #tpu.memory_space<vmem>>, vector<1x1x7x64xbf16>
    %247 = vector.shape_cast %246 : vector<1x1x7x64xbf16> to vector<1x7x64xbf16>
    %c0_535 = arith.constant 0 : index
    %c203_536 = arith.constant 203 : index
    %c128_537 = arith.constant 128 : index
    %248 = vector.load %arg18[%c0_535, %c203_536, %c128_537] : memref<1x225x256xbf16, #tpu.memory_space<vmem>>, vector<1x7x64xbf16>
    tpu.vector_store %arg18[%c0_535, %c203_536, %c128_537], %247 {strides = array<i32>} : memref<1x225x256xbf16, #tpu.memory_space<vmem>>, vector<1x7x64xbf16>,
    %c0_538 = arith.constant 0 : index
    %c14_539 = arith.constant 14 : index
    %c1_540 = arith.constant 1 : index
    %c0_541 = arith.constant 0 : index
    %249 = vector.load %arg1[%c0_538, %c14_539, %c1_540, %c0_541] : memref<1x16x8x128xbf16, #tpu.memory_space<vmem>>, vector<1x1x7x64xbf16>
    %250 = vector.shape_cast %249 : vector<1x1x7x64xbf16> to vector<1x7x64xbf16>
    %c0_542 = arith.constant 0 : index
    %c203_543 = arith.constant 203 : index
    %c192_544 = arith.constant 192 : index
    %251 = vector.load %arg18[%c0_542, %c203_543, %c192_544] : memref<1x225x256xbf16, #tpu.memory_space<vmem>>, vector<1x7x64xbf16>
    tpu.vector_store %arg18[%c0_542, %c203_543, %c192_544], %250 {strides = array<i32>} : memref<1x225x256xbf16, #tpu.memory_space<vmem>>, vector<1x7x64xbf16>,
    %c0_545 = arith.constant 0 : index
    %c14_546 = arith.constant 14 : index
    %c0_547 = arith.constant 0 : index
    %c0_548 = arith.constant 0 : index
    %252 = vector.load %arg1[%c0_545, %c14_546, %c0_547, %c0_548] : memref<1x16x8x128xbf16, #tpu.memory_space<vmem>>, vector<1x1x8x128xbf16>
    %253 = vector.shape_cast %252 : vector<1x1x8x128xbf16> to vector<1x8x128xbf16>
    %c0_549 = arith.constant 0 : index
    %c210 = arith.constant 210 : index
    %c0_550 = arith.constant 0 : index
    %254 = vector.load %arg18[%c0_549, %c210, %c0_550] : memref<1x225x256xbf16, #tpu.memory_space<vmem>>, vector<1x8x128xbf16>
    tpu.vector_store %arg18[%c0_549, %c210, %c0_550], %253 {strides = array<i32>} : memref<1x225x256xbf16, #tpu.memory_space<vmem>>, vector<1x8x128xbf16>,
    %c0_551 = arith.constant 0 : index
    %c14_552 = arith.constant 14 : index
    %c0_553 = arith.constant 0 : index
    %c64_554 = arith.constant 64 : index
    %255 = vector.load %arg1[%c0_551, %c14_552, %c0_553, %c64_554] : memref<1x16x8x128xbf16, #tpu.memory_space<vmem>>, vector<1x1x7x64xbf16>
    %256 = vector.shape_cast %255 : vector<1x1x7x64xbf16> to vector<1x7x64xbf16>
    %c0_555 = arith.constant 0 : index
    %c218 = arith.constant 218 : index
    %c0_556 = arith.constant 0 : index
    %257 = vector.load %arg18[%c0_555, %c218, %c0_556] : memref<1x225x256xbf16, #tpu.memory_space<vmem>>, vector<1x7x64xbf16>
    tpu.vector_store %arg18[%c0_555, %c218, %c0_556], %256 {strides = array<i32>} : memref<1x225x256xbf16, #tpu.memory_space<vmem>>, vector<1x7x64xbf16>,
    %c0_557 = arith.constant 0 : index
    %c14_558 = arith.constant 14 : index
    %c1_559 = arith.constant 1 : index
    %c0_560 = arith.constant 0 : index
    %258 = vector.load %arg1[%c0_557, %c14_558, %c1_559, %c0_560] : memref<1x16x8x128xbf16, #tpu.memory_space<vmem>>, vector<1x1x7x64xbf16>
    %259 = vector.shape_cast %258 : vector<1x1x7x64xbf16> to vector<1x7x64xbf16>
    %c0_561 = arith.constant 0 : index
    %c218_562 = arith.constant 218 : index
    %c64_563 = arith.constant 64 : index
    %260 = vector.load %arg18[%c0_561, %c218_562, %c64_563] : memref<1x225x256xbf16, #tpu.memory_space<vmem>>, vector<1x7x64xbf16>
    tpu.vector_store %arg18[%c0_561, %c218_562, %c64_563], %259 {strides = array<i32>} : memref<1x225x256xbf16, #tpu.memory_space<vmem>>, vector<1x7x64xbf16>,
    %c0_564 = arith.constant 0 : index
    %c15_565 = arith.constant 15 : index
    %c0_566 = arith.constant 0 : index
    %c0_567 = arith.constant 0 : index
    %261 = vector.load %arg1[%c0_564, %c15_565, %c0_566, %c0_567] : memref<1x16x8x128xbf16, #tpu.memory_space<vmem>>, vector<1x1x8x128xbf16>
    %262 = vector.shape_cast %261 : vector<1x1x8x128xbf16> to vector<1x8x128xbf16>
    %c0_568 = arith.constant 0 : index
    %c210_569 = arith.constant 210 : index
    %c128_570 = arith.constant 128 : index
    %263 = vector.load %arg18[%c0_568, %c210_569, %c128_570] : memref<1x225x256xbf16, #tpu.memory_space<vmem>>, vector<1x8x128xbf16>
    tpu.vector_store %arg18[%c0_568, %c210_569, %c128_570], %262 {strides = array<i32>} : memref<1x225x256xbf16, #tpu.memory_space<vmem>>, vector<1x8x128xbf16>,
    %c0_571 = arith.constant 0 : index
    %c15_572 = arith.constant 15 : index
    %c0_573 = arith.constant 0 : index
    %c64_574 = arith.constant 64 : index
    %264 = vector.load %arg1[%c0_571, %c15_572, %c0_573, %c64_574] : memref<1x16x8x128xbf16, #tpu.memory_space<vmem>>, vector<1x1x7x64xbf16>
    %265 = vector.shape_cast %264 : vector<1x1x7x64xbf16> to vector<1x7x64xbf16>
    %c0_575 = arith.constant 0 : index
    %c218_576 = arith.constant 218 : index
    %c128_577 = arith.constant 128 : index
    %266 = vector.load %arg18[%c0_575, %c218_576, %c128_577] : memref<1x225x256xbf16, #tpu.memory_space<vmem>>, vector<1x7x64xbf16>
    tpu.vector_store %arg18[%c0_575, %c218_576, %c128_577], %265 {strides = array<i32>} : memref<1x225x256xbf16, #tpu.memory_space<vmem>>, vector<1x7x64xbf16>,
    %c0_578 = arith.constant 0 : index
    %c15_579 = arith.constant 15 : index
    %c1_580 = arith.constant 1 : index
    %c0_581 = arith.constant 0 : index
    %267 = vector.load %arg1[%c0_578, %c15_579, %c1_580, %c0_581] : memref<1x16x8x128xbf16, #tpu.memory_space<vmem>>, vector<1x1x7x64xbf16>
    %268 = vector.shape_cast %267 : vector<1x1x7x64xbf16> to vector<1x7x64xbf16>
    %c0_582 = arith.constant 0 : index
    %c218_583 = arith.constant 218 : index
    %c192_584 = arith.constant 192 : index
    %269 = vector.load %arg18[%c0_582, %c218_583, %c192_584] : memref<1x225x256xbf16, #tpu.memory_space<vmem>>, vector<1x7x64xbf16>
    tpu.vector_store %arg18[%c0_582, %c218_583, %c192_584], %268 {strides = array<i32>} : memref<1x225x256xbf16, #tpu.memory_space<vmem>>, vector<1x7x64xbf16>,
    %c0_585 = arith.constant 0 : index
    %c0_586 = arith.constant 0 : index
    %270 = vector.load %arg2[%c0_585, %c0_586] : memref<256x32xbf16, #tpu.memory_space<vmem>>, vector<256x32xbf16>
    %c0_587 = arith.constant 0 : index
    %c0_588 = arith.constant 0 : index
    %271 = vector.load %arg3[%c0_587, %c0_588] : memref<1x32xf32, #tpu.memory_space<vmem>>, vector<1x32xf32>
    %c0_589 = arith.constant 0 : index
    %c0_590 = arith.constant 0 : index
    %c0_591 = arith.constant 0 : index
    %272 = vector.load %arg18[%c0_589, %c0_590, %c0_591] : memref<1x225x256xbf16, #tpu.memory_space<vmem>>, vector<1x225x256xbf16>
    %273 = vector.shape_cast %272 : vector<1x225x256xbf16> to vector<225x256xbf16>
    %cst = arith.constant dense<0.000000e+00> : vector<225x32xf32>
    %274 = tpu.matmul %273, %270, %cst {dimension_numbers = #tpu.dot_dimension_numbers<[1], [0], [0], [1], [0, 0, 1, 1], [], []>} : vector<225x256xbf16>, vector<256x32xbf16>, vector<225x32xf32> -> vector<225x32xf32>
    %275 = vector.broadcast %271 : vector<1x32xf32> to vector<225x32xf32>
    %276 = arith.addf %274, %275 : vector<225x32xf32>
    %cst_592 = arith.constant 0.000000e+00 : f32
    %277 = vector.broadcast %cst_592 : f32 to vector<225x32xf32>
    %278 = arith.maximumf %276, %277 : vector<225x32xf32>
    %279 = arith.truncf %278 : vector<225x32xf32> to vector<225x32xbf16>
    %c0_593 = arith.constant 0 : index
    %c0_594 = arith.constant 0 : index
    %c0_595 = arith.constant 0 : index
    %280 = vector.load %arg19[%c0_593, %c0_594, %c0_595] : memref<1x225x32xbf16, #tpu.memory_space<vmem>>, vector<1x225x32xbf16>
    %281 = vector.shape_cast %280 : vector<1x225x32xbf16> to vector<225x32xbf16>
    %282 = vector.shape_cast %279 : vector<225x32xbf16> to vector<1x225x32xbf16>
    tpu.vector_store %arg19[%c0_593, %c0_594, %c0_595], %282 {strides = array<i32>} : memref<1x225x32xbf16, #tpu.memory_space<vmem>>, vector<1x225x32xbf16>,
    %c0_596 = arith.constant 0 : index
    %c0_597 = arith.constant 0 : index
    %c0_598 = arith.constant 0 : index
    %283 = vector.load %arg19[%c0_596, %c0_597, %c0_598] : memref<1x225x32xbf16, #tpu.memory_space<vmem>>, vector<1x6x32xbf16>
    %c0_599 = arith.constant 0 : index
    %c0_600 = arith.constant 0 : index
    %c0_601 = arith.constant 0 : index
    %284 = vector.load %arg20[%c0_599, %c0_600, %c0_601] : memref<1x36x512xbf16, #tpu.memory_space<vmem>>, vector<1x6x32xbf16>
    tpu.vector_store %arg20[%c0_599, %c0_600, %c0_601], %283 {strides = array<i32>} : memref<1x36x512xbf16, #tpu.memory_space<vmem>>, vector<1x6x32xbf16>,
    %c0_602 = arith.constant 0 : index
    %c8_603 = arith.constant 8 : index
    %c0_604 = arith.constant 0 : index
    %285 = vector.load %arg19[%c0_602, %c8_603, %c0_604] : memref<1x225x32xbf16, #tpu.memory_space<vmem>>, vector<1x6x32xbf16>
    %c0_605 = arith.constant 0 : index
    %c0_606 = arith.constant 0 : index
    %c32 = arith.constant 32 : index
    %286 = vector.load %arg20[%c0_605, %c0_606, %c32] : memref<1x36x512xbf16, #tpu.memory_space<vmem>>, vector<1x6x32xbf16>
    tpu.vector_store %arg20[%c0_605, %c0_606, %c32], %285 {strides = array<i32>} : memref<1x36x512xbf16, #tpu.memory_space<vmem>>, vector<1x6x32xbf16>,
    %c0_607 = arith.constant 0 : index
    %c1_608 = arith.constant 1 : index
    %c0_609 = arith.constant 0 : index
    %287 = vector.load %arg19[%c0_607, %c1_608, %c0_609] : memref<1x225x32xbf16, #tpu.memory_space<vmem>>, vector<1x6x32xbf16>
    %c0_610 = arith.constant 0 : index
    %c0_611 = arith.constant 0 : index
    %c64_612 = arith.constant 64 : index
    %288 = vector.load %arg20[%c0_610, %c0_611, %c64_612] : memref<1x36x512xbf16, #tpu.memory_space<vmem>>, vector<1x6x32xbf16>
    tpu.vector_store %arg20[%c0_610, %c0_611, %c64_612], %287 {strides = array<i32>} : memref<1x36x512xbf16, #tpu.memory_space<vmem>>, vector<1x6x32xbf16>,
    %c0_613 = arith.constant 0 : index
    %c9_614 = arith.constant 9 : index
    %c0_615 = arith.constant 0 : index
    %289 = vector.load %arg19[%c0_613, %c9_614, %c0_615] : memref<1x225x32xbf16, #tpu.memory_space<vmem>>, vector<1x6x32xbf16>
    %c0_616 = arith.constant 0 : index
    %c0_617 = arith.constant 0 : index
    %c96 = arith.constant 96 : index
    %290 = vector.load %arg20[%c0_616, %c0_617, %c96] : memref<1x36x512xbf16, #tpu.memory_space<vmem>>, vector<1x6x32xbf16>
    tpu.vector_store %arg20[%c0_616, %c0_617, %c96], %289 {strides = array<i32>} : memref<1x36x512xbf16, #tpu.memory_space<vmem>>, vector<1x6x32xbf16>,
    %c0_618 = arith.constant 0 : index
    %c15_619 = arith.constant 15 : index
    %c0_620 = arith.constant 0 : index
    %291 = vector.load %arg19[%c0_618, %c15_619, %c0_620] : memref<1x225x32xbf16, #tpu.memory_space<vmem>>, vector<1x6x32xbf16>
    %c0_621 = arith.constant 0 : index
    %c0_622 = arith.constant 0 : index
    %c128_623 = arith.constant 128 : index
    %292 = vector.load %arg20[%c0_621, %c0_622, %c128_623] : memref<1x36x512xbf16, #tpu.memory_space<vmem>>, vector<1x6x32xbf16>
    tpu.vector_store %arg20[%c0_621, %c0_622, %c128_623], %291 {strides = array<i32>} : memref<1x36x512xbf16, #tpu.memory_space<vmem>>, vector<1x6x32xbf16>,
    %c0_624 = arith.constant 0 : index
    %c23_625 = arith.constant 23 : index
    %c0_626 = arith.constant 0 : index
    %293 = vector.load %arg19[%c0_624, %c23_625, %c0_626] : memref<1x225x32xbf16, #tpu.memory_space<vmem>>, vector<1x6x32xbf16>
    %c0_627 = arith.constant 0 : index
    %c0_628 = arith.constant 0 : index
    %c160 = arith.constant 160 : index
    %294 = vector.load %arg20[%c0_627, %c0_628, %c160] : memref<1x36x512xbf16, #tpu.memory_space<vmem>>, vector<1x6x32xbf16>
    tpu.vector_store %arg20[%c0_627, %c0_628, %c160], %293 {strides = array<i32>} : memref<1x36x512xbf16, #tpu.memory_space<vmem>>, vector<1x6x32xbf16>,
    %c0_629 = arith.constant 0 : index
    %c16 = arith.constant 16 : index
    %c0_630 = arith.constant 0 : index
    %295 = vector.load %arg19[%c0_629, %c16, %c0_630] : memref<1x225x32xbf16, #tpu.memory_space<vmem>>, vector<1x6x32xbf16>
    %c0_631 = arith.constant 0 : index
    %c0_632 = arith.constant 0 : index
    %c192_633 = arith.constant 192 : index
    %296 = vector.load %arg20[%c0_631, %c0_632, %c192_633] : memref<1x36x512xbf16, #tpu.memory_space<vmem>>, vector<1x6x32xbf16>
    tpu.vector_store %arg20[%c0_631, %c0_632, %c192_633], %295 {strides = array<i32>} : memref<1x36x512xbf16, #tpu.memory_space<vmem>>, vector<1x6x32xbf16>,
    %c0_634 = arith.constant 0 : index
    %c24 = arith.constant 24 : index
    %c0_635 = arith.constant 0 : index
    %297 = vector.load %arg19[%c0_634, %c24, %c0_635] : memref<1x225x32xbf16, #tpu.memory_space<vmem>>, vector<1x6x32xbf16>
    %c0_636 = arith.constant 0 : index
    %c0_637 = arith.constant 0 : index
    %c224 = arith.constant 224 : index
    %298 = vector.load %arg20[%c0_636, %c0_637, %c224] : memref<1x36x512xbf16, #tpu.memory_space<vmem>>, vector<1x6x32xbf16>
    tpu.vector_store %arg20[%c0_636, %c0_637, %c224], %297 {strides = array<i32>} : memref<1x36x512xbf16, #tpu.memory_space<vmem>>, vector<1x6x32xbf16>,
    %c0_638 = arith.constant 0 : index
    %c30_639 = arith.constant 30 : index
    %c0_640 = arith.constant 0 : index
    %299 = vector.load %arg19[%c0_638, %c30_639, %c0_640] : memref<1x225x32xbf16, #tpu.memory_space<vmem>>, vector<1x6x32xbf16>
    %c0_641 = arith.constant 0 : index
    %c0_642 = arith.constant 0 : index
    %c256 = arith.constant 256 : index
    %300 = vector.load %arg20[%c0_641, %c0_642, %c256] : memref<1x36x512xbf16, #tpu.memory_space<vmem>>, vector<1x6x32xbf16>
    tpu.vector_store %arg20[%c0_641, %c0_642, %c256], %299 {strides = array<i32>} : memref<1x36x512xbf16, #tpu.memory_space<vmem>>, vector<1x6x32xbf16>,
    %c0_643 = arith.constant 0 : index
    %c38_644 = arith.constant 38 : index
    %c0_645 = arith.constant 0 : index
    %301 = vector.load %arg19[%c0_643, %c38_644, %c0_645] : memref<1x225x32xbf16, #tpu.memory_space<vmem>>, vector<1x6x32xbf16>
    %c0_646 = arith.constant 0 : index
    %c0_647 = arith.constant 0 : index
    %c288 = arith.constant 288 : index
    %302 = vector.load %arg20[%c0_646, %c0_647, %c288] : memref<1x36x512xbf16, #tpu.memory_space<vmem>>, vector<1x6x32xbf16>
    tpu.vector_store %arg20[%c0_646, %c0_647, %c288], %301 {strides = array<i32>} : memref<1x36x512xbf16, #tpu.memory_space<vmem>>, vector<1x6x32xbf16>,
    %c0_648 = arith.constant 0 : index
    %c31 = arith.constant 31 : index
    %c0_649 = arith.constant 0 : index
    %303 = vector.load %arg19[%c0_648, %c31, %c0_649] : memref<1x225x32xbf16, #tpu.memory_space<vmem>>, vector<1x6x32xbf16>
    %c0_650 = arith.constant 0 : index
    %c0_651 = arith.constant 0 : index
    %c320 = arith.constant 320 : index
    %304 = vector.load %arg20[%c0_650, %c0_651, %c320] : memref<1x36x512xbf16, #tpu.memory_space<vmem>>, vector<1x6x32xbf16>
    tpu.vector_store %arg20[%c0_650, %c0_651, %c320], %303 {strides = array<i32>} : memref<1x36x512xbf16, #tpu.memory_space<vmem>>, vector<1x6x32xbf16>,
    %c0_652 = arith.constant 0 : index
    %c39 = arith.constant 39 : index
    %c0_653 = arith.constant 0 : index
    %305 = vector.load %arg19[%c0_652, %c39, %c0_653] : memref<1x225x32xbf16, #tpu.memory_space<vmem>>, vector<1x6x32xbf16>
    %c0_654 = arith.constant 0 : index
    %c0_655 = arith.constant 0 : index
    %c352 = arith.constant 352 : index
    %306 = vector.load %arg20[%c0_654, %c0_655, %c352] : memref<1x36x512xbf16, #tpu.memory_space<vmem>>, vector<1x6x32xbf16>
    tpu.vector_store %arg20[%c0_654, %c0_655, %c352], %305 {strides = array<i32>} : memref<1x36x512xbf16, #tpu.memory_space<vmem>>, vector<1x6x32xbf16>,
    %c0_656 = arith.constant 0 : index
    %c45_657 = arith.constant 45 : index
    %c0_658 = arith.constant 0 : index
    %307 = vector.load %arg19[%c0_656, %c45_657, %c0_658] : memref<1x225x32xbf16, #tpu.memory_space<vmem>>, vector<1x6x32xbf16>
    %c0_659 = arith.constant 0 : index
    %c0_660 = arith.constant 0 : index
    %c384 = arith.constant 384 : index
    %308 = vector.load %arg20[%c0_659, %c0_660, %c384] : memref<1x36x512xbf16, #tpu.memory_space<vmem>>, vector<1x6x32xbf16>
    tpu.vector_store %arg20[%c0_659, %c0_660, %c384], %307 {strides = array<i32>} : memref<1x36x512xbf16, #tpu.memory_space<vmem>>, vector<1x6x32xbf16>,
    %c0_661 = arith.constant 0 : index
    %c53_662 = arith.constant 53 : index
    %c0_663 = arith.constant 0 : index
    %309 = vector.load %arg19[%c0_661, %c53_662, %c0_663] : memref<1x225x32xbf16, #tpu.memory_space<vmem>>, vector<1x6x32xbf16>
    %c0_664 = arith.constant 0 : index
    %c0_665 = arith.constant 0 : index
    %c416 = arith.constant 416 : index
    %310 = vector.load %arg20[%c0_664, %c0_665, %c416] : memref<1x36x512xbf16, #tpu.memory_space<vmem>>, vector<1x6x32xbf16>
    tpu.vector_store %arg20[%c0_664, %c0_665, %c416], %309 {strides = array<i32>} : memref<1x36x512xbf16, #tpu.memory_space<vmem>>, vector<1x6x32xbf16>,
    %c0_666 = arith.constant 0 : index
    %c46 = arith.constant 46 : index
    %c0_667 = arith.constant 0 : index
    %311 = vector.load %arg19[%c0_666, %c46, %c0_667] : memref<1x225x32xbf16, #tpu.memory_space<vmem>>, vector<1x6x32xbf16>
    %c0_668 = arith.constant 0 : index
    %c0_669 = arith.constant 0 : index
    %c448 = arith.constant 448 : index
    %312 = vector.load %arg20[%c0_668, %c0_669, %c448] : memref<1x36x512xbf16, #tpu.memory_space<vmem>>, vector<1x6x32xbf16>
    tpu.vector_store %arg20[%c0_668, %c0_669, %c448], %311 {strides = array<i32>} : memref<1x36x512xbf16, #tpu.memory_space<vmem>>, vector<1x6x32xbf16>,
    %c0_670 = arith.constant 0 : index
    %c54 = arith.constant 54 : index
    %c0_671 = arith.constant 0 : index
    %313 = vector.load %arg19[%c0_670, %c54, %c0_671] : memref<1x225x32xbf16, #tpu.memory_space<vmem>>, vector<1x6x32xbf16>
    %c0_672 = arith.constant 0 : index
    %c0_673 = arith.constant 0 : index
    %c480 = arith.constant 480 : index
    %314 = vector.load %arg20[%c0_672, %c0_673, %c480] : memref<1x36x512xbf16, #tpu.memory_space<vmem>>, vector<1x6x32xbf16>
    tpu.vector_store %arg20[%c0_672, %c0_673, %c480], %313 {strides = array<i32>} : memref<1x36x512xbf16, #tpu.memory_space<vmem>>, vector<1x6x32xbf16>,
    %c0_674 = arith.constant 0 : index
    %c30_675 = arith.constant 30 : index
    %c0_676 = arith.constant 0 : index
    %315 = vector.load %arg19[%c0_674, %c30_675, %c0_676] : memref<1x225x32xbf16, #tpu.memory_space<vmem>>, vector<1x6x32xbf16>
    %c0_677 = arith.constant 0 : index
    %c6_678 = arith.constant 6 : index
    %c0_679 = arith.constant 0 : index
    %316 = vector.load %arg20[%c0_677, %c6_678, %c0_679] : memref<1x36x512xbf16, #tpu.memory_space<vmem>>, vector<1x6x32xbf16>
    tpu.vector_store %arg20[%c0_677, %c6_678, %c0_679], %315 {strides = array<i32>} : memref<1x36x512xbf16, #tpu.memory_space<vmem>>, vector<1x6x32xbf16>,
    %c0_680 = arith.constant 0 : index
    %c38_681 = arith.constant 38 : index
    %c0_682 = arith.constant 0 : index
    %317 = vector.load %arg19[%c0_680, %c38_681, %c0_682] : memref<1x225x32xbf16, #tpu.memory_space<vmem>>, vector<1x6x32xbf16>
    %c0_683 = arith.constant 0 : index
    %c6_684 = arith.constant 6 : index
    %c32_685 = arith.constant 32 : index
    %318 = vector.load %arg20[%c0_683, %c6_684, %c32_685] : memref<1x36x512xbf16, #tpu.memory_space<vmem>>, vector<1x6x32xbf16>
    tpu.vector_store %arg20[%c0_683, %c6_684, %c32_685], %317 {strides = array<i32>} : memref<1x36x512xbf16, #tpu.memory_space<vmem>>, vector<1x6x32xbf16>,
    %c0_686 = arith.constant 0 : index
    %c31_687 = arith.constant 31 : index
    %c0_688 = arith.constant 0 : index
    %319 = vector.load %arg19[%c0_686, %c31_687, %c0_688] : memref<1x225x32xbf16, #tpu.memory_space<vmem>>, vector<1x6x32xbf16>
    %c0_689 = arith.constant 0 : index
    %c6_690 = arith.constant 6 : index
    %c64_691 = arith.constant 64 : index
    %320 = vector.load %arg20[%c0_689, %c6_690, %c64_691] : memref<1x36x512xbf16, #tpu.memory_space<vmem>>, vector<1x6x32xbf16>
    tpu.vector_store %arg20[%c0_689, %c6_690, %c64_691], %319 {strides = array<i32>} : memref<1x36x512xbf16, #tpu.memory_space<vmem>>, vector<1x6x32xbf16>,
    %c0_692 = arith.constant 0 : index
    %c39_693 = arith.constant 39 : index
    %c0_694 = arith.constant 0 : index
    %321 = vector.load %arg19[%c0_692, %c39_693, %c0_694] : memref<1x225x32xbf16, #tpu.memory_space<vmem>>, vector<1x6x32xbf16>
    %c0_695 = arith.constant 0 : index
    %c6_696 = arith.constant 6 : index
    %c96_697 = arith.constant 96 : index
    %322 = vector.load %arg20[%c0_695, %c6_696, %c96_697] : memref<1x36x512xbf16, #tpu.memory_space<vmem>>, vector<1x6x32xbf16>
    tpu.vector_store %arg20[%c0_695, %c6_696, %c96_697], %321 {strides = array<i32>} : memref<1x36x512xbf16, #tpu.memory_space<vmem>>, vector<1x6x32xbf16>,
    %c0_698 = arith.constant 0 : index
    %c45_699 = arith.constant 45 : index
    %c0_700 = arith.constant 0 : index
    %323 = vector.load %arg19[%c0_698, %c45_699, %c0_700] : memref<1x225x32xbf16, #tpu.memory_space<vmem>>, vector<1x6x32xbf16>
    %c0_701 = arith.constant 0 : index
    %c6_702 = arith.constant 6 : index
    %c128_703 = arith.constant 128 : index
    %324 = vector.load %arg20[%c0_701, %c6_702, %c128_703] : memref<1x36x512xbf16, #tpu.memory_space<vmem>>, vector<1x6x32xbf16>
    tpu.vector_store %arg20[%c0_701, %c6_702, %c128_703], %323 {strides = array<i32>} : memref<1x36x512xbf16, #tpu.memory_space<vmem>>, vector<1x6x32xbf16>,
    %c0_704 = arith.constant 0 : index
    %c53_705 = arith.constant 53 : index
    %c0_706 = arith.constant 0 : index
    %325 = vector.load %arg19[%c0_704, %c53_705, %c0_706] : memref<1x225x32xbf16, #tpu.memory_space<vmem>>, vector<1x6x32xbf16>
    %c0_707 = arith.constant 0 : index
    %c6_708 = arith.constant 6 : index
    %c160_709 = arith.constant 160 : index
    %326 = vector.load %arg20[%c0_707, %c6_708, %c160_709] : memref<1x36x512xbf16, #tpu.memory_space<vmem>>, vector<1x6x32xbf16>
    tpu.vector_store %arg20[%c0_707, %c6_708, %c160_709], %325 {strides = array<i32>} : memref<1x36x512xbf16, #tpu.memory_space<vmem>>, vector<1x6x32xbf16>,
    %c0_710 = arith.constant 0 : index
    %c46_711 = arith.constant 46 : index
    %c0_712 = arith.constant 0 : index
    %327 = vector.load %arg19[%c0_710, %c46_711, %c0_712] : memref<1x225x32xbf16, #tpu.memory_space<vmem>>, vector<1x6x32xbf16>
    %c0_713 = arith.constant 0 : index
    %c6_714 = arith.constant 6 : index
    %c192_715 = arith.constant 192 : index
    %328 = vector.load %arg20[%c0_713, %c6_714, %c192_715] : memref<1x36x512xbf16, #tpu.memory_space<vmem>>, vector<1x6x32xbf16>
    tpu.vector_store %arg20[%c0_713, %c6_714, %c192_715], %327 {strides = array<i32>} : memref<1x36x512xbf16, #tpu.memory_space<vmem>>, vector<1x6x32xbf16>,
    %c0_716 = arith.constant 0 : index
    %c54_717 = arith.constant 54 : index
    %c0_718 = arith.constant 0 : index
    %329 = vector.load %arg19[%c0_716, %c54_717, %c0_718] : memref<1x225x32xbf16, #tpu.memory_space<vmem>>, vector<1x6x32xbf16>
    %c0_719 = arith.constant 0 : index
    %c6_720 = arith.constant 6 : index
    %c224_721 = arith.constant 224 : index
    %330 = vector.load %arg20[%c0_719, %c6_720, %c224_721] : memref<1x36x512xbf16, #tpu.memory_space<vmem>>, vector<1x6x32xbf16>
    tpu.vector_store %arg20[%c0_719, %c6_720, %c224_721], %329 {strides = array<i32>} : memref<1x36x512xbf16, #tpu.memory_space<vmem>>, vector<1x6x32xbf16>,
    %c0_722 = arith.constant 0 : index
    %c60_723 = arith.constant 60 : index
    %c0_724 = arith.constant 0 : index
    %331 = vector.load %arg19[%c0_722, %c60_723, %c0_724] : memref<1x225x32xbf16, #tpu.memory_space<vmem>>, vector<1x6x32xbf16>
    %c0_725 = arith.constant 0 : index
    %c6_726 = arith.constant 6 : index
    %c256_727 = arith.constant 256 : index
    %332 = vector.load %arg20[%c0_725, %c6_726, %c256_727] : memref<1x36x512xbf16, #tpu.memory_space<vmem>>, vector<1x6x32xbf16>
    tpu.vector_store %arg20[%c0_725, %c6_726, %c256_727], %331 {strides = array<i32>} : memref<1x36x512xbf16, #tpu.memory_space<vmem>>, vector<1x6x32xbf16>,
    %c0_728 = arith.constant 0 : index
    %c68_729 = arith.constant 68 : index
    %c0_730 = arith.constant 0 : index
    %333 = vector.load %arg19[%c0_728, %c68_729, %c0_730] : memref<1x225x32xbf16, #tpu.memory_space<vmem>>, vector<1x6x32xbf16>
    %c0_731 = arith.constant 0 : index
    %c6_732 = arith.constant 6 : index
    %c288_733 = arith.constant 288 : index
    %334 = vector.load %arg20[%c0_731, %c6_732, %c288_733] : memref<1x36x512xbf16, #tpu.memory_space<vmem>>, vector<1x6x32xbf16>
    tpu.vector_store %arg20[%c0_731, %c6_732, %c288_733], %333 {strides = array<i32>} : memref<1x36x512xbf16, #tpu.memory_space<vmem>>, vector<1x6x32xbf16>,
    %c0_734 = arith.constant 0 : index
    %c61 = arith.constant 61 : index
    %c0_735 = arith.constant 0 : index
    %335 = vector.load %arg19[%c0_734, %c61, %c0_735] : memref<1x225x32xbf16, #tpu.memory_space<vmem>>, vector<1x6x32xbf16>
    %c0_736 = arith.constant 0 : index
    %c6_737 = arith.constant 6 : index
    %c320_738 = arith.constant 320 : index
    %336 = vector.load %arg20[%c0_736, %c6_737, %c320_738] : memref<1x36x512xbf16, #tpu.memory_space<vmem>>, vector<1x6x32xbf16>
    tpu.vector_store %arg20[%c0_736, %c6_737, %c320_738], %335 {strides = array<i32>} : memref<1x36x512xbf16, #tpu.memory_space<vmem>>, vector<1x6x32xbf16>,
    %c0_739 = arith.constant 0 : index
    %c69 = arith.constant 69 : index
    %c0_740 = arith.constant 0 : index
    %337 = vector.load %arg19[%c0_739, %c69, %c0_740] : memref<1x225x32xbf16, #tpu.memory_space<vmem>>, vector<1x6x32xbf16>
    %c0_741 = arith.constant 0 : index
    %c6_742 = arith.constant 6 : index
    %c352_743 = arith.constant 352 : index
    %338 = vector.load %arg20[%c0_741, %c6_742, %c352_743] : memref<1x36x512xbf16, #tpu.memory_space<vmem>>, vector<1x6x32xbf16>
    tpu.vector_store %arg20[%c0_741, %c6_742, %c352_743], %337 {strides = array<i32>} : memref<1x36x512xbf16, #tpu.memory_space<vmem>>, vector<1x6x32xbf16>,
    %c0_744 = arith.constant 0 : index
    %c75_745 = arith.constant 75 : index
    %c0_746 = arith.constant 0 : index
    %339 = vector.load %arg19[%c0_744, %c75_745, %c0_746] : memref<1x225x32xbf16, #tpu.memory_space<vmem>>, vector<1x6x32xbf16>
    %c0_747 = arith.constant 0 : index
    %c6_748 = arith.constant 6 : index
    %c384_749 = arith.constant 384 : index
    %340 = vector.load %arg20[%c0_747, %c6_748, %c384_749] : memref<1x36x512xbf16, #tpu.memory_space<vmem>>, vector<1x6x32xbf16>
    tpu.vector_store %arg20[%c0_747, %c6_748, %c384_749], %339 {strides = array<i32>} : memref<1x36x512xbf16, #tpu.memory_space<vmem>>, vector<1x6x32xbf16>,
    %c0_750 = arith.constant 0 : index
    %c83_751 = arith.constant 83 : index
    %c0_752 = arith.constant 0 : index
    %341 = vector.load %arg19[%c0_750, %c83_751, %c0_752] : memref<1x225x32xbf16, #tpu.memory_space<vmem>>, vector<1x6x32xbf16>
    %c0_753 = arith.constant 0 : index
    %c6_754 = arith.constant 6 : index
    %c416_755 = arith.constant 416 : index
    %342 = vector.load %arg20[%c0_753, %c6_754, %c416_755] : memref<1x36x512xbf16, #tpu.memory_space<vmem>>, vector<1x6x32xbf16>
    tpu.vector_store %arg20[%c0_753, %c6_754, %c416_755], %341 {strides = array<i32>} : memref<1x36x512xbf16, #tpu.memory_space<vmem>>, vector<1x6x32xbf16>,
    %c0_756 = arith.constant 0 : index
    %c76 = arith.constant 76 : index
    %c0_757 = arith.constant 0 : index
    %343 = vector.load %arg19[%c0_756, %c76, %c0_757] : memref<1x225x32xbf16, #tpu.memory_space<vmem>>, vector<1x6x32xbf16>
    %c0_758 = arith.constant 0 : index
    %c6_759 = arith.constant 6 : index
    %c448_760 = arith.constant 448 : index
    %344 = vector.load %arg20[%c0_758, %c6_759, %c448_760] : memref<1x36x512xbf16, #tpu.memory_space<vmem>>, vector<1x6x32xbf16>
    tpu.vector_store %arg20[%c0_758, %c6_759, %c448_760], %343 {strides = array<i32>} : memref<1x36x512xbf16, #tpu.memory_space<vmem>>, vector<1x6x32xbf16>,
    %c0_761 = arith.constant 0 : index
    %c84 = arith.constant 84 : index
    %c0_762 = arith.constant 0 : index
    %345 = vector.load %arg19[%c0_761, %c84, %c0_762] : memref<1x225x32xbf16, #tpu.memory_space<vmem>>, vector<1x6x32xbf16>
    %c0_763 = arith.constant 0 : index
    %c6_764 = arith.constant 6 : index
    %c480_765 = arith.constant 480 : index
    %346 = vector.load %arg20[%c0_763, %c6_764, %c480_765] : memref<1x36x512xbf16, #tpu.memory_space<vmem>>, vector<1x6x32xbf16>
    tpu.vector_store %arg20[%c0_763, %c6_764, %c480_765], %345 {strides = array<i32>} : memref<1x36x512xbf16, #tpu.memory_space<vmem>>, vector<1x6x32xbf16>,
    %c0_766 = arith.constant 0 : index
    %c60_767 = arith.constant 60 : index
    %c0_768 = arith.constant 0 : index
    %347 = vector.load %arg19[%c0_766, %c60_767, %c0_768] : memref<1x225x32xbf16, #tpu.memory_space<vmem>>, vector<1x6x32xbf16>
    %c0_769 = arith.constant 0 : index
    %c12_770 = arith.constant 12 : index
    %c0_771 = arith.constant 0 : index
    %348 = vector.load %arg20[%c0_769, %c12_770, %c0_771] : memref<1x36x512xbf16, #tpu.memory_space<vmem>>, vector<1x6x32xbf16>
    tpu.vector_store %arg20[%c0_769, %c12_770, %c0_771], %347 {strides = array<i32>} : memref<1x36x512xbf16, #tpu.memory_space<vmem>>, vector<1x6x32xbf16>,
    %c0_772 = arith.constant 0 : index
    %c68_773 = arith.constant 68 : index
    %c0_774 = arith.constant 0 : index
    %349 = vector.load %arg19[%c0_772, %c68_773, %c0_774] : memref<1x225x32xbf16, #tpu.memory_space<vmem>>, vector<1x6x32xbf16>
    %c0_775 = arith.constant 0 : index
    %c12_776 = arith.constant 12 : index
    %c32_777 = arith.constant 32 : index
    %350 = vector.load %arg20[%c0_775, %c12_776, %c32_777] : memref<1x36x512xbf16, #tpu.memory_space<vmem>>, vector<1x6x32xbf16>
    tpu.vector_store %arg20[%c0_775, %c12_776, %c32_777], %349 {strides = array<i32>} : memref<1x36x512xbf16, #tpu.memory_space<vmem>>, vector<1x6x32xbf16>,
    %c0_778 = arith.constant 0 : index
    %c61_779 = arith.constant 61 : index
    %c0_780 = arith.constant 0 : index
    %351 = vector.load %arg19[%c0_778, %c61_779, %c0_780] : memref<1x225x32xbf16, #tpu.memory_space<vmem>>, vector<1x6x32xbf16>
    %c0_781 = arith.constant 0 : index
    %c12_782 = arith.constant 12 : index
    %c64_783 = arith.constant 64 : index
    %352 = vector.load %arg20[%c0_781, %c12_782, %c64_783] : memref<1x36x512xbf16, #tpu.memory_space<vmem>>, vector<1x6x32xbf16>
    tpu.vector_store %arg20[%c0_781, %c12_782, %c64_783], %351 {strides = array<i32>} : memref<1x36x512xbf16, #tpu.memory_space<vmem>>, vector<1x6x32xbf16>,
    %c0_784 = arith.constant 0 : index
    %c69_785 = arith.constant 69 : index
    %c0_786 = arith.constant 0 : index
    %353 = vector.load %arg19[%c0_784, %c69_785, %c0_786] : memref<1x225x32xbf16, #tpu.memory_space<vmem>>, vector<1x6x32xbf16>
    %c0_787 = arith.constant 0 : index
    %c12_788 = arith.constant 12 : index
    %c96_789 = arith.constant 96 : index
    %354 = vector.load %arg20[%c0_787, %c12_788, %c96_789] : memref<1x36x512xbf16, #tpu.memory_space<vmem>>, vector<1x6x32xbf16>
    tpu.vector_store %arg20[%c0_787, %c12_788, %c96_789], %353 {strides = array<i32>} : memref<1x36x512xbf16, #tpu.memory_space<vmem>>, vector<1x6x32xbf16>,
    %c0_790 = arith.constant 0 : index
    %c75_791 = arith.constant 75 : index
    %c0_792 = arith.constant 0 : index
    %355 = vector.load %arg19[%c0_790, %c75_791, %c0_792] : memref<1x225x32xbf16, #tpu.memory_space<vmem>>, vector<1x6x32xbf16>
    %c0_793 = arith.constant 0 : index
    %c12_794 = arith.constant 12 : index
    %c128_795 = arith.constant 128 : index
    %356 = vector.load %arg20[%c0_793, %c12_794, %c128_795] : memref<1x36x512xbf16, #tpu.memory_space<vmem>>, vector<1x6x32xbf16>
    tpu.vector_store %arg20[%c0_793, %c12_794, %c128_795], %355 {strides = array<i32>} : memref<1x36x512xbf16, #tpu.memory_space<vmem>>, vector<1x6x32xbf16>,
    %c0_796 = arith.constant 0 : index
    %c83_797 = arith.constant 83 : index
    %c0_798 = arith.constant 0 : index
    %357 = vector.load %arg19[%c0_796, %c83_797, %c0_798] : memref<1x225x32xbf16, #tpu.memory_space<vmem>>, vector<1x6x32xbf16>
    %c0_799 = arith.constant 0 : index
    %c12_800 = arith.constant 12 : index
    %c160_801 = arith.constant 160 : index
    %358 = vector.load %arg20[%c0_799, %c12_800, %c160_801] : memref<1x36x512xbf16, #tpu.memory_space<vmem>>, vector<1x6x32xbf16>
    tpu.vector_store %arg20[%c0_799, %c12_800, %c160_801], %357 {strides = array<i32>} : memref<1x36x512xbf16, #tpu.memory_space<vmem>>, vector<1x6x32xbf16>,
    %c0_802 = arith.constant 0 : index
    %c76_803 = arith.constant 76 : index
    %c0_804 = arith.constant 0 : index
    %359 = vector.load %arg19[%c0_802, %c76_803, %c0_804] : memref<1x225x32xbf16, #tpu.memory_space<vmem>>, vector<1x6x32xbf16>
    %c0_805 = arith.constant 0 : index
    %c12_806 = arith.constant 12 : index
    %c192_807 = arith.constant 192 : index
    %360 = vector.load %arg20[%c0_805, %c12_806, %c192_807] : memref<1x36x512xbf16, #tpu.memory_space<vmem>>, vector<1x6x32xbf16>
    tpu.vector_store %arg20[%c0_805, %c12_806, %c192_807], %359 {strides = array<i32>} : memref<1x36x512xbf16, #tpu.memory_space<vmem>>, vector<1x6x32xbf16>,
    %c0_808 = arith.constant 0 : index
    %c84_809 = arith.constant 84 : index
    %c0_810 = arith.constant 0 : index
    %361 = vector.load %arg19[%c0_808, %c84_809, %c0_810] : memref<1x225x32xbf16, #tpu.memory_space<vmem>>, vector<1x6x32xbf16>
    %c0_811 = arith.constant 0 : index
    %c12_812 = arith.constant 12 : index
    %c224_813 = arith.constant 224 : index
    %362 = vector.load %arg20[%c0_811, %c12_812, %c224_813] : memref<1x36x512xbf16, #tpu.memory_space<vmem>>, vector<1x6x32xbf16>
    tpu.vector_store %arg20[%c0_811, %c12_812, %c224_813], %361 {strides = array<i32>} : memref<1x36x512xbf16, #tpu.memory_space<vmem>>, vector<1x6x32xbf16>,
    %c0_814 = arith.constant 0 : index
    %c90_815 = arith.constant 90 : index
    %c0_816 = arith.constant 0 : index
    %363 = vector.load %arg19[%c0_814, %c90_815, %c0_816] : memref<1x225x32xbf16, #tpu.memory_space<vmem>>, vector<1x6x32xbf16>
    %c0_817 = arith.constant 0 : index
    %c12_818 = arith.constant 12 : index
    %c256_819 = arith.constant 256 : index
    %364 = vector.load %arg20[%c0_817, %c12_818, %c256_819] : memref<1x36x512xbf16, #tpu.memory_space<vmem>>, vector<1x6x32xbf16>
    tpu.vector_store %arg20[%c0_817, %c12_818, %c256_819], %363 {strides = array<i32>} : memref<1x36x512xbf16, #tpu.memory_space<vmem>>, vector<1x6x32xbf16>,
    %c0_820 = arith.constant 0 : index
    %c98_821 = arith.constant 98 : index
    %c0_822 = arith.constant 0 : index
    %365 = vector.load %arg19[%c0_820, %c98_821, %c0_822] : memref<1x225x32xbf16, #tpu.memory_space<vmem>>, vector<1x6x32xbf16>
    %c0_823 = arith.constant 0 : index
    %c12_824 = arith.constant 12 : index
    %c288_825 = arith.constant 288 : index
    %366 = vector.load %arg20[%c0_823, %c12_824, %c288_825] : memref<1x36x512xbf16, #tpu.memory_space<vmem>>, vector<1x6x32xbf16>
    tpu.vector_store %arg20[%c0_823, %c12_824, %c288_825], %365 {strides = array<i32>} : memref<1x36x512xbf16, #tpu.memory_space<vmem>>, vector<1x6x32xbf16>,
    %c0_826 = arith.constant 0 : index
    %c91 = arith.constant 91 : index
    %c0_827 = arith.constant 0 : index
    %367 = vector.load %arg19[%c0_826, %c91, %c0_827] : memref<1x225x32xbf16, #tpu.memory_space<vmem>>, vector<1x6x32xbf16>
    %c0_828 = arith.constant 0 : index
    %c12_829 = arith.constant 12 : index
    %c320_830 = arith.constant 320 : index
    %368 = vector.load %arg20[%c0_828, %c12_829, %c320_830] : memref<1x36x512xbf16, #tpu.memory_space<vmem>>, vector<1x6x32xbf16>
    tpu.vector_store %arg20[%c0_828, %c12_829, %c320_830], %367 {strides = array<i32>} : memref<1x36x512xbf16, #tpu.memory_space<vmem>>, vector<1x6x32xbf16>,
    %c0_831 = arith.constant 0 : index
    %c99 = arith.constant 99 : index
    %c0_832 = arith.constant 0 : index
    %369 = vector.load %arg19[%c0_831, %c99, %c0_832] : memref<1x225x32xbf16, #tpu.memory_space<vmem>>, vector<1x6x32xbf16>
    %c0_833 = arith.constant 0 : index
    %c12_834 = arith.constant 12 : index
    %c352_835 = arith.constant 352 : index
    %370 = vector.load %arg20[%c0_833, %c12_834, %c352_835] : memref<1x36x512xbf16, #tpu.memory_space<vmem>>, vector<1x6x32xbf16>
    tpu.vector_store %arg20[%c0_833, %c12_834, %c352_835], %369 {strides = array<i32>} : memref<1x36x512xbf16, #tpu.memory_space<vmem>>, vector<1x6x32xbf16>,
    %c0_836 = arith.constant 0 : index
    %c105_837 = arith.constant 105 : index
    %c0_838 = arith.constant 0 : index
    %371 = vector.load %arg19[%c0_836, %c105_837, %c0_838] : memref<1x225x32xbf16, #tpu.memory_space<vmem>>, vector<1x6x32xbf16>
    %c0_839 = arith.constant 0 : index
    %c12_840 = arith.constant 12 : index
    %c384_841 = arith.constant 384 : index
    %372 = vector.load %arg20[%c0_839, %c12_840, %c384_841] : memref<1x36x512xbf16, #tpu.memory_space<vmem>>, vector<1x6x32xbf16>
    tpu.vector_store %arg20[%c0_839, %c12_840, %c384_841], %371 {strides = array<i32>} : memref<1x36x512xbf16, #tpu.memory_space<vmem>>, vector<1x6x32xbf16>,
    %c0_842 = arith.constant 0 : index
    %c113_843 = arith.constant 113 : index
    %c0_844 = arith.constant 0 : index
    %373 = vector.load %arg19[%c0_842, %c113_843, %c0_844] : memref<1x225x32xbf16, #tpu.memory_space<vmem>>, vector<1x6x32xbf16>
    %c0_845 = arith.constant 0 : index
    %c12_846 = arith.constant 12 : index
    %c416_847 = arith.constant 416 : index
    %374 = vector.load %arg20[%c0_845, %c12_846, %c416_847] : memref<1x36x512xbf16, #tpu.memory_space<vmem>>, vector<1x6x32xbf16>
    tpu.vector_store %arg20[%c0_845, %c12_846, %c416_847], %373 {strides = array<i32>} : memref<1x36x512xbf16, #tpu.memory_space<vmem>>, vector<1x6x32xbf16>,
    %c0_848 = arith.constant 0 : index
    %c106 = arith.constant 106 : index
    %c0_849 = arith.constant 0 : index
    %375 = vector.load %arg19[%c0_848, %c106, %c0_849] : memref<1x225x32xbf16, #tpu.memory_space<vmem>>, vector<1x6x32xbf16>
    %c0_850 = arith.constant 0 : index
    %c12_851 = arith.constant 12 : index
    %c448_852 = arith.constant 448 : index
    %376 = vector.load %arg20[%c0_850, %c12_851, %c448_852] : memref<1x36x512xbf16, #tpu.memory_space<vmem>>, vector<1x6x32xbf16>
    tpu.vector_store %arg20[%c0_850, %c12_851, %c448_852], %375 {strides = array<i32>} : memref<1x36x512xbf16, #tpu.memory_space<vmem>>, vector<1x6x32xbf16>,
    %c0_853 = arith.constant 0 : index
    %c114 = arith.constant 114 : index
    %c0_854 = arith.constant 0 : index
    %377 = vector.load %arg19[%c0_853, %c114, %c0_854] : memref<1x225x32xbf16, #tpu.memory_space<vmem>>, vector<1x6x32xbf16>
    %c0_855 = arith.constant 0 : index
    %c12_856 = arith.constant 12 : index
    %c480_857 = arith.constant 480 : index
    %378 = vector.load %arg20[%c0_855, %c12_856, %c480_857] : memref<1x36x512xbf16, #tpu.memory_space<vmem>>, vector<1x6x32xbf16>
    tpu.vector_store %arg20[%c0_855, %c12_856, %c480_857], %377 {strides = array<i32>} : memref<1x36x512xbf16, #tpu.memory_space<vmem>>, vector<1x6x32xbf16>,
    %c0_858 = arith.constant 0 : index
    %c90_859 = arith.constant 90 : index
    %c0_860 = arith.constant 0 : index
    %379 = vector.load %arg19[%c0_858, %c90_859, %c0_860] : memref<1x225x32xbf16, #tpu.memory_space<vmem>>, vector<1x6x32xbf16>
    %c0_861 = arith.constant 0 : index
    %c18 = arith.constant 18 : index
    %c0_862 = arith.constant 0 : index
    %380 = vector.load %arg20[%c0_861, %c18, %c0_862] : memref<1x36x512xbf16, #tpu.memory_space<vmem>>, vector<1x6x32xbf16>
    tpu.vector_store %arg20[%c0_861, %c18, %c0_862], %379 {strides = array<i32>} : memref<1x36x512xbf16, #tpu.memory_space<vmem>>, vector<1x6x32xbf16>,
    %c0_863 = arith.constant 0 : index
    %c98_864 = arith.constant 98 : index
    %c0_865 = arith.constant 0 : index
    %381 = vector.load %arg19[%c0_863, %c98_864, %c0_865] : memref<1x225x32xbf16, #tpu.memory_space<vmem>>, vector<1x6x32xbf16>
    %c0_866 = arith.constant 0 : index
    %c18_867 = arith.constant 18 : index
    %c32_868 = arith.constant 32 : index
    %382 = vector.load %arg20[%c0_866, %c18_867, %c32_868] : memref<1x36x512xbf16, #tpu.memory_space<vmem>>, vector<1x6x32xbf16>
    tpu.vector_store %arg20[%c0_866, %c18_867, %c32_868], %381 {strides = array<i32>} : memref<1x36x512xbf16, #tpu.memory_space<vmem>>, vector<1x6x32xbf16>,
    %c0_869 = arith.constant 0 : index
    %c91_870 = arith.constant 91 : index
    %c0_871 = arith.constant 0 : index
    %383 = vector.load %arg19[%c0_869, %c91_870, %c0_871] : memref<1x225x32xbf16, #tpu.memory_space<vmem>>, vector<1x6x32xbf16>
    %c0_872 = arith.constant 0 : index
    %c18_873 = arith.constant 18 : index
    %c64_874 = arith.constant 64 : index
    %384 = vector.load %arg20[%c0_872, %c18_873, %c64_874] : memref<1x36x512xbf16, #tpu.memory_space<vmem>>, vector<1x6x32xbf16>
    tpu.vector_store %arg20[%c0_872, %c18_873, %c64_874], %383 {strides = array<i32>} : memref<1x36x512xbf16, #tpu.memory_space<vmem>>, vector<1x6x32xbf16>,
    %c0_875 = arith.constant 0 : index
    %c99_876 = arith.constant 99 : index
    %c0_877 = arith.constant 0 : index
    %385 = vector.load %arg19[%c0_875, %c99_876, %c0_877] : memref<1x225x32xbf16, #tpu.memory_space<vmem>>, vector<1x6x32xbf16>
    %c0_878 = arith.constant 0 : index
    %c18_879 = arith.constant 18 : index
    %c96_880 = arith.constant 96 : index
    %386 = vector.load %arg20[%c0_878, %c18_879, %c96_880] : memref<1x36x512xbf16, #tpu.memory_space<vmem>>, vector<1x6x32xbf16>
    tpu.vector_store %arg20[%c0_878, %c18_879, %c96_880], %385 {strides = array<i32>} : memref<1x36x512xbf16, #tpu.memory_space<vmem>>, vector<1x6x32xbf16>,
    %c0_881 = arith.constant 0 : index
    %c105_882 = arith.constant 105 : index
    %c0_883 = arith.constant 0 : index
    %387 = vector.load %arg19[%c0_881, %c105_882, %c0_883] : memref<1x225x32xbf16, #tpu.memory_space<vmem>>, vector<1x6x32xbf16>
    %c0_884 = arith.constant 0 : index
    %c18_885 = arith.constant 18 : index
    %c128_886 = arith.constant 128 : index
    %388 = vector.load %arg20[%c0_884, %c18_885, %c128_886] : memref<1x36x512xbf16, #tpu.memory_space<vmem>>, vector<1x6x32xbf16>
    tpu.vector_store %arg20[%c0_884, %c18_885, %c128_886], %387 {strides = array<i32>} : memref<1x36x512xbf16, #tpu.memory_space<vmem>>, vector<1x6x32xbf16>,
    %c0_887 = arith.constant 0 : index
    %c113_888 = arith.constant 113 : index
    %c0_889 = arith.constant 0 : index
    %389 = vector.load %arg19[%c0_887, %c113_888, %c0_889] : memref<1x225x32xbf16, #tpu.memory_space<vmem>>, vector<1x6x32xbf16>
    %c0_890 = arith.constant 0 : index
    %c18_891 = arith.constant 18 : index
    %c160_892 = arith.constant 160 : index
    %390 = vector.load %arg20[%c0_890, %c18_891, %c160_892] : memref<1x36x512xbf16, #tpu.memory_space<vmem>>, vector<1x6x32xbf16>
    tpu.vector_store %arg20[%c0_890, %c18_891, %c160_892], %389 {strides = array<i32>} : memref<1x36x512xbf16, #tpu.memory_space<vmem>>, vector<1x6x32xbf16>,
    %c0_893 = arith.constant 0 : index
    %c106_894 = arith.constant 106 : index
    %c0_895 = arith.constant 0 : index
    %391 = vector.load %arg19[%c0_893, %c106_894, %c0_895] : memref<1x225x32xbf16, #tpu.memory_space<vmem>>, vector<1x6x32xbf16>
    %c0_896 = arith.constant 0 : index
    %c18_897 = arith.constant 18 : index
    %c192_898 = arith.constant 192 : index
    %392 = vector.load %arg20[%c0_896, %c18_897, %c192_898] : memref<1x36x512xbf16, #tpu.memory_space<vmem>>, vector<1x6x32xbf16>
    tpu.vector_store %arg20[%c0_896, %c18_897, %c192_898], %391 {strides = array<i32>} : memref<1x36x512xbf16, #tpu.memory_space<vmem>>, vector<1x6x32xbf16>,
    %c0_899 = arith.constant 0 : index
    %c114_900 = arith.constant 114 : index
    %c0_901 = arith.constant 0 : index
    %393 = vector.load %arg19[%c0_899, %c114_900, %c0_901] : memref<1x225x32xbf16, #tpu.memory_space<vmem>>, vector<1x6x32xbf16>
    %c0_902 = arith.constant 0 : index
    %c18_903 = arith.constant 18 : index
    %c224_904 = arith.constant 224 : index
    %394 = vector.load %arg20[%c0_902, %c18_903, %c224_904] : memref<1x36x512xbf16, #tpu.memory_space<vmem>>, vector<1x6x32xbf16>
    tpu.vector_store %arg20[%c0_902, %c18_903, %c224_904], %393 {strides = array<i32>} : memref<1x36x512xbf16, #tpu.memory_space<vmem>>, vector<1x6x32xbf16>,
    %c0_905 = arith.constant 0 : index
    %c120_906 = arith.constant 120 : index
    %c0_907 = arith.constant 0 : index
    %395 = vector.load %arg19[%c0_905, %c120_906, %c0_907] : memref<1x225x32xbf16, #tpu.memory_space<vmem>>, vector<1x6x32xbf16>
    %c0_908 = arith.constant 0 : index
    %c18_909 = arith.constant 18 : index
    %c256_910 = arith.constant 256 : index
    %396 = vector.load %arg20[%c0_908, %c18_909, %c256_910] : memref<1x36x512xbf16, #tpu.memory_space<vmem>>, vector<1x6x32xbf16>
    tpu.vector_store %arg20[%c0_908, %c18_909, %c256_910], %395 {strides = array<i32>} : memref<1x36x512xbf16, #tpu.memory_space<vmem>>, vector<1x6x32xbf16>,
    %c0_911 = arith.constant 0 : index
    %c128_912 = arith.constant 128 : index
    %c0_913 = arith.constant 0 : index
    %397 = vector.load %arg19[%c0_911, %c128_912, %c0_913] : memref<1x225x32xbf16, #tpu.memory_space<vmem>>, vector<1x6x32xbf16>
    %c0_914 = arith.constant 0 : index
    %c18_915 = arith.constant 18 : index
    %c288_916 = arith.constant 288 : index
    %398 = vector.load %arg20[%c0_914, %c18_915, %c288_916] : memref<1x36x512xbf16, #tpu.memory_space<vmem>>, vector<1x6x32xbf16>
    tpu.vector_store %arg20[%c0_914, %c18_915, %c288_916], %397 {strides = array<i32>} : memref<1x36x512xbf16, #tpu.memory_space<vmem>>, vector<1x6x32xbf16>,
    %c0_917 = arith.constant 0 : index
    %c121 = arith.constant 121 : index
    %c0_918 = arith.constant 0 : index
    %399 = vector.load %arg19[%c0_917, %c121, %c0_918] : memref<1x225x32xbf16, #tpu.memory_space<vmem>>, vector<1x6x32xbf16>
    %c0_919 = arith.constant 0 : index
    %c18_920 = arith.constant 18 : index
    %c320_921 = arith.constant 320 : index
    %400 = vector.load %arg20[%c0_919, %c18_920, %c320_921] : memref<1x36x512xbf16, #tpu.memory_space<vmem>>, vector<1x6x32xbf16>
    tpu.vector_store %arg20[%c0_919, %c18_920, %c320_921], %399 {strides = array<i32>} : memref<1x36x512xbf16, #tpu.memory_space<vmem>>, vector<1x6x32xbf16>,
    %c0_922 = arith.constant 0 : index
    %c129 = arith.constant 129 : index
    %c0_923 = arith.constant 0 : index
    %401 = vector.load %arg19[%c0_922, %c129, %c0_923] : memref<1x225x32xbf16, #tpu.memory_space<vmem>>, vector<1x6x32xbf16>
    %c0_924 = arith.constant 0 : index
    %c18_925 = arith.constant 18 : index
    %c352_926 = arith.constant 352 : index
    %402 = vector.load %arg20[%c0_924, %c18_925, %c352_926] : memref<1x36x512xbf16, #tpu.memory_space<vmem>>, vector<1x6x32xbf16>
    tpu.vector_store %arg20[%c0_924, %c18_925, %c352_926], %401 {strides = array<i32>} : memref<1x36x512xbf16, #tpu.memory_space<vmem>>, vector<1x6x32xbf16>,
    %c0_927 = arith.constant 0 : index
    %c135_928 = arith.constant 135 : index
    %c0_929 = arith.constant 0 : index
    %403 = vector.load %arg19[%c0_927, %c135_928, %c0_929] : memref<1x225x32xbf16, #tpu.memory_space<vmem>>, vector<1x6x32xbf16>
    %c0_930 = arith.constant 0 : index
    %c18_931 = arith.constant 18 : index
    %c384_932 = arith.constant 384 : index
    %404 = vector.load %arg20[%c0_930, %c18_931, %c384_932] : memref<1x36x512xbf16, #tpu.memory_space<vmem>>, vector<1x6x32xbf16>
    tpu.vector_store %arg20[%c0_930, %c18_931, %c384_932], %403 {strides = array<i32>} : memref<1x36x512xbf16, #tpu.memory_space<vmem>>, vector<1x6x32xbf16>,
    %c0_933 = arith.constant 0 : index
    %c143_934 = arith.constant 143 : index
    %c0_935 = arith.constant 0 : index
    %405 = vector.load %arg19[%c0_933, %c143_934, %c0_935] : memref<1x225x32xbf16, #tpu.memory_space<vmem>>, vector<1x6x32xbf16>
    %c0_936 = arith.constant 0 : index
    %c18_937 = arith.constant 18 : index
    %c416_938 = arith.constant 416 : index
    %406 = vector.load %arg20[%c0_936, %c18_937, %c416_938] : memref<1x36x512xbf16, #tpu.memory_space<vmem>>, vector<1x6x32xbf16>
    tpu.vector_store %arg20[%c0_936, %c18_937, %c416_938], %405 {strides = array<i32>} : memref<1x36x512xbf16, #tpu.memory_space<vmem>>, vector<1x6x32xbf16>,
    %c0_939 = arith.constant 0 : index
    %c136 = arith.constant 136 : index
    %c0_940 = arith.constant 0 : index
    %407 = vector.load %arg19[%c0_939, %c136, %c0_940] : memref<1x225x32xbf16, #tpu.memory_space<vmem>>, vector<1x6x32xbf16>
    %c0_941 = arith.constant 0 : index
    %c18_942 = arith.constant 18 : index
    %c448_943 = arith.constant 448 : index
    %408 = vector.load %arg20[%c0_941, %c18_942, %c448_943] : memref<1x36x512xbf16, #tpu.memory_space<vmem>>, vector<1x6x32xbf16>
    tpu.vector_store %arg20[%c0_941, %c18_942, %c448_943], %407 {strides = array<i32>} : memref<1x36x512xbf16, #tpu.memory_space<vmem>>, vector<1x6x32xbf16>,
    %c0_944 = arith.constant 0 : index
    %c144 = arith.constant 144 : index
    %c0_945 = arith.constant 0 : index
    %409 = vector.load %arg19[%c0_944, %c144, %c0_945] : memref<1x225x32xbf16, #tpu.memory_space<vmem>>, vector<1x6x32xbf16>
    %c0_946 = arith.constant 0 : index
    %c18_947 = arith.constant 18 : index
    %c480_948 = arith.constant 480 : index
    %410 = vector.load %arg20[%c0_946, %c18_947, %c480_948] : memref<1x36x512xbf16, #tpu.memory_space<vmem>>, vector<1x6x32xbf16>
    tpu.vector_store %arg20[%c0_946, %c18_947, %c480_948], %409 {strides = array<i32>} : memref<1x36x512xbf16, #tpu.memory_space<vmem>>, vector<1x6x32xbf16>,
    %c0_949 = arith.constant 0 : index
    %c120_950 = arith.constant 120 : index
    %c0_951 = arith.constant 0 : index
    %411 = vector.load %arg19[%c0_949, %c120_950, %c0_951] : memref<1x225x32xbf16, #tpu.memory_space<vmem>>, vector<1x6x32xbf16>
    %c0_952 = arith.constant 0 : index
    %c24_953 = arith.constant 24 : index
    %c0_954 = arith.constant 0 : index
    %412 = vector.load %arg20[%c0_952, %c24_953, %c0_954] : memref<1x36x512xbf16, #tpu.memory_space<vmem>>, vector<1x6x32xbf16>
    tpu.vector_store %arg20[%c0_952, %c24_953, %c0_954], %411 {strides = array<i32>} : memref<1x36x512xbf16, #tpu.memory_space<vmem>>, vector<1x6x32xbf16>,
    %c0_955 = arith.constant 0 : index
    %c128_956 = arith.constant 128 : index
    %c0_957 = arith.constant 0 : index
    %413 = vector.load %arg19[%c0_955, %c128_956, %c0_957] : memref<1x225x32xbf16, #tpu.memory_space<vmem>>, vector<1x6x32xbf16>
    %c0_958 = arith.constant 0 : index
    %c24_959 = arith.constant 24 : index
    %c32_960 = arith.constant 32 : index
    %414 = vector.load %arg20[%c0_958, %c24_959, %c32_960] : memref<1x36x512xbf16, #tpu.memory_space<vmem>>, vector<1x6x32xbf16>
    tpu.vector_store %arg20[%c0_958, %c24_959, %c32_960], %413 {strides = array<i32>} : memref<1x36x512xbf16, #tpu.memory_space<vmem>>, vector<1x6x32xbf16>,
    %c0_961 = arith.constant 0 : index
    %c121_962 = arith.constant 121 : index
    %c0_963 = arith.constant 0 : index
    %415 = vector.load %arg19[%c0_961, %c121_962, %c0_963] : memref<1x225x32xbf16, #tpu.memory_space<vmem>>, vector<1x6x32xbf16>
    %c0_964 = arith.constant 0 : index
    %c24_965 = arith.constant 24 : index
    %c64_966 = arith.constant 64 : index
    %416 = vector.load %arg20[%c0_964, %c24_965, %c64_966] : memref<1x36x512xbf16, #tpu.memory_space<vmem>>, vector<1x6x32xbf16>
    tpu.vector_store %arg20[%c0_964, %c24_965, %c64_966], %415 {strides = array<i32>} : memref<1x36x512xbf16, #tpu.memory_space<vmem>>, vector<1x6x32xbf16>,
    %c0_967 = arith.constant 0 : index
    %c129_968 = arith.constant 129 : index
    %c0_969 = arith.constant 0 : index
    %417 = vector.load %arg19[%c0_967, %c129_968, %c0_969] : memref<1x225x32xbf16, #tpu.memory_space<vmem>>, vector<1x6x32xbf16>
    %c0_970 = arith.constant 0 : index
    %c24_971 = arith.constant 24 : index
    %c96_972 = arith.constant 96 : index
    %418 = vector.load %arg20[%c0_970, %c24_971, %c96_972] : memref<1x36x512xbf16, #tpu.memory_space<vmem>>, vector<1x6x32xbf16>
    tpu.vector_store %arg20[%c0_970, %c24_971, %c96_972], %417 {strides = array<i32>} : memref<1x36x512xbf16, #tpu.memory_space<vmem>>, vector<1x6x32xbf16>,
    %c0_973 = arith.constant 0 : index
    %c135_974 = arith.constant 135 : index
    %c0_975 = arith.constant 0 : index
    %419 = vector.load %arg19[%c0_973, %c135_974, %c0_975] : memref<1x225x32xbf16, #tpu.memory_space<vmem>>, vector<1x6x32xbf16>
    %c0_976 = arith.constant 0 : index
    %c24_977 = arith.constant 24 : index
    %c128_978 = arith.constant 128 : index
    %420 = vector.load %arg20[%c0_976, %c24_977, %c128_978] : memref<1x36x512xbf16, #tpu.memory_space<vmem>>, vector<1x6x32xbf16>
    tpu.vector_store %arg20[%c0_976, %c24_977, %c128_978], %419 {strides = array<i32>} : memref<1x36x512xbf16, #tpu.memory_space<vmem>>, vector<1x6x32xbf16>,
    %c0_979 = arith.constant 0 : index
    %c143_980 = arith.constant 143 : index
    %c0_981 = arith.constant 0 : index
    %421 = vector.load %arg19[%c0_979, %c143_980, %c0_981] : memref<1x225x32xbf16, #tpu.memory_space<vmem>>, vector<1x6x32xbf16>
    %c0_982 = arith.constant 0 : index
    %c24_983 = arith.constant 24 : index
    %c160_984 = arith.constant 160 : index
    %422 = vector.load %arg20[%c0_982, %c24_983, %c160_984] : memref<1x36x512xbf16, #tpu.memory_space<vmem>>, vector<1x6x32xbf16>
    tpu.vector_store %arg20[%c0_982, %c24_983, %c160_984], %421 {strides = array<i32>} : memref<1x36x512xbf16, #tpu.memory_space<vmem>>, vector<1x6x32xbf16>,
    %c0_985 = arith.constant 0 : index
    %c136_986 = arith.constant 136 : index
    %c0_987 = arith.constant 0 : index
    %423 = vector.load %arg19[%c0_985, %c136_986, %c0_987] : memref<1x225x32xbf16, #tpu.memory_space<vmem>>, vector<1x6x32xbf16>
    %c0_988 = arith.constant 0 : index
    %c24_989 = arith.constant 24 : index
    %c192_990 = arith.constant 192 : index
    %424 = vector.load %arg20[%c0_988, %c24_989, %c192_990] : memref<1x36x512xbf16, #tpu.memory_space<vmem>>, vector<1x6x32xbf16>
    tpu.vector_store %arg20[%c0_988, %c24_989, %c192_990], %423 {strides = array<i32>} : memref<1x36x512xbf16, #tpu.memory_space<vmem>>, vector<1x6x32xbf16>,
    %c0_991 = arith.constant 0 : index
    %c144_992 = arith.constant 144 : index
    %c0_993 = arith.constant 0 : index
    %425 = vector.load %arg19[%c0_991, %c144_992, %c0_993] : memref<1x225x32xbf16, #tpu.memory_space<vmem>>, vector<1x6x32xbf16>
    %c0_994 = arith.constant 0 : index
    %c24_995 = arith.constant 24 : index
    %c224_996 = arith.constant 224 : index
    %426 = vector.load %arg20[%c0_994, %c24_995, %c224_996] : memref<1x36x512xbf16, #tpu.memory_space<vmem>>, vector<1x6x32xbf16>
    tpu.vector_store %arg20[%c0_994, %c24_995, %c224_996], %425 {strides = array<i32>} : memref<1x36x512xbf16, #tpu.memory_space<vmem>>, vector<1x6x32xbf16>,
    %c0_997 = arith.constant 0 : index
    %c150_998 = arith.constant 150 : index
    %c0_999 = arith.constant 0 : index
    %427 = vector.load %arg19[%c0_997, %c150_998, %c0_999] : memref<1x225x32xbf16, #tpu.memory_space<vmem>>, vector<1x6x32xbf16>
    %c0_1000 = arith.constant 0 : index
    %c24_1001 = arith.constant 24 : index
    %c256_1002 = arith.constant 256 : index
    %428 = vector.load %arg20[%c0_1000, %c24_1001, %c256_1002] : memref<1x36x512xbf16, #tpu.memory_space<vmem>>, vector<1x6x32xbf16>
    tpu.vector_store %arg20[%c0_1000, %c24_1001, %c256_1002], %427 {strides = array<i32>} : memref<1x36x512xbf16, #tpu.memory_space<vmem>>, vector<1x6x32xbf16>,
    %c0_1003 = arith.constant 0 : index
    %c158_1004 = arith.constant 158 : index
    %c0_1005 = arith.constant 0 : index
    %429 = vector.load %arg19[%c0_1003, %c158_1004, %c0_1005] : memref<1x225x32xbf16, #tpu.memory_space<vmem>>, vector<1x6x32xbf16>
    %c0_1006 = arith.constant 0 : index
    %c24_1007 = arith.constant 24 : index
    %c288_1008 = arith.constant 288 : index
    %430 = vector.load %arg20[%c0_1006, %c24_1007, %c288_1008] : memref<1x36x512xbf16, #tpu.memory_space<vmem>>, vector<1x6x32xbf16>
    tpu.vector_store %arg20[%c0_1006, %c24_1007, %c288_1008], %429 {strides = array<i32>} : memref<1x36x512xbf16, #tpu.memory_space<vmem>>, vector<1x6x32xbf16>,
    %c0_1009 = arith.constant 0 : index
    %c151 = arith.constant 151 : index
    %c0_1010 = arith.constant 0 : index
    %431 = vector.load %arg19[%c0_1009, %c151, %c0_1010] : memref<1x225x32xbf16, #tpu.memory_space<vmem>>, vector<1x6x32xbf16>
    %c0_1011 = arith.constant 0 : index
    %c24_1012 = arith.constant 24 : index
    %c320_1013 = arith.constant 320 : index
    %432 = vector.load %arg20[%c0_1011, %c24_1012, %c320_1013] : memref<1x36x512xbf16, #tpu.memory_space<vmem>>, vector<1x6x32xbf16>
    tpu.vector_store %arg20[%c0_1011, %c24_1012, %c320_1013], %431 {strides = array<i32>} : memref<1x36x512xbf16, #tpu.memory_space<vmem>>, vector<1x6x32xbf16>,
    %c0_1014 = arith.constant 0 : index
    %c159 = arith.constant 159 : index
    %c0_1015 = arith.constant 0 : index
    %433 = vector.load %arg19[%c0_1014, %c159, %c0_1015] : memref<1x225x32xbf16, #tpu.memory_space<vmem>>, vector<1x6x32xbf16>
    %c0_1016 = arith.constant 0 : index
    %c24_1017 = arith.constant 24 : index
    %c352_1018 = arith.constant 352 : index
    %434 = vector.load %arg20[%c0_1016, %c24_1017, %c352_1018] : memref<1x36x512xbf16, #tpu.memory_space<vmem>>, vector<1x6x32xbf16>
    tpu.vector_store %arg20[%c0_1016, %c24_1017, %c352_1018], %433 {strides = array<i32>} : memref<1x36x512xbf16, #tpu.memory_space<vmem>>, vector<1x6x32xbf16>,
    %c0_1019 = arith.constant 0 : index
    %c165_1020 = arith.constant 165 : index
    %c0_1021 = arith.constant 0 : index
    %435 = vector.load %arg19[%c0_1019, %c165_1020, %c0_1021] : memref<1x225x32xbf16, #tpu.memory_space<vmem>>, vector<1x6x32xbf16>
    %c0_1022 = arith.constant 0 : index
    %c24_1023 = arith.constant 24 : index
    %c384_1024 = arith.constant 384 : index
    %436 = vector.load %arg20[%c0_1022, %c24_1023, %c384_1024] : memref<1x36x512xbf16, #tpu.memory_space<vmem>>, vector<1x6x32xbf16>
    tpu.vector_store %arg20[%c0_1022, %c24_1023, %c384_1024], %435 {strides = array<i32>} : memref<1x36x512xbf16, #tpu.memory_space<vmem>>, vector<1x6x32xbf16>,
    %c0_1025 = arith.constant 0 : index
    %c173_1026 = arith.constant 173 : index
    %c0_1027 = arith.constant 0 : index
    %437 = vector.load %arg19[%c0_1025, %c173_1026, %c0_1027] : memref<1x225x32xbf16, #tpu.memory_space<vmem>>, vector<1x6x32xbf16>
    %c0_1028 = arith.constant 0 : index
    %c24_1029 = arith.constant 24 : index
    %c416_1030 = arith.constant 416 : index
    %438 = vector.load %arg20[%c0_1028, %c24_1029, %c416_1030] : memref<1x36x512xbf16, #tpu.memory_space<vmem>>, vector<1x6x32xbf16>
    tpu.vector_store %arg20[%c0_1028, %c24_1029, %c416_1030], %437 {strides = array<i32>} : memref<1x36x512xbf16, #tpu.memory_space<vmem>>, vector<1x6x32xbf16>,
    %c0_1031 = arith.constant 0 : index
    %c166 = arith.constant 166 : index
    %c0_1032 = arith.constant 0 : index
    %439 = vector.load %arg19[%c0_1031, %c166, %c0_1032] : memref<1x225x32xbf16, #tpu.memory_space<vmem>>, vector<1x6x32xbf16>
    %c0_1033 = arith.constant 0 : index
    %c24_1034 = arith.constant 24 : index
    %c448_1035 = arith.constant 448 : index
    %440 = vector.load %arg20[%c0_1033, %c24_1034, %c448_1035] : memref<1x36x512xbf16, #tpu.memory_space<vmem>>, vector<1x6x32xbf16>
    tpu.vector_store %arg20[%c0_1033, %c24_1034, %c448_1035], %439 {strides = array<i32>} : memref<1x36x512xbf16, #tpu.memory_space<vmem>>, vector<1x6x32xbf16>,
    %c0_1036 = arith.constant 0 : index
    %c174 = arith.constant 174 : index
    %c0_1037 = arith.constant 0 : index
    %441 = vector.load %arg19[%c0_1036, %c174, %c0_1037] : memref<1x225x32xbf16, #tpu.memory_space<vmem>>, vector<1x6x32xbf16>
    %c0_1038 = arith.constant 0 : index
    %c24_1039 = arith.constant 24 : index
    %c480_1040 = arith.constant 480 : index
    %442 = vector.load %arg20[%c0_1038, %c24_1039, %c480_1040] : memref<1x36x512xbf16, #tpu.memory_space<vmem>>, vector<1x6x32xbf16>
    tpu.vector_store %arg20[%c0_1038, %c24_1039, %c480_1040], %441 {strides = array<i32>} : memref<1x36x512xbf16, #tpu.memory_space<vmem>>, vector<1x6x32xbf16>,
    %c0_1041 = arith.constant 0 : index
    %c150_1042 = arith.constant 150 : index
    %c0_1043 = arith.constant 0 : index
    %443 = vector.load %arg19[%c0_1041, %c150_1042, %c0_1043] : memref<1x225x32xbf16, #tpu.memory_space<vmem>>, vector<1x6x32xbf16>
    %c0_1044 = arith.constant 0 : index
    %c30_1045 = arith.constant 30 : index
    %c0_1046 = arith.constant 0 : index
    %444 = vector.load %arg20[%c0_1044, %c30_1045, %c0_1046] : memref<1x36x512xbf16, #tpu.memory_space<vmem>>, vector<1x6x32xbf16>
    tpu.vector_store %arg20[%c0_1044, %c30_1045, %c0_1046], %443 {strides = array<i32>} : memref<1x36x512xbf16, #tpu.memory_space<vmem>>, vector<1x6x32xbf16>,
    %c0_1047 = arith.constant 0 : index
    %c158_1048 = arith.constant 158 : index
    %c0_1049 = arith.constant 0 : index
    %445 = vector.load %arg19[%c0_1047, %c158_1048, %c0_1049] : memref<1x225x32xbf16, #tpu.memory_space<vmem>>, vector<1x6x32xbf16>
    %c0_1050 = arith.constant 0 : index
    %c30_1051 = arith.constant 30 : index
    %c32_1052 = arith.constant 32 : index
    %446 = vector.load %arg20[%c0_1050, %c30_1051, %c32_1052] : memref<1x36x512xbf16, #tpu.memory_space<vmem>>, vector<1x6x32xbf16>
    tpu.vector_store %arg20[%c0_1050, %c30_1051, %c32_1052], %445 {strides = array<i32>} : memref<1x36x512xbf16, #tpu.memory_space<vmem>>, vector<1x6x32xbf16>,
    %c0_1053 = arith.constant 0 : index
    %c151_1054 = arith.constant 151 : index
    %c0_1055 = arith.constant 0 : index
    %447 = vector.load %arg19[%c0_1053, %c151_1054, %c0_1055] : memref<1x225x32xbf16, #tpu.memory_space<vmem>>, vector<1x6x32xbf16>
    %c0_1056 = arith.constant 0 : index
    %c30_1057 = arith.constant 30 : index
    %c64_1058 = arith.constant 64 : index
    %448 = vector.load %arg20[%c0_1056, %c30_1057, %c64_1058] : memref<1x36x512xbf16, #tpu.memory_space<vmem>>, vector<1x6x32xbf16>
    tpu.vector_store %arg20[%c0_1056, %c30_1057, %c64_1058], %447 {strides = array<i32>} : memref<1x36x512xbf16, #tpu.memory_space<vmem>>, vector<1x6x32xbf16>,
    %c0_1059 = arith.constant 0 : index
    %c159_1060 = arith.constant 159 : index
    %c0_1061 = arith.constant 0 : index
    %449 = vector.load %arg19[%c0_1059, %c159_1060, %c0_1061] : memref<1x225x32xbf16, #tpu.memory_space<vmem>>, vector<1x6x32xbf16>
    %c0_1062 = arith.constant 0 : index
    %c30_1063 = arith.constant 30 : index
    %c96_1064 = arith.constant 96 : index
    %450 = vector.load %arg20[%c0_1062, %c30_1063, %c96_1064] : memref<1x36x512xbf16, #tpu.memory_space<vmem>>, vector<1x6x32xbf16>
    tpu.vector_store %arg20[%c0_1062, %c30_1063, %c96_1064], %449 {strides = array<i32>} : memref<1x36x512xbf16, #tpu.memory_space<vmem>>, vector<1x6x32xbf16>,
    %c0_1065 = arith.constant 0 : index
    %c165_1066 = arith.constant 165 : index
    %c0_1067 = arith.constant 0 : index
    %451 = vector.load %arg19[%c0_1065, %c165_1066, %c0_1067] : memref<1x225x32xbf16, #tpu.memory_space<vmem>>, vector<1x6x32xbf16>
    %c0_1068 = arith.constant 0 : index
    %c30_1069 = arith.constant 30 : index
    %c128_1070 = arith.constant 128 : index
    %452 = vector.load %arg20[%c0_1068, %c30_1069, %c128_1070] : memref<1x36x512xbf16, #tpu.memory_space<vmem>>, vector<1x6x32xbf16>
    tpu.vector_store %arg20[%c0_1068, %c30_1069, %c128_1070], %451 {strides = array<i32>} : memref<1x36x512xbf16, #tpu.memory_space<vmem>>, vector<1x6x32xbf16>,
    %c0_1071 = arith.constant 0 : index
    %c173_1072 = arith.constant 173 : index
    %c0_1073 = arith.constant 0 : index
    %453 = vector.load %arg19[%c0_1071, %c173_1072, %c0_1073] : memref<1x225x32xbf16, #tpu.memory_space<vmem>>, vector<1x6x32xbf16>
    %c0_1074 = arith.constant 0 : index
    %c30_1075 = arith.constant 30 : index
    %c160_1076 = arith.constant 160 : index
    %454 = vector.load %arg20[%c0_1074, %c30_1075, %c160_1076] : memref<1x36x512xbf16, #tpu.memory_space<vmem>>, vector<1x6x32xbf16>
    tpu.vector_store %arg20[%c0_1074, %c30_1075, %c160_1076], %453 {strides = array<i32>} : memref<1x36x512xbf16, #tpu.memory_space<vmem>>, vector<1x6x32xbf16>,
    %c0_1077 = arith.constant 0 : index
    %c166_1078 = arith.constant 166 : index
    %c0_1079 = arith.constant 0 : index
    %455 = vector.load %arg19[%c0_1077, %c166_1078, %c0_1079] : memref<1x225x32xbf16, #tpu.memory_space<vmem>>, vector<1x6x32xbf16>
    %c0_1080 = arith.constant 0 : index
    %c30_1081 = arith.constant 30 : index
    %c192_1082 = arith.constant 192 : index
    %456 = vector.load %arg20[%c0_1080, %c30_1081, %c192_1082] : memref<1x36x512xbf16, #tpu.memory_space<vmem>>, vector<1x6x32xbf16>
    tpu.vector_store %arg20[%c0_1080, %c30_1081, %c192_1082], %455 {strides = array<i32>} : memref<1x36x512xbf16, #tpu.memory_space<vmem>>, vector<1x6x32xbf16>,
    %c0_1083 = arith.constant 0 : index
    %c174_1084 = arith.constant 174 : index
    %c0_1085 = arith.constant 0 : index
    %457 = vector.load %arg19[%c0_1083, %c174_1084, %c0_1085] : memref<1x225x32xbf16, #tpu.memory_space<vmem>>, vector<1x6x32xbf16>
    %c0_1086 = arith.constant 0 : index
    %c30_1087 = arith.constant 30 : index
    %c224_1088 = arith.constant 224 : index
    %458 = vector.load %arg20[%c0_1086, %c30_1087, %c224_1088] : memref<1x36x512xbf16, #tpu.memory_space<vmem>>, vector<1x6x32xbf16>
    tpu.vector_store %arg20[%c0_1086, %c30_1087, %c224_1088], %457 {strides = array<i32>} : memref<1x36x512xbf16, #tpu.memory_space<vmem>>, vector<1x6x32xbf16>,
    %c0_1089 = arith.constant 0 : index
    %c180_1090 = arith.constant 180 : index
    %c0_1091 = arith.constant 0 : index
    %459 = vector.load %arg19[%c0_1089, %c180_1090, %c0_1091] : memref<1x225x32xbf16, #tpu.memory_space<vmem>>, vector<1x6x32xbf16>
    %c0_1092 = arith.constant 0 : index
    %c30_1093 = arith.constant 30 : index
    %c256_1094 = arith.constant 256 : index
    %460 = vector.load %arg20[%c0_1092, %c30_1093, %c256_1094] : memref<1x36x512xbf16, #tpu.memory_space<vmem>>, vector<1x6x32xbf16>
    tpu.vector_store %arg20[%c0_1092, %c30_1093, %c256_1094], %459 {strides = array<i32>} : memref<1x36x512xbf16, #tpu.memory_space<vmem>>, vector<1x6x32xbf16>,
    %c0_1095 = arith.constant 0 : index
    %c188_1096 = arith.constant 188 : index
    %c0_1097 = arith.constant 0 : index
    %461 = vector.load %arg19[%c0_1095, %c188_1096, %c0_1097] : memref<1x225x32xbf16, #tpu.memory_space<vmem>>, vector<1x6x32xbf16>
    %c0_1098 = arith.constant 0 : index
    %c30_1099 = arith.constant 30 : index
    %c288_1100 = arith.constant 288 : index
    %462 = vector.load %arg20[%c0_1098, %c30_1099, %c288_1100] : memref<1x36x512xbf16, #tpu.memory_space<vmem>>, vector<1x6x32xbf16>
    tpu.vector_store %arg20[%c0_1098, %c30_1099, %c288_1100], %461 {strides = array<i32>} : memref<1x36x512xbf16, #tpu.memory_space<vmem>>, vector<1x6x32xbf16>,
    %c0_1101 = arith.constant 0 : index
    %c181 = arith.constant 181 : index
    %c0_1102 = arith.constant 0 : index
    %463 = vector.load %arg19[%c0_1101, %c181, %c0_1102] : memref<1x225x32xbf16, #tpu.memory_space<vmem>>, vector<1x6x32xbf16>
    %c0_1103 = arith.constant 0 : index
    %c30_1104 = arith.constant 30 : index
    %c320_1105 = arith.constant 320 : index
    %464 = vector.load %arg20[%c0_1103, %c30_1104, %c320_1105] : memref<1x36x512xbf16, #tpu.memory_space<vmem>>, vector<1x6x32xbf16>
    tpu.vector_store %arg20[%c0_1103, %c30_1104, %c320_1105], %463 {strides = array<i32>} : memref<1x36x512xbf16, #tpu.memory_space<vmem>>, vector<1x6x32xbf16>,
    %c0_1106 = arith.constant 0 : index
    %c189 = arith.constant 189 : index
    %c0_1107 = arith.constant 0 : index
    %465 = vector.load %arg19[%c0_1106, %c189, %c0_1107] : memref<1x225x32xbf16, #tpu.memory_space<vmem>>, vector<1x6x32xbf16>
    %c0_1108 = arith.constant 0 : index
    %c30_1109 = arith.constant 30 : index
    %c352_1110 = arith.constant 352 : index
    %466 = vector.load %arg20[%c0_1108, %c30_1109, %c352_1110] : memref<1x36x512xbf16, #tpu.memory_space<vmem>>, vector<1x6x32xbf16>
    tpu.vector_store %arg20[%c0_1108, %c30_1109, %c352_1110], %465 {strides = array<i32>} : memref<1x36x512xbf16, #tpu.memory_space<vmem>>, vector<1x6x32xbf16>,
    %c0_1111 = arith.constant 0 : index
    %c195_1112 = arith.constant 195 : index
    %c0_1113 = arith.constant 0 : index
    %467 = vector.load %arg19[%c0_1111, %c195_1112, %c0_1113] : memref<1x225x32xbf16, #tpu.memory_space<vmem>>, vector<1x6x32xbf16>
    %c0_1114 = arith.constant 0 : index
    %c30_1115 = arith.constant 30 : index
    %c384_1116 = arith.constant 384 : index
    %468 = vector.load %arg20[%c0_1114, %c30_1115, %c384_1116] : memref<1x36x512xbf16, #tpu.memory_space<vmem>>, vector<1x6x32xbf16>
    tpu.vector_store %arg20[%c0_1114, %c30_1115, %c384_1116], %467 {strides = array<i32>} : memref<1x36x512xbf16, #tpu.memory_space<vmem>>, vector<1x6x32xbf16>,
    %c0_1117 = arith.constant 0 : index
    %c203_1118 = arith.constant 203 : index
    %c0_1119 = arith.constant 0 : index
    %469 = vector.load %arg19[%c0_1117, %c203_1118, %c0_1119] : memref<1x225x32xbf16, #tpu.memory_space<vmem>>, vector<1x6x32xbf16>
    %c0_1120 = arith.constant 0 : index
    %c30_1121 = arith.constant 30 : index
    %c416_1122 = arith.constant 416 : index
    %470 = vector.load %arg20[%c0_1120, %c30_1121, %c416_1122] : memref<1x36x512xbf16, #tpu.memory_space<vmem>>, vector<1x6x32xbf16>
    tpu.vector_store %arg20[%c0_1120, %c30_1121, %c416_1122], %469 {strides = array<i32>} : memref<1x36x512xbf16, #tpu.memory_space<vmem>>, vector<1x6x32xbf16>,
    %c0_1123 = arith.constant 0 : index
    %c196 = arith.constant 196 : index
    %c0_1124 = arith.constant 0 : index
    %471 = vector.load %arg19[%c0_1123, %c196, %c0_1124] : memref<1x225x32xbf16, #tpu.memory_space<vmem>>, vector<1x6x32xbf16>
    %c0_1125 = arith.constant 0 : index
    %c30_1126 = arith.constant 30 : index
    %c448_1127 = arith.constant 448 : index
    %472 = vector.load %arg20[%c0_1125, %c30_1126, %c448_1127] : memref<1x36x512xbf16, #tpu.memory_space<vmem>>, vector<1x6x32xbf16>
    tpu.vector_store %arg20[%c0_1125, %c30_1126, %c448_1127], %471 {strides = array<i32>} : memref<1x36x512xbf16, #tpu.memory_space<vmem>>, vector<1x6x32xbf16>,
    %c0_1128 = arith.constant 0 : index
    %c204 = arith.constant 204 : index
    %c0_1129 = arith.constant 0 : index
    %473 = vector.load %arg19[%c0_1128, %c204, %c0_1129] : memref<1x225x32xbf16, #tpu.memory_space<vmem>>, vector<1x6x32xbf16>
    %c0_1130 = arith.constant 0 : index
    %c30_1131 = arith.constant 30 : index
    %c480_1132 = arith.constant 480 : index
    %474 = vector.load %arg20[%c0_1130, %c30_1131, %c480_1132] : memref<1x36x512xbf16, #tpu.memory_space<vmem>>, vector<1x6x32xbf16>
    tpu.vector_store %arg20[%c0_1130, %c30_1131, %c480_1132], %473 {strides = array<i32>} : memref<1x36x512xbf16, #tpu.memory_space<vmem>>, vector<1x6x32xbf16>,
    %c0_1133 = arith.constant 0 : index
    %c0_1134 = arith.constant 0 : index
    %475 = vector.load %arg4[%c0_1133, %c0_1134] : memref<512x64xbf16, #tpu.memory_space<vmem>>, vector<512x64xbf16>
    %c0_1135 = arith.constant 0 : index
    %c0_1136 = arith.constant 0 : index
    %476 = vector.load %arg5[%c0_1135, %c0_1136] : memref<1x64xf32, #tpu.memory_space<vmem>>, vector<1x64xf32>
    %c0_1137 = arith.constant 0 : index
    %c0_1138 = arith.constant 0 : index
    %c0_1139 = arith.constant 0 : index
    %477 = vector.load %arg20[%c0_1137, %c0_1138, %c0_1139] : memref<1x36x512xbf16, #tpu.memory_space<vmem>>, vector<1x36x512xbf16>
    %478 = vector.shape_cast %477 : vector<1x36x512xbf16> to vector<36x512xbf16>
    %cst_1140 = arith.constant dense<0.000000e+00> : vector<36x64xf32>
    %479 = tpu.matmul %478, %475, %cst_1140 {dimension_numbers = #tpu.dot_dimension_numbers<[1], [0], [0], [1], [0, 0, 1, 1], [], []>} : vector<36x512xbf16>, vector<512x64xbf16>, vector<36x64xf32> -> vector<36x64xf32>
    %480 = vector.broadcast %476 : vector<1x64xf32> to vector<36x64xf32>
    %481 = arith.addf %479, %480 : vector<36x64xf32>
    %cst_1141 = arith.constant 0.000000e+00 : f32
    %482 = vector.broadcast %cst_1141 : f32 to vector<36x64xf32>
    %483 = arith.maximumf %481, %482 : vector<36x64xf32>
    %484 = arith.truncf %483 : vector<36x64xf32> to vector<36x64xbf16>
    %c0_1142 = arith.constant 0 : index
    %c0_1143 = arith.constant 0 : index
    %c0_1144 = arith.constant 0 : index
    %485 = vector.load %arg21[%c0_1142, %c0_1143, %c0_1144] : memref<1x36x64xbf16, #tpu.memory_space<vmem>>, vector<1x36x64xbf16>
    %486 = vector.shape_cast %485 : vector<1x36x64xbf16> to vector<36x64xbf16>
    %487 = vector.shape_cast %484 : vector<36x64xbf16> to vector<1x36x64xbf16>
    tpu.vector_store %arg21[%c0_1142, %c0_1143, %c0_1144], %487 {strides = array<i32>} : memref<1x36x64xbf16, #tpu.memory_space<vmem>>, vector<1x36x64xbf16>,
    %c0_1145 = arith.constant 0 : index
    %c0_1146 = arith.constant 0 : index
    %c0_1147 = arith.constant 0 : index
    %488 = vector.load %arg21[%c0_1145, %c0_1146, %c0_1147] : memref<1x36x64xbf16, #tpu.memory_space<vmem>>, vector<1x4x64xbf16>
    %c0_1148 = arith.constant 0 : index
    %c0_1149 = arith.constant 0 : index
    %c0_1150 = arith.constant 0 : index
    %489 = vector.load %arg22[%c0_1148, %c0_1149, %c0_1150] : memref<1x16x576xbf16, #tpu.memory_space<vmem>>, vector<1x4x64xbf16>
    tpu.vector_store %arg22[%c0_1148, %c0_1149, %c0_1150], %488 {strides = array<i32>} : memref<1x16x576xbf16, #tpu.memory_space<vmem>>, vector<1x4x64xbf16>,
    %c0_1151 = arith.constant 0 : index
    %c1_1152 = arith.constant 1 : index
    %c0_1153 = arith.constant 0 : index
    %490 = vector.load %arg21[%c0_1151, %c1_1152, %c0_1153] : memref<1x36x64xbf16, #tpu.memory_space<vmem>>, vector<1x4x64xbf16>
    %c0_1154 = arith.constant 0 : index
    %c0_1155 = arith.constant 0 : index
    %c64_1156 = arith.constant 64 : index
    %491 = vector.load %arg22[%c0_1154, %c0_1155, %c64_1156] : memref<1x16x576xbf16, #tpu.memory_space<vmem>>, vector<1x4x64xbf16>
    tpu.vector_store %arg22[%c0_1154, %c0_1155, %c64_1156], %490 {strides = array<i32>} : memref<1x16x576xbf16, #tpu.memory_space<vmem>>, vector<1x4x64xbf16>,
    %c0_1157 = arith.constant 0 : index
    %c2_1158 = arith.constant 2 : index
    %c0_1159 = arith.constant 0 : index
    %492 = vector.load %arg21[%c0_1157, %c2_1158, %c0_1159] : memref<1x36x64xbf16, #tpu.memory_space<vmem>>, vector<1x4x64xbf16>
    %c0_1160 = arith.constant 0 : index
    %c0_1161 = arith.constant 0 : index
    %c128_1162 = arith.constant 128 : index
    %493 = vector.load %arg22[%c0_1160, %c0_1161, %c128_1162] : memref<1x16x576xbf16, #tpu.memory_space<vmem>>, vector<1x4x64xbf16>
    tpu.vector_store %arg22[%c0_1160, %c0_1161, %c128_1162], %492 {strides = array<i32>} : memref<1x16x576xbf16, #tpu.memory_space<vmem>>, vector<1x4x64xbf16>,
    %c0_1163 = arith.constant 0 : index
    %c6_1164 = arith.constant 6 : index
    %c0_1165 = arith.constant 0 : index
    %494 = vector.load %arg21[%c0_1163, %c6_1164, %c0_1165] : memref<1x36x64xbf16, #tpu.memory_space<vmem>>, vector<1x4x64xbf16>
    %c0_1166 = arith.constant 0 : index
    %c0_1167 = arith.constant 0 : index
    %c192_1168 = arith.constant 192 : index
    %495 = vector.load %arg22[%c0_1166, %c0_1167, %c192_1168] : memref<1x16x576xbf16, #tpu.memory_space<vmem>>, vector<1x4x64xbf16>
    tpu.vector_store %arg22[%c0_1166, %c0_1167, %c192_1168], %494 {strides = array<i32>} : memref<1x16x576xbf16, #tpu.memory_space<vmem>>, vector<1x4x64xbf16>,
    %c0_1169 = arith.constant 0 : index
    %c7_1170 = arith.constant 7 : index
    %c0_1171 = arith.constant 0 : index
    %496 = vector.load %arg21[%c0_1169, %c7_1170, %c0_1171] : memref<1x36x64xbf16, #tpu.memory_space<vmem>>, vector<1x4x64xbf16>
    %c0_1172 = arith.constant 0 : index
    %c0_1173 = arith.constant 0 : index
    %c256_1174 = arith.constant 256 : index
    %497 = vector.load %arg22[%c0_1172, %c0_1173, %c256_1174] : memref<1x16x576xbf16, #tpu.memory_space<vmem>>, vector<1x4x64xbf16>
    tpu.vector_store %arg22[%c0_1172, %c0_1173, %c256_1174], %496 {strides = array<i32>} : memref<1x16x576xbf16, #tpu.memory_space<vmem>>, vector<1x4x64xbf16>,
    %c0_1175 = arith.constant 0 : index
    %c8_1176 = arith.constant 8 : index
    %c0_1177 = arith.constant 0 : index
    %498 = vector.load %arg21[%c0_1175, %c8_1176, %c0_1177] : memref<1x36x64xbf16, #tpu.memory_space<vmem>>, vector<1x4x64xbf16>
    %c0_1178 = arith.constant 0 : index
    %c0_1179 = arith.constant 0 : index
    %c320_1180 = arith.constant 320 : index
    %499 = vector.load %arg22[%c0_1178, %c0_1179, %c320_1180] : memref<1x16x576xbf16, #tpu.memory_space<vmem>>, vector<1x4x64xbf16>
    tpu.vector_store %arg22[%c0_1178, %c0_1179, %c320_1180], %498 {strides = array<i32>} : memref<1x16x576xbf16, #tpu.memory_space<vmem>>, vector<1x4x64xbf16>,
    %c0_1181 = arith.constant 0 : index
    %c12_1182 = arith.constant 12 : index
    %c0_1183 = arith.constant 0 : index
    %500 = vector.load %arg21[%c0_1181, %c12_1182, %c0_1183] : memref<1x36x64xbf16, #tpu.memory_space<vmem>>, vector<1x4x64xbf16>
    %c0_1184 = arith.constant 0 : index
    %c0_1185 = arith.constant 0 : index
    %c384_1186 = arith.constant 384 : index
    %501 = vector.load %arg22[%c0_1184, %c0_1185, %c384_1186] : memref<1x16x576xbf16, #tpu.memory_space<vmem>>, vector<1x4x64xbf16>
    tpu.vector_store %arg22[%c0_1184, %c0_1185, %c384_1186], %500 {strides = array<i32>} : memref<1x16x576xbf16, #tpu.memory_space<vmem>>, vector<1x4x64xbf16>,
    %c0_1187 = arith.constant 0 : index
    %c13_1188 = arith.constant 13 : index
    %c0_1189 = arith.constant 0 : index
    %502 = vector.load %arg21[%c0_1187, %c13_1188, %c0_1189] : memref<1x36x64xbf16, #tpu.memory_space<vmem>>, vector<1x4x64xbf16>
    %c0_1190 = arith.constant 0 : index
    %c0_1191 = arith.constant 0 : index
    %c448_1192 = arith.constant 448 : index
    %503 = vector.load %arg22[%c0_1190, %c0_1191, %c448_1192] : memref<1x16x576xbf16, #tpu.memory_space<vmem>>, vector<1x4x64xbf16>
    tpu.vector_store %arg22[%c0_1190, %c0_1191, %c448_1192], %502 {strides = array<i32>} : memref<1x16x576xbf16, #tpu.memory_space<vmem>>, vector<1x4x64xbf16>,
    %c0_1193 = arith.constant 0 : index
    %c14_1194 = arith.constant 14 : index
    %c0_1195 = arith.constant 0 : index
    %504 = vector.load %arg21[%c0_1193, %c14_1194, %c0_1195] : memref<1x36x64xbf16, #tpu.memory_space<vmem>>, vector<1x4x64xbf16>
    %c0_1196 = arith.constant 0 : index
    %c0_1197 = arith.constant 0 : index
    %c512 = arith.constant 512 : index
    %505 = vector.load %arg22[%c0_1196, %c0_1197, %c512] : memref<1x16x576xbf16, #tpu.memory_space<vmem>>, vector<1x4x64xbf16>
    tpu.vector_store %arg22[%c0_1196, %c0_1197, %c512], %504 {strides = array<i32>} : memref<1x16x576xbf16, #tpu.memory_space<vmem>>, vector<1x4x64xbf16>,
    %c0_1198 = arith.constant 0 : index
    %c6_1199 = arith.constant 6 : index
    %c0_1200 = arith.constant 0 : index
    %506 = vector.load %arg21[%c0_1198, %c6_1199, %c0_1200] : memref<1x36x64xbf16, #tpu.memory_space<vmem>>, vector<1x4x64xbf16>
    %c0_1201 = arith.constant 0 : index
    %c4_1202 = arith.constant 4 : index
    %c0_1203 = arith.constant 0 : index
    %507 = vector.load %arg22[%c0_1201, %c4_1202, %c0_1203] : memref<1x16x576xbf16, #tpu.memory_space<vmem>>, vector<1x4x64xbf16>
    tpu.vector_store %arg22[%c0_1201, %c4_1202, %c0_1203], %506 {strides = array<i32>} : memref<1x16x576xbf16, #tpu.memory_space<vmem>>, vector<1x4x64xbf16>,
    %c0_1204 = arith.constant 0 : index
    %c7_1205 = arith.constant 7 : index
    %c0_1206 = arith.constant 0 : index
    %508 = vector.load %arg21[%c0_1204, %c7_1205, %c0_1206] : memref<1x36x64xbf16, #tpu.memory_space<vmem>>, vector<1x4x64xbf16>
    %c0_1207 = arith.constant 0 : index
    %c4_1208 = arith.constant 4 : index
    %c64_1209 = arith.constant 64 : index
    %509 = vector.load %arg22[%c0_1207, %c4_1208, %c64_1209] : memref<1x16x576xbf16, #tpu.memory_space<vmem>>, vector<1x4x64xbf16>
    tpu.vector_store %arg22[%c0_1207, %c4_1208, %c64_1209], %508 {strides = array<i32>} : memref<1x16x576xbf16, #tpu.memory_space<vmem>>, vector<1x4x64xbf16>,
    %c0_1210 = arith.constant 0 : index
    %c8_1211 = arith.constant 8 : index
    %c0_1212 = arith.constant 0 : index
    %510 = vector.load %arg21[%c0_1210, %c8_1211, %c0_1212] : memref<1x36x64xbf16, #tpu.memory_space<vmem>>, vector<1x4x64xbf16>
    %c0_1213 = arith.constant 0 : index
    %c4_1214 = arith.constant 4 : index
    %c128_1215 = arith.constant 128 : index
    %511 = vector.load %arg22[%c0_1213, %c4_1214, %c128_1215] : memref<1x16x576xbf16, #tpu.memory_space<vmem>>, vector<1x4x64xbf16>
    tpu.vector_store %arg22[%c0_1213, %c4_1214, %c128_1215], %510 {strides = array<i32>} : memref<1x16x576xbf16, #tpu.memory_space<vmem>>, vector<1x4x64xbf16>,
    %c0_1216 = arith.constant 0 : index
    %c12_1217 = arith.constant 12 : index
    %c0_1218 = arith.constant 0 : index
    %512 = vector.load %arg21[%c0_1216, %c12_1217, %c0_1218] : memref<1x36x64xbf16, #tpu.memory_space<vmem>>, vector<1x4x64xbf16>
    %c0_1219 = arith.constant 0 : index
    %c4_1220 = arith.constant 4 : index
    %c192_1221 = arith.constant 192 : index
    %513 = vector.load %arg22[%c0_1219, %c4_1220, %c192_1221] : memref<1x16x576xbf16, #tpu.memory_space<vmem>>, vector<1x4x64xbf16>
    tpu.vector_store %arg22[%c0_1219, %c4_1220, %c192_1221], %512 {strides = array<i32>} : memref<1x16x576xbf16, #tpu.memory_space<vmem>>, vector<1x4x64xbf16>,
    %c0_1222 = arith.constant 0 : index
    %c13_1223 = arith.constant 13 : index
    %c0_1224 = arith.constant 0 : index
    %514 = vector.load %arg21[%c0_1222, %c13_1223, %c0_1224] : memref<1x36x64xbf16, #tpu.memory_space<vmem>>, vector<1x4x64xbf16>
    %c0_1225 = arith.constant 0 : index
    %c4_1226 = arith.constant 4 : index
    %c256_1227 = arith.constant 256 : index
    %515 = vector.load %arg22[%c0_1225, %c4_1226, %c256_1227] : memref<1x16x576xbf16, #tpu.memory_space<vmem>>, vector<1x4x64xbf16>
    tpu.vector_store %arg22[%c0_1225, %c4_1226, %c256_1227], %514 {strides = array<i32>} : memref<1x16x576xbf16, #tpu.memory_space<vmem>>, vector<1x4x64xbf16>,
    %c0_1228 = arith.constant 0 : index
    %c14_1229 = arith.constant 14 : index
    %c0_1230 = arith.constant 0 : index
    %516 = vector.load %arg21[%c0_1228, %c14_1229, %c0_1230] : memref<1x36x64xbf16, #tpu.memory_space<vmem>>, vector<1x4x64xbf16>
    %c0_1231 = arith.constant 0 : index
    %c4_1232 = arith.constant 4 : index
    %c320_1233 = arith.constant 320 : index
    %517 = vector.load %arg22[%c0_1231, %c4_1232, %c320_1233] : memref<1x16x576xbf16, #tpu.memory_space<vmem>>, vector<1x4x64xbf16>
    tpu.vector_store %arg22[%c0_1231, %c4_1232, %c320_1233], %516 {strides = array<i32>} : memref<1x16x576xbf16, #tpu.memory_space<vmem>>, vector<1x4x64xbf16>,
    %c0_1234 = arith.constant 0 : index
    %c18_1235 = arith.constant 18 : index
    %c0_1236 = arith.constant 0 : index
    %518 = vector.load %arg21[%c0_1234, %c18_1235, %c0_1236] : memref<1x36x64xbf16, #tpu.memory_space<vmem>>, vector<1x4x64xbf16>
    %c0_1237 = arith.constant 0 : index
    %c4_1238 = arith.constant 4 : index
    %c384_1239 = arith.constant 384 : index
    %519 = vector.load %arg22[%c0_1237, %c4_1238, %c384_1239] : memref<1x16x576xbf16, #tpu.memory_space<vmem>>, vector<1x4x64xbf16>
    tpu.vector_store %arg22[%c0_1237, %c4_1238, %c384_1239], %518 {strides = array<i32>} : memref<1x16x576xbf16, #tpu.memory_space<vmem>>, vector<1x4x64xbf16>,
    %c0_1240 = arith.constant 0 : index
    %c19 = arith.constant 19 : index
    %c0_1241 = arith.constant 0 : index
    %520 = vector.load %arg21[%c0_1240, %c19, %c0_1241] : memref<1x36x64xbf16, #tpu.memory_space<vmem>>, vector<1x4x64xbf16>
    %c0_1242 = arith.constant 0 : index
    %c4_1243 = arith.constant 4 : index
    %c448_1244 = arith.constant 448 : index
    %521 = vector.load %arg22[%c0_1242, %c4_1243, %c448_1244] : memref<1x16x576xbf16, #tpu.memory_space<vmem>>, vector<1x4x64xbf16>
    tpu.vector_store %arg22[%c0_1242, %c4_1243, %c448_1244], %520 {strides = array<i32>} : memref<1x16x576xbf16, #tpu.memory_space<vmem>>, vector<1x4x64xbf16>,
    %c0_1245 = arith.constant 0 : index
    %c20 = arith.constant 20 : index
    %c0_1246 = arith.constant 0 : index
    %522 = vector.load %arg21[%c0_1245, %c20, %c0_1246] : memref<1x36x64xbf16, #tpu.memory_space<vmem>>, vector<1x4x64xbf16>
    %c0_1247 = arith.constant 0 : index
    %c4_1248 = arith.constant 4 : index
    %c512_1249 = arith.constant 512 : index
    %523 = vector.load %arg22[%c0_1247, %c4_1248, %c512_1249] : memref<1x16x576xbf16, #tpu.memory_space<vmem>>, vector<1x4x64xbf16>
    tpu.vector_store %arg22[%c0_1247, %c4_1248, %c512_1249], %522 {strides = array<i32>} : memref<1x16x576xbf16, #tpu.memory_space<vmem>>, vector<1x4x64xbf16>,
    %c0_1250 = arith.constant 0 : index
    %c12_1251 = arith.constant 12 : index
    %c0_1252 = arith.constant 0 : index
    %524 = vector.load %arg21[%c0_1250, %c12_1251, %c0_1252] : memref<1x36x64xbf16, #tpu.memory_space<vmem>>, vector<1x4x64xbf16>
    %c0_1253 = arith.constant 0 : index
    %c8_1254 = arith.constant 8 : index
    %c0_1255 = arith.constant 0 : index
    %525 = vector.load %arg22[%c0_1253, %c8_1254, %c0_1255] : memref<1x16x576xbf16, #tpu.memory_space<vmem>>, vector<1x4x64xbf16>
    tpu.vector_store %arg22[%c0_1253, %c8_1254, %c0_1255], %524 {strides = array<i32>} : memref<1x16x576xbf16, #tpu.memory_space<vmem>>, vector<1x4x64xbf16>,
    %c0_1256 = arith.constant 0 : index
    %c13_1257 = arith.constant 13 : index
    %c0_1258 = arith.constant 0 : index
    %526 = vector.load %arg21[%c0_1256, %c13_1257, %c0_1258] : memref<1x36x64xbf16, #tpu.memory_space<vmem>>, vector<1x4x64xbf16>
    %c0_1259 = arith.constant 0 : index
    %c8_1260 = arith.constant 8 : index
    %c64_1261 = arith.constant 64 : index
    %527 = vector.load %arg22[%c0_1259, %c8_1260, %c64_1261] : memref<1x16x576xbf16, #tpu.memory_space<vmem>>, vector<1x4x64xbf16>
    tpu.vector_store %arg22[%c0_1259, %c8_1260, %c64_1261], %526 {strides = array<i32>} : memref<1x16x576xbf16, #tpu.memory_space<vmem>>, vector<1x4x64xbf16>,
    %c0_1262 = arith.constant 0 : index
    %c14_1263 = arith.constant 14 : index
    %c0_1264 = arith.constant 0 : index
    %528 = vector.load %arg21[%c0_1262, %c14_1263, %c0_1264] : memref<1x36x64xbf16, #tpu.memory_space<vmem>>, vector<1x4x64xbf16>
    %c0_1265 = arith.constant 0 : index
    %c8_1266 = arith.constant 8 : index
    %c128_1267 = arith.constant 128 : index
    %529 = vector.load %arg22[%c0_1265, %c8_1266, %c128_1267] : memref<1x16x576xbf16, #tpu.memory_space<vmem>>, vector<1x4x64xbf16>
    tpu.vector_store %arg22[%c0_1265, %c8_1266, %c128_1267], %528 {strides = array<i32>} : memref<1x16x576xbf16, #tpu.memory_space<vmem>>, vector<1x4x64xbf16>,
    %c0_1268 = arith.constant 0 : index
    %c18_1269 = arith.constant 18 : index
    %c0_1270 = arith.constant 0 : index
    %530 = vector.load %arg21[%c0_1268, %c18_1269, %c0_1270] : memref<1x36x64xbf16, #tpu.memory_space<vmem>>, vector<1x4x64xbf16>
    %c0_1271 = arith.constant 0 : index
    %c8_1272 = arith.constant 8 : index
    %c192_1273 = arith.constant 192 : index
    %531 = vector.load %arg22[%c0_1271, %c8_1272, %c192_1273] : memref<1x16x576xbf16, #tpu.memory_space<vmem>>, vector<1x4x64xbf16>
    tpu.vector_store %arg22[%c0_1271, %c8_1272, %c192_1273], %530 {strides = array<i32>} : memref<1x16x576xbf16, #tpu.memory_space<vmem>>, vector<1x4x64xbf16>,
    %c0_1274 = arith.constant 0 : index
    %c19_1275 = arith.constant 19 : index
    %c0_1276 = arith.constant 0 : index
    %532 = vector.load %arg21[%c0_1274, %c19_1275, %c0_1276] : memref<1x36x64xbf16, #tpu.memory_space<vmem>>, vector<1x4x64xbf16>
    %c0_1277 = arith.constant 0 : index
    %c8_1278 = arith.constant 8 : index
    %c256_1279 = arith.constant 256 : index
    %533 = vector.load %arg22[%c0_1277, %c8_1278, %c256_1279] : memref<1x16x576xbf16, #tpu.memory_space<vmem>>, vector<1x4x64xbf16>
    tpu.vector_store %arg22[%c0_1277, %c8_1278, %c256_1279], %532 {strides = array<i32>} : memref<1x16x576xbf16, #tpu.memory_space<vmem>>, vector<1x4x64xbf16>,
    %c0_1280 = arith.constant 0 : index
    %c20_1281 = arith.constant 20 : index
    %c0_1282 = arith.constant 0 : index
    %534 = vector.load %arg21[%c0_1280, %c20_1281, %c0_1282] : memref<1x36x64xbf16, #tpu.memory_space<vmem>>, vector<1x4x64xbf16>
    %c0_1283 = arith.constant 0 : index
    %c8_1284 = arith.constant 8 : index
    %c320_1285 = arith.constant 320 : index
    %535 = vector.load %arg22[%c0_1283, %c8_1284, %c320_1285] : memref<1x16x576xbf16, #tpu.memory_space<vmem>>, vector<1x4x64xbf16>
    tpu.vector_store %arg22[%c0_1283, %c8_1284, %c320_1285], %534 {strides = array<i32>} : memref<1x16x576xbf16, #tpu.memory_space<vmem>>, vector<1x4x64xbf16>,
    %c0_1286 = arith.constant 0 : index
    %c24_1287 = arith.constant 24 : index
    %c0_1288 = arith.constant 0 : index
    %536 = vector.load %arg21[%c0_1286, %c24_1287, %c0_1288] : memref<1x36x64xbf16, #tpu.memory_space<vmem>>, vector<1x4x64xbf16>
    %c0_1289 = arith.constant 0 : index
    %c8_1290 = arith.constant 8 : index
    %c384_1291 = arith.constant 384 : index
    %537 = vector.load %arg22[%c0_1289, %c8_1290, %c384_1291] : memref<1x16x576xbf16, #tpu.memory_space<vmem>>, vector<1x4x64xbf16>
    tpu.vector_store %arg22[%c0_1289, %c8_1290, %c384_1291], %536 {strides = array<i32>} : memref<1x16x576xbf16, #tpu.memory_space<vmem>>, vector<1x4x64xbf16>,
    %c0_1292 = arith.constant 0 : index
    %c25 = arith.constant 25 : index
    %c0_1293 = arith.constant 0 : index
    %538 = vector.load %arg21[%c0_1292, %c25, %c0_1293] : memref<1x36x64xbf16, #tpu.memory_space<vmem>>, vector<1x4x64xbf16>
    %c0_1294 = arith.constant 0 : index
    %c8_1295 = arith.constant 8 : index
    %c448_1296 = arith.constant 448 : index
    %539 = vector.load %arg22[%c0_1294, %c8_1295, %c448_1296] : memref<1x16x576xbf16, #tpu.memory_space<vmem>>, vector<1x4x64xbf16>
    tpu.vector_store %arg22[%c0_1294, %c8_1295, %c448_1296], %538 {strides = array<i32>} : memref<1x16x576xbf16, #tpu.memory_space<vmem>>, vector<1x4x64xbf16>,
    %c0_1297 = arith.constant 0 : index
    %c26 = arith.constant 26 : index
    %c0_1298 = arith.constant 0 : index
    %540 = vector.load %arg21[%c0_1297, %c26, %c0_1298] : memref<1x36x64xbf16, #tpu.memory_space<vmem>>, vector<1x4x64xbf16>
    %c0_1299 = arith.constant 0 : index
    %c8_1300 = arith.constant 8 : index
    %c512_1301 = arith.constant 512 : index
    %541 = vector.load %arg22[%c0_1299, %c8_1300, %c512_1301] : memref<1x16x576xbf16, #tpu.memory_space<vmem>>, vector<1x4x64xbf16>
    tpu.vector_store %arg22[%c0_1299, %c8_1300, %c512_1301], %540 {strides = array<i32>} : memref<1x16x576xbf16, #tpu.memory_space<vmem>>, vector<1x4x64xbf16>,
    %c0_1302 = arith.constant 0 : index
    %c18_1303 = arith.constant 18 : index
    %c0_1304 = arith.constant 0 : index
    %542 = vector.load %arg21[%c0_1302, %c18_1303, %c0_1304] : memref<1x36x64xbf16, #tpu.memory_space<vmem>>, vector<1x4x64xbf16>
    %c0_1305 = arith.constant 0 : index
    %c12_1306 = arith.constant 12 : index
    %c0_1307 = arith.constant 0 : index
    %543 = vector.load %arg22[%c0_1305, %c12_1306, %c0_1307] : memref<1x16x576xbf16, #tpu.memory_space<vmem>>, vector<1x4x64xbf16>
    tpu.vector_store %arg22[%c0_1305, %c12_1306, %c0_1307], %542 {strides = array<i32>} : memref<1x16x576xbf16, #tpu.memory_space<vmem>>, vector<1x4x64xbf16>,
    %c0_1308 = arith.constant 0 : index
    %c19_1309 = arith.constant 19 : index
    %c0_1310 = arith.constant 0 : index
    %544 = vector.load %arg21[%c0_1308, %c19_1309, %c0_1310] : memref<1x36x64xbf16, #tpu.memory_space<vmem>>, vector<1x4x64xbf16>
    %c0_1311 = arith.constant 0 : index
    %c12_1312 = arith.constant 12 : index
    %c64_1313 = arith.constant 64 : index
    %545 = vector.load %arg22[%c0_1311, %c12_1312, %c64_1313] : memref<1x16x576xbf16, #tpu.memory_space<vmem>>, vector<1x4x64xbf16>
    tpu.vector_store %arg22[%c0_1311, %c12_1312, %c64_1313], %544 {strides = array<i32>} : memref<1x16x576xbf16, #tpu.memory_space<vmem>>, vector<1x4x64xbf16>,
    %c0_1314 = arith.constant 0 : index
    %c20_1315 = arith.constant 20 : index
    %c0_1316 = arith.constant 0 : index
    %546 = vector.load %arg21[%c0_1314, %c20_1315, %c0_1316] : memref<1x36x64xbf16, #tpu.memory_space<vmem>>, vector<1x4x64xbf16>
    %c0_1317 = arith.constant 0 : index
    %c12_1318 = arith.constant 12 : index
    %c128_1319 = arith.constant 128 : index
    %547 = vector.load %arg22[%c0_1317, %c12_1318, %c128_1319] : memref<1x16x576xbf16, #tpu.memory_space<vmem>>, vector<1x4x64xbf16>
    tpu.vector_store %arg22[%c0_1317, %c12_1318, %c128_1319], %546 {strides = array<i32>} : memref<1x16x576xbf16, #tpu.memory_space<vmem>>, vector<1x4x64xbf16>,
    %c0_1320 = arith.constant 0 : index
    %c24_1321 = arith.constant 24 : index
    %c0_1322 = arith.constant 0 : index
    %548 = vector.load %arg21[%c0_1320, %c24_1321, %c0_1322] : memref<1x36x64xbf16, #tpu.memory_space<vmem>>, vector<1x4x64xbf16>
    %c0_1323 = arith.constant 0 : index
    %c12_1324 = arith.constant 12 : index
    %c192_1325 = arith.constant 192 : index
    %549 = vector.load %arg22[%c0_1323, %c12_1324, %c192_1325] : memref<1x16x576xbf16, #tpu.memory_space<vmem>>, vector<1x4x64xbf16>
    tpu.vector_store %arg22[%c0_1323, %c12_1324, %c192_1325], %548 {strides = array<i32>} : memref<1x16x576xbf16, #tpu.memory_space<vmem>>, vector<1x4x64xbf16>,
    %c0_1326 = arith.constant 0 : index
    %c25_1327 = arith.constant 25 : index
    %c0_1328 = arith.constant 0 : index
    %550 = vector.load %arg21[%c0_1326, %c25_1327, %c0_1328] : memref<1x36x64xbf16, #tpu.memory_space<vmem>>, vector<1x4x64xbf16>
    %c0_1329 = arith.constant 0 : index
    %c12_1330 = arith.constant 12 : index
    %c256_1331 = arith.constant 256 : index
    %551 = vector.load %arg22[%c0_1329, %c12_1330, %c256_1331] : memref<1x16x576xbf16, #tpu.memory_space<vmem>>, vector<1x4x64xbf16>
    tpu.vector_store %arg22[%c0_1329, %c12_1330, %c256_1331], %550 {strides = array<i32>} : memref<1x16x576xbf16, #tpu.memory_space<vmem>>, vector<1x4x64xbf16>,
    %c0_1332 = arith.constant 0 : index
    %c26_1333 = arith.constant 26 : index
    %c0_1334 = arith.constant 0 : index
    %552 = vector.load %arg21[%c0_1332, %c26_1333, %c0_1334] : memref<1x36x64xbf16, #tpu.memory_space<vmem>>, vector<1x4x64xbf16>
    %c0_1335 = arith.constant 0 : index
    %c12_1336 = arith.constant 12 : index
    %c320_1337 = arith.constant 320 : index
    %553 = vector.load %arg22[%c0_1335, %c12_1336, %c320_1337] : memref<1x16x576xbf16, #tpu.memory_space<vmem>>, vector<1x4x64xbf16>
    tpu.vector_store %arg22[%c0_1335, %c12_1336, %c320_1337], %552 {strides = array<i32>} : memref<1x16x576xbf16, #tpu.memory_space<vmem>>, vector<1x4x64xbf16>,
    %c0_1338 = arith.constant 0 : index
    %c30_1339 = arith.constant 30 : index
    %c0_1340 = arith.constant 0 : index
    %554 = vector.load %arg21[%c0_1338, %c30_1339, %c0_1340] : memref<1x36x64xbf16, #tpu.memory_space<vmem>>, vector<1x4x64xbf16>
    %c0_1341 = arith.constant 0 : index
    %c12_1342 = arith.constant 12 : index
    %c384_1343 = arith.constant 384 : index
    %555 = vector.load %arg22[%c0_1341, %c12_1342, %c384_1343] : memref<1x16x576xbf16, #tpu.memory_space<vmem>>, vector<1x4x64xbf16>
    tpu.vector_store %arg22[%c0_1341, %c12_1342, %c384_1343], %554 {strides = array<i32>} : memref<1x16x576xbf16, #tpu.memory_space<vmem>>, vector<1x4x64xbf16>,
    %c0_1344 = arith.constant 0 : index
    %c31_1345 = arith.constant 31 : index
    %c0_1346 = arith.constant 0 : index
    %556 = vector.load %arg21[%c0_1344, %c31_1345, %c0_1346] : memref<1x36x64xbf16, #tpu.memory_space<vmem>>, vector<1x4x64xbf16>
    %c0_1347 = arith.constant 0 : index
    %c12_1348 = arith.constant 12 : index
    %c448_1349 = arith.constant 448 : index
    %557 = vector.load %arg22[%c0_1347, %c12_1348, %c448_1349] : memref<1x16x576xbf16, #tpu.memory_space<vmem>>, vector<1x4x64xbf16>
    tpu.vector_store %arg22[%c0_1347, %c12_1348, %c448_1349], %556 {strides = array<i32>} : memref<1x16x576xbf16, #tpu.memory_space<vmem>>, vector<1x4x64xbf16>,
    %c0_1350 = arith.constant 0 : index
    %c32_1351 = arith.constant 32 : index
    %c0_1352 = arith.constant 0 : index
    %558 = vector.load %arg21[%c0_1350, %c32_1351, %c0_1352] : memref<1x36x64xbf16, #tpu.memory_space<vmem>>, vector<1x4x64xbf16>
    %c0_1353 = arith.constant 0 : index
    %c12_1354 = arith.constant 12 : index
    %c512_1355 = arith.constant 512 : index
    %559 = vector.load %arg22[%c0_1353, %c12_1354, %c512_1355] : memref<1x16x576xbf16, #tpu.memory_space<vmem>>, vector<1x4x64xbf16>
    tpu.vector_store %arg22[%c0_1353, %c12_1354, %c512_1355], %558 {strides = array<i32>} : memref<1x16x576xbf16, #tpu.memory_space<vmem>>, vector<1x4x64xbf16>,
    %c0_1356 = arith.constant 0 : index
    %c0_1357 = arith.constant 0 : index
    %560 = vector.load %arg6[%c0_1356, %c0_1357] : memref<576x32xbf16, #tpu.memory_space<vmem>>, vector<576x32xbf16>
    %c0_1358 = arith.constant 0 : index
    %c0_1359 = arith.constant 0 : index
    %561 = vector.load %arg7[%c0_1358, %c0_1359] : memref<1x32xf32, #tpu.memory_space<vmem>>, vector<1x32xf32>
    %c0_1360 = arith.constant 0 : index
    %c0_1361 = arith.constant 0 : index
    %c0_1362 = arith.constant 0 : index
    %562 = vector.load %arg22[%c0_1360, %c0_1361, %c0_1362] : memref<1x16x576xbf16, #tpu.memory_space<vmem>>, vector<1x16x576xbf16>
    %563 = vector.shape_cast %562 : vector<1x16x576xbf16> to vector<16x576xbf16>
    %cst_1363 = arith.constant dense<0.000000e+00> : vector<16x32xf32>
    %564 = tpu.matmul %563, %560, %cst_1363 {dimension_numbers = #tpu.dot_dimension_numbers<[1], [0], [0], [1], [0, 0, 1, 1], [], []>} : vector<16x576xbf16>, vector<576x32xbf16>, vector<16x32xf32> -> vector<16x32xf32>
    %565 = vector.broadcast %561 : vector<1x32xf32> to vector<16x32xf32>
    %566 = arith.addf %564, %565 : vector<16x32xf32>
    %cst_1364 = arith.constant 0.000000e+00 : f32
    %567 = vector.broadcast %cst_1364 : f32 to vector<16x32xf32>
    %568 = arith.maximumf %566, %567 : vector<16x32xf32>
    %569 = arith.truncf %568 : vector<16x32xf32> to vector<16x32xbf16>
    %c0_1365 = arith.constant 0 : index
    %c0_1366 = arith.constant 0 : index
    %c0_1367 = arith.constant 0 : index
    %570 = vector.load %arg23[%c0_1365, %c0_1366, %c0_1367] : memref<1x16x32xbf16, #tpu.memory_space<vmem>>, vector<1x16x32xbf16>
    %571 = vector.shape_cast %570 : vector<1x16x32xbf16> to vector<16x32xbf16>
    %572 = vector.shape_cast %569 : vector<16x32xbf16> to vector<1x16x32xbf16>
    tpu.vector_store %arg23[%c0_1365, %c0_1366, %c0_1367], %572 {strides = array<i32>} : memref<1x16x32xbf16, #tpu.memory_space<vmem>>, vector<1x16x32xbf16>,
    %c0_1368 = arith.constant 0 : index
    %c0_1369 = arith.constant 0 : index
    %c0_1370 = arith.constant 0 : index
    %573 = vector.load %arg23[%c0_1368, %c0_1369, %c0_1370] : memref<1x16x32xbf16, #tpu.memory_space<vmem>>, vector<1x1x32xbf16>
    %574 = vector.shape_cast %573 : vector<1x1x32xbf16> to vector<1x32xbf16>
    %c0_1371 = arith.constant 0 : index
    %c0_1372 = arith.constant 0 : index
    %575 = vector.load %arg24[%c0_1371, %c0_1372] : memref<1x512xbf16, #tpu.memory_space<vmem>>, vector<1x32xbf16>
    tpu.vector_store %arg24[%c0_1371, %c0_1372], %574 {strides = array<i32>} : memref<1x512xbf16, #tpu.memory_space<vmem>>, vector<1x32xbf16>,
    %c0_1373 = arith.constant 0 : index
    %c1_1374 = arith.constant 1 : index
    %c0_1375 = arith.constant 0 : index
    %576 = vector.load %arg23[%c0_1373, %c1_1374, %c0_1375] : memref<1x16x32xbf16, #tpu.memory_space<vmem>>, vector<1x1x32xbf16>
    %577 = vector.shape_cast %576 : vector<1x1x32xbf16> to vector<1x32xbf16>
    %c0_1376 = arith.constant 0 : index
    %c32_1377 = arith.constant 32 : index
    %578 = vector.load %arg24[%c0_1376, %c32_1377] : memref<1x512xbf16, #tpu.memory_space<vmem>>, vector<1x32xbf16>
    tpu.vector_store %arg24[%c0_1376, %c32_1377], %577 {strides = array<i32>} : memref<1x512xbf16, #tpu.memory_space<vmem>>, vector<1x32xbf16>,
    %c0_1378 = arith.constant 0 : index
    %c2_1379 = arith.constant 2 : index
    %c0_1380 = arith.constant 0 : index
    %579 = vector.load %arg23[%c0_1378, %c2_1379, %c0_1380] : memref<1x16x32xbf16, #tpu.memory_space<vmem>>, vector<1x1x32xbf16>
    %580 = vector.shape_cast %579 : vector<1x1x32xbf16> to vector<1x32xbf16>
    %c0_1381 = arith.constant 0 : index
    %c64_1382 = arith.constant 64 : index
    %581 = vector.load %arg24[%c0_1381, %c64_1382] : memref<1x512xbf16, #tpu.memory_space<vmem>>, vector<1x32xbf16>
    tpu.vector_store %arg24[%c0_1381, %c64_1382], %580 {strides = array<i32>} : memref<1x512xbf16, #tpu.memory_space<vmem>>, vector<1x32xbf16>,
    %c0_1383 = arith.constant 0 : index
    %c3_1384 = arith.constant 3 : index
    %c0_1385 = arith.constant 0 : index
    %582 = vector.load %arg23[%c0_1383, %c3_1384, %c0_1385] : memref<1x16x32xbf16, #tpu.memory_space<vmem>>, vector<1x1x32xbf16>
    %583 = vector.shape_cast %582 : vector<1x1x32xbf16> to vector<1x32xbf16>
    %c0_1386 = arith.constant 0 : index
    %c96_1387 = arith.constant 96 : index
    %584 = vector.load %arg24[%c0_1386, %c96_1387] : memref<1x512xbf16, #tpu.memory_space<vmem>>, vector<1x32xbf16>
    tpu.vector_store %arg24[%c0_1386, %c96_1387], %583 {strides = array<i32>} : memref<1x512xbf16, #tpu.memory_space<vmem>>, vector<1x32xbf16>,
    %c0_1388 = arith.constant 0 : index
    %c4_1389 = arith.constant 4 : index
    %c0_1390 = arith.constant 0 : index
    %585 = vector.load %arg23[%c0_1388, %c4_1389, %c0_1390] : memref<1x16x32xbf16, #tpu.memory_space<vmem>>, vector<1x1x32xbf16>
    %586 = vector.shape_cast %585 : vector<1x1x32xbf16> to vector<1x32xbf16>
    %c0_1391 = arith.constant 0 : index
    %c128_1392 = arith.constant 128 : index
    %587 = vector.load %arg24[%c0_1391, %c128_1392] : memref<1x512xbf16, #tpu.memory_space<vmem>>, vector<1x32xbf16>
    tpu.vector_store %arg24[%c0_1391, %c128_1392], %586 {strides = array<i32>} : memref<1x512xbf16, #tpu.memory_space<vmem>>, vector<1x32xbf16>,
    %c0_1393 = arith.constant 0 : index
    %c5_1394 = arith.constant 5 : index
    %c0_1395 = arith.constant 0 : index
    %588 = vector.load %arg23[%c0_1393, %c5_1394, %c0_1395] : memref<1x16x32xbf16, #tpu.memory_space<vmem>>, vector<1x1x32xbf16>
    %589 = vector.shape_cast %588 : vector<1x1x32xbf16> to vector<1x32xbf16>
    %c0_1396 = arith.constant 0 : index
    %c160_1397 = arith.constant 160 : index
    %590 = vector.load %arg24[%c0_1396, %c160_1397] : memref<1x512xbf16, #tpu.memory_space<vmem>>, vector<1x32xbf16>
    tpu.vector_store %arg24[%c0_1396, %c160_1397], %589 {strides = array<i32>} : memref<1x512xbf16, #tpu.memory_space<vmem>>, vector<1x32xbf16>,
    %c0_1398 = arith.constant 0 : index
    %c6_1399 = arith.constant 6 : index
    %c0_1400 = arith.constant 0 : index
    %591 = vector.load %arg23[%c0_1398, %c6_1399, %c0_1400] : memref<1x16x32xbf16, #tpu.memory_space<vmem>>, vector<1x1x32xbf16>
    %592 = vector.shape_cast %591 : vector<1x1x32xbf16> to vector<1x32xbf16>
    %c0_1401 = arith.constant 0 : index
    %c192_1402 = arith.constant 192 : index
    %593 = vector.load %arg24[%c0_1401, %c192_1402] : memref<1x512xbf16, #tpu.memory_space<vmem>>, vector<1x32xbf16>
    tpu.vector_store %arg24[%c0_1401, %c192_1402], %592 {strides = array<i32>} : memref<1x512xbf16, #tpu.memory_space<vmem>>, vector<1x32xbf16>,
    %c0_1403 = arith.constant 0 : index
    %c7_1404 = arith.constant 7 : index
    %c0_1405 = arith.constant 0 : index
    %594 = vector.load %arg23[%c0_1403, %c7_1404, %c0_1405] : memref<1x16x32xbf16, #tpu.memory_space<vmem>>, vector<1x1x32xbf16>
    %595 = vector.shape_cast %594 : vector<1x1x32xbf16> to vector<1x32xbf16>
    %c0_1406 = arith.constant 0 : index
    %c224_1407 = arith.constant 224 : index
    %596 = vector.load %arg24[%c0_1406, %c224_1407] : memref<1x512xbf16, #tpu.memory_space<vmem>>, vector<1x32xbf16>
    tpu.vector_store %arg24[%c0_1406, %c224_1407], %595 {strides = array<i32>} : memref<1x512xbf16, #tpu.memory_space<vmem>>, vector<1x32xbf16>,
    %c0_1408 = arith.constant 0 : index
    %c8_1409 = arith.constant 8 : index
    %c0_1410 = arith.constant 0 : index
    %597 = vector.load %arg23[%c0_1408, %c8_1409, %c0_1410] : memref<1x16x32xbf16, #tpu.memory_space<vmem>>, vector<1x1x32xbf16>
    %598 = vector.shape_cast %597 : vector<1x1x32xbf16> to vector<1x32xbf16>
    %c0_1411 = arith.constant 0 : index
    %c256_1412 = arith.constant 256 : index
    %599 = vector.load %arg24[%c0_1411, %c256_1412] : memref<1x512xbf16, #tpu.memory_space<vmem>>, vector<1x32xbf16>
    tpu.vector_store %arg24[%c0_1411, %c256_1412], %598 {strides = array<i32>} : memref<1x512xbf16, #tpu.memory_space<vmem>>, vector<1x32xbf16>,
    %c0_1413 = arith.constant 0 : index
    %c9_1414 = arith.constant 9 : index
    %c0_1415 = arith.constant 0 : index
    %600 = vector.load %arg23[%c0_1413, %c9_1414, %c0_1415] : memref<1x16x32xbf16, #tpu.memory_space<vmem>>, vector<1x1x32xbf16>
    %601 = vector.shape_cast %600 : vector<1x1x32xbf16> to vector<1x32xbf16>
    %c0_1416 = arith.constant 0 : index
    %c288_1417 = arith.constant 288 : index
    %602 = vector.load %arg24[%c0_1416, %c288_1417] : memref<1x512xbf16, #tpu.memory_space<vmem>>, vector<1x32xbf16>
    tpu.vector_store %arg24[%c0_1416, %c288_1417], %601 {strides = array<i32>} : memref<1x512xbf16, #tpu.memory_space<vmem>>, vector<1x32xbf16>,
    %c0_1418 = arith.constant 0 : index
    %c10_1419 = arith.constant 10 : index
    %c0_1420 = arith.constant 0 : index
    %603 = vector.load %arg23[%c0_1418, %c10_1419, %c0_1420] : memref<1x16x32xbf16, #tpu.memory_space<vmem>>, vector<1x1x32xbf16>
    %604 = vector.shape_cast %603 : vector<1x1x32xbf16> to vector<1x32xbf16>
    %c0_1421 = arith.constant 0 : index
    %c320_1422 = arith.constant 320 : index
    %605 = vector.load %arg24[%c0_1421, %c320_1422] : memref<1x512xbf16, #tpu.memory_space<vmem>>, vector<1x32xbf16>
    tpu.vector_store %arg24[%c0_1421, %c320_1422], %604 {strides = array<i32>} : memref<1x512xbf16, #tpu.memory_space<vmem>>, vector<1x32xbf16>,
    %c0_1423 = arith.constant 0 : index
    %c11_1424 = arith.constant 11 : index
    %c0_1425 = arith.constant 0 : index
    %606 = vector.load %arg23[%c0_1423, %c11_1424, %c0_1425] : memref<1x16x32xbf16, #tpu.memory_space<vmem>>, vector<1x1x32xbf16>
    %607 = vector.shape_cast %606 : vector<1x1x32xbf16> to vector<1x32xbf16>
    %c0_1426 = arith.constant 0 : index
    %c352_1427 = arith.constant 352 : index
    %608 = vector.load %arg24[%c0_1426, %c352_1427] : memref<1x512xbf16, #tpu.memory_space<vmem>>, vector<1x32xbf16>
    tpu.vector_store %arg24[%c0_1426, %c352_1427], %607 {strides = array<i32>} : memref<1x512xbf16, #tpu.memory_space<vmem>>, vector<1x32xbf16>,
    %c0_1428 = arith.constant 0 : index
    %c12_1429 = arith.constant 12 : index
    %c0_1430 = arith.constant 0 : index
    %609 = vector.load %arg23[%c0_1428, %c12_1429, %c0_1430] : memref<1x16x32xbf16, #tpu.memory_space<vmem>>, vector<1x1x32xbf16>
    %610 = vector.shape_cast %609 : vector<1x1x32xbf16> to vector<1x32xbf16>
    %c0_1431 = arith.constant 0 : index
    %c384_1432 = arith.constant 384 : index
    %611 = vector.load %arg24[%c0_1431, %c384_1432] : memref<1x512xbf16, #tpu.memory_space<vmem>>, vector<1x32xbf16>
    tpu.vector_store %arg24[%c0_1431, %c384_1432], %610 {strides = array<i32>} : memref<1x512xbf16, #tpu.memory_space<vmem>>, vector<1x32xbf16>,
    %c0_1433 = arith.constant 0 : index
    %c13_1434 = arith.constant 13 : index
    %c0_1435 = arith.constant 0 : index
    %612 = vector.load %arg23[%c0_1433, %c13_1434, %c0_1435] : memref<1x16x32xbf16, #tpu.memory_space<vmem>>, vector<1x1x32xbf16>
    %613 = vector.shape_cast %612 : vector<1x1x32xbf16> to vector<1x32xbf16>
    %c0_1436 = arith.constant 0 : index
    %c416_1437 = arith.constant 416 : index
    %614 = vector.load %arg24[%c0_1436, %c416_1437] : memref<1x512xbf16, #tpu.memory_space<vmem>>, vector<1x32xbf16>
    tpu.vector_store %arg24[%c0_1436, %c416_1437], %613 {strides = array<i32>} : memref<1x512xbf16, #tpu.memory_space<vmem>>, vector<1x32xbf16>,
    %c0_1438 = arith.constant 0 : index
    %c14_1439 = arith.constant 14 : index
    %c0_1440 = arith.constant 0 : index
    %615 = vector.load %arg23[%c0_1438, %c14_1439, %c0_1440] : memref<1x16x32xbf16, #tpu.memory_space<vmem>>, vector<1x1x32xbf16>
    %616 = vector.shape_cast %615 : vector<1x1x32xbf16> to vector<1x32xbf16>
    %c0_1441 = arith.constant 0 : index
    %c448_1442 = arith.constant 448 : index
    %617 = vector.load %arg24[%c0_1441, %c448_1442] : memref<1x512xbf16, #tpu.memory_space<vmem>>, vector<1x32xbf16>
    tpu.vector_store %arg24[%c0_1441, %c448_1442], %616 {strides = array<i32>} : memref<1x512xbf16, #tpu.memory_space<vmem>>, vector<1x32xbf16>,
    %c0_1443 = arith.constant 0 : index
    %c15_1444 = arith.constant 15 : index
    %c0_1445 = arith.constant 0 : index
    %618 = vector.load %arg23[%c0_1443, %c15_1444, %c0_1445] : memref<1x16x32xbf16, #tpu.memory_space<vmem>>, vector<1x1x32xbf16>
    %619 = vector.shape_cast %618 : vector<1x1x32xbf16> to vector<1x32xbf16>
    %c0_1446 = arith.constant 0 : index
    %c480_1447 = arith.constant 480 : index
    %620 = vector.load %arg24[%c0_1446, %c480_1447] : memref<1x512xbf16, #tpu.memory_space<vmem>>, vector<1x32xbf16>
    tpu.vector_store %arg24[%c0_1446, %c480_1447], %619 {strides = array<i32>} : memref<1x512xbf16, #tpu.memory_space<vmem>>, vector<1x32xbf16>,
    %c0_1448 = arith.constant 0 : index
    %c0_1449 = arith.constant 0 : index
    %621 = vector.load %arg24[%c0_1448, %c0_1449] : memref<1x512xbf16, #tpu.memory_space<vmem>>, vector<1x512xbf16>
    %c0_1450 = arith.constant 0 : index
    %c0_1451 = arith.constant 0 : index
    %622 = vector.load %arg8[%c0_1450, %c0_1451] : memref<512x512xbf16, #tpu.memory_space<vmem>>, vector<512x512xbf16>
    %cst_1452 = arith.constant dense<0.000000e+00> : vector<1x512xf32>
    %623 = tpu.matmul %621, %622, %cst_1452 {dimension_numbers = #tpu.dot_dimension_numbers<[1], [0], [0], [1], [0, 0, 1, 1], [], []>} : vector<1x512xbf16>, vector<512x512xbf16>, vector<1x512xf32> -> vector<1x512xf32>
    %c0_1453 = arith.constant 0 : index
    %c0_1454 = arith.constant 0 : index
    %624 = vector.load %arg9[%c0_1453, %c0_1454] : memref<1x512xf32, #tpu.memory_space<vmem>>, vector<1x512xf32>
    %625 = arith.addf %623, %624 : vector<1x512xf32>
    %cst_1455 = arith.constant 0.000000e+00 : f32
    %626 = vector.broadcast %cst_1455 : f32 to vector<1x512xf32>
    %627 = arith.maximumf %625, %626 : vector<1x512xf32>
    %c0_1456 = arith.constant 0 : index
    %c0_1457 = arith.constant 0 : index
    %c0_1458 = arith.constant 0 : index
    %628 = vector.load %arg17[%c0_1456, %c0_1457, %c0_1458] : memref<1x1x512xf32, #tpu.memory_space<vmem>>, vector<1x1x512xf32>
    %629 = vector.shape_cast %628 : vector<1x1x512xf32> to vector<1x512xf32>
    %630 = vector.shape_cast %627 : vector<1x512xf32> to vector<1x1x512xf32>
    tpu.vector_store %arg17[%c0_1456, %c0_1457, %c0_1458], %630 {strides = array<i32>} : memref<1x1x512xf32, #tpu.memory_space<vmem>>, vector<1x1x512xf32>,
    %631 = arith.truncf %627 : vector<1x512xf32> to vector<1x512xbf16>
    %c0_1459 = arith.constant 0 : index
    %c0_1460 = arith.constant 0 : index
    %632 = vector.load %arg10[%c0_1459, %c0_1460] : memref<512x50xbf16, #tpu.memory_space<vmem>>, vector<512x50xbf16>
    %cst_1461 = arith.constant dense<0.000000e+00> : vector<1x50xf32>
    %633 = tpu.matmul %631, %632, %cst_1461 {dimension_numbers = #tpu.dot_dimension_numbers<[1], [0], [0], [1], [0, 0, 1, 1], [], []>} : vector<1x512xbf16>, vector<512x50xbf16>, vector<1x50xf32> -> vector<1x50xf32>
    %c0_1462 = arith.constant 0 : index
    %c0_1463 = arith.constant 0 : index
    %634 = vector.load %arg11[%c0_1462, %c0_1463] : memref<1x50xf32, #tpu.memory_space<vmem>>, vector<1x50xf32>
    %635 = arith.addf %633, %634 : vector<1x50xf32>
    %636 = arith.truncf %635 : vector<1x50xf32> to vector<1x50xbf16>
    %c0_1464 = arith.constant 0 : index
    %c0_1465 = arith.constant 0 : index
    %637 = vector.load %arg12[%c0_1464, %c0_1465] : memref<50x50xbf16, #tpu.memory_space<vmem>>, vector<50x50xbf16>
    %cst_1466 = arith.constant dense<0.000000e+00> : vector<1x50xf32>
    %638 = tpu.matmul %636, %637, %cst_1466 {dimension_numbers = #tpu.dot_dimension_numbers<[1], [0], [0], [1], [0, 0, 1, 1], [], []>} : vector<1x50xbf16>, vector<50x50xbf16>, vector<1x50xf32> -> vector<1x50xf32>
    %c0_1467 = arith.constant 0 : index
    %c0_1468 = arith.constant 0 : index
    %639 = vector.load %arg13[%c0_1467, %c0_1468] : memref<1x50xf32, #tpu.memory_space<vmem>>, vector<1x50xf32>
    %640 = arith.addf %638, %639 : vector<1x50xf32>
    %c0_1469 = arith.constant 0 : index
    %c0_1470 = arith.constant 0 : index
    %641 = vector.load %arg14[%c0_1469, %c0_1470] : memref<50x50xbf16, #tpu.memory_space<vmem>>, vector<50x50xbf16>
    %cst_1471 = arith.constant dense<0.000000e+00> : vector<1x50xf32>
    %642 = tpu.matmul %636, %641, %cst_1471 {dimension_numbers = #tpu.dot_dimension_numbers<[1], [0], [0], [1], [0, 0, 1, 1], [], []>} : vector<1x50xbf16>, vector<50x50xbf16>, vector<1x50xf32> -> vector<1x50xf32>
    %c0_1472 = arith.constant 0 : index
    %c0_1473 = arith.constant 0 : index
    %643 = vector.load %arg15[%c0_1472, %c0_1473] : memref<1x50xf32, #tpu.memory_space<vmem>>, vector<1x50xf32>
    %644 = arith.addf %642, %643 : vector<1x50xf32>
    %cst_1474 = arith.constant dense<0xFF800000> : vector<1xf32>
    %645 = vector.multi_reduction <maximumf>, %640, %cst_1474 [1] : vector<1x50xf32> to vector<1xf32>
    %646 = vector.shape_cast %645 : vector<1xf32> to vector<1x1xf32>
    %647 = vector.broadcast %646 : vector<1x1xf32> to vector<1x50xf32>
    %648 = arith.subf %640, %647 : vector<1x50xf32>
    %649 = math.exp %648 : vector<1x50xf32>
    %650 = arith.mulf %649, %644 : vector<1x50xf32>
    %cst_1475 = arith.constant dense<0.000000e+00> : vector<1xf32>
    %651 = vector.multi_reduction <add>, %650, %cst_1475 [1] : vector<1x50xf32> to vector<1xf32>
    %652 = vector.shape_cast %651 : vector<1xf32> to vector<1x1xf32>
    %cst_1476 = arith.constant dense<0.000000e+00> : vector<1xf32>
    %653 = vector.multi_reduction <add>, %649, %cst_1476 [1] : vector<1x50xf32> to vector<1xf32>
    %654 = vector.shape_cast %653 : vector<1xf32> to vector<1x1xf32>
    %655 = arith.divf %652, %654 : vector<1x1xf32>
    %c0_1477 = arith.constant 0 : index
    %c0_1478 = arith.constant 0 : index
    %c0_1479 = arith.constant 0 : index
    %656 = vector.load %arg16[%c0_1477, %c0_1478, %c0_1479] : memref<1x1x1xf32, #tpu.memory_space<vmem>>, vector<1x1x1xf32>
    %657 = vector.shape_cast %656 : vector<1x1x1xf32> to vector<1x1xf32>
    %658 = vector.shape_cast %655 : vector<1x1xf32> to vector<1x1x1xf32>
    tpu.vector_store %arg16[%c0_1477, %c0_1478, %c0_1479], %658 {strides = array<i32>} : memref<1x1x1xf32, #tpu.memory_space<vmem>>, vector<1x1x1xf32>,
    return
  }
  func.func @transform_0(%arg0: i32) -> (i32, i32, i32, i32) {
    %c0_i32 = arith.constant 0 : i32
    %c0_i32_0 = arith.constant 0 : i32
    %c0_i32_1 = arith.constant 0 : i32
    %c0_i32_2 = arith.constant 0 : i32
    return %arg0, %c0_i32, %c0_i32_0, %c0_i32_1 : i32, i32, i32, i32
  }
  func.func @transform_1(%arg0: i32) -> (i32, i32) {
    %c0_i32 = arith.constant 0 : i32
    %c0_i32_0 = arith.constant 0 : i32
    %c0_i32_1 = arith.constant 0 : i32
    return %c0_i32, %c0_i32_0 : i32, i32
  }
  func.func @transform_2(%arg0: i32) -> (i32, i32) {
    %c0_i32 = arith.constant 0 : i32
    %c0_i32_0 = arith.constant 0 : i32
    %c0_i32_1 = arith.constant 0 : i32
    return %c0_i32, %c0_i32_0 : i32, i32
  }
  func.func @transform_3(%arg0: i32) -> (i32, i32) {
    %c0_i32 = arith.constant 0 : i32
    %c0_i32_0 = arith.constant 0 : i32
    %c0_i32_1 = arith.constant 0 : i32
    return %c0_i32, %c0_i32_0 : i32, i32
  }
  func.func @transform_4(%arg0: i32) -> (i32, i32) {
    %c0_i32 = arith.constant 0 : i32
    %c0_i32_0 = arith.constant 0 : i32
    %c0_i32_1 = arith.constant 0 : i32
    return %c0_i32, %c0_i32_0 : i32, i32
  }
  func.func @transform_5(%arg0: i32) -> (i32, i32) {
    %c0_i32 = arith.constant 0 : i32
    %c0_i32_0 = arith.constant 0 : i32
    %c0_i32_1 = arith.constant 0 : i32
    return %c0_i32, %c0_i32_0 : i32, i32
  }
  func.func @transform_6(%arg0: i32) -> (i32, i32) {
    %c0_i32 = arith.constant 0 : i32
    %c0_i32_0 = arith.constant 0 : i32
    %c0_i32_1 = arith.constant 0 : i32
    return %c0_i32, %c0_i32_0 : i32, i32
  }
  func.func @transform_7(%arg0: i32) -> (i32, i32) {
    %c0_i32 = arith.constant 0 : i32
    %c0_i32_0 = arith.constant 0 : i32
    %c0_i32_1 = arith.constant 0 : i32
    return %c0_i32, %c0_i32_0 : i32, i32
  }
  func.func @transform_8(%arg0: i32) -> (i32, i32) {
    %c0_i32 = arith.constant 0 : i32
    %c0_i32_0 = arith.constant 0 : i32
    %c0_i32_1 = arith.constant 0 : i32
    return %c0_i32, %c0_i32_0 : i32, i32
  }
  func.func @transform_9(%arg0: i32) -> (i32, i32) {
    %c0_i32 = arith.constant 0 : i32
    %c0_i32_0 = arith.constant 0 : i32
    %c0_i32_1 = arith.constant 0 : i32
    return %c0_i32, %c0_i32_0 : i32, i32
  }
  func.func @transform_10(%arg0: i32) -> (i32, i32) {
    %c0_i32 = arith.constant 0 : i32
    %c0_i32_0 = arith.constant 0 : i32
    %c0_i32_1 = arith.constant 0 : i32
    return %c0_i32, %c0_i32_0 : i32, i32
  }
  func.func @transform_11(%arg0: i32) -> (i32, i32) {
    %c0_i32 = arith.constant 0 : i32
    %c0_i32_0 = arith.constant 0 : i32
    %c0_i32_1 = arith.constant 0 : i32
    return %c0_i32, %c0_i32_0 : i32, i32
  }
  func.func @transform_12(%arg0: i32) -> (i32, i32) {
    %c0_i32 = arith.constant 0 : i32
    %c0_i32_0 = arith.constant 0 : i32
    %c0_i32_1 = arith.constant 0 : i32
    return %c0_i32, %c0_i32_0 : i32, i32
  }
  func.func @transform_13(%arg0: i32) -> (i32, i32) {
    %c0_i32 = arith.constant 0 : i32
    %c0_i32_0 = arith.constant 0 : i32
    %c0_i32_1 = arith.constant 0 : i32
    return %c0_i32, %c0_i32_0 : i32, i32
  }
  func.func @transform_14(%arg0: i32) -> (i32, i32) {
    %c0_i32 = arith.constant 0 : i32
    %c0_i32_0 = arith.constant 0 : i32
    %c0_i32_1 = arith.constant 0 : i32
    return %c0_i32, %c0_i32_0 : i32, i32
  }
  func.func @transform_15(%arg0: i32) -> (i32, i32, i32) {
    %c0_i32 = arith.constant 0 : i32
    %c0_i32_0 = arith.constant 0 : i32
    %c0_i32_1 = arith.constant 0 : i32
    return %arg0, %c0_i32, %c0_i32_0 : i32, i32, i32
  }
  func.func @transform_16(%arg0: i32) -> (i32, i32, i32) {
    %c0_i32 = arith.constant 0 : i32
    %c0_i32_0 = arith.constant 0 : i32
    %c0_i32_1 = arith.constant 0 : i32
    return %arg0, %c0_i32, %c0_i32_0 : i32, i32, i32
  }
}

</mosaic_0001>

<llo_original>
// kernel: cnn_base_forward.1
$region0: #{cnn_base_forward.1}
  #allocation0 [shape = 'u32[]', space=smem, size = 0x4, offset = 0x4, fixed_abs, tag = 'smem constant byte address 0x4 - core index']
  #allocation1 [shape = 'u32[144,128]{1,0:T(1,128)}', space=vmem, size = 0x12000, scoped, tag = 'internal scratch']
  #allocation2 [shape = 'bf16[1,225,256]{2,1,0:T(8,128)(2,1)}', space=vmem, size = 0x1d000, scoped, tag = 'scratch operand']
  #allocation3 [shape = 'bf16[1,225,32]{2,1,0:T(8,128)(2,1)}', space=vmem, size = 0xe800, scoped, tag = 'scratch operand']
  #allocation4 [shape = 'bf16[1,36,512]{2,1,0:T(8,128)(2,1)}', space=vmem, size = 0xa000, scoped, tag = 'scratch operand']
  #allocation5 [shape = 'bf16[1,36,64]{2,1,0:T(8,128)(2,1)}', space=vmem, size = 0x2800, scoped, tag = 'scratch operand']
  #allocation6 [shape = 'bf16[1,16,576]{2,1,0:T(8,128)(2,1)}', space=vmem, size = 0x5000, scoped, tag = 'scratch operand']
  #allocation7 [shape = 'bf16[1,16,32]{2,1,0:T(8,128)(2,1)}', space=vmem, size = 0x1000, scoped, tag = 'scratch operand']
  #allocation8 [shape = 'bf16[1,512]{1,0:T(2,128)(2,1)}', space=vmem, size = 0x800, scoped, tag = 'scratch operand']
  %s0 = inlined_call_operand.vmem [shape: bf16[2,16,8,128], index: 0, kind: input, shape index: {}]
  %s1 = inlined_call_operand.vmem [shape: bf16[256,32], index: 1, kind: input, shape index: {}]
  %s2 = inlined_call_operand.vmem [shape: f32[1,32], index: 2, kind: input, shape index: {}]
  %s3 = inlined_call_operand.vmem [shape: bf16[512,64], index: 3, kind: input, shape index: {}]
  %s4 = inlined_call_operand.vmem [shape: f32[1,64], index: 4, kind: input, shape index: {}]
  %s5 = inlined_call_operand.vmem [shape: bf16[576,32], index: 5, kind: input, shape index: {}]
  %s6 = inlined_call_operand.vmem [shape: f32[1,32], index: 6, kind: input, shape index: {}]
  %s7 = inlined_call_operand.vmem [shape: bf16[512,512], index: 7, kind: input, shape index: {}]
  %s8 = inlined_call_operand.vmem [shape: f32[1,512], index: 8, kind: input, shape index: {}]
  %s9 = inlined_call_operand.vmem [shape: bf16[512,50], index: 9, kind: input, shape index: {}]
  %s10 = inlined_call_operand.vmem [shape: f32[1,50], index: 10, kind: input, shape index: {}]
  %s11 = inlined_call_operand.vmem [shape: bf16[50,50], index: 11, kind: input, shape index: {}]
  %s12 = inlined_call_operand.vmem [shape: f32[1,50], index: 12, kind: input, shape index: {}]
  %s13 = inlined_call_operand.vmem [shape: bf16[50,50], index: 13, kind: input, shape index: {}]
  %s14 = inlined_call_operand.vmem [shape: f32[1,50], index: 14, kind: input, shape index: {}]
  %s15 = inlined_call_operand.vmem [shape: f32[2,1,1], index: 15, kind: output, shape index: {0}]
  %s16 = inlined_call_operand.vmem [shape: f32[2,1,512], index: 16, kind: output, shape index: {1}]
  %17 = xla_tuple %s15, %s16
  %s18 = sld [smem:[#allocation0]]
  $region101: #{cnn_base_forward.1} parent=0
    _
  %s20 = ssub.s32 1, %s18
  %s21 = scalar_select 0, %s20, %s18
  loop: start=0, step=1, limit=4
  $region2: #{cnn_base_forward.1} parent=0 // loop_pre_header
    _
  $region3: #{cnn_base_forward.1} parent=0 // loop_header
    %s23 = sphi 0, %s27
    %p24 = scmp.ge.s32.totalorder %s23, 4
    %s33 = sphi 0, %s35
    %s36 = sphi 0, %s33
    %s37 = sphi 0, %s36
    %s53 = sphi 0, %s37
    %s57 = sphi 0, %s57
    %s59 = sphi 0, %s57
    %s60 = sphi 0, %s59
    %s74 = sphi 0, %s60
    %s78 = sphi 0, %s78
    %s80 = sphi 0, %s78
    %s81 = sphi 0, %s80
    %s95 = sphi 0, %s81
    %s99 = sphi 0, %s99
    %s101 = sphi 0, %s99
    %s102 = sphi 0, %s101
    %s116 = sphi 0, %s102
    %s120 = sphi 0, %s120
    %s122 = sphi 0, %s120
    %s123 = sphi 0, %s122
    %s137 = sphi 0, %s123
    %s141 = sphi 0, %s141
    %s143 = sphi 0, %s141
    %s144 = sphi 0, %s143
    %s158 = sphi 0, %s144
    %s162 = sphi 0, %s162
    %s164 = sphi 0, %s162
    %s165 = sphi 0, %s164
    %s179 = sphi 0, %s165
    %s183 = sphi 0, %s183
    %s185 = sphi 0, %s183
    %s186 = sphi 0, %s185
    %s200 = sphi 0, %s186
    %s204 = sphi 0, %s204
    %s206 = sphi 0, %s204
    %s207 = sphi 0, %s206
    %s221 = sphi 0, %s207
    %s225 = sphi 0, %s225
    %s227 = sphi 0, %s225
    %s228 = sphi 0, %s227
    %s242 = sphi 0, %s228
    %s246 = sphi 0, %s246
    %s248 = sphi 0, %s246
    %s249 = sphi 0, %s248
    %s263 = sphi 0, %s249
    %s267 = sphi 0, %s267
    %s269 = sphi 0, %s267
    %s270 = sphi 0, %s269
    %s284 = sphi 0, %s270
    %s288 = sphi 0, %s288
    %s290 = sphi 0, %s288
    %s291 = sphi 0, %s290
    %s305 = sphi 0, %s291
    %s309 = sphi 0, %s309
    %s311 = sphi 0, %s309
    %s312 = sphi 0, %s311
    %s326 = sphi 0, %s312
    %s330 = sphi 0, %s330
    %s332 = sphi 0, %s330
    %s333 = sphi 0, %s332
    %s347 = sphi 0, %s333
    %s353 = sphi 0, %s355
    %s356 = sphi 0, %s353
    %s357 = sphi 0, %s356
    %s373 = sphi 0, %s357
    %s379 = sphi 0, %s381
    %s382 = sphi 0, %s379
    %s383 = sphi 0, %s382
    %s399 = sphi 0, %s383
  $region4: #{cnn_base_forward.1} parent=0 // loop_header_branch
    %26 = sbr.rel (%p24) target = $region8
  $region5: #{cnn_base_forward.1} parent=0 // loop_body
    %s28 = ssub.s32 %s23, 1
    %s29 = ssub.s32 %s23, 2
    %s30 = sadd.s32 %s23, 1
    %s31 = ssub.s32 %s23, %s30
    %p32 = scmp.eq.s32.totalorder %s31, 0
    %s34 = sadd.s32 %s33, 1
    %s35 = scalar_select %p32, %s33, %s34
    %p38 = pneg %p32
    %p39 = scmp.eq.s32.totalorder %s23, 1
    %p40 = por %p38, %p39
    %p41 = scmp.ne.s32.totalorder %s33, %s36
    %p42 = scmp.eq.s32.totalorder %s23, 0
    %p43 = por %p41, %p42
    %p44 = scmp.ne.s32.totalorder %s33, %s36
    %p45 = scmp.eq.s32.totalorder %s28, 1
    %p46 = por %p44, %p45
    %p47 = scmp.ne.s32.totalorder %s36, %s37
    %p48 = scmp.eq.s32.totalorder %s28, 0
    %p49 = por %p47, %p48
    %p50 = scmp.ne.s32.totalorder %s36, %s37
    %p51 = scmp.eq.s32.totalorder %s29, 1
    %p52 = por %p50, %p51
    %p54 = scmp.ne.s32.totalorder %s37, %s53
    %p55 = scmp.eq.s32.totalorder %s29, 0
    %p56 = por %p54, %p55
    %s58 = sadd.s32 %s57, 1
    %p61 = scmp.eq.s32.totalorder %s23, 1
    %p62 = scmp.ne.s32.totalorder %s57, %s59
    %p63 = scmp.eq.s32.totalorder %s23, 0
    %p64 = por %p62, %p63
    %p65 = scmp.ne.s32.totalorder %s57, %s59
    %p66 = scmp.eq.s32.totalorder %s28, 1
    %p67 = por %p65, %p66
    %p68 = scmp.ne.s32.totalorder %s59, %s60
    %p69 = scmp.eq.s32.totalorder %s28, 0
    %p70 = por %p68, %p69
    %p71 = scmp.ne.s32.totalorder %s59, %s60
    %p72 = scmp.eq.s32.totalorder %s29, 1
    %p73 = por %p71, %p72
    %p75 = scmp.ne.s32.totalorder %s60, %s74
    %p76 = scmp.eq.s32.totalorder %s29, 0
    %p77 = por %p75, %p76
    %s79 = sadd.s32 %s78, 1
    %p82 = scmp.eq.s32.totalorder %s23, 1
    %p83 = scmp.ne.s32.totalorder %s78, %s80
    %p84 = scmp.eq.s32.totalorder %s23, 0
    %p85 = por %p83, %p84
    %p86 = scmp.ne.s32.totalorder %s78, %s80
    %p87 = scmp.eq.s32.totalorder %s28, 1
    %p88 = por %p86, %p87
    %p89 = scmp.ne.s32.totalorder %s80, %s81
    %p90 = scmp.eq.s32.totalorder %s28, 0
    %p91 = por %p89, %p90
    %p92 = scmp.ne.s32.totalorder %s80, %s81
    %p93 = scmp.eq.s32.totalorder %s29, 1
    %p94 = por %p92, %p93
    %p96 = scmp.ne.s32.totalorder %s81, %s95
    %p97 = scmp.eq.s32.totalorder %s29, 0
    %p98 = por %p96, %p97
    %s100 = sadd.s32 %s99, 1
    %p103 = scmp.eq.s32.totalorder %s23, 1
    %p104 = scmp.ne.s32.totalorder %s99, %s101
    %p105 = scmp.eq.s32.totalorder %s23, 0
    %p106 = por %p104, %p105
    %p107 = scmp.ne.s32.totalorder %s99, %s101
    %p108 = scmp.eq.s32.totalorder %s28, 1
    %p109 = por %p107, %p108
    %p110 = scmp.ne.s32.totalorder %s101, %s102
    %p111 = scmp.eq.s32.totalorder %s28, 0
    %p112 = por %p110, %p111
    %p113 = scmp.ne.s32.totalorder %s101, %s102
    %p114 = scmp.eq.s32.totalorder %s29, 1
    %p115 = por %p113, %p114
    %p117 = scmp.ne.s32.totalorder %s102, %s116
    %p118 = scmp.eq.s32.totalorder %s29, 0
    %p119 = por %p117, %p118
    %s121 = sadd.s32 %s120, 1
    %p124 = scmp.eq.s32.totalorder %s23, 1
    %p125 = scmp.ne.s32.totalorder %s120, %s122
    %p126 = scmp.eq.s32.totalorder %s23, 0
    %p127 = por %p125, %p126
    %p128 = scmp.ne.s32.totalorder %s120, %s122
    %p129 = scmp.eq.s32.totalorder %s28, 1
    %p130 = por %p128, %p129
    %p131 = scmp.ne.s32.totalorder %s122, %s123
    %p132 = scmp.eq.s32.totalorder %s28, 0
    %p133 = por %p131, %p132
    %p134 = scmp.ne.s32.totalorder %s122, %s123
    %p135 = scmp.eq.s32.totalorder %s29, 1
    %p136 = por %p134, %p135
    %p138 = scmp.ne.s32.totalorder %s123, %s137
    %p139 = scmp.eq.s32.totalorder %s29, 0
    %p140 = por %p138, %p139
    %s142 = sadd.s32 %s141, 1
    %p145 = scmp.eq.s32.totalorder %s23, 1
    %p146 = scmp.ne.s32.totalorder %s141, %s143
    %p147 = scmp.eq.s32.totalorder %s23, 0
    %p148 = por %p146, %p147
    %p149 = scmp.ne.s32.totalorder %s141, %s143
    %p150 = scmp.eq.s32.totalorder %s28, 1
    %p151 = por %p149, %p150
    %p152 = scmp.ne.s32.totalorder %s143, %s144
    %p153 = scmp.eq.s32.totalorder %s28, 0
    %p154 = por %p152, %p153
    %p155 = scmp.ne.s32.totalorder %s143, %s144
    %p156 = scmp.eq.s32.totalorder %s29, 1
    %p157 = por %p155, %p156
    %p159 = scmp.ne.s32.totalorder %s144, %s158
    %p160 = scmp.eq.s32.totalorder %s29, 0
    %p161 = por %p159, %p160
    %s163 = sadd.s32 %s162, 1
    %p166 = scmp.eq.s32.totalorder %s23, 1
    %p167 = scmp.ne.s32.totalorder %s162, %s164
    %p168 = scmp.eq.s32.totalorder %s23, 0
    %p169 = por %p167, %p168
    %p170 = scmp.ne.s32.totalorder %s162, %s164
    %p171 = scmp.eq.s32.totalorder %s28, 1
    %p172 = por %p170, %p171
    %p173 = scmp.ne.s32.totalorder %s164, %s165
    %p174 = scmp.eq.s32.totalorder %s28, 0
    %p175 = por %p173, %p174
    %p176 = scmp.ne.s32.totalorder %s164, %s165
    %p177 = scmp.eq.s32.totalorder %s29, 1
    %p178 = por %p176, %p177
    %p180 = scmp.ne.s32.totalorder %s165, %s179
    %p181 = scmp.eq.s32.totalorder %s29, 0
    %p182 = por %p180, %p181
    %s184 = sadd.s32 %s183, 1
    %p187 = scmp.eq.s32.totalorder %s23, 1
    %p188 = scmp.ne.s32.totalorder %s183, %s185
    %p189 = scmp.eq.s32.totalorder %s23, 0
    %p190 = por %p188, %p189
    %p191 = scmp.ne.s32.totalorder %s183, %s185
    %p192 = scmp.eq.s32.totalorder %s28, 1
    %p193 = por %p191, %p192
    %p194 = scmp.ne.s32.totalorder %s185, %s186
    %p195 = scmp.eq.s32.totalorder %s28, 0
    %p196 = por %p194, %p195
    %p197 = scmp.ne.s32.totalorder %s185, %s186
    %p198 = scmp.eq.s32.totalorder %s29, 1
    %p199 = por %p197, %p198
    %p201 = scmp.ne.s32.totalorder %s186, %s200
    %p202 = scmp.eq.s32.totalorder %s29, 0
    %p203 = por %p201, %p202
    %s205 = sadd.s32 %s204, 1
    %p208 = scmp.eq.s32.totalorder %s23, 1
    %p209 = scmp.ne.s32.totalorder %s204, %s206
    %p210 = scmp.eq.s32.totalorder %s23, 0
    %p211 = por %p209, %p210
    %p212 = scmp.ne.s32.totalorder %s204, %s206
    %p213 = scmp.eq.s32.totalorder %s28, 1
    %p214 = por %p212, %p213
    %p215 = scmp.ne.s32.totalorder %s206, %s207
    %p216 = scmp.eq.s32.totalorder %s28, 0
    %p217 = por %p215, %p216
    %p218 = scmp.ne.s32.totalorder %s206, %s207
    %p219 = scmp.eq.s32.totalorder %s29, 1
    %p220 = por %p218, %p219
    %p222 = scmp.ne.s32.totalorder %s207, %s221
    %p223 = scmp.eq.s32.totalorder %s29, 0
    %p224 = por %p222, %p223
    %s226 = sadd.s32 %s225, 1
    %p229 = scmp.eq.s32.totalorder %s23, 1
    %p230 = scmp.ne.s32.totalorder %s225, %s227
    %p231 = scmp.eq.s32.totalorder %s23, 0
    %p232 = por %p230, %p231
    %p233 = scmp.ne.s32.totalorder %s225, %s227
    %p234 = scmp.eq.s32.totalorder %s28, 1
    %p235 = por %p233, %p234
    %p236 = scmp.ne.s32.totalorder %s227, %s228
    %p237 = scmp.eq.s32.totalorder %s28, 0
    %p238 = por %p236, %p237
    %p239 = scmp.ne.s32.totalorder %s227, %s228
    %p240 = scmp.eq.s32.totalorder %s29, 1
    %p241 = por %p239, %p240
    %p243 = scmp.ne.s32.totalorder %s228, %s242
    %p244 = scmp.eq.s32.totalorder %s29, 0
    %p245 = por %p243, %p244
    %s247 = sadd.s32 %s246, 1
    %p250 = scmp.eq.s32.totalorder %s23, 1
    %p251 = scmp.ne.s32.totalorder %s246, %s248
    %p252 = scmp.eq.s32.totalorder %s23, 0
    %p253 = por %p251, %p252
    %p254 = scmp.ne.s32.totalorder %s246, %s248
    %p255 = scmp.eq.s32.totalorder %s28, 1
    %p256 = por %p254, %p255
    %p257 = scmp.ne.s32.totalorder %s248, %s249
    %p258 = scmp.eq.s32.totalorder %s28, 0
    %p259 = por %p257, %p258
    %p260 = scmp.ne.s32.totalorder %s248, %s249
    %p261 = scmp.eq.s32.totalorder %s29, 1
    %p262 = por %p260, %p261
    %p264 = scmp.ne.s32.totalorder %s249, %s263
    %p265 = scmp.eq.s32.totalorder %s29, 0
    %p266 = por %p264, %p265
    %s268 = sadd.s32 %s267, 1
    %p271 = scmp.eq.s32.totalorder %s23, 1
    %p272 = scmp.ne.s32.totalorder %s267, %s269
    %p273 = scmp.eq.s32.totalorder %s23, 0
    %p274 = por %p272, %p273
    %p275 = scmp.ne.s32.totalorder %s267, %s269
    %p276 = scmp.eq.s32.totalorder %s28, 1
    %p277 = por %p275, %p276
    %p278 = scmp.ne.s32.totalorder %s269, %s270
    %p279 = scmp.eq.s32.totalorder %s28, 0
    %p280 = por %p278, %p279
    %p281 = scmp.ne.s32.totalorder %s269, %s270
    %p282 = scmp.eq.s32.totalorder %s29, 1
    %p283 = por %p281, %p282
    %p285 = scmp.ne.s32.totalorder %s270, %s284
    %p286 = scmp.eq.s32.totalorder %s29, 0
    %p287 = por %p285, %p286
    %s289 = sadd.s32 %s288, 1
    %p292 = scmp.eq.s32.totalorder %s23, 1
    %p293 = scmp.ne.s32.totalorder %s288, %s290
    %p294 = scmp.eq.s32.totalorder %s23, 0
    %p295 = por %p293, %p294
    %p296 = scmp.ne.s32.totalorder %s288, %s290
    %p297 = scmp.eq.s32.totalorder %s28, 1
    %p298 = por %p296, %p297
    %p299 = scmp.ne.s32.totalorder %s290, %s291
    %p300 = scmp.eq.s32.totalorder %s28, 0
    %p301 = por %p299, %p300
    %p302 = scmp.ne.s32.totalorder %s290, %s291
    %p303 = scmp.eq.s32.totalorder %s29, 1
    %p304 = por %p302, %p303
    %p306 = scmp.ne.s32.totalorder %s291, %s305
    %p307 = scmp.eq.s32.totalorder %s29, 0
    %p308 = por %p306, %p307
    %s310 = sadd.s32 %s309, 1
    %p313 = scmp.eq.s32.totalorder %s23, 1
    %p314 = scmp.ne.s32.totalorder %s309, %s311
    %p315 = scmp.eq.s32.totalorder %s23, 0
    %p316 = por %p314, %p315
    %p317 = scmp.ne.s32.totalorder %s309, %s311
    %p318 = scmp.eq.s32.totalorder %s28, 1
    %p319 = por %p317, %p318
    %p320 = scmp.ne.s32.totalorder %s311, %s312
    %p321 = scmp.eq.s32.totalorder %s28, 0
    %p322 = por %p320, %p321
    %p323 = scmp.ne.s32.totalorder %s311, %s312
    %p324 = scmp.eq.s32.totalorder %s29, 1
    %p325 = por %p323, %p324
    %p327 = scmp.ne.s32.totalorder %s312, %s326
    %p328 = scmp.eq.s32.totalorder %s29, 0
    %p329 = por %p327, %p328
    %s331 = sadd.s32 %s330, 1
    %p334 = scmp.eq.s32.totalorder %s23, 1
    %p335 = scmp.ne.s32.totalorder %s330, %s332
    %p336 = scmp.eq.s32.totalorder %s23, 0
    %p337 = por %p335, %p336
    %p338 = scmp.ne.s32.totalorder %s330, %s332
    %p339 = scmp.eq.s32.totalorder %s28, 1
    %p340 = por %p338, %p339
    %p341 = scmp.ne.s32.totalorder %s332, %s333
    %p342 = scmp.eq.s32.totalorder %s28, 0
    %p343 = por %p341, %p342
    %p344 = scmp.ne.s32.totalorder %s332, %s333
    %p345 = scmp.eq.s32.totalorder %s29, 1
    %p346 = por %p344, %p345
    %p348 = scmp.ne.s32.totalorder %s333, %s347
    %p349 = scmp.eq.s32.totalorder %s29, 0
    %p350 = por %p348, %p349
    %s351 = ssub.s32 %s23, %s30
    %p352 = scmp.eq.s32.totalorder %s351, 0
    %s354 = sadd.s32 %s353, 1
    %s355 = scalar_select %p352, %s353, %s354
    %p358 = pneg %p352
    %p359 = scmp.eq.s32.totalorder %s23, 1
    %p360 = por %p358, %p359
    %p361 = scmp.ne.s32.totalorder %s353, %s356
    %p362 = scmp.eq.s32.totalorder %s23, 0
    %p363 = por %p361, %p362
    %p364 = scmp.ne.s32.totalorder %s353, %s356
    %p365 = scmp.eq.s32.totalorder %s28, 1
    %p366 = por %p364, %p365
    %p367 = scmp.ne.s32.totalorder %s356, %s357
    %p368 = scmp.eq.s32.totalorder %s28, 0
    %p369 = por %p367, %p368
    %p370 = scmp.ne.s32.totalorder %s356, %s357
    %p371 = scmp.eq.s32.totalorder %s29, 1
    %p372 = por %p370, %p371
    %p374 = scmp.ne.s32.totalorder %s357, %s373
    %p375 = scmp.eq.s32.totalorder %s29, 0
    %p376 = por %p374, %p375
    %s377 = ssub.s32 %s23, %s30
    %p378 = scmp.eq.s32.totalorder %s377, 0
    %s380 = sadd.s32 %s379, 1
    %s381 = scalar_select %p378, %s379, %s380
    %p384 = pneg %p378
    %p385 = scmp.eq.s32.totalorder %s23, 1
    %p386 = por %p384, %p385
    %p387 = scmp.ne.s32.totalorder %s379, %s382
    %p388 = scmp.eq.s32.totalorder %s23, 0
    %p389 = por %p387, %p388
    %p390 = scmp.ne.s32.totalorder %s379, %s382
    %p391 = scmp.eq.s32.totalorder %s28, 1
    %p392 = por %p390, %p391
    %p393 = scmp.ne.s32.totalorder %s382, %s383
    %p394 = scmp.eq.s32.totalorder %s28, 0
    %p395 = por %p393, %p394
    %p396 = scmp.ne.s32.totalorder %s382, %s383
    %p397 = scmp.eq.s32.totalorder %s29, 1
    %p398 = por %p396, %p397
    %p400 = scmp.ne.s32.totalorder %s383, %s399
    %p401 = scmp.eq.s32.totalorder %s29, 0
    %p402 = por %p400, %p401
    %p403 = scmp.le.s32.totalorder 1, %s23
    %p404 = scmp.lt.s32.totalorder %s23, 3
    %p405 = pnand %p403, %p404
    %p406 = pneg %p405
    // Predicated region
    $region9: #{cnn_base_forward.1} parent=5 // pred_check
      _
    $region10: #{cnn_base_forward.1} parent=5 // pred_check_branch
      %408 = sbr.rel (%p405) target = $region12
    $region11: #{cnn_base_forward.1} parent=5 // pred_region
      %s409 = ssub.s32 %s23, 1
      // Predicated region
      $region13: #{cnn_base_forward.1} parent=11 // pred_check
        %p410 = pneg %p70
      $region14: #{cnn_base_forward.1} parent=11 // pred_check_branch
        %412 = sbr.rel (%p410) target = $region16
      $region15: #{cnn_base_forward.1} parent=11 // pred_region
        _
      $region16: #{cnn_base_forward.1} parent=11 // pred_fallthru
        _
      // Predicated region
      $region17: #{cnn_base_forward.1} parent=11 // pred_check
        %p413 = pneg %p91
      $region18: #{cnn_base_forward.1} parent=11 // pred_check_branch
        %415 = sbr.rel (%p413) target = $region20
      $region19: #{cnn_base_forward.1} parent=11 // pred_region
        _
      $region20: #{cnn_base_forward.1} parent=11 // pred_fallthru
        _
      // Predicated region
      $region21: #{cnn_base_forward.1} parent=11 // pred_check
        %p416 = pneg %p112
      $region22: #{cnn_base_forward.1} parent=11 // pred_check_branch
        %418 = sbr.rel (%p416) target = $region24
      $region23: #{cnn_base_forward.1} parent=11 // pred_region
        _
      $region24: #{cnn_base_forward.1} parent=11 // pred_fallthru
        _
      // Predicated region
      $region25: #{cnn_base_forward.1} parent=11 // pred_check
        %p419 = pneg %p133
      $region26: #{cnn_base_forward.1} parent=11 // pred_check_branch
        %421 = sbr.rel (%p419) target = $region28
      $region27: #{cnn_base_forward.1} parent=11 // pred_region
        _
      $region28: #{cnn_base_forward.1} parent=11 // pred_fallthru
        _
      // Predicated region
      $region29: #{cnn_base_forward.1} parent=11 // pred_check
        %p422 = pneg %p154
      $region30: #{cnn_base_forward.1} parent=11 // pred_check_branch
        %424 = sbr.rel (%p422) target = $region32
      $region31: #{cnn_base_forward.1} parent=11 // pred_region
        _
      $region32: #{cnn_base_forward.1} parent=11 // pred_fallthru
        _
      // Predicated region
      $region33: #{cnn_base_forward.1} parent=11 // pred_check
        %p425 = pneg %p175
      $region34: #{cnn_base_forward.1} parent=11 // pred_check_branch
        %427 = sbr.rel (%p425) target = $region36
      $region35: #{cnn_base_forward.1} parent=11 // pred_region
        _
      $region36: #{cnn_base_forward.1} parent=11 // pred_fallthru
        _
      // Predicated region
      $region37: #{cnn_base_forward.1} parent=11 // pred_check
        %p428 = pneg %p196
      $region38: #{cnn_base_forward.1} parent=11 // pred_check_branch
        %430 = sbr.rel (%p428) target = $region40
      $region39: #{cnn_base_forward.1} parent=11 // pred_region
        _
      $region40: #{cnn_base_forward.1} parent=11 // pred_fallthru
        _
      // Predicated region
      $region41: #{cnn_base_forward.1} parent=11 // pred_check
        %p431 = pneg %p217
      $region42: #{cnn_base_forward.1} parent=11 // pred_check_branch
        %433 = sbr.rel (%p431) target = $region44
      $region43: #{cnn_base_forward.1} parent=11 // pred_region
        _
      $region44: #{cnn_base_forward.1} parent=11 // pred_fallthru
        _
      // Predicated region
      $region45: #{cnn_base_forward.1} parent=11 // pred_check
        %p434 = pneg %p238
      $region46: #{cnn_base_forward.1} parent=11 // pred_check_branch
        %436 = sbr.rel (%p434) target = $region48
      $region47: #{cnn_base_forward.1} parent=11 // pred_region
        _
      $region48: #{cnn_base_forward.1} parent=11 // pred_fallthru
        _
      // Predicated region
      $region49: #{cnn_base_forward.1} parent=11 // pred_check
        %p437 = pneg %p259
      $region50: #{cnn_base_forward.1} parent=11 // pred_check_branch
        %439 = sbr.rel (%p437) target = $region52
      $region51: #{cnn_base_forward.1} parent=11 // pred_region
        _
      $region52: #{cnn_base_forward.1} parent=11 // pred_fallthru
        _
      // Predicated region
      $region53: #{cnn_base_forward.1} parent=11 // pred_check
        %p440 = pneg %p280
      $region54: #{cnn_base_forward.1} parent=11 // pred_check_branch
        %442 = sbr.rel (%p440) target = $region56
      $region55: #{cnn_base_forward.1} parent=11 // pred_region
        _
      $region56: #{cnn_base_forward.1} parent=11 // pred_fallthru
        _
      // Predicated region
      $region57: #{cnn_base_forward.1} parent=11 // pred_check
        %p443 = pneg %p301
      $region58: #{cnn_base_forward.1} parent=11 // pred_check_branch
        %445 = sbr.rel (%p443) target = $region60
      $region59: #{cnn_base_forward.1} parent=11 // pred_region
        _
      $region60: #{cnn_base_forward.1} parent=11 // pred_fallthru
        _
      // Predicated region
      $region61: #{cnn_base_forward.1} parent=11 // pred_check
        %p446 = pneg %p322
      $region62: #{cnn_base_forward.1} parent=11 // pred_check_branch
        %448 = sbr.rel (%p446) target = $region64
      $region63: #{cnn_base_forward.1} parent=11 // pred_region
        _
      $region64: #{cnn_base_forward.1} parent=11 // pred_fallthru
        _
      // Predicated region
      $region65: #{cnn_base_forward.1} parent=11 // pred_check
        %p449 = pneg %p343
      $region66: #{cnn_base_forward.1} parent=11 // pred_check_branch
        %451 = sbr.rel (%p449) target = $region68
      $region67: #{cnn_base_forward.1} parent=11 // pred_region
        _
      $region68: #{cnn_base_forward.1} parent=11 // pred_fallthru
        _
    $region12: #{cnn_base_forward.1} parent=5 // pred_fallthru
      _
    %p452 = scmp.lt.s32.totalorder %s23, 2
    // Predicated region
    $region69: #{cnn_base_forward.1} parent=5 // pred_check
      %p453 = pneg %p452
    $region70: #{cnn_base_forward.1} parent=5 // pred_check_branch
      %455 = sbr.rel (%p453) target = $region72
    $region71: #{cnn_base_forward.1} parent=5 // pred_region
      // Predicated region
      $region73: #{cnn_base_forward.1} parent=71 // pred_check
        %p456 = pneg %p43
      $region74: #{cnn_base_forward.1} parent=71 // pred_check_branch
        %458 = sbr.rel (%p456) target = $region76
      $region75: #{cnn_base_forward.1} parent=71 // pred_region
        %p459 = scmp.lt.s32.totalorder %s23, 1
        %s460 = scalar_select %p459, %s23, 1
        %s461 = smul.addr %s460, 16
        %s462 = smul.addr %s461, 4
        %s463 = scalar_lea.vmem %s0, %s462
      $region76: #{cnn_base_forward.1} parent=71 // pred_fallthru
        _
    $region72: #{cnn_base_forward.1} parent=5 // pred_fallthru
      _
    %p464 = scmp.le.s32.totalorder 1, %s23
    %p465 = scmp.lt.s32.totalorder %s23, 3
    %p466 = pnand %p464, %p465
    %p467 = pneg %p466
    // Predicated region
    $region77: #{cnn_base_forward.1} parent=5 // pred_check
      _
    $region78: #{cnn_base_forward.1} parent=5 // pred_check_branch
      %469 = sbr.rel (%p466) target = $region80
    $region79: #{cnn_base_forward.1} parent=5 // pred_region
      %s470 = ssub.s32 %s23, 1
      %p471 = scmp.lt.s32.totalorder %s28, 1
      %s472 = scalar_select %p471, %s28, 1
      %s473 = smul.addr %s472, 16
      %s474 = smul.addr %s473, 4
      %s475 = scalar_lea.vmem %s0, %s474
      %p476 = pneg %p49
      %p477 = pneg %p46
      %p478 = pneg %p70
      %p479 = pneg %p67
      %p480 = pneg %p91
      %p481 = pneg %p88
      %p482 = pneg %p112
      %p483 = pneg %p109
      %p484 = pneg %p133
      %p485 = pneg %p130
      %p486 = pneg %p154
      %p487 = pneg %p151
      %p488 = pneg %p175
      %p489 = pneg %p172
      %p490 = pneg %p196
      %p491 = pneg %p193
      %p492 = pneg %p217
      %p493 = pneg %p214
      %p494 = pneg %p238
      %p495 = pneg %p235
      %p496 = pneg %p259
      %p497 = pneg %p256
      %p498 = pneg %p280
      %p499 = pneg %p277
      %p500 = pneg %p301
      %p501 = pneg %p298
      %p502 = pneg %p322
      %p503 = pneg %p319
      %p504 = pneg %p343
      %p505 = pneg %p340
      %p506 = pneg %p369
      %p507 = pneg %p366
      %p508 = scmp.lt.s32.totalorder %s28, 1
      %s509 = scalar_select %p508, %s28, 1
      %s510 = scalar_lea.vmem %s15, %s509
      %p511 = pneg %p395
      %p512 = pneg %p392
      %p513 = scmp.lt.s32.totalorder %s28, 1
      %s514 = scalar_select %p513, %s28, 1
      %s515 = smul.addr %s514, 4
      %s516 = scalar_lea.vmem %s16, %s515
      %p517 = scmp.lt.s32.totalorder %s28, 1
      %s518 = scalar_select %p517, %s28, 1
      %s519 = smul.addr %s518, 16
      %s520 = smul.addr %s519, 4
      %s521 = scalar_lea.vmem %s0, %s520
      %p522 = scmp.lt.s32.totalorder %s28, 1
      %s523 = scalar_select %p522, %s28, 1
      %s524 = scalar_lea.vmem %s15, %s523
      %p525 = scmp.lt.s32.totalorder %s28, 1
      %s526 = scalar_select %p525, %s28, 1
      %s527 = smul.addr %s526, 4
      %s528 = scalar_lea.vmem %s16, %s527
      %v530 = vld [vmem:[%s521] sm:$0xf]
      %531 = vst [vmem:[#allocation2] sm:$0xf] %v530
      %v532 = vld [vmem:[%s521] sm:$0xf]
      %534 = vrot.lane.b32.xlu0 %v532, 64
      %v535 = vpop.permute.xlu0 %534
      %vm537 = vcmask 519168
      %vm538 = vsmask.f32 3328
      %vm539 = vmand %vm537, %vm538
      %v540 = vld [vmem:[#allocation2 + $0x8] sm:$0xf]
      %v541 = vsel %vm539, %v535, %v540
      %542 = vst [vmem:[#allocation2 + $0x8] sm:$0xf] %v541
      %v543 = vld [vmem:[%s521] sm:$0xf]
      %v545 = vshrl.u32 %v543, 16
      %v547 = vrot.slane %v545, 4
      %v548 = vshll.u32 %v543, 16
      %v550 = vrot.slane %v548, 5
      %v551 = vor.u32 %v547, %v550
      %v552 = vrot.slane %v551, 4
      %553 = vrot.lane.b32.xlu0 %v552, 64
      %v554 = vpop.permute.xlu0 %553
      %vm556 = vcmask 1043968
      %vm557 = vmand %vm556, %vm538
      %v558 = vld [vmem:[#allocation2 + $0x8] sm:$0xf]
      %v559 = vsel %vm557, %v554, %v558
      %560 = vst [vmem:[#allocation2 + $0x8] sm:$0xf] %v559
      %s561 = scalar_lea.vmem %s521, 4
      %v562 = vld [vmem:[%s561] sm:$0xf]
      %563 = vst [vmem:[#allocation2 + $0x4] sm:$0xf] %v562
      %v564 = vld [vmem:[%s561] sm:$0xf]
      %566 = vrot.lane.b32.xlu0 %v564, 64
      %v567 = vpop.permute.xlu0 %566
      %v569 = vld [vmem:[#allocation2 + $0xc] sm:$0xf]
      %v570 = vsel %vm539, %v567, %v569
      %571 = vst [vmem:[#allocation2 + $0xc] sm:$0xf] %v570
      %v572 = vld [vmem:[%s561] sm:$0xf]
      %v574 = vshrl.u32 %v572, 16
      %v576 = vrot.slane %v574, 4
      %v577 = vshll.u32 %v572, 16
      %v579 = vrot.slane %v577, 5
      %v580 = vor.u32 %v576, %v579
      %v581 = vrot.slane %v580, 4
      %582 = vrot.lane.b32.xlu0 %v581, 64
      %v583 = vpop.permute.xlu0 %582
      %v585 = vld [vmem:[#allocation2 + $0xc] sm:$0xf]
      %v586 = vsel %vm557, %v583, %v585
      %587 = vst [vmem:[#allocation2 + $0xc] sm:$0xf] %v586
      %v588 = vld [vmem:[%s561] sm:$0xf]
      %v590 = vshll.u32 %v588, 16
      %v592 = vrot.slane %v590, 5
      %v593 = vshrl.u32 %v588, 16
      %v595 = vrot.slane %v593, 4
      %v596 = vor.u32 %v595, %v592
      %v597 = vrot.slane %v596, 4
      %vm600 = vcmask 1043459
      %vm601 = vsmask.f32 7950
      %vm602 = vmand %vm600, %vm601
      %v603 = vld [vmem:[#allocation2 + $0x8] sm:$0x8]
      %v604 = vsel %vm602, %v592, %v603
      %605 = vst [vmem:[#allocation2 + $0x8] sm:$0x8] %v604
      %vm606 = vcmask 1043456
      %vm607 = vmand %vm606, %vm538
      %v608 = vld [vmem:[#allocation2 + $0x10] sm:$0xf]
      %v609 = vsel %vm607, %v597, %v608
      %610 = vst [vmem:[#allocation2 + $0x10] sm:$0xf] %v609
      %v611 = vld [vmem:[%s561] sm:$0xf]
      %v613 = vshll.u32 %v611, 16
      %v615 = vrot.slane %v613, 5
      %v616 = vshrl.u32 %v611, 16
      %v618 = vrot.slane %v616, 4
      %v619 = vor.u32 %v618, %v615
      %v620 = vrot.slane %v619, 4
      %621 = vrot.lane.b32.xlu0 %v615, 64
      %v622 = vpop.permute.xlu0 %621
      %623 = vrot.lane.b32.xlu0 %v620, 64
      %v624 = vpop.permute.xlu0 %623
      %vm627 = vcmask 519171
      %vm628 = vmand %vm627, %vm601
      %v629 = vld [vmem:[#allocation2 + $0x10] sm:$0x8]
      %v630 = vsel %vm628, %v622, %v629
      %631 = vst [vmem:[#allocation2 + $0x10] sm:$0x8] %v630
      %vm632 = vcmask 518144
      %633 = vst.msk [vmem:[#allocation2 + $0x18] sm:$0x7] %vm632, %v624
      %v634 = vld [vmem:[%s561] sm:$0xf]
      %v636 = vrot.slane %v634, 5
      %v637 = vrot.slane %v636, 4
      %638 = vrot.lane.b32.xlu0 %v636, 64
      %v639 = vpop.permute.xlu0 %638
      %640 = vrot.lane.b32.xlu0 %v637, 64
      %v641 = vpop.permute.xlu0 %640
      %vm644 = vcmask 1043971
      %vm645 = vmand %vm644, %vm601
      %v646 = vld [vmem:[#allocation2 + $0x10] sm:$0x8]
      %v647 = vsel %vm645, %v639, %v646
      %648 = vst [vmem:[#allocation2 + $0x10] sm:$0x8] %v647
      %vm649 = vcmask 1042944
      %650 = vst.msk [vmem:[#allocation2 + $0x18] sm:$0x7] %vm649, %v641
      %s651 = scalar_lea.vmem %s521, 8
      %v652 = vld [vmem:[%s651] sm:$0xf]
      %v654 = vshll.u32 %v652, 16
      %v656 = vrot.slane %v654, 5
      %v657 = vshrl.u32 %v652, 16
      %v659 = vrot.slane %v657, 4
      %v660 = vor.u32 %v659, %v656
      %v661 = vrot.slane %v660, 4
      %v664 = vld [vmem:[#allocation2 + $0xc] sm:$0x8]
      %v665 = vsel %vm602, %v656, %v664
      %666 = vst [vmem:[#allocation2 + $0xc] sm:$0x8] %v665
      %v667 = vld [vmem:[#allocation2 + $0x14] sm:$0xf]
      %v668 = vsel %vm607, %v661, %v667
      %669 = vst [vmem:[#allocation2 + $0x14] sm:$0xf] %v668
      %v670 = vld [vmem:[%s651] sm:$0xf]
      %v672 = vshll.u32 %v670, 16
      %v674 = vrot.slane %v672, 5
      %v675 = vshrl.u32 %v670, 16
      %v677 = vrot.slane %v675, 4
      %v678 = vor.u32 %v677, %v674
      %v679 = vrot.slane %v678, 4
      %680 = vrot.lane.b32.xlu0 %v674, 64
      %v681 = vpop.permute.xlu0 %680
      %682 = vrot.lane.b32.xlu0 %v679, 64
      %v683 = vpop.permute.xlu0 %682
      %v686 = vld [vmem:[#allocation2 + $0x14] sm:$0x8]
      %v687 = vsel %vm628, %v681, %v686
      %688 = vst [vmem:[#allocation2 + $0x14] sm:$0x8] %v687
      %689 = vst.msk [vmem:[#allocation2 + $0x1c] sm:$0x7] %vm632, %v683
      %v690 = vld [vmem:[%s651] sm:$0xf]
      %v692 = vrot.slane %v690, 5
      %v693 = vrot.slane %v692, 4
      %694 = vrot.lane.b32.xlu0 %v692, 64
      %v695 = vpop.permute.xlu0 %694
      %696 = vrot.lane.b32.xlu0 %v693, 64
      %v697 = vpop.permute.xlu0 %696
      %v700 = vld [vmem:[#allocation2 + $0x14] sm:$0x8]
      %v701 = vsel %vm645, %v695, %v700
      %702 = vst [vmem:[#allocation2 + $0x14] sm:$0x8] %v701
      %703 = vst.msk [vmem:[#allocation2 + $0x1c] sm:$0x7] %vm649, %v697
      %v704 = vld [vmem:[%s651] sm:$0xf]
      %v706 = vrot.slane %v704, 5
      %v707 = vrot.slane %v706, 4
      %710 = vst [vmem:[#allocation2 + $0x18] sm:$0x8] %v706
      %711 = vst [vmem:[#allocation2 + $0x20] sm:$0x7] %v707
      %v712 = vld [vmem:[%s651] sm:$0xf]
      %v714 = vrot.slane %v712, 5
      %v715 = vrot.slane %v714, 4
      %716 = vrot.lane.b32.xlu0 %v714, 64
      %v717 = vpop.permute.xlu0 %716
      %718 = vrot.lane.b32.xlu0 %v715, 64
      %v719 = vpop.permute.xlu0 %718
      %vm722 = vcmask 519171
      %723 = vst.msk [vmem:[#allocation2 + $0x20] sm:$0x8] %vm722, %v717
      %vm724 = vcmask 518144
      %vm725 = vsmask.f32 2304
      %vm726 = vmand %vm724, %vm725
      %v727 = vld [vmem:[#allocation2 + $0x28] sm:$0x7]
      %v728 = vsel %vm726, %v719, %v727
      %729 = vst [vmem:[#allocation2 + $0x28] sm:$0x7] %v728
      %v730 = vld [vmem:[%s651] sm:$0xf]
      %v732 = vshrl.u32 %v730, 16
      %v734 = vrot.slane %v732, 5
      %v735 = vshll.u32 %v730, 16
      %v737 = vrot.slane %v735, 6
      %v738 = vor.u32 %v734, %v737
      %v739 = vrot.slane %v738, 4
      %740 = vrot.lane.b32.xlu0 %v738, 64
      %v741 = vpop.permute.xlu0 %740
      %742 = vrot.lane.b32.xlu0 %v739, 64
      %v743 = vpop.permute.xlu0 %742
      %vm746 = vcmask 1043971
      %747 = vst.msk [vmem:[#allocation2 + $0x20] sm:$0x8] %vm746, %v741
      %vm748 = vcmask 1042944
      %vm749 = vmand %vm748, %vm725
      %v750 = vld [vmem:[#allocation2 + $0x28] sm:$0x7]
      %v751 = vsel %vm749, %v743, %v750
      %752 = vst [vmem:[#allocation2 + $0x28] sm:$0x7] %v751
      %s753 = scalar_lea.vmem %s521, 12
      %v754 = vld [vmem:[%s753] sm:$0xf]
      %v756 = vrot.slane %v754, 5
      %v757 = vrot.slane %v756, 4
      %760 = vst [vmem:[#allocation2 + $0x1c] sm:$0x8] %v756
      %761 = vst [vmem:[#allocation2 + $0x24] sm:$0x7] %v757
      %v762 = vld [vmem:[%s753] sm:$0xf]
      %v764 = vrot.slane %v762, 5
      %v765 = vrot.slane %v764, 4
      %766 = vrot.lane.b32.xlu0 %v764, 64
      %v767 = vpop.permute.xlu0 %766
      %768 = vrot.lane.b32.xlu0 %v765, 64
      %v769 = vpop.permute.xlu0 %768
      %772 = vst.msk [vmem:[#allocation2 + $0x24] sm:$0x8] %vm722, %v767
      %v773 = vld [vmem:[#allocation2 + $0x2c] sm:$0x7]
      %v774 = vsel %vm726, %v769, %v773
      %775 = vst [vmem:[#allocation2 + $0x2c] sm:$0x7] %v774
      %v776 = vld [vmem:[%s753] sm:$0xf]
      %v778 = vshrl.u32 %v776, 16
      %v780 = vrot.slane %v778, 5
      %v781 = vshll.u32 %v776, 16
      %v783 = vrot.slane %v781, 6
      %v784 = vor.u32 %v780, %v783
      %v785 = vrot.slane %v784, 4
      %786 = vrot.lane.b32.xlu0 %v784, 64
      %v787 = vpop.permute.xlu0 %786
      %788 = vrot.lane.b32.xlu0 %v785, 64
      %v789 = vpop.permute.xlu0 %788
      %792 = vst.msk [vmem:[#allocation2 + $0x24] sm:$0x8] %vm746, %v787
      %v793 = vld [vmem:[#allocation2 + $0x2c] sm:$0x7]
      %v794 = vsel %vm749, %v789, %v793
      %795 = vst [vmem:[#allocation2 + $0x2c] sm:$0x7] %v794
      %v796 = vld [vmem:[%s753] sm:$0xf]
      %v798 = vshrl.u32 %v796, 16
      %v800 = vrot.slane %v798, 5
      %v801 = vshll.u32 %v796, 16
      %v803 = vrot.slane %v801, 6
      %v804 = vor.u32 %v800, %v803
      %v805 = vrot.slane %v804, 4
      %vm808 = vcmask 1043458
      %vm809 = vsmask.f32 7946
      %vm810 = vmand %vm808, %vm809
      %v811 = vld [vmem:[#allocation2 + $0x28] sm:$0xc]
      %v812 = vsel %vm810, %v804, %v811
      %813 = vst [vmem:[#allocation2 + $0x28] sm:$0xc] %v812
      %vm814 = vcmask 1042432
      %vm815 = vmand %vm814, %vm725
      %v816 = vld [vmem:[#allocation2 + $0x30] sm:$0x7]
      %v817 = vsel %vm815, %v805, %v816
      %818 = vst [vmem:[#allocation2 + $0x30] sm:$0x7] %v817
      %v819 = vld [vmem:[%s753] sm:$0xf]
      %v821 = vshrl.u32 %v819, 16
      %v823 = vrot.slane %v821, 5
      %v824 = vshll.u32 %v819, 16
      %v826 = vrot.slane %v824, 6
      %v827 = vor.u32 %v823, %v826
      %v828 = vrot.slane %v827, 4
      %829 = vrot.lane.b32.xlu0 %v827, 64
      %v830 = vpop.permute.xlu0 %829
      %831 = vrot.lane.b32.xlu0 %v828, 64
      %v832 = vpop.permute.xlu0 %831
      %vm835 = vcmask 519170
      %vm836 = vmand %vm835, %vm809
      %v837 = vld [vmem:[#allocation2 + $0x30] sm:$0xc]
      %v838 = vsel %vm836, %v830, %v837
      %839 = vst [vmem:[#allocation2 + $0x30] sm:$0xc] %v838
      %vm840 = vcmask 517120
      %841 = vst.msk [vmem:[#allocation2 + $0x38] sm:$0x3] %vm840, %v832
      %v842 = vld [vmem:[%s753] sm:$0xf]
      %v844 = vrot.slane %v842, 6
      %v845 = vrot.slane %v844, 4
      %846 = vrot.lane.b32.xlu0 %v844, 64
      %v847 = vpop.permute.xlu0 %846
      %848 = vrot.lane.b32.xlu0 %v845, 64
      %v849 = vpop.permute.xlu0 %848
      %vm852 = vcmask 1043970
      %vm853 = vmand %vm852, %vm809
      %v854 = vld [vmem:[#allocation2 + $0x30] sm:$0xc]
      %v855 = vsel %vm853, %v847, %v854
      %856 = vst [vmem:[#allocation2 + $0x30] sm:$0xc] %v855
      %vm857 = vcmask 1041920
      %858 = vst.msk [vmem:[#allocation2 + $0x38] sm:$0x3] %vm857, %v849
      %s859 = scalar_lea.vmem %s521, 16
      %v860 = vld [vmem:[%s859] sm:$0xf]
      %v862 = vshrl.u32 %v860, 16
      %v864 = vrot.slane %v862, 5
      %v865 = vshll.u32 %v860, 16
      %v867 = vrot.slane %v865, 6
      %v868 = vor.u32 %v864, %v867
      %v869 = vrot.slane %v868, 4
      %v872 = vld [vmem:[#allocation2 + $0x2c] sm:$0xc]
      %v873 = vsel %vm810, %v868, %v872
      %874 = vst [vmem:[#allocation2 + $0x2c] sm:$0xc] %v873
      %v875 = vld [vmem:[#allocation2 + $0x34] sm:$0x7]
      %v876 = vsel %vm815, %v869, %v875
      %877 = vst [vmem:[#allocation2 + $0x34] sm:$0x7] %v876
      %v878 = vld [vmem:[%s859] sm:$0xf]
      %v880 = vshrl.u32 %v878, 16
      %v882 = vrot.slane %v880, 5
      %v883 = vshll.u32 %v878, 16
      %v885 = vrot.slane %v883, 6
      %v886 = vor.u32 %v882, %v885
      %v887 = vrot.slane %v886, 4
      %888 = vrot.lane.b32.xlu0 %v886, 64
      %v889 = vpop.permute.xlu0 %888
      %890 = vrot.lane.b32.xlu0 %v887, 64
      %v891 = vpop.permute.xlu0 %890
      %v894 = vld [vmem:[#allocation2 + $0x34] sm:$0xc]
      %v895 = vsel %vm836, %v889, %v894
      %896 = vst [vmem:[#allocation2 + $0x34] sm:$0xc] %v895
      %897 = vst.msk [vmem:[#allocation2 + $0x3c] sm:$0x3] %vm840, %v891
      %v898 = vld [vmem:[%s859] sm:$0xf]
      %v900 = vrot.slane %v898, 6
      %v901 = vrot.slane %v900, 4
      %902 = vrot.lane.b32.xlu0 %v900, 64
      %v903 = vpop.permute.xlu0 %902
      %904 = vrot.lane.b32.xlu0 %v901, 64
      %v905 = vpop.permute.xlu0 %904
      %v908 = vld [vmem:[#allocation2 + $0x34] sm:$0xc]
      %v909 = vsel %vm853, %v903, %v908
      %910 = vst [vmem:[#allocation2 + $0x34] sm:$0xc] %v909
      %911 = vst.msk [vmem:[#allocation2 + $0x3c] sm:$0x3] %vm857, %v905
      %v912 = vld [vmem:[%s859] sm:$0xf]
      %v914 = vrot.slane %v912, 6
      %v915 = vrot.slane %v914, 4
      %918 = vst [vmem:[#allocation2 + $0x38] sm:$0xc] %v914
      %919 = vst [vmem:[#allocation2 + $0x40] sm:$0x3] %v915
      %v920 = vld [vmem:[%s859] sm:$0xf]
      %v922 = vrot.slane %v920, 6
      %v923 = vrot.slane %v922, 4
      %924 = vrot.lane.b32.xlu0 %v922, 64
      %v925 = vpop.permute.xlu0 %924
      %926 = vrot.lane.b32.xlu0 %v923, 64
      %v927 = vpop.permute.xlu0 %926
      %vm930 = vcmask 519170
      %931 = vst.msk [vmem:[#allocation2 + $0x40] sm:$0xc] %vm930, %v925
      %vm932 = vcmask 517120
      %vm933 = vsmask.f32 1280
      %vm934 = vmand %vm932, %vm933
      %v935 = vld [vmem:[#allocation2 + $0x48] sm:$0x3]
      %v936 = vsel %vm934, %v927, %v935
      %937 = vst [vmem:[#allocation2 + $0x48] sm:$0x3] %v936
      %v938 = vld [vmem:[%s859] sm:$0xf]
      %v940 = vshrl.u32 %v938, 16
      %v942 = vrot.slane %v940, 6
      %v943 = vshll.u32 %v938, 16
      %v945 = vrot.slane %v943, 7
      %v946 = vor.u32 %v942, %v945
      %v947 = vrot.slane %v946, 4
      %948 = vrot.lane.b32.xlu0 %v946, 64
      %v949 = vpop.permute.xlu0 %948
      %950 = vrot.lane.b32.xlu0 %v947, 64
      %v951 = vpop.permute.xlu0 %950
      %vm954 = vcmask 1043970
      %955 = vst.msk [vmem:[#allocation2 + $0x40] sm:$0xc] %vm954, %v949
      %vm956 = vcmask 1041920
      %vm957 = vmand %vm956, %vm933
      %v958 = vld [vmem:[#allocation2 + $0x48] sm:$0x3]
      %v959 = vsel %vm957, %v951, %v958
      %960 = vst [vmem:[#allocation2 + $0x48] sm:$0x3] %v959
      %s961 = scalar_lea.vmem %s521, 20
      %v962 = vld [vmem:[%s961] sm:$0xf]
      %v964 = vrot.slane %v962, 6
      %v965 = vrot.slane %v964, 4
      %968 = vst [vmem:[#allocation2 + $0x3c] sm:$0xc] %v964
      %969 = vst [vmem:[#allocation2 + $0x44] sm:$0x3] %v965
      %v970 = vld [vmem:[%s961] sm:$0xf]
      %v972 = vrot.slane %v970, 6
      %v973 = vrot.slane %v972, 4
      %974 = vrot.lane.b32.xlu0 %v972, 64
      %v975 = vpop.permute.xlu0 %974
      %976 = vrot.lane.b32.xlu0 %v973, 64
      %v977 = vpop.permute.xlu0 %976
      %980 = vst.msk [vmem:[#allocation2 + $0x44] sm:$0xc] %vm930, %v975
      %v981 = vld [vmem:[#allocation2 + $0x4c] sm:$0x3]
      %v982 = vsel %vm934, %v977, %v981
      %983 = vst [vmem:[#allocation2 + $0x4c] sm:$0x3] %v982
      %v984 = vld [vmem:[%s961] sm:$0xf]
      %v986 = vshrl.u32 %v984, 16
      %v988 = vrot.slane %v986, 6
      %v989 = vshll.u32 %v984, 16
      %v991 = vrot.slane %v989, 7
      %v992 = vor.u32 %v988, %v991
      %v993 = vrot.slane %v992, 4
      %994 = vrot.lane.b32.xlu0 %v992, 64
      %v995 = vpop.permute.xlu0 %994
      %996 = vrot.lane.b32.xlu0 %v993, 64
      %v997 = vpop.permute.xlu0 %996
      %1000 = vst.msk [vmem:[#allocation2 + $0x44] sm:$0xc] %vm954, %v995
      %v1001 = vld [vmem:[#allocation2 + $0x4c] sm:$0x3]
      %v1002 = vsel %vm957, %v997, %v1001
      %1003 = vst [vmem:[#allocation2 + $0x4c] sm:$0x3] %v1002
      %v1004 = vld [vmem:[%s961] sm:$0xf]
      %v1006 = vshrl.u32 %v1004, 16
      %v1008 = vrot.slane %v1006, 6
      %v1009 = vshll.u32 %v1004, 16
      %v1011 = vrot.slane %v1009, 7
      %v1012 = vor.u32 %v1008, %v1011
      %v1013 = vrot.slane %v1012, 4
      %vm1016 = vcmask 1043457
      %vm1017 = vsmask.f32 7942
      %vm1018 = vmand %vm1016, %vm1017
      %v1019 = vld [vmem:[#allocation2 + $0x48] sm:$0xe]
      %v1020 = vsel %vm1018, %v1012, %v1019
      %1021 = vst [vmem:[#allocation2 + $0x48] sm:$0xe] %v1020
      %vm1022 = vcmask 1041408
      %vm1023 = vmand %vm1022, %vm933
      %v1024 = vld [vmem:[#allocation2 + $0x50] sm:$0x3]
      %v1025 = vsel %vm1023, %v1013, %v1024
      %1026 = vst [vmem:[#allocation2 + $0x50] sm:$0x3] %v1025
      %v1027 = vld [vmem:[%s961] sm:$0xf]
      %v1029 = vshrl.u32 %v1027, 16
      %v1031 = vrot.slane %v1029, 6
      %v1032 = vshll.u32 %v1027, 16
      %v1034 = vrot.slane %v1032, 7
      %v1035 = vor.u32 %v1031, %v1034
      %v1036 = vrot.slane %v1035, 4
      %1037 = vrot.lane.b32.xlu0 %v1035, 64
      %v1038 = vpop.permute.xlu0 %1037
      %1039 = vrot.lane.b32.xlu0 %v1036, 64
      %v1040 = vpop.permute.xlu0 %1039
      %vm1043 = vcmask 519169
      %vm1044 = vmand %vm1043, %vm1017
      %v1045 = vld [vmem:[#allocation2 + $0x50] sm:$0xe]
      %v1046 = vsel %vm1044, %v1038, %v1045
      %1047 = vst [vmem:[#allocation2 + $0x50] sm:$0xe] %v1046
      %vm1048 = vcmask 516096
      %1049 = vst.msk [vmem:[#allocation2 + $0x58] sm:$0x1] %vm1048, %v1040
      %v1050 = vld [vmem:[%s961] sm:$0xf]
      %v1052 = vrot.slane %v1050, 7
      %v1053 = vrot.slane %v1052, 4
      %1054 = vrot.lane.b32.xlu0 %v1052, 64
      %v1055 = vpop.permute.xlu0 %1054
      %1056 = vrot.lane.b32.xlu0 %v1053, 64
      %v1057 = vpop.permute.xlu0 %1056
      %vm1060 = vcmask 1043969
      %vm1061 = vmand %vm1060, %vm1017
      %v1062 = vld [vmem:[#allocation2 + $0x50] sm:$0xe]
      %v1063 = vsel %vm1061, %v1055, %v1062
      %1064 = vst [vmem:[#allocation2 + $0x50] sm:$0xe] %v1063
      %vm1065 = vcmask 1040896
      %1066 = vst.msk [vmem:[#allocation2 + $0x58] sm:$0x1] %vm1065, %v1057
      %s1067 = scalar_lea.vmem %s521, 24
      %v1068 = vld [vmem:[%s1067] sm:$0xf]
      %v1070 = vshrl.u32 %v1068, 16
      %v1072 = vrot.slane %v1070, 6
      %v1073 = vshll.u32 %v1068, 16
      %v1075 = vrot.slane %v1073, 7
      %v1076 = vor.u32 %v1072, %v1075
      %v1077 = vrot.slane %v1076, 4
      %v1080 = vld [vmem:[#allocation2 + $0x4c] sm:$0xe]
      %v1081 = vsel %vm1018, %v1076, %v1080
      %1082 = vst [vmem:[#allocation2 + $0x4c] sm:$0xe] %v1081
      %v1083 = vld [vmem:[#allocation2 + $0x54] sm:$0x3]
      %v1084 = vsel %vm1023, %v1077, %v1083
      %1085 = vst [vmem:[#allocation2 + $0x54] sm:$0x3] %v1084
      %v1086 = vld [vmem:[%s1067] sm:$0xf]
      %v1088 = vshrl.u32 %v1086, 16
      %v1090 = vrot.slane %v1088, 6
      %v1091 = vshll.u32 %v1086, 16
      %v1093 = vrot.slane %v1091, 7
      %v1094 = vor.u32 %v1090, %v1093
      %v1095 = vrot.slane %v1094, 4
      %1096 = vrot.lane.b32.xlu0 %v1094, 64
      %v1097 = vpop.permute.xlu0 %1096
      %1098 = vrot.lane.b32.xlu0 %v1095, 64
      %v1099 = vpop.permute.xlu0 %1098
      %v1102 = vld [vmem:[#allocation2 + $0x54] sm:$0xe]
      %v1103 = vsel %vm1044, %v1097, %v1102
      %1104 = vst [vmem:[#allocation2 + $0x54] sm:$0xe] %v1103
      %1105 = vst.msk [vmem:[#allocation2 + $0x5c] sm:$0x1] %vm1048, %v1099
      %v1106 = vld [vmem:[%s1067] sm:$0xf]
      %v1108 = vrot.slane %v1106, 7
      %v1109 = vrot.slane %v1108, 4
      %1110 = vrot.lane.b32.xlu0 %v1108, 64
      %v1111 = vpop.permute.xlu0 %1110
      %1112 = vrot.lane.b32.xlu0 %v1109, 64
      %v1113 = vpop.permute.xlu0 %1112
      %v1116 = vld [vmem:[#allocation2 + $0x54] sm:$0xe]
      %v1117 = vsel %vm1061, %v1111, %v1116
      %1118 = vst [vmem:[#allocation2 + $0x54] sm:$0xe] %v1117
      %1119 = vst.msk [vmem:[#allocation2 + $0x5c] sm:$0x1] %vm1065, %v1113
      %v1120 = vld [vmem:[%s1067] sm:$0xf]
      %v1122 = vrot.slane %v1120, 7
      %v1123 = vrot.slane %v1122, 4
      %1126 = vst [vmem:[#allocation2 + $0x58] sm:$0xe] %v1122
      %1127 = vst [vmem:[#allocation2 + $0x60] sm:$0x1] %v1123
      %v1128 = vld [vmem:[%s1067] sm:$0xf]
      %v1130 = vrot.slane %v1128, 7
      %v1131 = vrot.slane %v1130, 4
      %1132 = vrot.lane.b32.xlu0 %v1130, 64
      %v1133 = vpop.permute.xlu0 %1132
      %1134 = vrot.lane.b32.xlu0 %v1131, 64
      %v1135 = vpop.permute.xlu0 %1134
      %vm1138 = vcmask 519169
      %1139 = vst.msk [vmem:[#allocation2 + $0x60] sm:$0xe] %vm1138, %v1133
      %vm1140 = vcmask 516096
      %vm1141 = vsmask.f32 256
      %vm1142 = vmand %vm1140, %vm1141
      %v1143 = vld [vmem:[#allocation2 + $0x68] sm:$0x1]
      %v1144 = vsel %vm1142, %v1135, %v1143
      %1145 = vst [vmem:[#allocation2 + $0x68] sm:$0x1] %v1144
      %v1146 = vld [vmem:[%s1067] sm:$0xf]
      %v1148 = vshrl.u32 %v1146, 16
      %v1150 = vrot.slane %v1148, 7
      %v1151 = vshll.u32 %v1146, 16
      %v1153 = vor.u32 %v1150, %v1151
      %v1154 = vrot.slane %v1150, 4
      %1155 = vrot.lane.b32.xlu0 %v1153, 64
      %v1156 = vpop.permute.xlu0 %1155
      %1157 = vrot.lane.b32.xlu0 %v1154, 64
      %v1158 = vpop.permute.xlu0 %1157
      %vm1161 = vcmask 1043969
      %1162 = vst.msk [vmem:[#allocation2 + $0x60] sm:$0xe] %vm1161, %v1156
      %vm1163 = vcmask 1040896
      %vm1164 = vmand %vm1163, %vm1141
      %v1165 = vld [vmem:[#allocation2 + $0x68] sm:$0x1]
      %v1166 = vsel %vm1164, %v1158, %v1165
      %1167 = vst [vmem:[#allocation2 + $0x68] sm:$0x1] %v1166
      %s1168 = scalar_lea.vmem %s521, 28
      %v1169 = vld [vmem:[%s1168] sm:$0xf]
      %v1171 = vrot.slane %v1169, 7
      %v1172 = vrot.slane %v1171, 4
      %1175 = vst [vmem:[#allocation2 + $0x5c] sm:$0xe] %v1171
      %1176 = vst [vmem:[#allocation2 + $0x64] sm:$0x1] %v1172
      %v1177 = vld [vmem:[%s1168] sm:$0xf]
      %v1179 = vrot.slane %v1177, 7
      %v1180 = vrot.slane %v1179, 4
      %1181 = vrot.lane.b32.xlu0 %v1179, 64
      %v1182 = vpop.permute.xlu0 %1181
      %1183 = vrot.lane.b32.xlu0 %v1180, 64
      %v1184 = vpop.permute.xlu0 %1183
      %1187 = vst.msk [vmem:[#allocation2 + $0x64] sm:$0xe] %vm1138, %v1182
      %v1188 = vld [vmem:[#allocation2 + $0x6c] sm:$0x1]
      %v1189 = vsel %vm1142, %v1184, %v1188
      %1190 = vst [vmem:[#allocation2 + $0x6c] sm:$0x1] %v1189
      %v1191 = vld [vmem:[%s1168] sm:$0xf]
      %v1193 = vshrl.u32 %v1191, 16
      %v1195 = vrot.slane %v1193, 7
      %v1196 = vshll.u32 %v1191, 16
      %v1198 = vor.u32 %v1195, %v1196
      %v1199 = vrot.slane %v1195, 4
      %1200 = vrot.lane.b32.xlu0 %v1198, 64
      %v1201 = vpop.permute.xlu0 %1200
      %1202 = vrot.lane.b32.xlu0 %v1199, 64
      %v1203 = vpop.permute.xlu0 %1202
      %1206 = vst.msk [vmem:[#allocation2 + $0x64] sm:$0xe] %vm1161, %v1201
      %v1207 = vld [vmem:[#allocation2 + $0x6c] sm:$0x1]
      %v1208 = vsel %vm1164, %v1203, %v1207
      %1209 = vst [vmem:[#allocation2 + $0x6c] sm:$0x1] %v1208
      %v1210 = vld [vmem:[%s1168] sm:$0xf]
      %v1212 = vshrl.u32 %v1210, 16
      %v1214 = vrot.slane %v1212, 7
      %v1215 = vshll.u32 %v1210, 16
      %v1217 = vor.u32 %v1214, %v1215
      %v1218 = vrot.slane %v1214, 4
      %vm1221 = vsmask.f32 7938
      %vm1222 = vmand %vm606, %vm1221
      %v1223 = vld [vmem:[#allocation2 + $0x68] sm:$0xf]
      %v1224 = vsel %vm1222, %v1217, %v1223
      %1225 = vst [vmem:[#allocation2 + $0x68] sm:$0xf] %v1224
      %vm1226 = vcmask 1040384
      %vm1227 = vmand %vm1226, %vm1141
      %v1228 = vld [vmem:[#allocation2 + $0x70] sm:$0x1]
      %v1229 = vsel %vm1227, %v1218, %v1228
      %1230 = vst [vmem:[#allocation2 + $0x70] sm:$0x1] %v1229
      %v1231 = vld [vmem:[%s1168] sm:$0xf]
      %v1233 = vshrl.u32 %v1231, 16
      %v1235 = vrot.slane %v1233, 7
      %v1236 = vshll.u32 %v1231, 16
      %v1238 = vor.u32 %v1235, %v1236
      %1239 = vrot.lane.b32.xlu0 %v1238, 64
      %v1240 = vpop.permute.xlu0 %1239
      %vm1242 = vmand %vm537, %vm1221
      %v1243 = vld [vmem:[#allocation2 + $0x70] sm:$0xf]
      %v1244 = vsel %vm1242, %v1240, %v1243
      %1245 = vst [vmem:[#allocation2 + $0x70] sm:$0xf] %v1244
      %v1246 = vld [vmem:[%s1168] sm:$0xf]
      %1248 = vrot.lane.b32.xlu0 %v1246, 64
      %v1249 = vpop.permute.xlu0 %1248
      %vm1251 = vmand %vm556, %vm1221
      %v1252 = vld [vmem:[#allocation2 + $0x70] sm:$0xf]
      %v1253 = vsel %vm1251, %v1249, %v1252
      %1254 = vst [vmem:[#allocation2 + $0x70] sm:$0xf] %v1253
      %s1255 = scalar_lea.vmem %s521, 32
      %v1256 = vld [vmem:[%s1255] sm:$0xf]
      %v1258 = vshrl.u32 %v1256, 16
      %v1260 = vrot.slane %v1258, 7
      %v1261 = vshll.u32 %v1256, 16
      %v1263 = vor.u32 %v1260, %v1261
      %v1264 = vrot.slane %v1260, 4
      %v1267 = vld [vmem:[#allocation2 + $0x6c] sm:$0xf]
      %v1268 = vsel %vm1222, %v1263, %v1267
      %1269 = vst [vmem:[#allocation2 + $0x6c] sm:$0xf] %v1268
      %v1270 = vld [vmem:[#allocation2 + $0x74] sm:$0x1]
      %v1271 = vsel %vm1227, %v1264, %v1270
      %1272 = vst [vmem:[#allocation2 + $0x74] sm:$0x1] %v1271
      %v1273 = vld [vmem:[%s1255] sm:$0xf]
      %v1275 = vshrl.u32 %v1273, 16
      %v1277 = vrot.slane %v1275, 7
      %v1278 = vshll.u32 %v1273, 16
      %v1280 = vor.u32 %v1277, %v1278
      %1281 = vrot.lane.b32.xlu0 %v1280, 64
      %v1282 = vpop.permute.xlu0 %1281
      %v1284 = vld [vmem:[#allocation2 + $0x74] sm:$0xf]
      %v1285 = vsel %vm1242, %v1282, %v1284
      %1286 = vst [vmem:[#allocation2 + $0x74] sm:$0xf] %v1285
      %v1287 = vld [vmem:[%s1255] sm:$0xf]
      %1289 = vrot.lane.b32.xlu0 %v1287, 64
      %v1290 = vpop.permute.xlu0 %1289
      %v1292 = vld [vmem:[#allocation2 + $0x74] sm:$0xf]
      %v1293 = vsel %vm1251, %v1290, %v1292
      %1294 = vst [vmem:[#allocation2 + $0x74] sm:$0xf] %v1293
      %v1295 = vld [vmem:[%s1255] sm:$0xf]
      %1296 = vst [vmem:[#allocation2 + $0x78] sm:$0xf] %v1295
      %v1297 = vld [vmem:[%s1255] sm:$0xf]
      %1299 = vrot.lane.b32.xlu0 %v1297, 64
      %v1300 = vpop.permute.xlu0 %1299
      %v1302 = vld [vmem:[#allocation2 + $0x80] sm:$0xf]
      %v1303 = vsel %vm539, %v1300, %v1302
      %1304 = vst [vmem:[#allocation2 + $0x80] sm:$0xf] %v1303
      %v1305 = vld [vmem:[%s1255] sm:$0xf]
      %v1307 = vshrl.u32 %v1305, 16
      %v1309 = vrot.slane %v1307, 4
      %v1310 = vshll.u32 %v1305, 16
      %v1312 = vrot.slane %v1310, 5
      %v1313 = vor.u32 %v1309, %v1312
      %v1314 = vrot.slane %v1313, 4
      %1315 = vrot.lane.b32.xlu0 %v1314, 64
      %v1316 = vpop.permute.xlu0 %1315
      %v1318 = vld [vmem:[#allocation2 + $0x80] sm:$0xf]
      %v1319 = vsel %vm557, %v1316, %v1318
      %1320 = vst [vmem:[#allocation2 + $0x80] sm:$0xf] %v1319
      %s1321 = scalar_lea.vmem %s521, 36
      %v1322 = vld [vmem:[%s1321] sm:$0xf]
      %1323 = vst [vmem:[#allocation2 + $0x7c] sm:$0xf] %v1322
      %v1324 = vld [vmem:[%s1321] sm:$0xf]
      %1326 = vrot.lane.b32.xlu0 %v1324, 64
      %v1327 = vpop.permute.xlu0 %1326
      %v1329 = vld [vmem:[#allocation2 + $0x84] sm:$0xf]
      %v1330 = vsel %vm539, %v1327, %v1329
      %1331 = vst [vmem:[#allocation2 + $0x84] sm:$0xf] %v1330
      %v1332 = vld [vmem:[%s1321] sm:$0xf]
      %v1334 = vshrl.u32 %v1332, 16
      %v1336 = vrot.slane %v1334, 4
      %v1337 = vshll.u32 %v1332, 16
      %v1339 = vrot.slane %v1337, 5
      %v1340 = vor.u32 %v1336, %v1339
      %v1341 = vrot.slane %v1340, 4
      %1342 = vrot.lane.b32.xlu0 %v1341, 64
      %v1343 = vpop.permute.xlu0 %1342
      %v1345 = vld [vmem:[#allocation2 + $0x84] sm:$0xf]
      %v1346 = vsel %vm557, %v1343, %v1345
      %1347 = vst [vmem:[#allocation2 + $0x84] sm:$0xf] %v1346
      %v1348 = vld [vmem:[%s1321] sm:$0xf]
      %v1350 = vshll.u32 %v1348, 16
      %v1352 = vrot.slane %v1350, 5
      %v1353 = vshrl.u32 %v1348, 16
      %v1355 = vrot.slane %v1353, 4
      %v1356 = vor.u32 %v1355, %v1352
      %v1357 = vrot.slane %v1356, 4
      %v1360 = vld [vmem:[#allocation2 + $0x80] sm:$0x8]
      %v1361 = vsel %vm602, %v1352, %v1360
      %1362 = vst [vmem:[#allocation2 + $0x80] sm:$0x8] %v1361
      %v1363 = vld [vmem:[#allocation2 + $0x88] sm:$0xf]
      %v1364 = vsel %vm607, %v1357, %v1363
      %1365 = vst [vmem:[#allocation2 + $0x88] sm:$0xf] %v1364
      %v1366 = vld [vmem:[%s1321] sm:$0xf]
      %v1368 = vshll.u32 %v1366, 16
      %v1370 = vrot.slane %v1368, 5
      %v1371 = vshrl.u32 %v1366, 16
      %v1373 = vrot.slane %v1371, 4
      %v1374 = vor.u32 %v1373, %v1370
      %v1375 = vrot.slane %v1374, 4
      %1376 = vrot.lane.b32.xlu0 %v1370, 64
      %v1377 = vpop.permute.xlu0 %1376
      %1378 = vrot.lane.b32.xlu0 %v1375, 64
      %v1379 = vpop.permute.xlu0 %1378
      %v1382 = vld [vmem:[#allocation2 + $0x88] sm:$0x8]
      %v1383 = vsel %vm628, %v1377, %v1382
      %1384 = vst [vmem:[#allocation2 + $0x88] sm:$0x8] %v1383
      %1385 = vst.msk [vmem:[#allocation2 + $0x90] sm:$0x7] %vm632, %v1379
      %v1386 = vld [vmem:[%s1321] sm:$0xf]
      %v1388 = vrot.slane %v1386, 5
      %v1389 = vrot.slane %v1388, 4
      %1390 = vrot.lane.b32.xlu0 %v1388, 64
      %v1391 = vpop.permute.xlu0 %1390
      %1392 = vrot.lane.b32.xlu0 %v1389, 64
      %v1393 = vpop.permute.xlu0 %1392
      %v1396 = vld [vmem:[#allocation2 + $0x88] sm:$0x8]
      %v1397 = vsel %vm645, %v1391, %v1396
      %1398 = vst [vmem:[#allocation2 + $0x88] sm:$0x8] %v1397
      %1399 = vst.msk [vmem:[#allocation2 + $0x90] sm:$0x7] %vm649, %v1393
      %s1400 = scalar_lea.vmem %s521, 40
      %v1401 = vld [vmem:[%s1400] sm:$0xf]
      %v1403 = vshll.u32 %v1401, 16
      %v1405 = vrot.slane %v1403, 5
      %v1406 = vshrl.u32 %v1401, 16
      %v1408 = vrot.slane %v1406, 4
      %v1409 = vor.u32 %v1408, %v1405
      %v1410 = vrot.slane %v1409, 4
      %v1413 = vld [vmem:[#allocation2 + $0x84] sm:$0x8]
      %v1414 = vsel %vm602, %v1405, %v1413
      %1415 = vst [vmem:[#allocation2 + $0x84] sm:$0x8] %v1414
      %v1416 = vld [vmem:[#allocation2 + $0x8c] sm:$0xf]
      %v1417 = vsel %vm607, %v1410, %v1416
      %1418 = vst [vmem:[#allocation2 + $0x8c] sm:$0xf] %v1417
      %v1419 = vld [vmem:[%s1400] sm:$0xf]
      %v1421 = vshll.u32 %v1419, 16
      %v1423 = vrot.slane %v1421, 5
      %v1424 = vshrl.u32 %v1419, 16
      %v1426 = vrot.slane %v1424, 4
      %v1427 = vor.u32 %v1426, %v1423
      %v1428 = vrot.slane %v1427, 4
      %1429 = vrot.lane.b32.xlu0 %v1423, 64
      %v1430 = vpop.permute.xlu0 %1429
      %1431 = vrot.lane.b32.xlu0 %v1428, 64
      %v1432 = vpop.permute.xlu0 %1431
      %v1435 = vld [vmem:[#allocation2 + $0x8c] sm:$0x8]
      %v1436 = vsel %vm628, %v1430, %v1435
      %1437 = vst [vmem:[#allocation2 + $0x8c] sm:$0x8] %v1436
      %1438 = vst.msk [vmem:[#allocation2 + $0x94] sm:$0x7] %vm632, %v1432
      %v1439 = vld [vmem:[%s1400] sm:$0xf]
      %v1441 = vrot.slane %v1439, 5
      %v1442 = vrot.slane %v1441, 4
      %1443 = vrot.lane.b32.xlu0 %v1441, 64
      %v1444 = vpop.permute.xlu0 %1443
      %1445 = vrot.lane.b32.xlu0 %v1442, 64
      %v1446 = vpop.permute.xlu0 %1445
      %v1449 = vld [vmem:[#allocation2 + $0x8c] sm:$0x8]
      %v1450 = vsel %vm645, %v1444, %v1449
      %1451 = vst [vmem:[#allocation2 + $0x8c] sm:$0x8] %v1450
      %1452 = vst.msk [vmem:[#allocation2 + $0x94] sm:$0x7] %vm649, %v1446
      %v1453 = vld [vmem:[%s1400] sm:$0xf]
      %v1455 = vrot.slane %v1453, 5
      %v1456 = vrot.slane %v1455, 4
      %1459 = vst [vmem:[#allocation2 + $0x90] sm:$0x8] %v1455
      %1460 = vst [vmem:[#allocation2 + $0x98] sm:$0x7] %v1456
      %v1461 = vld [vmem:[%s1400] sm:$0xf]
      %v1463 = vrot.slane %v1461, 5
      %v1464 = vrot.slane %v1463, 4
      %1465 = vrot.lane.b32.xlu0 %v1463, 64
      %v1466 = vpop.permute.xlu0 %1465
      %1467 = vrot.lane.b32.xlu0 %v1464, 64
      %v1468 = vpop.permute.xlu0 %1467
      %1471 = vst.msk [vmem:[#allocation2 + $0x98] sm:$0x8] %vm722, %v1466
      %v1472 = vld [vmem:[#allocation2 + $0xa0] sm:$0x7]
      %v1473 = vsel %vm726, %v1468, %v1472
      %1474 = vst [vmem:[#allocation2 + $0xa0] sm:$0x7] %v1473
      %v1475 = vld [vmem:[%s1400] sm:$0xf]
      %v1477 = vshrl.u32 %v1475, 16
      %v1479 = vrot.slane %v1477, 5
      %v1480 = vshll.u32 %v1475, 16
      %v1482 = vrot.slane %v1480, 6
      %v1483 = vor.u32 %v1479, %v1482
      %v1484 = vrot.slane %v1483, 4
      %1485 = vrot.lane.b32.xlu0 %v1483, 64
      %v1486 = vpop.permute.xlu0 %1485
      %1487 = vrot.lane.b32.xlu0 %v1484, 64
      %v1488 = vpop.permute.xlu0 %1487
      %1491 = vst.msk [vmem:[#allocation2 + $0x98] sm:$0x8] %vm746, %v1486
      %v1492 = vld [vmem:[#allocation2 + $0xa0] sm:$0x7]
      %v1493 = vsel %vm749, %v1488, %v1492
      %1494 = vst [vmem:[#allocation2 + $0xa0] sm:$0x7] %v1493
      %s1495 = scalar_lea.vmem %s521, 44
      %v1496 = vld [vmem:[%s1495] sm:$0xf]
      %v1498 = vrot.slane %v1496, 5
      %v1499 = vrot.slane %v1498, 4
      %1502 = vst [vmem:[#allocation2 + $0x94] sm:$0x8] %v1498
      %1503 = vst [vmem:[#allocation2 + $0x9c] sm:$0x7] %v1499
      %v1504 = vld [vmem:[%s1495] sm:$0xf]
      %v1506 = vrot.slane %v1504, 5
      %v1507 = vrot.slane %v1506, 4
      %1508 = vrot.lane.b32.xlu0 %v1506, 64
      %v1509 = vpop.permute.xlu0 %1508
      %1510 = vrot.lane.b32.xlu0 %v1507, 64
      %v1511 = vpop.permute.xlu0 %1510
      %1514 = vst.msk [vmem:[#allocation2 + $0x9c] sm:$0x8] %vm722, %v1509
      %v1515 = vld [vmem:[#allocation2 + $0xa4] sm:$0x7]
      %v1516 = vsel %vm726, %v1511, %v1515
      %1517 = vst [vmem:[#allocation2 + $0xa4] sm:$0x7] %v1516
      %v1518 = vld [vmem:[%s1495] sm:$0xf]
      %v1520 = vshrl.u32 %v1518, 16
      %v1522 = vrot.slane %v1520, 5
      %v1523 = vshll.u32 %v1518, 16
      %v1525 = vrot.slane %v1523, 6
      %v1526 = vor.u32 %v1522, %v1525
      %v1527 = vrot.slane %v1526, 4
      %1528 = vrot.lane.b32.xlu0 %v1526, 64
      %v1529 = vpop.permute.xlu0 %1528
      %1530 = vrot.lane.b32.xlu0 %v1527, 64
      %v1531 = vpop.permute.xlu0 %1530
      %1534 = vst.msk [vmem:[#allocation2 + $0x9c] sm:$0x8] %vm746, %v1529
      %v1535 = vld [vmem:[#allocation2 + $0xa4] sm:$0x7]
      %v1536 = vsel %vm749, %v1531, %v1535
      %1537 = vst [vmem:[#allocation2 + $0xa4] sm:$0x7] %v1536
      %v1538 = vld [vmem:[%s1495] sm:$0xf]
      %v1540 = vshrl.u32 %v1538, 16
      %v1542 = vrot.slane %v1540, 5
      %v1543 = vshll.u32 %v1538, 16
      %v1545 = vrot.slane %v1543, 6
      %v1546 = vor.u32 %v1542, %v1545
      %v1547 = vrot.slane %v1546, 4
      %v1550 = vld [vmem:[#allocation2 + $0xa0] sm:$0xc]
      %v1551 = vsel %vm810, %v1546, %v1550
      %1552 = vst [vmem:[#allocation2 + $0xa0] sm:$0xc] %v1551
      %v1553 = vld [vmem:[#allocation2 + $0xa8] sm:$0x7]
      %v1554 = vsel %vm815, %v1547, %v1553
      %1555 = vst [vmem:[#allocation2 + $0xa8] sm:$0x7] %v1554
      %v1556 = vld [vmem:[%s1495] sm:$0xf]
      %v1558 = vshrl.u32 %v1556, 16
      %v1560 = vrot.slane %v1558, 5
      %v1561 = vshll.u32 %v1556, 16
      %v1563 = vrot.slane %v1561, 6
      %v1564 = vor.u32 %v1560, %v1563
      %v1565 = vrot.slane %v1564, 4
      %1566 = vrot.lane.b32.xlu0 %v1564, 64
      %v1567 = vpop.permute.xlu0 %1566
      %1568 = vrot.lane.b32.xlu0 %v1565, 64
      %v1569 = vpop.permute.xlu0 %1568
      %v1572 = vld [vmem:[#allocation2 + $0xa8] sm:$0xc]
      %v1573 = vsel %vm836, %v1567, %v1572
      %1574 = vst [vmem:[#allocation2 + $0xa8] sm:$0xc] %v1573
      %1575 = vst.msk [vmem:[#allocation2 + $0xb0] sm:$0x3] %vm840, %v1569
      %v1576 = vld [vmem:[%s1495] sm:$0xf]
      %v1578 = vrot.slane %v1576, 6
      %v1579 = vrot.slane %v1578, 4
      %1580 = vrot.lane.b32.xlu0 %v1578, 64
      %v1581 = vpop.permute.xlu0 %1580
      %1582 = vrot.lane.b32.xlu0 %v1579, 64
      %v1583 = vpop.permute.xlu0 %1582
      %v1586 = vld [vmem:[#allocation2 + $0xa8] sm:$0xc]
      %v1587 = vsel %vm853, %v1581, %v1586
      %1588 = vst [vmem:[#allocation2 + $0xa8] sm:$0xc] %v1587
      %1589 = vst.msk [vmem:[#allocation2 + $0xb0] sm:$0x3] %vm857, %v1583
      %s1590 = scalar_lea.vmem %s521, 48
      %v1591 = vld [vmem:[%s1590] sm:$0xf]
      %v1593 = vshrl.u32 %v1591, 16
      %v1595 = vrot.slane %v1593, 5
      %v1596 = vshll.u32 %v1591, 16
      %v1598 = vrot.slane %v1596, 6
      %v1599 = vor.u32 %v1595, %v1598
      %v1600 = vrot.slane %v1599, 4
      %v1603 = vld [vmem:[#allocation2 + $0xa4] sm:$0xc]
      %v1604 = vsel %vm810, %v1599, %v1603
      %1605 = vst [vmem:[#allocation2 + $0xa4] sm:$0xc] %v1604
      %v1606 = vld [vmem:[#allocation2 + $0xac] sm:$0x7]
      %v1607 = vsel %vm815, %v1600, %v1606
      %1608 = vst [vmem:[#allocation2 + $0xac] sm:$0x7] %v1607
      %v1609 = vld [vmem:[%s1590] sm:$0xf]
      %v1611 = vshrl.u32 %v1609, 16
      %v1613 = vrot.slane %v1611, 5
      %v1614 = vshll.u32 %v1609, 16
      %v1616 = vrot.slane %v1614, 6
      %v1617 = vor.u32 %v1613, %v1616
      %v1618 = vrot.slane %v1617, 4
      %1619 = vrot.lane.b32.xlu0 %v1617, 64
      %v1620 = vpop.permute.xlu0 %1619
      %1621 = vrot.lane.b32.xlu0 %v1618, 64
      %v1622 = vpop.permute.xlu0 %1621
      %v1625 = vld [vmem:[#allocation2 + $0xac] sm:$0xc]
      %v1626 = vsel %vm836, %v1620, %v1625
      %1627 = vst [vmem:[#allocation2 + $0xac] sm:$0xc] %v1626
      %1628 = vst.msk [vmem:[#allocation2 + $0xb4] sm:$0x3] %vm840, %v1622
      %v1629 = vld [vmem:[%s1590] sm:$0xf]
      %v1631 = vrot.slane %v1629, 6
      %v1632 = vrot.slane %v1631, 4
      %1633 = vrot.lane.b32.xlu0 %v1631, 64
      %v1634 = vpop.permute.xlu0 %1633
      %1635 = vrot.lane.b32.xlu0 %v1632, 64
      %v1636 = vpop.permute.xlu0 %1635
      %v1639 = vld [vmem:[#allocation2 + $0xac] sm:$0xc]
      %v1640 = vsel %vm853, %v1634, %v1639
      %1641 = vst [vmem:[#allocation2 + $0xac] sm:$0xc] %v1640
      %1642 = vst.msk [vmem:[#allocation2 + $0xb4] sm:$0x3] %vm857, %v1636
      %v1643 = vld [vmem:[%s1590] sm:$0xf]
      %v1645 = vrot.slane %v1643, 6
      %v1646 = vrot.slane %v1645, 4
      %1649 = vst [vmem:[#allocation2 + $0xb0] sm:$0xc] %v1645
      %1650 = vst [vmem:[#allocation2 + $0xb8] sm:$0x3] %v1646
      %v1651 = vld [vmem:[%s1590] sm:$0xf]
      %v1653 = vrot.slane %v1651, 6
      %v1654 = vrot.slane %v1653, 4
      %1655 = vrot.lane.b32.xlu0 %v1653, 64
      %v1656 = vpop.permute.xlu0 %1655
      %1657 = vrot.lane.b32.xlu0 %v1654, 64
      %v1658 = vpop.permute.xlu0 %1657
      %1661 = vst.msk [vmem:[#allocation2 + $0xb8] sm:$0xc] %vm930, %v1656
      %v1662 = vld [vmem:[#allocation2 + $0xc0] sm:$0x3]
      %v1663 = vsel %vm934, %v1658, %v1662
      %1664 = vst [vmem:[#allocation2 + $0xc0] sm:$0x3] %v1663
      %v1665 = vld [vmem:[%s1590] sm:$0xf]
      %v1667 = vshrl.u32 %v1665, 16
      %v1669 = vrot.slane %v1667, 6
      %v1670 = vshll.u32 %v1665, 16
      %v1672 = vrot.slane %v1670, 7
      %v1673 = vor.u32 %v1669, %v1672
      %v1674 = vrot.slane %v1673, 4
      %1675 = vrot.lane.b32.xlu0 %v1673, 64
      %v1676 = vpop.permute.xlu0 %1675
      %1677 = vrot.lane.b32.xlu0 %v1674, 64
      %v1678 = vpop.permute.xlu0 %1677
      %1681 = vst.msk [vmem:[#allocation2 + $0xb8] sm:$0xc] %vm954, %v1676
      %v1682 = vld [vmem:[#allocation2 + $0xc0] sm:$0x3]
      %v1683 = vsel %vm957, %v1678, %v1682
      %1684 = vst [vmem:[#allocation2 + $0xc0] sm:$0x3] %v1683
      %s1685 = scalar_lea.vmem %s521, 52
      %v1686 = vld [vmem:[%s1685] sm:$0xf]
      %v1688 = vrot.slane %v1686, 6
      %v1689 = vrot.slane %v1688, 4
      %1692 = vst [vmem:[#allocation2 + $0xb4] sm:$0xc] %v1688
      %1693 = vst [vmem:[#allocation2 + $0xbc] sm:$0x3] %v1689
      %v1694 = vld [vmem:[%s1685] sm:$0xf]
      %v1696 = vrot.slane %v1694, 6
      %v1697 = vrot.slane %v1696, 4
      %1698 = vrot.lane.b32.xlu0 %v1696, 64
      %v1699 = vpop.permute.xlu0 %1698
      %1700 = vrot.lane.b32.xlu0 %v1697, 64
      %v1701 = vpop.permute.xlu0 %1700
      %1704 = vst.msk [vmem:[#allocation2 + $0xbc] sm:$0xc] %vm930, %v1699
      %v1705 = vld [vmem:[#allocation2 + $0xc4] sm:$0x3]
      %v1706 = vsel %vm934, %v1701, %v1705
      %1707 = vst [vmem:[#allocation2 + $0xc4] sm:$0x3] %v1706
      %v1708 = vld [vmem:[%s1685] sm:$0xf]
      %v1710 = vshrl.u32 %v1708, 16
      %v1712 = vrot.slane %v1710, 6
      %v1713 = vshll.u32 %v1708, 16
      %v1715 = vrot.slane %v1713, 7
      %v1716 = vor.u32 %v1712, %v1715
      %v1717 = vrot.slane %v1716, 4
      %1718 = vrot.lane.b32.xlu0 %v1716, 64
      %v1719 = vpop.permute.xlu0 %1718
      %1720 = vrot.lane.b32.xlu0 %v1717, 64
      %v1721 = vpop.permute.xlu0 %1720
      %1724 = vst.msk [vmem:[#allocation2 + $0xbc] sm:$0xc] %vm954, %v1719
      %v1725 = vld [vmem:[#allocation2 + $0xc4] sm:$0x3]
      %v1726 = vsel %vm957, %v1721, %v1725
      %1727 = vst [vmem:[#allocation2 + $0xc4] sm:$0x3] %v1726
      %v1728 = vld [vmem:[%s1685] sm:$0xf]
      %v1730 = vshrl.u32 %v1728, 16
      %v1732 = vrot.slane %v1730, 6
      %v1733 = vshll.u32 %v1728, 16
      %v1735 = vrot.slane %v1733, 7
      %v1736 = vor.u32 %v1732, %v1735
      %v1737 = vrot.slane %v1736, 4
      %v1740 = vld [vmem:[#allocation2 + $0xc0] sm:$0xe]
      %v1741 = vsel %vm1018, %v1736, %v1740
      %1742 = vst [vmem:[#allocation2 + $0xc0] sm:$0xe] %v1741
      %v1743 = vld [vmem:[#allocation2 + $0xc8] sm:$0x3]
      %v1744 = vsel %vm1023, %v1737, %v1743
      %1745 = vst [vmem:[#allocation2 + $0xc8] sm:$0x3] %v1744
      %v1746 = vld [vmem:[%s1685] sm:$0xf]
      %v1748 = vshrl.u32 %v1746, 16
      %v1750 = vrot.slane %v1748, 6
      %v1751 = vshll.u32 %v1746, 16
      %v1753 = vrot.slane %v1751, 7
      %v1754 = vor.u32 %v1750, %v1753
      %v1755 = vrot.slane %v1754, 4
      %1756 = vrot.lane.b32.xlu0 %v1754, 64
      %v1757 = vpop.permute.xlu0 %1756
      %1758 = vrot.lane.b32.xlu0 %v1755, 64
      %v1759 = vpop.permute.xlu0 %1758
      %v1762 = vld [vmem:[#allocation2 + $0xc8] sm:$0xe]
      %v1763 = vsel %vm1044, %v1757, %v1762
      %1764 = vst [vmem:[#allocation2 + $0xc8] sm:$0xe] %v1763
      %1765 = vst.msk [vmem:[#allocation2 + $0xd0] sm:$0x1] %vm1048, %v1759
      %v1766 = vld [vmem:[%s1685] sm:$0xf]
      %v1768 = vrot.slane %v1766, 7
      %v1769 = vrot.slane %v1768, 4
      %1770 = vrot.lane.b32.xlu0 %v1768, 64
      %v1771 = vpop.permute.xlu0 %1770
      %1772 = vrot.lane.b32.xlu0 %v1769, 64
      %v1773 = vpop.permute.xlu0 %1772
      %v1776 = vld [vmem:[#allocation2 + $0xc8] sm:$0xe]
      %v1777 = vsel %vm1061, %v1771, %v1776
      %1778 = vst [vmem:[#allocation2 + $0xc8] sm:$0xe] %v1777
      %1779 = vst.msk [vmem:[#allocation2 + $0xd0] sm:$0x1] %vm1065, %v1773
      %s1780 = scalar_lea.vmem %s521, 56
      %v1781 = vld [vmem:[%s1780] sm:$0xf]
      %v1783 = vshrl.u32 %v1781, 16
      %v1785 = vrot.slane %v1783, 6
      %v1786 = vshll.u32 %v1781, 16
      %v1788 = vrot.slane %v1786, 7
      %v1789 = vor.u32 %v1785, %v1788
      %v1790 = vrot.slane %v1789, 4
      %v1793 = vld [vmem:[#allocation2 + $0xc4] sm:$0xe]
      %v1794 = vsel %vm1018, %v1789, %v1793
      %1795 = vst [vmem:[#allocation2 + $0xc4] sm:$0xe] %v1794
      %v1796 = vld [vmem:[#allocation2 + $0xcc] sm:$0x3]
      %v1797 = vsel %vm1023, %v1790, %v1796
      %1798 = vst [vmem:[#allocation2 + $0xcc] sm:$0x3] %v1797
      %v1799 = vld [vmem:[%s1780] sm:$0xf]
      %v1801 = vshrl.u32 %v1799, 16
      %v1803 = vrot.slane %v1801, 6
      %v1804 = vshll.u32 %v1799, 16
      %v1806 = vrot.slane %v1804, 7
      %v1807 = vor.u32 %v1803, %v1806
      %v1808 = vrot.slane %v1807, 4
      %1809 = vrot.lane.b32.xlu0 %v1807, 64
      %v1810 = vpop.permute.xlu0 %1809
      %1811 = vrot.lane.b32.xlu0 %v1808, 64
      %v1812 = vpop.permute.xlu0 %1811
      %v1815 = vld [vmem:[#allocation2 + $0xcc] sm:$0xe]
      %v1816 = vsel %vm1044, %v1810, %v1815
      %1817 = vst [vmem:[#allocation2 + $0xcc] sm:$0xe] %v1816
      %1818 = vst.msk [vmem:[#allocation2 + $0xd4] sm:$0x1] %vm1048, %v1812
      %v1819 = vld [vmem:[%s1780] sm:$0xf]
      %v1821 = vrot.slane %v1819, 7
      %v1822 = vrot.slane %v1821, 4
      %1823 = vrot.lane.b32.xlu0 %v1821, 64
      %v1824 = vpop.permute.xlu0 %1823
      %1825 = vrot.lane.b32.xlu0 %v1822, 64
      %v1826 = vpop.permute.xlu0 %1825
      %v1829 = vld [vmem:[#allocation2 + $0xcc] sm:$0xe]
      %v1830 = vsel %vm1061, %v1824, %v1829
      %1831 = vst [vmem:[#allocation2 + $0xcc] sm:$0xe] %v1830
      %1832 = vst.msk [vmem:[#allocation2 + $0xd4] sm:$0x1] %vm1065, %v1826
      %v1833 = vld [vmem:[%s1780] sm:$0xf]
      %v1835 = vrot.slane %v1833, 7
      %v1836 = vrot.slane %v1835, 4
      %1839 = vst [vmem:[#allocation2 + $0xd0] sm:$0xe] %v1835
      %1840 = vst [vmem:[#allocation2 + $0xd8] sm:$0x1] %v1836
      %v1841 = vld [vmem:[%s1780] sm:$0xf]
      %v1843 = vrot.slane %v1841, 7
      %v1844 = vrot.slane %v1843, 4
      %1845 = vrot.lane.b32.xlu0 %v1843, 64
      %v1846 = vpop.permute.xlu0 %1845
      %1847 = vrot.lane.b32.xlu0 %v1844, 64
      %v1848 = vpop.permute.xlu0 %1847
      %1851 = vst.msk [vmem:[#allocation2 + $0xd8] sm:$0xe] %vm1138, %v1846
      %v1852 = vld [vmem:[#allocation2 + $0xe0] sm:$0x1]
      %v1853 = vsel %vm1142, %v1848, %v1852
      %1854 = vst [vmem:[#allocation2 + $0xe0] sm:$0x1] %v1853
      %v1855 = vld [vmem:[%s1780] sm:$0xf]
      %v1857 = vshrl.u32 %v1855, 16
      %v1859 = vrot.slane %v1857, 7
      %v1860 = vshll.u32 %v1855, 16
      %v1862 = vor.u32 %v1859, %v1860
      %v1863 = vrot.slane %v1859, 4
      %1864 = vrot.lane.b32.xlu0 %v1862, 64
      %v1865 = vpop.permute.xlu0 %1864
      %1866 = vrot.lane.b32.xlu0 %v1863, 64
      %v1867 = vpop.permute.xlu0 %1866
      %1870 = vst.msk [vmem:[#allocation2 + $0xd8] sm:$0xe] %vm1161, %v1865
      %v1871 = vld [vmem:[#allocation2 + $0xe0] sm:$0x1]
      %v1872 = vsel %vm1164, %v1867, %v1871
      %1873 = vst [vmem:[#allocation2 + $0xe0] sm:$0x1] %v1872
      %s1874 = scalar_lea.vmem %s521, 60
      %v1875 = vld [vmem:[%s1874] sm:$0xf]
      %v1877 = vrot.slane %v1875, 7
      %v1878 = vrot.slane %v1877, 4
      %1881 = vst [vmem:[#allocation2 + $0xd4] sm:$0xe] %v1877
      %1882 = vst [vmem:[#allocation2 + $0xdc] sm:$0x1] %v1878
      %v1883 = vld [vmem:[%s1874] sm:$0xf]
      %v1885 = vrot.slane %v1883, 7
      %v1886 = vrot.slane %v1885, 4
      %1887 = vrot.lane.b32.xlu0 %v1885, 64
      %v1888 = vpop.permute.xlu0 %1887
      %1889 = vrot.lane.b32.xlu0 %v1886, 64
      %v1890 = vpop.permute.xlu0 %1889
      %1893 = vst.msk [vmem:[#allocation2 + $0xdc] sm:$0xe] %vm1138, %v1888
      %v1894 = vld [vmem:[#allocation2 + $0xe4] sm:$0x1]
      %v1895 = vsel %vm1142, %v1890, %v1894
      %1896 = vst [vmem:[#allocation2 + $0xe4] sm:$0x1] %v1895
      %v1897 = vld [vmem:[%s1874] sm:$0xf]
      %v1899 = vshrl.u32 %v1897, 16
      %v1901 = vrot.slane %v1899, 7
      %v1902 = vshll.u32 %v1897, 16
      %v1904 = vor.u32 %v1901, %v1902
      %v1905 = vrot.slane %v1901, 4
      %1906 = vrot.lane.b32.xlu0 %v1904, 64
      %v1907 = vpop.permute.xlu0 %1906
      %1908 = vrot.lane.b32.xlu0 %v1905, 64
      %v1909 = vpop.permute.xlu0 %1908
      %1912 = vst.msk [vmem:[#allocation2 + $0xdc] sm:$0xe] %vm1161, %v1907
      %v1913 = vld [vmem:[#allocation2 + $0xe4] sm:$0x1]
      %v1914 = vsel %vm1164, %v1909, %v1913
      %1915 = vst [vmem:[#allocation2 + $0xe4] sm:$0x1] %v1914
      %v1916 = vld [vmem:[%s1] sm:$0xf]
      %v1917 = vld [vmem:[%s1 + $0x4] sm:$0xf]
      %v1918 = vld [vmem:[%s1 + $0x8] sm:$0xf]
      %v1919 = vld [vmem:[%s1 + $0xc] sm:$0xf]
      %v1920 = vld [vmem:[%s1 + $0x10] sm:$0xf]
      %v1921 = vld [vmem:[%s1 + $0x14] sm:$0xf]
      %v1922 = vld [vmem:[%s1 + $0x18] sm:$0xf]
      %v1923 = vld [vmem:[%s1 + $0x1c] sm:$0xf]
      %v1924 = vld [vmem:[%s1 + $0x20] sm:$0xf]
      %v1925 = vld [vmem:[%s1 + $0x24] sm:$0xf]
      %v1926 = vld [vmem:[%s1 + $0x28] sm:$0xf]
      %v1927 = vld [vmem:[%s1 + $0x2c] sm:$0xf]
      %v1928 = vld [vmem:[%s1 + $0x30] sm:$0xf]
      %v1929 = vld [vmem:[%s1 + $0x34] sm:$0xf]
      %v1930 = vld [vmem:[%s1 + $0x38] sm:$0xf]
      %v1931 = vld [vmem:[%s1 + $0x3c] sm:$0xf]
      %v1932 = vld [vmem:[%s1 + $0x40] sm:$0xf]
      %v1933 = vld [vmem:[%s1 + $0x44] sm:$0xf]
      %v1934 = vld [vmem:[%s1 + $0x48] sm:$0xf]
      %v1935 = vld [vmem:[%s1 + $0x4c] sm:$0xf]
      %v1936 = vld [vmem:[%s1 + $0x50] sm:$0xf]
      %v1937 = vld [vmem:[%s1 + $0x54] sm:$0xf]
      %v1938 = vld [vmem:[%s1 + $0x58] sm:$0xf]
      %v1939 = vld [vmem:[%s1 + $0x5c] sm:$0xf]
      %v1940 = vld [vmem:[%s1 + $0x60] sm:$0xf]
      %v1941 = vld [vmem:[%s1 + $0x64] sm:$0xf]
      %v1942 = vld [vmem:[%s1 + $0x68] sm:$0xf]
      %v1943 = vld [vmem:[%s1 + $0x6c] sm:$0xf]
      %v1944 = vld [vmem:[%s1 + $0x70] sm:$0xf]
      %v1945 = vld [vmem:[%s1 + $0x74] sm:$0xf]
      %v1946 = vld [vmem:[%s1 + $0x78] sm:$0xf]
      %v1947 = vld [vmem:[%s1 + $0x7c] sm:$0xf]
      %v1948 = vld [vmem:[%s2] sm:$0x1]
      %v1949 = vld [vmem:[#allocation2] sm:$0xff]
      %v1950 = vld [vmem:[#allocation2 + $0x8] sm:$0xff]
      %v1951 = vld [vmem:[#allocation2 + $0x10] sm:$0xff]
      %v1952 = vld [vmem:[#allocation2 + $0x18] sm:$0xff]
      %v1953 = vld [vmem:[#allocation2 + $0x20] sm:$0xff]
      %v1954 = vld [vmem:[#allocation2 + $0x28] sm:$0xff]
      %v1955 = vld [vmem:[#allocation2 + $0x30] sm:$0xff]
      %v1956 = vld [vmem:[#allocation2 + $0x38] sm:$0xff]
      %v1957 = vld [vmem:[#allocation2 + $0x40] sm:$0xff]
      %v1958 = vld [vmem:[#allocation2 + $0x48] sm:$0xff]
      %v1959 = vld [vmem:[#allocation2 + $0x50] sm:$0xff]
      %v1960 = vld [vmem:[#allocation2 + $0x58] sm:$0xff]
      %v1961 = vld [vmem:[#allocation2 + $0x60] sm:$0xff]
      %v1962 = vld [vmem:[#allocation2 + $0x68] sm:$0xff]
      %v1963 = vld [vmem:[#allocation2 + $0x70] sm:$0xff]
      %v1964 = vld [vmem:[#allocation2 + $0x78] sm:$0xff]
      %v1965 = vld [vmem:[#allocation2 + $0x80] sm:$0xff]
      %v1966 = vld [vmem:[#allocation2 + $0x88] sm:$0xff]
      %v1967 = vld [vmem:[#allocation2 + $0x90] sm:$0xff]
      %v1968 = vld [vmem:[#allocation2 + $0x98] sm:$0xff]
      %v1969 = vld [vmem:[#allocation2 + $0xa0] sm:$0xff]
      %v1970 = vld [vmem:[#allocation2 + $0xa8] sm:$0xff]
      %v1971 = vld [vmem:[#allocation2 + $0xb0] sm:$0xff]
      %v1972 = vld [vmem:[#allocation2 + $0xb8] sm:$0xff]
      %v1973 = vld [vmem:[#allocation2 + $0xc0] sm:$0xff]
      %v1974 = vld [vmem:[#allocation2 + $0xc8] sm:$0xff]
      %v1975 = vld [vmem:[#allocation2 + $0xd0] sm:$0xff]
      %v1976 = vld [vmem:[#allocation2 + $0xd8] sm:$0xff]
      %v1977 = vld [vmem:[#allocation2 + $0xe0] sm:$0x11]
      %v1979 = vlaneseq
      %v1980 = vshrl.u32 %v1979, 7
      %v1981 = vsub.s32 0, %v1980
      %v1982 = vrot.slane %v1948, %v1981
      %v2013 = vunpack.c.l.b16 %v1949
      %v2014 = vunpack.c.h.b16 %v1949
      %v2015 = vunpack.c.l.b16 %v1950
      %v2016 = vunpack.c.h.b16 %v1950
      %v2017 = vunpack.c.l.b16 %v1951
      %v2018 = vunpack.c.h.b16 %v1951
      %v2019 = vunpack.c.l.b16 %v1952
      %v2020 = vunpack.c.h.b16 %v1952
      %v2021 = vunpack.c.l.b16 %v1953
      %v2022 = vunpack.c.h.b16 %v1953
      %v2023 = vunpack.c.l.b16 %v1954
      %v2024 = vunpack.c.h.b16 %v1954
      %v2025 = vunpack.c.l.b16 %v1955
      %v2026 = vunpack.c.h.b16 %v1955
      %v2027 = vunpack.c.l.b16 %v1956
      %v2028 = vunpack.c.h.b16 %v1956
      %v2029 = vunpack.c.l.b16 %v1957
      %v2030 = vunpack.c.h.b16 %v1957
      %v2031 = vunpack.c.l.b16 %v1958
      %v2032 = vunpack.c.h.b16 %v1958
      %v2033 = vunpack.c.l.b16 %v1959
      %v2034 = vunpack.c.h.b16 %v1959
      %v2035 = vunpack.c.l.b16 %v1960
      %v2036 = vunpack.c.h.b16 %v1960
      %v2037 = vunpack.c.l.b16 %v1961
      %v2038 = vunpack.c.h.b16 %v1961
      %v2039 = vunpack.c.l.b16 %v1962
      %v2040 = vunpack.c.h.b16 %v1962
      %v2041 = vunpack.c.l.b16 %v1963
      %v2042 = vunpack.c.h.b16 %v1963
      %v2043 = vunpack.c.l.b16 %v1964
      %v2044 = vunpack.c.h.b16 %v1964
      %v2045 = vunpack.c.l.b16 %v1965
      %v2046 = vunpack.c.h.b16 %v1965
      %v2047 = vunpack.c.l.b16 %v1966
      %v2048 = vunpack.c.h.b16 %v1966
      %v2049 = vunpack.c.l.b16 %v1967
      %v2050 = vunpack.c.h.b16 %v1967
      %v2051 = vunpack.c.l.b16 %v1968
      %v2052 = vunpack.c.h.b16 %v1968
      %v2053 = vunpack.c.l.b16 %v1969
      %v2054 = vunpack.c.h.b16 %v1969
      %v2055 = vunpack.c.l.b16 %v1970
      %v2056 = vunpack.c.h.b16 %v1970
      %v2057 = vunpack.c.l.b16 %v1971
      %v2058 = vunpack.c.h.b16 %v1971
      %v2059 = vunpack.c.l.b16 %v1972
      %v2060 = vunpack.c.h.b16 %v1972
      %v2061 = vunpack.c.l.b16 %v1973
      %v2062 = vunpack.c.h.b16 %v1973
      %v2063 = vunpack.c.l.b16 %v1974
      %v2064 = vunpack.c.h.b16 %v1974
      %v2065 = vunpack.c.l.b16 %v1975
      %v2066 = vunpack.c.h.b16 %v1975
      %v2067 = vunpack.c.l.b16 %v1976
      %v2068 = vunpack.c.h.b16 %v1976
      %v2069 = vunpack.c.l.b16 %v1977
      %v2070 = vunpack.c.h.b16 %v1977
      %v2071 = vpack.c.b16 %v2015, %v2013
      %v2072 = vpack.c.b16 %v2016, %v2014
      %v2073 = vpack.c.b16 %v2019, %v2017
      %v2074 = vpack.c.b16 %v2020, %v2018
      %v2075 = vpack.c.b16 %v2023, %v2021
      %v2076 = vpack.c.b16 %v2024, %v2022
      %v2077 = vpack.c.b16 %v2027, %v2025
      %v2078 = vpack.c.b16 %v2028, %v2026
      %v2079 = vpack.c.b16 %v2031, %v2029
      %v2080 = vpack.c.b16 %v2032, %v2030
      %v2081 = vpack.c.b16 %v2035, %v2033
      %v2082 = vpack.c.b16 %v2036, %v2034
      %v2083 = vpack.c.b16 %v2039, %v2037
      %v2084 = vpack.c.b16 %v2040, %v2038
      %v2085 = vpack.c.b16 %v2043, %v2041
      %v2086 = vpack.c.b16 %v2044, %v2042
      %v2087 = vpack.c.b16 %v2047, %v2045
      %v2088 = vpack.c.b16 %v2048, %v2046
      %v2089 = vpack.c.b16 %v2051, %v2049
      %v2090 = vpack.c.b16 %v2052, %v2050
      %v2091 = vpack.c.b16 %v2055, %v2053
      %v2092 = vpack.c.b16 %v2056, %v2054
      %v2093 = vpack.c.b16 %v2059, %v2057
      %v2094 = vpack.c.b16 %v2060, %v2058
      %v2095 = vpack.c.b16 %v2063, %v2061
      %v2096 = vpack.c.b16 %v2064, %v2062
      %v2097 = vpack.c.b16 %v2067, %v2065
      %v2098 = vpack.c.b16 %v2068, %v2066
      %v2099 = vpack.c.b16 %v2069, %v2069
      %v2100 = vpack.c.b16 %v2070, %v2070
      %v2163 = vunpack.c.l.b16 %v1916
      %v2164 = vunpack.c.l.b16 %v1917
      %v2165 = vunpack.c.l.b16 %v1918
      %v2166 = vunpack.c.l.b16 %v1919
      %v2167 = vunpack.c.l.b16 %v1920
      %v2168 = vunpack.c.l.b16 %v1921
      %v2169 = vunpack.c.l.b16 %v1922
      %v2170 = vunpack.c.l.b16 %v1923
      %v2171 = vunpack.c.l.b16 %v1924
      %v2172 = vunpack.c.l.b16 %v1925
      %v2173 = vunpack.c.l.b16 %v1926
      %v2174 = vunpack.c.l.b16 %v1927
      %v2175 = vunpack.c.l.b16 %v1928
      %v2176 = vunpack.c.l.b16 %v1929
      %v2177 = vunpack.c.l.b16 %v1930
      %v2178 = vunpack.c.l.b16 %v1931
      %v2179 = vunpack.c.l.b16 %v1932
      %v2180 = vunpack.c.l.b16 %v1933
      %v2181 = vunpack.c.l.b16 %v1934
      %v2182 = vunpack.c.l.b16 %v1935
      %v2183 = vunpack.c.l.b16 %v1936
      %v2184 = vunpack.c.l.b16 %v1937
      %v2185 = vunpack.c.l.b16 %v1938
      %v2186 = vunpack.c.l.b16 %v1939
      %v2187 = vunpack.c.l.b16 %v1940
      %v2188 = vunpack.c.l.b16 %v1941
      %v2189 = vunpack.c.l.b16 %v1942
      %v2190 = vunpack.c.l.b16 %v1943
      %v2191 = vunpack.c.l.b16 %v1944
      %v2192 = vunpack.c.l.b16 %v1945
      %v2193 = vunpack.c.l.b16 %v1946
      %v2194 = vunpack.c.l.b16 %v1947
      %v2195 = vpack.c.b16 %v2164, %v2163
      %v2196 = vpack.c.b16 %v2166, %v2165
      %v2197 = vpack.c.b16 %v2168, %v2167
      %v2198 = vpack.c.b16 %v2170, %v2169
      %v2199 = vpack.c.b16 %v2172, %v2171
      %v2200 = vpack.c.b16 %v2174, %v2173
      %v2201 = vpack.c.b16 %v2176, %v2175
      %v2202 = vpack.c.b16 %v2178, %v2177
      %v2203 = vpack.c.b16 %v2180, %v2179
      %v2204 = vpack.c.b16 %v2182, %v2181
      %v2205 = vpack.c.b16 %v2184, %v2183
      %v2206 = vpack.c.b16 %v2186, %v2185
      %v2207 = vpack.c.b16 %v2188, %v2187
      %v2208 = vpack.c.b16 %v2190, %v2189
      %v2209 = vpack.c.b16 %v2192, %v2191
      %v2210 = vpack.c.b16 %v2194, %v2193
      %2227 = vmatprep.subr.bf16.mxu0 0
      %2228 = vmatpush1.bf16.msra.mxu0 %v2202
      %2229 = vmatprep.subr.bf16.mxu0 0
      %2230 = vmatpush1.bf16.msra.mxu0 %v2201
      %2231 = vmatprep.subr.bf16.mxu0 0
      %2232 = vmatpush1.bf16.msra.mxu0 %v2200
      %2233 = vmatprep.subr.bf16.mxu0 0
      %2234 = vmatpush1.bf16.msra.mxu0 %v2199
      %2235 = vmatprep.subr.bf16.mxu0 0
      %2236 = vmatpush1.bf16.msra.mxu0 %v2198
      %2237 = vmatprep.subr.bf16.mxu0 0
      %2238 = vmatpush1.bf16.msra.mxu0 %v2197
      %2239 = vmatprep.subr.bf16.mxu0 0
      %2240 = vmatpush1.bf16.msra.mxu0 %v2196
      %2241 = vmatprep.subr.bf16.mxu0 0
      %2242 = vmatpush1.bf16.msra.mxu0 %v2195
      %2243 = vmatprep.subr.bf16.mxu0 0
      %2244 = vmatpush2.bf16.msra.mxu0 %v2210
      %2245 = vmatprep.subr.bf16.mxu0 0
      %2246 = vmatpush2.bf16.msra.mxu0 %v2209
      %2247 = vmatprep.subr.bf16.mxu0 0
      %2248 = vmatpush2.bf16.msra.mxu0 %v2208
      %2249 = vmatprep.subr.bf16.mxu0 0
      %2250 = vmatpush2.bf16.msra.mxu0 %v2207
      %2251 = vmatprep.subr.bf16.mxu0 0
      %2252 = vmatpush2.bf16.msra.mxu0 %v2206
      %2253 = vmatprep.subr.bf16.mxu0 0
      %2254 = vmatpush2.bf16.msra.mxu0 %v2205
      %2255 = vmatprep.subr.bf16.mxu0 0
      %2256 = vmatpush2.bf16.msra.mxu0 %v2204
      %2257 = vmatprep.subr.bf16.mxu0 0
      %2258 = vmatpush2.bf16.msra.mxu0 %v2203
      %2259 = vmatprep.mubr.bf16.mxu0 %v2072
      %2260 = vmatmul.mubr.bf16.gmra.mxu0 %v2071
      %v2261 = vpop.f32.mrf.mxu0
      %v2262 = vadd.f32 %v1982, %v2261
      %v2263 = vpop.f32.mrf.mxu0
      %v2264 = vpop.f32.mrf.mxu0
      %v2265 = vadd.f32 %v1982, %v2264
      %v2266 = vpop.f32.mrf.mxu0
      %2267 = vmatprep.mubr.bf16.mxu0 %v2074
      %2268 = vmatmul.mubr.bf16.gmra.mxu0 %v2073
      %v2269 = vpop.f32.mrf.mxu0
      %v2270 = vadd.f32 %v1982, %v2269
      %v2271 = vpop.f32.mrf.mxu0
      %v2272 = vpop.f32.mrf.mxu0
      %v2273 = vadd.f32 %v1982, %v2272
      %v2274 = vpop.f32.mrf.mxu0
      %2275 = vmatprep.mubr.bf16.mxu0 %v2076
      %2276 = vmatmul.mubr.bf16.gmra.mxu0 %v2075
      %v2277 = vpop.f32.mrf.mxu0
      %v2278 = vadd.f32 %v1982, %v2277
      %v2279 = vpop.f32.mrf.mxu0
      %v2280 = vpop.f32.mrf.mxu0
      %v2281 = vadd.f32 %v1982, %v2280
      %v2282 = vpop.f32.mrf.mxu0
      %2283 = vmatprep.mubr.bf16.mxu0 %v2078
      %2284 = vmatmul.mubr.bf16.gmra.mxu0 %v2077
      %v2285 = vpop.f32.mrf.mxu0
      %v2286 = vadd.f32 %v1982, %v2285
      %v2287 = vpop.f32.mrf.mxu0
      %v2288 = vpop.f32.mrf.mxu0
      %v2289 = vadd.f32 %v1982, %v2288
      %v2290 = vpop.f32.mrf.mxu0
      %2291 = vmatprep.mubr.bf16.mxu0 %v2080
      %2292 = vmatmul.mubr.bf16.gmra.mxu0 %v2079
      %v2293 = vpop.f32.mrf.mxu0
      %v2294 = vadd.f32 %v1982, %v2293
      %v2295 = vpop.f32.mrf.mxu0
      %v2296 = vpop.f32.mrf.mxu0
      %v2297 = vadd.f32 %v1982, %v2296
      %v2298 = vpop.f32.mrf.mxu0
      %2299 = vmatprep.mubr.bf16.mxu0 %v2082
      %2300 = vmatmul.mubr.bf16.gmra.mxu0 %v2081
      %v2301 = vpop.f32.mrf.mxu0
      %v2302 = vadd.f32 %v1982, %v2301
      %v2303 = vpop.f32.mrf.mxu0
      %v2304 = vpop.f32.mrf.mxu0
      %v2305 = vadd.f32 %v1982, %v2304
      %v2306 = vpop.f32.mrf.mxu0
      %2307 = vmatprep.mubr.bf16.mxu0 %v2084
      %2308 = vmatmul.mubr.bf16.gmra.mxu0 %v2083
      %v2309 = vpop.f32.mrf.mxu0
      %v2310 = vadd.f32 %v1982, %v2309
      %v2311 = vpop.f32.mrf.mxu0
      %v2312 = vpop.f32.mrf.mxu0
      %v2313 = vadd.f32 %v1982, %v2312
      %v2314 = vpop.f32.mrf.mxu0
      %2315 = vmatprep.mubr.bf16.mxu0 %v2086
      %2316 = vmatmul.mubr.bf16.gmra.mxu0 %v2085
      %v2317 = vpop.f32.mrf.mxu0
      %v2318 = vadd.f32 %v1982, %v2317
      %v2319 = vpop.f32.mrf.mxu0
      %v2320 = vpop.f32.mrf.mxu0
      %v2321 = vadd.f32 %v1982, %v2320
      %v2322 = vpop.f32.mrf.mxu0
      %2323 = vmatprep.mubr.bf16.mxu0 %v2088
      %2324 = vmatmul.mubr.bf16.gmra.mxu0 %v2087
      %v2325 = vpop.f32.mrf.mxu0
      %v2326 = vadd.f32 %v1982, %v2325
      %v2327 = vpop.f32.mrf.mxu0
      %v2328 = vpop.f32.mrf.mxu0
      %v2329 = vadd.f32 %v1982, %v2328
      %v2330 = vpop.f32.mrf.mxu0
      %2331 = vmatprep.mubr.bf16.mxu0 %v2090
      %2332 = vmatmul.mubr.bf16.gmra.mxu0 %v2089
      %v2333 = vpop.f32.mrf.mxu0
      %v2334 = vadd.f32 %v1982, %v2333
      %v2335 = vpop.f32.mrf.mxu0
      %v2336 = vpop.f32.mrf.mxu0
      %v2337 = vadd.f32 %v1982, %v2336
      %v2338 = vpop.f32.mrf.mxu0
      %2339 = vmatprep.mubr.bf16.mxu0 %v2092
      %2340 = vmatmul.mubr.bf16.gmra.mxu0 %v2091
      %v2341 = vpop.f32.mrf.mxu0
      %v2342 = vadd.f32 %v1982, %v2341
      %v2343 = vpop.f32.mrf.mxu0
      %v2344 = vpop.f32.mrf.mxu0
      %v2345 = vadd.f32 %v1982, %v2344
      %v2346 = vpop.f32.mrf.mxu0
      %2347 = vmatprep.mubr.bf16.mxu0 %v2094
      %2348 = vmatmul.mubr.bf16.gmra.mxu0 %v2093
      %v2349 = vpop.f32.mrf.mxu0
      %v2350 = vadd.f32 %v1982, %v2349
      %v2351 = vpop.f32.mrf.mxu0
      %v2352 = vpop.f32.mrf.mxu0
      %v2353 = vadd.f32 %v1982, %v2352
      %v2354 = vpop.f32.mrf.mxu0
      %2355 = vmatprep.mubr.bf16.mxu0 %v2096
      %2356 = vmatmul.mubr.bf16.gmra.mxu0 %v2095
      %v2357 = vpop.f32.mrf.mxu0
      %v2358 = vadd.f32 %v1982, %v2357
      %v2359 = vpop.f32.mrf.mxu0
      %v2360 = vpop.f32.mrf.mxu0
      %v2361 = vadd.f32 %v1982, %v2360
      %v2362 = vpop.f32.mrf.mxu0
      %2363 = vmatprep.mubr.bf16.mxu0 %v2098
      %2364 = vmatmul.mubr.bf16.gmra.mxu0 %v2097
      %v2365 = vpop.f32.mrf.mxu0
      %v2366 = vadd.f32 %v1982, %v2365
      %v2367 = vpop.f32.mrf.mxu0
      %v2368 = vpop.f32.mrf.mxu0
      %v2369 = vadd.f32 %v1982, %v2368
      %v2370 = vpop.f32.mrf.mxu0
      %2371 = vmatprep.mubr.bf16.mxu0 %v2100
      %2372 = vmatmul.mubr.bf16.gmra.mxu0 %v2099
      %v2373 = vpop.f32.mrf.mxu0
      %v2374 = vadd.f32 %v1982, %v2373
      %v2375 = vpop.f32.mrf.mxu0
      %v2376 = vpop.f32.mrf.mxu0
      %v2377 = vpop.f32.mrf.mxu0
      %2378 = vdwg.mxu0
      %v2379 = vmax.f32 %v2262, 0.0
      %v2380 = vmax.f32 %v2265, 0.0
      %v2381 = vmax.f32 %v2270, 0.0
      %v2382 = vmax.f32 %v2273, 0.0
      %v2383 = vmax.f32 %v2278, 0.0
      %v2384 = vmax.f32 %v2281, 0.0
      %v2385 = vmax.f32 %v2286, 0.0
      %v2386 = vmax.f32 %v2289, 0.0
      %v2387 = vmax.f32 %v2294, 0.0
      %v2388 = vmax.f32 %v2297, 0.0
      %v2389 = vmax.f32 %v2302, 0.0
      %v2390 = vmax.f32 %v2305, 0.0
      %v2391 = vmax.f32 %v2310, 0.0
      %v2392 = vmax.f32 %v2313, 0.0
      %v2393 = vmax.f32 %v2318, 0.0
      %v2394 = vmax.f32 %v2321, 0.0
      %v2395 = vmax.f32 %v2326, 0.0
      %v2396 = vmax.f32 %v2329, 0.0
      %v2397 = vmax.f32 %v2334, 0.0
      %v2398 = vmax.f32 %v2337, 0.0
      %v2399 = vmax.f32 %v2342, 0.0
      %v2400 = vmax.f32 %v2345, 0.0
      %v2401 = vmax.f32 %v2350, 0.0
      %v2402 = vmax.f32 %v2353, 0.0
      %v2403 = vmax.f32 %v2358, 0.0
      %v2404 = vmax.f32 %v2361, 0.0
      %v2405 = vmax.f32 %v2366, 0.0
      %v2406 = vmax.f32 %v2369, 0.0
      %v2407 = vmax.f32 %v2374, 0.0
      %v2408 = vpack.c.bf16 %v2380, %v2379
      %v2409 = vpack.c.bf16 %v2382, %v2381
      %v2410 = vpack.c.bf16 %v2384, %v2383
      %v2411 = vpack.c.bf16 %v2386, %v2385
      %v2412 = vpack.c.bf16 %v2388, %v2387
      %v2413 = vpack.c.bf16 %v2390, %v2389
      %v2414 = vpack.c.bf16 %v2392, %v2391
      %v2415 = vpack.c.bf16 %v2394, %v2393
      %v2416 = vpack.c.bf16 %v2396, %v2395
      %v2417 = vpack.c.bf16 %v2398, %v2397
      %v2418 = vpack.c.bf16 %v2400, %v2399
      %v2419 = vpack.c.bf16 %v2402, %v2401
      %v2420 = vpack.c.bf16 %v2404, %v2403
      %v2421 = vpack.c.bf16 %v2406, %v2405
      %v2422 = vpack.c.bf16 %v2407, %v2407
      %v2438 = vunpack.c.l.b16 %v2408
      %v2439 = vunpack.c.h.b16 %v2408
      %v2440 = vunpack.c.l.b16 %v2409
      %v2441 = vunpack.c.h.b16 %v2409
      %v2442 = vunpack.c.l.b16 %v2410
      %v2443 = vunpack.c.h.b16 %v2410
      %v2444 = vunpack.c.l.b16 %v2411
      %v2445 = vunpack.c.h.b16 %v2411
      %v2446 = vunpack.c.l.b16 %v2412
      %v2447 = vunpack.c.h.b16 %v2412
      %v2448 = vunpack.c.l.b16 %v2413
      %v2449 = vunpack.c.h.b16 %v2413
      %v2450 = vunpack.c.l.b16 %v2414
      %v2451 = vunpack.c.h.b16 %v2414
      %v2452 = vunpack.c.l.b16 %v2415
      %v2453 = vunpack.c.h.b16 %v2415
      %v2454 = vunpack.c.l.b16 %v2416
      %v2455 = vunpack.c.h.b16 %v2416
      %v2456 = vunpack.c.l.b16 %v2417
      %v2457 = vunpack.c.h.b16 %v2417
      %v2458 = vunpack.c.l.b16 %v2418
      %v2459 = vunpack.c.h.b16 %v2418
      %v2460 = vunpack.c.l.b16 %v2419
      %v2461 = vunpack.c.h.b16 %v2419
      %v2462 = vunpack.c.l.b16 %v2420
      %v2463 = vunpack.c.h.b16 %v2420
      %v2464 = vunpack.c.l.b16 %v2421
      %v2465 = vunpack.c.h.b16 %v2421
      %v2466 = vunpack.c.l.b16 %v2422
      %v2467 = vpack.c.b16 %v2438, %v2438
      %v2468 = vpack.c.b16 %v2439, %v2439
      %v2469 = vpack.c.b16 %v2440, %v2440
      %v2470 = vpack.c.b16 %v2441, %v2441
      %v2471 = vpack.c.b16 %v2442, %v2442
      %v2472 = vpack.c.b16 %v2443, %v2443
      %v2473 = vpack.c.b16 %v2444, %v2444
      %v2474 = vpack.c.b16 %v2445, %v2445
      %v2475 = vpack.c.b16 %v2446, %v2446
      %v2476 = vpack.c.b16 %v2447, %v2447
      %v2477 = vpack.c.b16 %v2448, %v2448
      %v2478 = vpack.c.b16 %v2449, %v2449
      %v2479 = vpack.c.b16 %v2450, %v2450
      %v2480 = vpack.c.b16 %v2451, %v2451
      %v2481 = vpack.c.b16 %v2452, %v2452
      %v2482 = vpack.c.b16 %v2453, %v2453
      %v2483 = vpack.c.b16 %v2454, %v2454
      %v2484 = vpack.c.b16 %v2455, %v2455
      %v2485 = vpack.c.b16 %v2456, %v2456
      %v2486 = vpack.c.b16 %v2457, %v2457
      %v2487 = vpack.c.b16 %v2458, %v2458
      %v2488 = vpack.c.b16 %v2459, %v2459
      %v2489 = vpack.c.b16 %v2460, %v2460
      %v2490 = vpack.c.b16 %v2461, %v2461
      %v2491 = vpack.c.b16 %v2462, %v2462
      %v2492 = vpack.c.b16 %v2463, %v2463
      %v2493 = vpack.c.b16 %v2464, %v2464
      %v2494 = vpack.c.b16 %v2465, %v2465
      %v2495 = vpack.c.b16 %v2466, %v2466
      %vm2525 = vcmask 257024
      %2526 = vst.msk [vmem:[#allocation3] sm:$0xf] %vm2525, %v2467
      %2527 = vst.msk [vmem:[#allocation3 + $0x4] sm:$0xf] %vm2525, %v2468
      %2528 = vst.msk [vmem:[#allocation3 + $0x8] sm:$0xf] %vm2525, %v2469
      %2529 = vst.msk [vmem:[#allocation3 + $0xc] sm:$0xf] %vm2525, %v2470
      %2530 = vst.msk [vmem:[#allocation3 + $0x10] sm:$0xf] %vm2525, %v2471
      %2531 = vst.msk [vmem:[#allocation3 + $0x14] sm:$0xf] %vm2525, %v2472
      %2532 = vst.msk [vmem:[#allocation3 + $0x18] sm:$0xf] %vm2525, %v2473
      %2533 = vst.msk [vmem:[#allocation3 + $0x1c] sm:$0xf] %vm2525, %v2474
      %2534 = vst.msk [vmem:[#allocation3 + $0x20] sm:$0xf] %vm2525, %v2475
      %2535 = vst.msk [vmem:[#allocation3 + $0x24] sm:$0xf] %vm2525, %v2476
      %2536 = vst.msk [vmem:[#allocation3 + $0x28] sm:$0xf] %vm2525, %v2477
      %2537 = vst.msk [vmem:[#allocation3 + $0x2c] sm:$0xf] %vm2525, %v2478
      %2538 = vst.msk [vmem:[#allocation3 + $0x30] sm:$0xf] %vm2525, %v2479
      %2539 = vst.msk [vmem:[#allocation3 + $0x34] sm:$0xf] %vm2525, %v2480
      %2540 = vst.msk [vmem:[#allocation3 + $0x38] sm:$0xf] %vm2525, %v2481
      %2541 = vst.msk [vmem:[#allocation3 + $0x3c] sm:$0xf] %vm2525, %v2482
      %2542 = vst.msk [vmem:[#allocation3 + $0x40] sm:$0xf] %vm2525, %v2483
      %2543 = vst.msk [vmem:[#allocation3 + $0x44] sm:$0xf] %vm2525, %v2484
      %2544 = vst.msk [vmem:[#allocation3 + $0x48] sm:$0xf] %vm2525, %v2485
      %2545 = vst.msk [vmem:[#allocation3 + $0x4c] sm:$0xf] %vm2525, %v2486
      %2546 = vst.msk [vmem:[#allocation3 + $0x50] sm:$0xf] %vm2525, %v2487
      %2547 = vst.msk [vmem:[#allocation3 + $0x54] sm:$0xf] %vm2525, %v2488
      %2548 = vst.msk [vmem:[#allocation3 + $0x58] sm:$0xf] %vm2525, %v2489
      %2549 = vst.msk [vmem:[#allocation3 + $0x5c] sm:$0xf] %vm2525, %v2490
      %2550 = vst.msk [vmem:[#allocation3 + $0x60] sm:$0xf] %vm2525, %v2491
      %2551 = vst.msk [vmem:[#allocation3 + $0x64] sm:$0xf] %vm2525, %v2492
      %2552 = vst.msk [vmem:[#allocation3 + $0x68] sm:$0xf] %vm2525, %v2493
      %2553 = vst.msk [vmem:[#allocation3 + $0x6c] sm:$0xf] %vm2525, %v2494
      %vm2554 = vcmask 253952
      %vm2555 = vmand %vm2554, %vm1141
      %v2556 = vld [vmem:[#allocation3 + $0x70] sm:$0x1]
      %v2557 = vsel %vm2555, %v2495, %v2556
      %2558 = vst [vmem:[#allocation3 + $0x70] sm:$0x1] %v2557
      %v2559 = vld [vmem:[#allocation3] sm:$0x7]
      %vm2560 = vcmask 256000
      %2561 = vst.msk [vmem:[#allocation4] sm:$0x7] %vm2560, %v2559
      %v2562 = vld [vmem:[#allocation3 + $0x4] sm:$0x7]
      %2564 = vrot.lane.b32.xlu0 %v2562, 32
      %v2565 = vpop.permute.xlu0 %2564
      %vm2567 = vcmask 518400
      %2568 = vst.msk [vmem:[#allocation4] sm:$0x7] %vm2567, %v2565
      %v2569 = vld [vmem:[#allocation3] sm:$0xf]
      %v2571 = vshrl.u32 %v2569, 16
      %v2573 = vrot.slane %v2571, 4
      %v2574 = vshll.u32 %v2569, 16
      %v2576 = vrot.slane %v2574, 5
      %v2577 = vor.u32 %v2573, %v2576
      %v2578 = vrot.slane %v2577, 4
      %2579 = vrot.lane.b32.xlu0 %v2578, 64
      %v2580 = vpop.permute.xlu0 %2579
      %vm2582 = vcmask 780800
      %2583 = vst.msk [vmem:[#allocation4] sm:$0x7] %vm2582, %v2580
      %v2584 = vld [vmem:[#allocation3 + $0x4] sm:$0xf]
      %v2586 = vshrl.u32 %v2584, 16
      %v2588 = vrot.slane %v2586, 4
      %v2589 = vshll.u32 %v2584, 16
      %v2591 = vrot.slane %v2589, 5
      %v2592 = vor.u32 %v2588, %v2591
      %v2593 = vrot.slane %v2592, 4
      %2594 = vrot.lane.b32.xlu0 %v2593, 96
      %v2595 = vpop.permute.xlu0 %2594
      %vm2597 = vcmask 1043200
      %2598 = vst.msk [vmem:[#allocation4] sm:$0x7] %vm2597, %v2595
      %v2599 = vld [vmem:[#allocation3 + $0x4] sm:$0x8]
      %v2600 = vld [vmem:[#allocation3 + $0x8] sm:$0x7]
      %vm2601 = vsmask.f32 4368
      %vm2602 = vmor %vm1141, %vm2601
      %v2604 = vshrl.u32 %v2599, 16
      %v2606 = vrot.slane %v2604, 7
      %v2607 = vrot.slane %v2606, 4
      %v2609 = vshrl.u32 %v2600, 16
      %v2611 = vrot.slane %v2609, 7
      %v2612 = vshll.u32 %v2600, 16
      %v2614 = vor.u32 %v2611, %v2612
      %v2615 = vsel %vm2602, %v2607, %v2614
      %2617 = vst.msk [vmem:[#allocation4 + $0x4] sm:$0x7] %vm2560, %v2615
      %v2618 = vld [vmem:[#allocation3 + $0x8] sm:$0x8]
      %v2619 = vld [vmem:[#allocation3 + $0xc] sm:$0x7]
      %v2621 = vshrl.u32 %v2618, 16
      %v2623 = vrot.slane %v2621, 7
      %v2624 = vrot.slane %v2623, 4
      %v2626 = vshrl.u32 %v2619, 16
      %v2628 = vrot.slane %v2626, 7
      %v2629 = vshll.u32 %v2619, 16
      %v2631 = vor.u32 %v2628, %v2629
      %v2632 = vsel %vm2602, %v2624, %v2631
      %2633 = vrot.lane.b32.xlu0 %v2632, 32
      %v2634 = vpop.permute.xlu0 %2633
      %2636 = vst.msk [vmem:[#allocation4 + $0x4] sm:$0x7] %vm2567, %v2634
      %v2637 = vld [vmem:[#allocation3 + $0x8] sm:$0x7]
      %2639 = vrot.lane.b32.xlu0 %v2637, 64
      %v2640 = vpop.permute.xlu0 %2639
      %2642 = vst.msk [vmem:[#allocation4 + $0x4] sm:$0x7] %vm2582, %v2640
      %v2643 = vld [vmem:[#allocation3 + $0xc] sm:$0x7]
      %2645 = vrot.lane.b32.xlu0 %v2643, 96
      %v2646 = vpop.permute.xlu0 %2645
      %2648 = vst.msk [vmem:[#allocation4 + $0x4] sm:$0x7] %vm2597, %v2646
      %v2649 = vld [vmem:[#allocation3 + $0xc] sm:$0x8]
      %v2650 = vld [vmem:[#allocation3 + $0x10] sm:$0x3]
      %vm2653 = vcmask 1044484
      %vm2654 = vmor %vm1226, %vm2653
      %v2655 = vrot.slane %v2649, 7
      %v2656 = vrot.slane %v2655, 4
      %v2657 = vrot.slane %v2650, 7
      %v2658 = vsel %vm2654, %v2656, %v2657
      %2660 = vst.msk [vmem:[#allocation4 + $0x8] sm:$0x7] %vm2560, %v2658
      %v2661 = vld [vmem:[#allocation3 + $0x10] sm:$0x8]
      %v2662 = vld [vmem:[#allocation3 + $0x14] sm:$0x3]
      %v2665 = vrot.slane %v2661, 7
      %v2666 = vrot.slane %v2665, 4
      %v2667 = vrot.slane %v2662, 7
      %v2668 = vsel %vm2654, %v2666, %v2667
      %2669 = vrot.lane.b32.xlu0 %v2668, 32
      %v2670 = vpop.permute.xlu0 %2669
      %2672 = vst.msk [vmem:[#allocation4 + $0x8] sm:$0x7] %vm2567, %v2670
      %v2673 = vld [vmem:[#allocation3 + $0xc] sm:$0x8]
      %v2674 = vld [vmem:[#allocation3 + $0x10] sm:$0x7]
      %v2676 = vshrl.u32 %v2673, 16
      %v2678 = vrot.slane %v2676, 7
      %v2679 = vrot.slane %v2678, 4
      %v2681 = vshrl.u32 %v2674, 16
      %v2683 = vrot.slane %v2681, 7
      %v2684 = vshll.u32 %v2674, 16
      %v2686 = vor.u32 %v2683, %v2684
      %v2687 = vsel %vm2602, %v2679, %v2686
      %2688 = vrot.lane.b32.xlu0 %v2687, 64
      %v2689 = vpop.permute.xlu0 %2688
      %2691 = vst.msk [vmem:[#allocation4 + $0x8] sm:$0x7] %vm2582, %v2689
      %v2692 = vld [vmem:[#allocation3 + $0x10] sm:$0x8]
      %v2693 = vld [vmem:[#allocation3 + $0x14] sm:$0x7]
      %v2695 = vshrl.u32 %v2692, 16
      %v2697 = vrot.slane %v2695, 7
      %v2698 = vrot.slane %v2697, 4
      %v2700 = vshrl.u32 %v2693, 16
      %v2702 = vrot.slane %v2700, 7
      %v2703 = vshll.u32 %v2693, 16
      %v2705 = vor.u32 %v2702, %v2703
      %v2706 = vsel %vm2602, %v2698, %v2705
      %2707 = vrot.lane.b32.xlu0 %v2706, 96
      %v2708 = vpop.permute.xlu0 %2707
      %2710 = vst.msk [vmem:[#allocation4 + $0x8] sm:$0x7] %vm2597, %v2708
      %v2711 = vld [vmem:[#allocation3 + $0x14] sm:$0xc]
      %v2712 = vld [vmem:[#allocation3 + $0x18] sm:$0x3]
      %vm2713 = vsmask.f32 5392
      %vm2714 = vmor %vm933, %vm2713
      %v2716 = vshrl.u32 %v2711, 16
      %v2718 = vrot.slane %v2716, 6
      %v2719 = vshll.u32 %v2711, 16
      %v2721 = vrot.slane %v2719, 7
      %v2722 = vor.u32 %v2718, %v2721
      %v2723 = vrot.slane %v2722, 4
      %v2725 = vshrl.u32 %v2712, 16
      %v2727 = vrot.slane %v2725, 6
      %v2728 = vshll.u32 %v2712, 16
      %v2730 = vrot.slane %v2728, 7
      %v2731 = vor.u32 %v2727, %v2730
      %v2732 = vsel %vm2714, %v2723, %v2731
      %2734 = vst.msk [vmem:[#allocation4 + $0xc] sm:$0x7] %vm2560, %v2732
      %v2735 = vld [vmem:[#allocation3 + $0x18] sm:$0xc]
      %v2736 = vld [vmem:[#allocation3 + $0x1c] sm:$0x3]
      %v2738 = vshrl.u32 %v2735, 16
      %v2740 = vrot.slane %v2738, 6
      %v2741 = vshll.u32 %v2735, 16
      %v2743 = vrot.slane %v2741, 7
      %v2744 = vor.u32 %v2740, %v2743
      %v2745 = vrot.slane %v2744, 4
      %v2747 = vshrl.u32 %v2736, 16
      %v2749 = vrot.slane %v2747, 6
      %v2750 = vshll.u32 %v2736, 16
      %v2752 = vrot.slane %v2750, 7
      %v2753 = vor.u32 %v2749, %v2752
      %v2754 = vsel %vm2714, %v2745, %v2753
      %2755 = vrot.lane.b32.xlu0 %v2754, 32
      %v2756 = vpop.permute.xlu0 %2755
      %2758 = vst.msk [vmem:[#allocation4 + $0xc] sm:$0x7] %vm2567, %v2756
      %v2759 = vld [vmem:[#allocation3 + $0x14] sm:$0x8]
      %v2760 = vld [vmem:[#allocation3 + $0x18] sm:$0x3]
      %v2763 = vrot.slane %v2759, 7
      %v2764 = vrot.slane %v2763, 4
      %v2765 = vrot.slane %v2760, 7
      %v2766 = vsel %vm2654, %v2764, %v2765
      %2767 = vrot.lane.b32.xlu0 %v2766, 64
      %v2768 = vpop.permute.xlu0 %2767
      %2770 = vst.msk [vmem:[#allocation4 + $0xc] sm:$0x7] %vm2582, %v2768
      %v2771 = vld [vmem:[#allocation3 + $0x18] sm:$0x8]
      %v2772 = vld [vmem:[#allocation3 + $0x1c] sm:$0x3]
      %v2775 = vrot.slane %v2771, 7
      %v2776 = vrot.slane %v2775, 4
      %v2777 = vrot.slane %v2772, 7
      %v2778 = vsel %vm2654, %v2776, %v2777
      %2779 = vrot.lane.b32.xlu0 %v2778, 96
      %v2780 = vpop.permute.xlu0 %2779
      %2782 = vst.msk [vmem:[#allocation4 + $0xc] sm:$0x7] %vm2597, %v2780
      %v2783 = vld [vmem:[#allocation3 + $0xc] sm:$0x8]
      %v2784 = vld [vmem:[#allocation3 + $0x10] sm:$0x3]
      %vm2785 = vcmask 257027
      %2786 = vst.msk [vmem:[#allocation4] sm:$0x8] %vm2785, %v2783
      %vm2787 = vcmask 254976
      %2788 = vst.msk [vmem:[#allocation4 + $0x10] sm:$0x3] %vm2787, %v2784
      %v2789 = vld [vmem:[#allocation3 + $0x10] sm:$0x8]
      %v2790 = vld [vmem:[#allocation3 + $0x14] sm:$0x3]
      %2793 = vrot.lane.b32.xlu0 %v2789, 32
      %v2794 = vpop.permute.xlu0 %2793
      %2795 = vrot.lane.b32.xlu0 %v2790, 32
      %v2796 = vpop.permute.xlu0 %2795
      %vm2799 = vcmask 519427
      %2800 = vst.msk [vmem:[#allocation4] sm:$0x8] %vm2799, %v2794
      %vm2801 = vcmask 517376
      %2802 = vst.msk [vmem:[#allocation4 + $0x10] sm:$0x3] %vm2801, %v2796
      %v2803 = vld [vmem:[#allocation3 + $0xc] sm:$0x8]
      %v2804 = vld [vmem:[#allocation3 + $0x10] sm:$0x7]
      %vm2805 = vsmask.f32 7440
      %vm2806 = vmor %vm538, %vm2805
      %v2808 = vshrl.u32 %v2803, 16
      %v2810 = vrot.slane %v2808, 4
      %v2811 = vrot.slane %v2810, 4
      %v2813 = vshll.u32 %v2804, 16
      %v2815 = vrot.slane %v2813, 5
      %v2816 = vsel %vm2806, %v2811, %v2815
      %v2817 = vshrl.u32 %v2804, 16
      %v2819 = vrot.slane %v2817, 4
      %v2820 = vor.u32 %v2819, %v2815
      %v2821 = vrot.slane %v2820, 4
      %2822 = vrot.lane.b32.xlu0 %v2816, 64
      %v2823 = vpop.permute.xlu0 %2822
      %2824 = vrot.lane.b32.xlu0 %v2821, 64
      %v2825 = vpop.permute.xlu0 %2824
      %vm2828 = vcmask 781827
      %2829 = vst.msk [vmem:[#allocation4] sm:$0x8] %vm2828, %v2823
      %vm2830 = vcmask 779776
      %2831 = vst.msk [vmem:[#allocation4 + $0x10] sm:$0x3] %vm2830, %v2825
      %v2832 = vld [vmem:[#allocation3 + $0x10] sm:$0x8]
      %v2833 = vld [vmem:[#allocation3 + $0x14] sm:$0x7]
      %v2835 = vshrl.u32 %v2832, 16
      %v2837 = vrot.slane %v2835, 4
      %v2838 = vrot.slane %v2837, 4
      %v2840 = vshll.u32 %v2833, 16
      %v2842 = vrot.slane %v2840, 5
      %v2843 = vsel %vm2806, %v2838, %v2842
      %v2844 = vshrl.u32 %v2833, 16
      %v2846 = vrot.slane %v2844, 4
      %v2847 = vor.u32 %v2846, %v2842
      %v2848 = vrot.slane %v2847, 4
      %2849 = vrot.lane.b32.xlu0 %v2843, 96
      %v2850 = vpop.permute.xlu0 %2849
      %2851 = vrot.lane.b32.xlu0 %v2848, 96
      %v2852 = vpop.permute.xlu0 %2851
      %vm2855 = vcmask 1044227
      %2856 = vst.msk [vmem:[#allocation4] sm:$0x8] %vm2855, %v2850
      %vm2857 = vcmask 1042176
      %2858 = vst.msk [vmem:[#allocation4 + $0x10] sm:$0x3] %vm2857, %v2852
      %v2859 = vld [vmem:[#allocation3 + $0x14] sm:$0xc]
      %v2860 = vld [vmem:[#allocation3 + $0x18] sm:$0x3]
      %v2862 = vshrl.u32 %v2859, 16
      %v2864 = vrot.slane %v2862, 7
      %v2865 = vshll.u32 %v2859, 16
      %v2867 = vor.u32 %v2864, %v2865
      %v2868 = vrot.slane %v2864, 4
      %v2870 = vshrl.u32 %v2860, 16
      %v2872 = vrot.slane %v2870, 7
      %v2873 = vshll.u32 %v2860, 16
      %v2875 = vor.u32 %v2872, %v2873
      %v2876 = vsel %vm2602, %v2868, %v2875
      %2879 = vst.msk [vmem:[#allocation4 + $0x4] sm:$0x8] %vm2785, %v2867
      %2880 = vst.msk [vmem:[#allocation4 + $0x14] sm:$0x3] %vm2787, %v2876
      %v2881 = vld [vmem:[#allocation3 + $0x18] sm:$0xc]
      %v2882 = vld [vmem:[#allocation3 + $0x1c] sm:$0x3]
      %v2884 = vshrl.u32 %v2881, 16
      %v2886 = vrot.slane %v2884, 7
      %v2887 = vshll.u32 %v2881, 16
      %v2889 = vor.u32 %v2886, %v2887
      %v2890 = vrot.slane %v2886, 4
      %v2892 = vshrl.u32 %v2882, 16
      %v2894 = vrot.slane %v2892, 7
      %v2895 = vshll.u32 %v2882, 16
      %v2897 = vor.u32 %v2894, %v2895
      %v2898 = vsel %vm2602, %v2890, %v2897
      %2899 = vrot.lane.b32.xlu0 %v2889, 32
      %v2900 = vpop.permute.xlu0 %2899
      %2901 = vrot.lane.b32.xlu0 %v2898, 32
      %v2902 = vpop.permute.xlu0 %2901
      %2905 = vst.msk [vmem:[#allocation4 + $0x4] sm:$0x8] %vm2799, %v2900
      %2906 = vst.msk [vmem:[#allocation4 + $0x14] sm:$0x3] %vm2801, %v2902
      %v2907 = vld [vmem:[#allocation3 + $0x14] sm:$0x8]
      %v2908 = vld [vmem:[#allocation3 + $0x18] sm:$0x3]
      %2911 = vrot.lane.b32.xlu0 %v2907, 64
      %v2912 = vpop.permute.xlu0 %2911
      %2913 = vrot.lane.b32.xlu0 %v2908, 64
      %v2914 = vpop.permute.xlu0 %2913
      %2917 = vst.msk [vmem:[#allocation4 + $0x4] sm:$0x8] %vm2828, %v2912
      %2918 = vst.msk [vmem:[#allocation4 + $0x14] sm:$0x3] %vm2830, %v2914
      %v2919 = vld [vmem:[#allocation3 + $0x18] sm:$0x8]
      %v2920 = vld [vmem:[#allocation3 + $0x1c] sm:$0x3]
      %2923 = vrot.lane.b32.xlu0 %v2919, 96
      %v2924 = vpop.permute.xlu0 %2923
      %2925 = vrot.lane.b32.xlu0 %v2920, 96
      %v2926 = vpop.permute.xlu0 %2925
      %2929 = vst.msk [vmem:[#allocation4 + $0x4] sm:$0x8] %vm2855, %v2924
      %2930 = vst.msk [vmem:[#allocation4 + $0x14] sm:$0x3] %vm2857, %v2926
      %v2931 = vld [vmem:[#allocation3 + $0x1c] sm:$0xc]
      %v2932 = vld [vmem:[#allocation3 + $0x20] sm:$0x1]
      %v2935 = vrot.slane %v2931, 7
      %v2936 = vrot.slane %v2935, 4
      %v2937 = vrot.slane %v2932, 7
      %v2938 = vsel %vm2654, %v2936, %v2937
      %2941 = vst.msk [vmem:[#allocation4 + $0x8] sm:$0x8] %vm2785, %v2935
      %2942 = vst.msk [vmem:[#allocation4 + $0x18] sm:$0x3] %vm2787, %v2938
      %v2943 = vld [vmem:[#allocation3 + $0x20] sm:$0xc]
      %v2944 = vld [vmem:[#allocation3 + $0x24] sm:$0x1]
      %v2947 = vrot.slane %v2943, 7
      %v2948 = vrot.slane %v2947, 4
      %v2949 = vrot.slane %v2944, 7
      %v2950 = vsel %vm2654, %v2948, %v2949
      %2951 = vrot.lane.b32.xlu0 %v2947, 32
      %v2952 = vpop.permute.xlu0 %2951
      %2953 = vrot.lane.b32.xlu0 %v2950, 32
      %v2954 = vpop.permute.xlu0 %2953
      %2957 = vst.msk [vmem:[#allocation4 + $0x8] sm:$0x8] %vm2799, %v2952
      %2958 = vst.msk [vmem:[#allocation4 + $0x18] sm:$0x3] %vm2801, %v2954
      %v2959 = vld [vmem:[#allocation3 + $0x1c] sm:$0xc]
      %v2960 = vld [vmem:[#allocation3 + $0x20] sm:$0x3]
      %v2962 = vshrl.u32 %v2959, 16
      %v2964 = vrot.slane %v2962, 7
      %v2965 = vshll.u32 %v2959, 16
      %v2967 = vor.u32 %v2964, %v2965
      %v2968 = vrot.slane %v2964, 4
      %v2970 = vshrl.u32 %v2960, 16
      %v2972 = vrot.slane %v2970, 7
      %v2973 = vshll.u32 %v2960, 16
      %v2975 = vor.u32 %v2972, %v2973
      %v2976 = vsel %vm2602, %v2968, %v2975
      %2977 = vrot.lane.b32.xlu0 %v2967, 64
      %v2978 = vpop.permute.xlu0 %2977
      %2979 = vrot.lane.b32.xlu0 %v2976, 64
      %v2980 = vpop.permute.xlu0 %2979
      %2983 = vst.msk [vmem:[#allocation4 + $0x8] sm:$0x8] %vm2828, %v2978
      %2984 = vst.msk [vmem:[#allocation4 + $0x18] sm:$0x3] %vm2830, %v2980
      %v2985 = vld [vmem:[#allocation3 + $0x20] sm:$0xc]
      %v2986 = vld [vmem:[#allocation3 + $0x24] sm:$0x3]
      %v2988 = vshrl.u32 %v2985, 16
      %v2990 = vrot.slane %v2988, 7
      %v2991 = vshll.u32 %v2985, 16
      %v2993 = vor.u32 %v2990, %v2991
      %v2994 = vrot.slane %v2990, 4
      %v2996 = vshrl.u32 %v2986, 16
      %v2998 = vrot.slane %v2996, 7
      %v2999 = vshll.u32 %v2986, 16
      %v3001 = vor.u32 %v2998, %v2999
      %v3002 = vsel %vm2602, %v2994, %v3001
      %3003 = vrot.lane.b32.xlu0 %v2993, 96
      %v3004 = vpop.permute.xlu0 %3003
      %3005 = vrot.lane.b32.xlu0 %v3002, 96
      %v3006 = vpop.permute.xlu0 %3005
      %3009 = vst.msk [vmem:[#allocation4 + $0x8] sm:$0x8] %vm2855, %v3004
      %3010 = vst.msk [vmem:[#allocation4 + $0x18] sm:$0x3] %vm2857, %v3006
      %v3011 = vld [vmem:[#allocation3 + $0x24] sm:$0xe]
      %v3012 = vld [vmem:[#allocation3 + $0x28] sm:$0x1]
      %v3014 = vshrl.u32 %v3011, 16
      %v3016 = vrot.slane %v3014, 6
      %v3017 = vshll.u32 %v3011, 16
      %v3019 = vrot.slane %v3017, 7
      %v3020 = vor.u32 %v3016, %v3019
      %v3021 = vrot.slane %v3020, 4
      %v3023 = vshll.u32 %v3012, 16
      %v3025 = vrot.slane %v3023, 7
      %v3026 = vsel %vm2714, %v3021, %v3025
      %3029 = vst.msk [vmem:[#allocation4 + $0xc] sm:$0x8] %vm2785, %v3020
      %3030 = vst.msk [vmem:[#allocation4 + $0x1c] sm:$0x3] %vm2787, %v3026
      %v3031 = vld [vmem:[#allocation3 + $0x28] sm:$0xe]
      %v3032 = vld [vmem:[#allocation3 + $0x2c] sm:$0x1]
      %v3034 = vshrl.u32 %v3031, 16
      %v3036 = vrot.slane %v3034, 6
      %v3037 = vshll.u32 %v3031, 16
      %v3039 = vrot.slane %v3037, 7
      %v3040 = vor.u32 %v3036, %v3039
      %v3041 = vrot.slane %v3040, 4
      %v3043 = vshll.u32 %v3032, 16
      %v3045 = vrot.slane %v3043, 7
      %v3046 = vsel %vm2714, %v3041, %v3045
      %3047 = vrot.lane.b32.xlu0 %v3040, 32
      %v3048 = vpop.permute.xlu0 %3047
      %3049 = vrot.lane.b32.xlu0 %v3046, 32
      %v3050 = vpop.permute.xlu0 %3049
      %3053 = vst.msk [vmem:[#allocation4 + $0xc] sm:$0x8] %vm2799, %v3048
      %3054 = vst.msk [vmem:[#allocation4 + $0x1c] sm:$0x3] %vm2801, %v3050
      %v3055 = vld [vmem:[#allocation3 + $0x24] sm:$0xc]
      %v3056 = vld [vmem:[#allocation3 + $0x28] sm:$0x1]
      %v3059 = vrot.slane %v3055, 7
      %v3060 = vrot.slane %v3059, 4
      %v3061 = vrot.slane %v3056, 7
      %v3062 = vsel %vm2654, %v3060, %v3061
      %3063 = vrot.lane.b32.xlu0 %v3059, 64
      %v3064 = vpop.permute.xlu0 %3063
      %3065 = vrot.lane.b32.xlu0 %v3062, 64
      %v3066 = vpop.permute.xlu0 %3065
      %3069 = vst.msk [vmem:[#allocation4 + $0xc] sm:$0x8] %vm2828, %v3064
      %3070 = vst.msk [vmem:[#allocation4 + $0x1c] sm:$0x3] %vm2830, %v3066
      %v3071 = vld [vmem:[#allocation3 + $0x28] sm:$0xc]
      %v3072 = vld [vmem:[#allocation3 + $0x2c] sm:$0x1]
      %v3075 = vrot.slane %v3071, 7
      %v3076 = vrot.slane %v3075, 4
      %v3077 = vrot.slane %v3072, 7
      %v3078 = vsel %vm2654, %v3076, %v3077
      %3079 = vrot.lane.b32.xlu0 %v3075, 96
      %v3080 = vpop.permute.xlu0 %3079
      %3081 = vrot.lane.b32.xlu0 %v3078, 96
      %v3082 = vpop.permute.xlu0 %3081
      %3085 = vst.msk [vmem:[#allocation4 + $0xc] sm:$0x8] %vm2855, %v3080
      %3086 = vst.msk [vmem:[#allocation4 + $0x1c] sm:$0x3] %vm2857, %v3082
      %v3087 = vld [vmem:[#allocation3 + $0x1c] sm:$0xc]
      %v3088 = vld [vmem:[#allocation3 + $0x20] sm:$0x1]
      %vm3089 = vcmask 257026
      %3090 = vst.msk [vmem:[#allocation4 + $0x10] sm:$0xc] %vm3089, %v3087
      %vm3091 = vcmask 253952
      %3092 = vst.msk [vmem:[#allocation4 + $0x20] sm:$0x1] %vm3091, %v3088
      %v3093 = vld [vmem:[#allocation3 + $0x20] sm:$0xc]
      %v3094 = vld [vmem:[#allocation3 + $0x24] sm:$0x1]
      %3097 = vrot.lane.b32.xlu0 %v3093, 32
      %v3098 = vpop.permute.xlu0 %3097
      %3099 = vrot.lane.b32.xlu0 %v3094, 32
      %v3100 = vpop.permute.xlu0 %3099
      %vm3103 = vcmask 519426
      %3104 = vst.msk [vmem:[#allocation4 + $0x10] sm:$0xc] %vm3103, %v3098
      %vm3105 = vcmask 516352
      %3106 = vst.msk [vmem:[#allocation4 + $0x20] sm:$0x1] %vm3105, %v3100
      %v3107 = vld [vmem:[#allocation3 + $0x1c] sm:$0xc]
      %v3108 = vld [vmem:[#allocation3 + $0x20] sm:$0x3]
      %v3110 = vshrl.u32 %v3107, 16
      %v3112 = vrot.slane %v3110, 4
      %v3113 = vshll.u32 %v3107, 16
      %v3115 = vrot.slane %v3113, 5
      %v3116 = vor.u32 %v3112, %v3115
      %v3117 = vrot.slane %v3116, 4
      %v3119 = vshll.u32 %v3108, 16
      %v3121 = vrot.slane %v3119, 5
      %v3122 = vsel %vm2806, %v3117, %v3121
      %v3123 = vshrl.u32 %v3108, 16
      %v3125 = vrot.slane %v3123, 4
      %v3126 = vor.u32 %v3125, %v3121
      %v3127 = vrot.slane %v3126, 4
      %3128 = vrot.lane.b32.xlu0 %v3122, 64
      %v3129 = vpop.permute.xlu0 %3128
      %3130 = vrot.lane.b32.xlu0 %v3127, 64
      %v3131 = vpop.permute.xlu0 %3130
      %vm3134 = vcmask 781826
      %3135 = vst.msk [vmem:[#allocation4 + $0x10] sm:$0xc] %vm3134, %v3129
      %vm3136 = vcmask 778752
      %3137 = vst.msk [vmem:[#allocation4 + $0x20] sm:$0x1] %vm3136, %v3131
      %v3138 = vld [vmem:[#allocation3 + $0x20] sm:$0xc]
      %v3139 = vld [vmem:[#allocation3 + $0x24] sm:$0x3]
      %v3141 = vshrl.u32 %v3138, 16
      %v3143 = vrot.slane %v3141, 4
      %v3144 = vshll.u32 %v3138, 16
      %v3146 = vrot.slane %v3144, 5
      %v3147 = vor.u32 %v3143, %v3146
      %v3148 = vrot.slane %v3147, 4
      %v3150 = vshll.u32 %v3139, 16
      %v3152 = vrot.slane %v3150, 5
      %v3153 = vsel %vm2806, %v3148, %v3152
      %v3154 = vshrl.u32 %v3139, 16
      %v3156 = vrot.slane %v3154, 4
      %v3157 = vor.u32 %v3156, %v3152
      %v3158 = vrot.slane %v3157, 4
      %3159 = vrot.lane.b32.xlu0 %v3153, 96
      %v3160 = vpop.permute.xlu0 %3159
      %3161 = vrot.lane.b32.xlu0 %v3158, 96
      %v3162 = vpop.permute.xlu0 %3161
      %vm3165 = vcmask 1044226
      %3166 = vst.msk [vmem:[#allocation4 + $0x10] sm:$0xc] %vm3165, %v3160
      %vm3167 = vcmask 1041152
      %3168 = vst.msk [vmem:[#allocation4 + $0x20] sm:$0x1] %vm3167, %v3162
      %v3169 = vld [vmem:[#allocation3 + $0x24] sm:$0xe]
      %v3170 = vld [vmem:[#allocation3 + $0x28] sm:$0x1]
      %v3172 = vshrl.u32 %v3169, 16
      %v3174 = vrot.slane %v3172, 7
      %v3175 = vshll.u32 %v3169, 16
      %v3177 = vor.u32 %v3174, %v3175
      %v3178 = vrot.slane %v3174, 4
      %v3180 = vshll.u32 %v3170, 16
      %v3182 = vsel %vm2602, %v3178, %v3180
      %3185 = vst.msk [vmem:[#allocation4 + $0x14] sm:$0xc] %vm3089, %v3177
      %3186 = vst.msk [vmem:[#allocation4 + $0x24] sm:$0x1] %vm3091, %v3182
      %v3187 = vld [vmem:[#allocation3 + $0x28] sm:$0xe]
      %v3188 = vld [vmem:[#allocation3 + $0x2c] sm:$0x1]
      %v3190 = vshrl.u32 %v3187, 16
      %v3192 = vrot.slane %v3190, 7
      %v3193 = vshll.u32 %v3187, 16
      %v3195 = vor.u32 %v3192, %v3193
      %v3196 = vrot.slane %v3192, 4
      %v3198 = vshll.u32 %v3188, 16
      %v3200 = vsel %vm2602, %v3196, %v3198
      %3201 = vrot.lane.b32.xlu0 %v3195, 32
      %v3202 = vpop.permute.xlu0 %3201
      %3203 = vrot.lane.b32.xlu0 %v3200, 32
      %v3204 = vpop.permute.xlu0 %3203
      %3207 = vst.msk [vmem:[#allocation4 + $0x14] sm:$0xc] %vm3103, %v3202
      %3208 = vst.msk [vmem:[#allocation4 + $0x24] sm:$0x1] %vm3105, %v3204
      %v3209 = vld [vmem:[#allocation3 + $0x24] sm:$0xc]
      %v3210 = vld [vmem:[#allocation3 + $0x28] sm:$0x1]
      %3213 = vrot.lane.b32.xlu0 %v3209, 64
      %v3214 = vpop.permute.xlu0 %3213
      %3215 = vrot.lane.b32.xlu0 %v3210, 64
      %v3216 = vpop.permute.xlu0 %3215
      %3219 = vst.msk [vmem:[#allocation4 + $0x14] sm:$0xc] %vm3134, %v3214
      %3220 = vst.msk [vmem:[#allocation4 + $0x24] sm:$0x1] %vm3136, %v3216
      %v3221 = vld [vmem:[#allocation3 + $0x28] sm:$0xc]
      %v3222 = vld [vmem:[#allocation3 + $0x2c] sm:$0x1]
      %3225 = vrot.lane.b32.xlu0 %v3221, 96
      %v3226 = vpop.permute.xlu0 %3225
      %3227 = vrot.lane.b32.xlu0 %v3222, 96
      %v3228 = vpop.permute.xlu0 %3227
      %3231 = vst.msk [vmem:[#allocation4 + $0x14] sm:$0xc] %vm3165, %v3226
      %3232 = vst.msk [vmem:[#allocation4 + $0x24] sm:$0x1] %vm3167, %v3228
      %v3233 = vld [vmem:[#allocation3 + $0x2c] sm:$0xe]
      %v3235 = vrot.slane %v3233, 7
      %v3236 = vrot.slane %v3235, 4
      %3239 = vst.msk [vmem:[#allocation4 + $0x18] sm:$0xc] %vm3089, %v3235
      %3240 = vst.msk [vmem:[#allocation4 + $0x28] sm:$0x1] %vm3091, %v3236
      %v3241 = vld [vmem:[#allocation3 + $0x30] sm:$0xe]
      %v3243 = vrot.slane %v3241, 7
      %v3244 = vrot.slane %v3243, 4
      %3245 = vrot.lane.b32.xlu0 %v3243, 32
      %v3246 = vpop.permute.xlu0 %3245
      %3247 = vrot.lane.b32.xlu0 %v3244, 32
      %v3248 = vpop.permute.xlu0 %3247
      %3251 = vst.msk [vmem:[#allocation4 + $0x18] sm:$0xc] %vm3103, %v3246
      %3252 = vst.msk [vmem:[#allocation4 + $0x28] sm:$0x1] %vm3105, %v3248
      %v3253 = vld [vmem:[#allocation3 + $0x2c] sm:$0xe]
      %v3254 = vld [vmem:[#allocation3 + $0x30] sm:$0x1]
      %v3256 = vshrl.u32 %v3253, 16
      %v3258 = vrot.slane %v3256, 7
      %v3259 = vshll.u32 %v3253, 16
      %v3261 = vor.u32 %v3258, %v3259
      %v3262 = vrot.slane %v3258, 4
      %v3264 = vshll.u32 %v3254, 16
      %v3266 = vsel %vm2602, %v3262, %v3264
      %3267 = vrot.lane.b32.xlu0 %v3261, 64
      %v3268 = vpop.permute.xlu0 %3267
      %3269 = vrot.lane.b32.xlu0 %v3266, 64
      %v3270 = vpop.permute.xlu0 %3269
      %3273 = vst.msk [vmem:[#allocation4 + $0x18] sm:$0xc] %vm3134, %v3268
      %3274 = vst.msk [vmem:[#allocation4 + $0x28] sm:$0x1] %vm3136, %v3270
      %v3275 = vld [vmem:[#allocation3 + $0x30] sm:$0xe]
      %v3276 = vld [vmem:[#allocation3 + $0x34] sm:$0x1]
      %v3278 = vshrl.u32 %v3275, 16
      %v3280 = vrot.slane %v3278, 7
      %v3281 = vshll.u32 %v3275, 16
      %v3283 = vor.u32 %v3280, %v3281
      %v3284 = vrot.slane %v3280, 4
      %v3286 = vshll.u32 %v3276, 16
      %v3288 = vsel %vm2602, %v3284, %v3286
      %3289 = vrot.lane.b32.xlu0 %v3283, 96
      %v3290 = vpop.permute.xlu0 %3289
      %3291 = vrot.lane.b32.xlu0 %v3288, 96
      %v3292 = vpop.permute.xlu0 %3291
      %3295 = vst.msk [vmem:[#allocation4 + $0x18] sm:$0xc] %vm3165, %v3290
      %3296 = vst.msk [vmem:[#allocation4 + $0x28] sm:$0x1] %vm3167, %v3292
      %v3297 = vld [vmem:[#allocation3 + $0x34] sm:$0xf]
      %v3299 = vshrl.u32 %v3297, 16
      %v3301 = vrot.slane %v3299, 6
      %v3302 = vshll.u32 %v3297, 16
      %v3304 = vrot.slane %v3302, 7
      %v3305 = vor.u32 %v3301, %v3304
      %v3306 = vrot.slane %v3305, 4
      %3309 = vst.msk [vmem:[#allocation4 + $0x1c] sm:$0xc] %vm3089, %v3305
      %3310 = vst.msk [vmem:[#allocation4 + $0x2c] sm:$0x1] %vm3091, %v3306
      %v3311 = vld [vmem:[#allocation3 + $0x38] sm:$0xf]
      %v3313 = vshrl.u32 %v3311, 16
      %v3315 = vrot.slane %v3313, 6
      %v3316 = vshll.u32 %v3311, 16
      %v3318 = vrot.slane %v3316, 7
      %v3319 = vor.u32 %v3315, %v3318
      %v3320 = vrot.slane %v3319, 4
      %3321 = vrot.lane.b32.xlu0 %v3319, 32
      %v3322 = vpop.permute.xlu0 %3321
      %3323 = vrot.lane.b32.xlu0 %v3320, 32
      %v3324 = vpop.permute.xlu0 %3323
      %3327 = vst.msk [vmem:[#allocation4 + $0x1c] sm:$0xc] %vm3103, %v3322
      %3328 = vst.msk [vmem:[#allocation4 + $0x2c] sm:$0x1] %vm3105, %v3324
      %v3329 = vld [vmem:[#allocation3 + $0x34] sm:$0xe]
      %v3331 = vrot.slane %v3329, 7
      %v3332 = vrot.slane %v3331, 4
      %3333 = vrot.lane.b32.xlu0 %v3331, 64
      %v3334 = vpop.permute.xlu0 %3333
      %3335 = vrot.lane.b32.xlu0 %v3332, 64
      %v3336 = vpop.permute.xlu0 %3335
      %3339 = vst.msk [vmem:[#allocation4 + $0x1c] sm:$0xc] %vm3134, %v3334
      %3340 = vst.msk [vmem:[#allocation4 + $0x2c] sm:$0x1] %vm3136, %v3336
      %v3341 = vld [vmem:[#allocation3 + $0x38] sm:$0xe]
      %v3343 = vrot.slane %v3341, 7
      %v3344 = vrot.slane %v3343, 4
      %3345 = vrot.lane.b32.xlu0 %v3343, 96
      %v3346 = vpop.permute.xlu0 %3345
      %3347 = vrot.lane.b32.xlu0 %v3344, 96
      %v3348 = vpop.permute.xlu0 %3347
      %3351 = vst.msk [vmem:[#allocation4 + $0x1c] sm:$0xc] %vm3165, %v3346
      %3352 = vst.msk [vmem:[#allocation4 + $0x2c] sm:$0x1] %vm3167, %v3348
      %v3353 = vld [vmem:[#allocation3 + $0x2c] sm:$0xe]
      %vm3354 = vcmask 257025
      %3355 = vst.msk [vmem:[#allocation4 + $0x20] sm:$0xe] %vm3354, %v3353
      %v3356 = vld [vmem:[#allocation3 + $0x30] sm:$0xe]
      %3358 = vrot.lane.b32.xlu0 %v3356, 32
      %v3359 = vpop.permute.xlu0 %3358
      %vm3361 = vcmask 519425
      %3362 = vst.msk [vmem:[#allocation4 + $0x20] sm:$0xe] %vm3361, %v3359
      %v3363 = vld [vmem:[#allocation3 + $0x2c] sm:$0xe]
      %v3364 = vld [vmem:[#allocation3 + $0x30] sm:$0x1]
      %v3366 = vshrl.u32 %v3363, 16
      %v3368 = vrot.slane %v3366, 4
      %v3369 = vshll.u32 %v3363, 16
      %v3371 = vrot.slane %v3369, 5
      %v3372 = vor.u32 %v3368, %v3371
      %v3373 = vrot.slane %v3372, 4
      %v3375 = vshll.u32 %v3364, 16
      %v3377 = vrot.slane %v3375, 5
      %v3378 = vsel %vm2806, %v3373, %v3377
      %3379 = vrot.lane.b32.xlu0 %v3378, 64
      %v3380 = vpop.permute.xlu0 %3379
      %vm3382 = vcmask 781825
      %3383 = vst.msk [vmem:[#allocation4 + $0x20] sm:$0xe] %vm3382, %v3380
      %v3384 = vld [vmem:[#allocation3 + $0x30] sm:$0xe]
      %v3385 = vld [vmem:[#allocation3 + $0x34] sm:$0x1]
      %v3387 = vshrl.u32 %v3384, 16
      %v3389 = vrot.slane %v3387, 4
      %v3390 = vshll.u32 %v3384, 16
      %v3392 = vrot.slane %v3390, 5
      %v3393 = vor.u32 %v3389, %v3392
      %v3394 = vrot.slane %v3393, 4
      %v3396 = vshll.u32 %v3385, 16
      %v3398 = vrot.slane %v3396, 5
      %v3399 = vsel %vm2806, %v3394, %v3398
      %3400 = vrot.lane.b32.xlu0 %v3399, 96
      %v3401 = vpop.permute.xlu0 %3400
      %vm3403 = vcmask 1044225
      %3404 = vst.msk [vmem:[#allocation4 + $0x20] sm:$0xe] %vm3403, %v3401
      %v3405 = vld [vmem:[#allocation3 + $0x34] sm:$0xf]
      %v3407 = vshrl.u32 %v3405, 16
      %v3409 = vrot.slane %v3407, 7
      %v3410 = vshll.u32 %v3405, 16
      %v3412 = vor.u32 %v3409, %v3410
      %3414 = vst.msk [vmem:[#allocation4 + $0x24] sm:$0xe] %vm3354, %v3412
      %v3415 = vld [vmem:[#allocation3 + $0x38] sm:$0xf]
      %v3417 = vshrl.u32 %v3415, 16
      %v3419 = vrot.slane %v3417, 7
      %v3420 = vshll.u32 %v3415, 16
      %v3422 = vor.u32 %v3419, %v3420
      %3423 = vrot.lane.b32.xlu0 %v3422, 32
      %v3424 = vpop.permute.xlu0 %3423
      %3426 = vst.msk [vmem:[#allocation4 + $0x24] sm:$0xe] %vm3361, %v3424
      %v3427 = vld [vmem:[#allocation3 + $0x34] sm:$0xe]
      %3429 = vrot.lane.b32.xlu0 %v3427, 64
      %v3430 = vpop.permute.xlu0 %3429
      %3432 = vst.msk [vmem:[#allocation4 + $0x24] sm:$0xe] %vm3382, %v3430
      %v3433 = vld [vmem:[#allocation3 + $0x38] sm:$0xe]
      %3435 = vrot.lane.b32.xlu0 %v3433, 96
      %v3436 = vpop.permute.xlu0 %3435
      %3438 = vst.msk [vmem:[#allocation4 + $0x24] sm:$0xe] %vm3403, %v3436
      %v3439 = vld [vmem:[#allocation3 + $0x3c] sm:$0x7]
      %v3441 = vrot.slane %v3439, 7
      %3443 = vst.msk [vmem:[#allocation4 + $0x28] sm:$0xe] %vm3354, %v3441
      %v3444 = vld [vmem:[#allocation3 + $0x40] sm:$0x7]
      %v3446 = vrot.slane %v3444, 7
      %3447 = vrot.lane.b32.xlu0 %v3446, 32
      %v3448 = vpop.permute.xlu0 %3447
      %3450 = vst.msk [vmem:[#allocation4 + $0x28] sm:$0xe] %vm3361, %v3448
      %v3451 = vld [vmem:[#allocation3 + $0x3c] sm:$0xf]
      %v3453 = vshrl.u32 %v3451, 16
      %v3455 = vrot.slane %v3453, 7
      %v3456 = vshll.u32 %v3451, 16
      %v3458 = vor.u32 %v3455, %v3456
      %3459 = vrot.lane.b32.xlu0 %v3458, 64
      %v3460 = vpop.permute.xlu0 %3459
      %3462 = vst.msk [vmem:[#allocation4 + $0x28] sm:$0xe] %vm3382, %v3460
      %v3463 = vld [vmem:[#allocation3 + $0x40] sm:$0xf]
      %v3465 = vshrl.u32 %v3463, 16
      %v3467 = vrot.slane %v3465, 7
      %v3468 = vshll.u32 %v3463, 16
      %v3470 = vor.u32 %v3467, %v3468
      %3471 = vrot.lane.b32.xlu0 %v3470, 96
      %v3472 = vpop.permute.xlu0 %3471
      %3474 = vst.msk [vmem:[#allocation4 + $0x28] sm:$0xe] %vm3403, %v3472
      %v3475 = vld [vmem:[#allocation3 + $0x40] sm:$0x8]
      %v3476 = vld [vmem:[#allocation3 + $0x44] sm:$0x7]
      %v3478 = vshrl.u32 %v3475, 16
      %v3480 = vrot.slane %v3478, 6
      %v3481 = vrot.slane %v3480, 4
      %v3483 = vshrl.u32 %v3476, 16
      %v3485 = vrot.slane %v3483, 6
      %v3486 = vshll.u32 %v3476, 16
      %v3488 = vrot.slane %v3486, 7
      %v3489 = vor.u32 %v3485, %v3488
      %v3490 = vsel %vm2714, %v3481, %v3489
      %3492 = vst.msk [vmem:[#allocation4 + $0x2c] sm:$0xe] %vm3354, %v3490
      %v3493 = vld [vmem:[#allocation3 + $0x44] sm:$0x8]
      %v3494 = vld [vmem:[#allocation3 + $0x48] sm:$0x7]
      %v3496 = vshrl.u32 %v3493, 16
      %v3498 = vrot.slane %v3496, 6
      %v3499 = vrot.slane %v3498, 4
      %v3501 = vshrl.u32 %v3494, 16
      %v3503 = vrot.slane %v3501, 6
      %v3504 = vshll.u32 %v3494, 16
      %v3506 = vrot.slane %v3504, 7
      %v3507 = vor.u32 %v3503, %v3506
      %v3508 = vsel %vm2714, %v3499, %v3507
      %3509 = vrot.lane.b32.xlu0 %v3508, 32
      %v3510 = vpop.permute.xlu0 %3509
      %3512 = vst.msk [vmem:[#allocation4 + $0x2c] sm:$0xe] %vm3361, %v3510
      %v3513 = vld [vmem:[#allocation3 + $0x44] sm:$0x7]
      %v3515 = vrot.slane %v3513, 7
      %3516 = vrot.lane.b32.xlu0 %v3515, 64
      %v3517 = vpop.permute.xlu0 %3516
      %3519 = vst.msk [vmem:[#allocation4 + $0x2c] sm:$0xe] %vm3382, %v3517
      %v3520 = vld [vmem:[#allocation3 + $0x48] sm:$0x7]
      %v3522 = vrot.slane %v3520, 7
      %3523 = vrot.lane.b32.xlu0 %v3522, 96
      %v3524 = vpop.permute.xlu0 %3523
      %3526 = vst.msk [vmem:[#allocation4 + $0x2c] sm:$0xe] %vm3403, %v3524
      %v3527 = vld [vmem:[#allocation3 + $0x3c] sm:$0x7]
      %3528 = vst.msk [vmem:[#allocation4 + $0x30] sm:$0x7] %vm2560, %v3527
      %v3529 = vld [vmem:[#allocation3 + $0x40] sm:$0x7]
      %3531 = vrot.lane.b32.xlu0 %v3529, 32
      %v3532 = vpop.permute.xlu0 %3531
      %3534 = vst.msk [vmem:[#allocation4 + $0x30] sm:$0x7] %vm2567, %v3532
      %v3535 = vld [vmem:[#allocation3 + $0x3c] sm:$0xf]
      %v3537 = vshrl.u32 %v3535, 16
      %v3539 = vrot.slane %v3537, 4
      %v3540 = vshll.u32 %v3535, 16
      %v3542 = vrot.slane %v3540, 5
      %v3543 = vor.u32 %v3539, %v3542
      %v3544 = vrot.slane %v3543, 4
      %3545 = vrot.lane.b32.xlu0 %v3544, 64
      %v3546 = vpop.permute.xlu0 %3545
      %3548 = vst.msk [vmem:[#allocation4 + $0x30] sm:$0x7] %vm2582, %v3546
      %v3549 = vld [vmem:[#allocation3 + $0x40] sm:$0xf]
      %v3551 = vshrl.u32 %v3549, 16
      %v3553 = vrot.slane %v3551, 4
      %v3554 = vshll.u32 %v3549, 16
      %v3556 = vrot.slane %v3554, 5
      %v3557 = vor.u32 %v3553, %v3556
      %v3558 = vrot.slane %v3557, 4
      %3559 = vrot.lane.b32.xlu0 %v3558, 96
      %v3560 = vpop.permute.xlu0 %3559
      %3562 = vst.msk [vmem:[#allocation4 + $0x30] sm:$0x7] %vm2597, %v3560
      %v3563 = vld [vmem:[#allocation3 + $0x40] sm:$0x8]
      %v3564 = vld [vmem:[#allocation3 + $0x44] sm:$0x7]
      %v3566 = vshrl.u32 %v3563, 16
      %v3568 = vrot.slane %v3566, 7
      %v3569 = vrot.slane %v3568, 4
      %v3571 = vshrl.u32 %v3564, 16
      %v3573 = vrot.slane %v3571, 7
      %v3574 = vshll.u32 %v3564, 16
      %v3576 = vor.u32 %v3573, %v3574
      %v3577 = vsel %vm2602, %v3569, %v3576
      %3579 = vst.msk [vmem:[#allocation4 + $0x34] sm:$0x7] %vm2560, %v3577
      %v3580 = vld [vmem:[#allocation3 + $0x44] sm:$0x8]
      %v3581 = vld [vmem:[#allocation3 + $0x48] sm:$0x7]
      %v3583 = vshrl.u32 %v3580, 16
      %v3585 = vrot.slane %v3583, 7
      %v3586 = vrot.slane %v3585, 4
      %v3588 = vshrl.u32 %v3581, 16
      %v3590 = vrot.slane %v3588, 7
      %v3591 = vshll.u32 %v3581, 16
      %v3593 = vor.u32 %v3590, %v3591
      %v3594 = vsel %vm2602, %v3586, %v3593
      %3595 = vrot.lane.b32.xlu0 %v3594, 32
      %v3596 = vpop.permute.xlu0 %3595
      %3598 = vst.msk [vmem:[#allocation4 + $0x34] sm:$0x7] %vm2567, %v3596
      %v3599 = vld [vmem:[#allocation3 + $0x44] sm:$0x7]
      %3601 = vrot.lane.b32.xlu0 %v3599, 64
      %v3602 = vpop.permute.xlu0 %3601
      %3604 = vst.msk [vmem:[#allocation4 + $0x34] sm:$0x7] %vm2582, %v3602
      %v3605 = vld [vmem:[#allocation3 + $0x48] sm:$0x7]
      %3607 = vrot.lane.b32.xlu0 %v3605, 96
      %v3608 = vpop.permute.xlu0 %3607
      %3610 = vst.msk [vmem:[#allocation4 + $0x34] sm:$0x7] %vm2597, %v3608
      %v3611 = vld [vmem:[#allocation3 + $0x48] sm:$0x8]
      %v3612 = vld [vmem:[#allocation3 + $0x4c] sm:$0x3]
      %v3615 = vrot.slane %v3611, 7
      %v3616 = vrot.slane %v3615, 4
      %v3617 = vrot.slane %v3612, 7
      %v3618 = vsel %vm2654, %v3616, %v3617
      %3620 = vst.msk [vmem:[#allocation4 + $0x38] sm:$0x7] %vm2560, %v3618
      %v3621 = vld [vmem:[#allocation3 + $0x4c] sm:$0x8]
      %v3622 = vld [vmem:[#allocation3 + $0x50] sm:$0x3]
      %v3625 = vrot.slane %v3621, 7
      %v3626 = vrot.slane %v3625, 4
      %v3627 = vrot.slane %v3622, 7
      %v3628 = vsel %vm2654, %v3626, %v3627
      %3629 = vrot.lane.b32.xlu0 %v3628, 32
      %v3630 = vpop.permute.xlu0 %3629
      %3632 = vst.msk [vmem:[#allocation4 + $0x38] sm:$0x7] %vm2567, %v3630
      %v3633 = vld [vmem:[#allocation3 + $0x48] sm:$0x8]
      %v3634 = vld [vmem:[#allocation3 + $0x4c] sm:$0x7]
      %v3636 = vshrl.u32 %v3633, 16
      %v3638 = vrot.slane %v3636, 7
      %v3639 = vrot.slane %v3638, 4
      %v3641 = vshrl.u32 %v3634, 16
      %v3643 = vrot.slane %v3641, 7
      %v3644 = vshll.u32 %v3634, 16
      %v3646 = vor.u32 %v3643, %v3644
      %v3647 = vsel %vm2602, %v3639, %v3646
      %3648 = vrot.lane.b32.xlu0 %v3647, 64
      %v3649 = vpop.permute.xlu0 %3648
      %3651 = vst.msk [vmem:[#allocation4 + $0x38] sm:$0x7] %vm2582, %v3649
      %v3652 = vld [vmem:[#allocation3 + $0x4c] sm:$0x8]
      %v3653 = vld [vmem:[#allocation3 + $0x50] sm:$0x7]
      %v3655 = vshrl.u32 %v3652, 16
      %v3657 = vrot.slane %v3655, 7
      %v3658 = vrot.slane %v3657, 4
      %v3660 = vshrl.u32 %v3653, 16
      %v3662 = vrot.slane %v3660, 7
      %v3663 = vshll.u32 %v3653, 16
      %v3665 = vor.u32 %v3662, %v3663
      %v3666 = vsel %vm2602, %v3658, %v3665
      %3667 = vrot.lane.b32.xlu0 %v3666, 96
      %v3668 = vpop.permute.xlu0 %3667
      %3670 = vst.msk [vmem:[#allocation4 + $0x38] sm:$0x7] %vm2597, %v3668
      %v3671 = vld [vmem:[#allocation3 + $0x50] sm:$0xc]
      %v3672 = vld [vmem:[#allocation3 + $0x54] sm:$0x3]
      %v3674 = vshrl.u32 %v3671, 16
      %v3676 = vrot.slane %v3674, 6
      %v3677 = vshll.u32 %v3671, 16
      %v3679 = vrot.slane %v3677, 7
      %v3680 = vor.u32 %v3676, %v3679
      %v3681 = vrot.slane %v3680, 4
      %v3683 = vshrl.u32 %v3672, 16
      %v3685 = vrot.slane %v3683, 6
      %v3686 = vshll.u32 %v3672, 16
      %v3688 = vrot.slane %v3686, 7
      %v3689 = vor.u32 %v3685, %v3688
      %v3690 = vsel %vm2714, %v3681, %v3689
      %3692 = vst.msk [vmem:[#allocation4 + $0x3c] sm:$0x7] %vm2560, %v3690
      %v3693 = vld [vmem:[#allocation3 + $0x54] sm:$0xc]
      %v3694 = vld [vmem:[#allocation3 + $0x58] sm:$0x3]
      %v3696 = vshrl.u32 %v3693, 16
      %v3698 = vrot.slane %v3696, 6
      %v3699 = vshll.u32 %v3693, 16
      %v3701 = vrot.slane %v3699, 7
      %v3702 = vor.u32 %v3698, %v3701
      %v3703 = vrot.slane %v3702, 4
      %v3705 = vshrl.u32 %v3694, 16
      %v3707 = vrot.slane %v3705, 6
      %v3708 = vshll.u32 %v3694, 16
      %v3710 = vrot.slane %v3708, 7
      %v3711 = vor.u32 %v3707, %v3710
      %v3712 = vsel %vm2714, %v3703, %v3711
      %3713 = vrot.lane.b32.xlu0 %v3712, 32
      %v3714 = vpop.permute.xlu0 %3713
      %3716 = vst.msk [vmem:[#allocation4 + $0x3c] sm:$0x7] %vm2567, %v3714
      %v3717 = vld [vmem:[#allocation3 + $0x50] sm:$0x8]
      %v3718 = vld [vmem:[#allocation3 + $0x54] sm:$0x3]
      %v3721 = vrot.slane %v3717, 7
      %v3722 = vrot.slane %v3721, 4
      %v3723 = vrot.slane %v3718, 7
      %v3724 = vsel %vm2654, %v3722, %v3723
      %3725 = vrot.lane.b32.xlu0 %v3724, 64
      %v3726 = vpop.permute.xlu0 %3725
      %3728 = vst.msk [vmem:[#allocation4 + $0x3c] sm:$0x7] %vm2582, %v3726
      %v3729 = vld [vmem:[#allocation3 + $0x54] sm:$0x8]
      %v3730 = vld [vmem:[#allocation3 + $0x58] sm:$0x3]
      %v3733 = vrot.slane %v3729, 7
      %v3734 = vrot.slane %v3733, 4
      %v3735 = vrot.slane %v3730, 7
      %v3736 = vsel %vm2654, %v3734, %v3735
      %3737 = vrot.lane.b32.xlu0 %v3736, 96
      %v3738 = vpop.permute.xlu0 %3737
      %3740 = vst.msk [vmem:[#allocation4 + $0x3c] sm:$0x7] %vm2597, %v3738
      %v3741 = vld [vmem:[#allocation3 + $0x48] sm:$0x8]
      %v3742 = vld [vmem:[#allocation3 + $0x4c] sm:$0x3]
      %3743 = vst.msk [vmem:[#allocation4 + $0x30] sm:$0x8] %vm2785, %v3741
      %3744 = vst.msk [vmem:[#allocation4 + $0x40] sm:$0x3] %vm2787, %v3742
      %v3745 = vld [vmem:[#allocation3 + $0x4c] sm:$0x8]
      %v3746 = vld [vmem:[#allocation3 + $0x50] sm:$0x3]
      %3749 = vrot.lane.b32.xlu0 %v3745, 32
      %v3750 = vpop.permute.xlu0 %3749
      %3751 = vrot.lane.b32.xlu0 %v3746, 32
      %v3752 = vpop.permute.xlu0 %3751
      %3755 = vst.msk [vmem:[#allocation4 + $0x30] sm:$0x8] %vm2799, %v3750
      %3756 = vst.msk [vmem:[#allocation4 + $0x40] sm:$0x3] %vm2801, %v3752
      %v3757 = vld [vmem:[#allocation3 + $0x48] sm:$0x8]
      %v3758 = vld [vmem:[#allocation3 + $0x4c] sm:$0x7]
      %v3760 = vshrl.u32 %v3757, 16
      %v3762 = vrot.slane %v3760, 4
      %v3763 = vrot.slane %v3762, 4
      %v3765 = vshll.u32 %v3758, 16
      %v3767 = vrot.slane %v3765, 5
      %v3768 = vsel %vm2806, %v3763, %v3767
      %v3769 = vshrl.u32 %v3758, 16
      %v3771 = vrot.slane %v3769, 4
      %v3772 = vor.u32 %v3771, %v3767
      %v3773 = vrot.slane %v3772, 4
      %3774 = vrot.lane.b32.xlu0 %v3768, 64
      %v3775 = vpop.permute.xlu0 %3774
      %3776 = vrot.lane.b32.xlu0 %v3773, 64
      %v3777 = vpop.permute.xlu0 %3776
      %3780 = vst.msk [vmem:[#allocation4 + $0x30] sm:$0x8] %vm2828, %v3775
      %3781 = vst.msk [vmem:[#allocation4 + $0x40] sm:$0x3] %vm2830, %v3777
      %v3782 = vld [vmem:[#allocation3 + $0x4c] sm:$0x8]
      %v3783 = vld [vmem:[#allocation3 + $0x50] sm:$0x7]
      %v3785 = vshrl.u32 %v3782, 16
      %v3787 = vrot.slane %v3785, 4
      %v3788 = vrot.slane %v3787, 4
      %v3790 = vshll.u32 %v3783, 16
      %v3792 = vrot.slane %v3790, 5
      %v3793 = vsel %vm2806, %v3788, %v3792
      %v3794 = vshrl.u32 %v3783, 16
      %v3796 = vrot.slane %v3794, 4
      %v3797 = vor.u32 %v3796, %v3792
      %v3798 = vrot.slane %v3797, 4
      %3799 = vrot.lane.b32.xlu0 %v3793, 96
      %v3800 = vpop.permute.xlu0 %3799
      %3801 = vrot.lane.b32.xlu0 %v3798, 96
      %v3802 = vpop.permute.xlu0 %3801
      %3805 = vst.msk [vmem:[#allocation4 + $0x30] sm:$0x8] %vm2855, %v3800
      %3806 = vst.msk [vmem:[#allocation4 + $0x40] sm:$0x3] %vm2857, %v3802
      %v3807 = vld [vmem:[#allocation3 + $0x50] sm:$0xc]
      %v3808 = vld [vmem:[#allocation3 + $0x54] sm:$0x3]
      %v3810 = vshrl.u32 %v3807, 16
      %v3812 = vrot.slane %v3810, 7
      %v3813 = vshll.u32 %v3807, 16
      %v3815 = vor.u32 %v3812, %v3813
      %v3816 = vrot.slane %v3812, 4
      %v3818 = vshrl.u32 %v3808, 16
      %v3820 = vrot.slane %v3818, 7
      %v3821 = vshll.u32 %v3808, 16
      %v3823 = vor.u32 %v3820, %v3821
      %v3824 = vsel %vm2602, %v3816, %v3823
      %3827 = vst.msk [vmem:[#allocation4 + $0x34] sm:$0x8] %vm2785, %v3815
      %3828 = vst.msk [vmem:[#allocation4 + $0x44] sm:$0x3] %vm2787, %v3824
      %v3829 = vld [vmem:[#allocation3 + $0x54] sm:$0xc]
      %v3830 = vld [vmem:[#allocation3 + $0x58] sm:$0x3]
      %v3832 = vshrl.u32 %v3829, 16
      %v3834 = vrot.slane %v3832, 7
      %v3835 = vshll.u32 %v3829, 16
      %v3837 = vor.u32 %v3834, %v3835
      %v3838 = vrot.slane %v3834, 4
      %v3840 = vshrl.u32 %v3830, 16
      %v3842 = vrot.slane %v3840, 7
      %v3843 = vshll.u32 %v3830, 16
      %v3845 = vor.u32 %v3842, %v3843
      %v3846 = vsel %vm2602, %v3838, %v3845
      %3847 = vrot.lane.b32.xlu0 %v3837, 32
      %v3848 = vpop.permute.xlu0 %3847
      %3849 = vrot.lane.b32.xlu0 %v3846, 32
      %v3850 = vpop.permute.xlu0 %3849
      %3853 = vst.msk [vmem:[#allocation4 + $0x34] sm:$0x8] %vm2799, %v3848
      %3854 = vst.msk [vmem:[#allocation4 + $0x44] sm:$0x3] %vm2801, %v3850
      %v3855 = vld [vmem:[#allocation3 + $0x50] sm:$0x8]
      %v3856 = vld [vmem:[#allocation3 + $0x54] sm:$0x3]
      %3859 = vrot.lane.b32.xlu0 %v3855, 64
      %v3860 = vpop.permute.xlu0 %3859
      %3861 = vrot.lane.b32.xlu0 %v3856, 64
      %v3862 = vpop.permute.xlu0 %3861
      %3865 = vst.msk [vmem:[#allocation4 + $0x34] sm:$0x8] %vm2828, %v3860
      %3866 = vst.msk [vmem:[#allocation4 + $0x44] sm:$0x3] %vm2830, %v3862
      %v3867 = vld [vmem:[#allocation3 + $0x54] sm:$0x8]
      %v3868 = vld [vmem:[#allocation3 + $0x58] sm:$0x3]
      %3871 = vrot.lane.b32.xlu0 %v3867, 96
      %v3872 = vpop.permute.xlu0 %3871
      %3873 = vrot.lane.b32.xlu0 %v3868, 96
      %v3874 = vpop.permute.xlu0 %3873
      %3877 = vst.msk [vmem:[#allocation4 + $0x34] sm:$0x8] %vm2855, %v3872
      %3878 = vst.msk [vmem:[#allocation4 + $0x44] sm:$0x3] %vm2857, %v3874
      %v3879 = vld [vmem:[#allocation3 + $0x58] sm:$0xc]
      %v3880 = vld [vmem:[#allocation3 + $0x5c] sm:$0x1]
      %v3883 = vrot.slane %v3879, 7
      %v3884 = vrot.slane %v3883, 4
      %v3885 = vrot.slane %v3880, 7
      %v3886 = vsel %vm2654, %v3884, %v3885
      %3889 = vst.msk [vmem:[#allocation4 + $0x38] sm:$0x8] %vm2785, %v3883
      %3890 = vst.msk [vmem:[#allocation4 + $0x48] sm:$0x3] %vm2787, %v3886
      %v3891 = vld [vmem:[#allocation3 + $0x5c] sm:$0xc]
      %v3892 = vld [vmem:[#allocation3 + $0x60] sm:$0x1]
      %v3895 = vrot.slane %v3891, 7
      %v3896 = vrot.slane %v3895, 4
      %v3897 = vrot.slane %v3892, 7
      %v3898 = vsel %vm2654, %v3896, %v3897
      %3899 = vrot.lane.b32.xlu0 %v3895, 32
      %v3900 = vpop.permute.xlu0 %3899
      %3901 = vrot.lane.b32.xlu0 %v3898, 32
      %v3902 = vpop.permute.xlu0 %3901
      %3905 = vst.msk [vmem:[#allocation4 + $0x38] sm:$0x8] %vm2799, %v3900
      %3906 = vst.msk [vmem:[#allocation4 + $0x48] sm:$0x3] %vm2801, %v3902
      %v3907 = vld [vmem:[#allocation3 + $0x58] sm:$0xc]
      %v3908 = vld [vmem:[#allocation3 + $0x5c] sm:$0x3]
      %v3910 = vshrl.u32 %v3907, 16
      %v3912 = vrot.slane %v3910, 7
      %v3913 = vshll.u32 %v3907, 16
      %v3915 = vor.u32 %v3912, %v3913
      %v3916 = vrot.slane %v3912, 4
      %v3918 = vshrl.u32 %v3908, 16
      %v3920 = vrot.slane %v3918, 7
      %v3921 = vshll.u32 %v3908, 16
      %v3923 = vor.u32 %v3920, %v3921
      %v3924 = vsel %vm2602, %v3916, %v3923
      %3925 = vrot.lane.b32.xlu0 %v3915, 64
      %v3926 = vpop.permute.xlu0 %3925
      %3927 = vrot.lane.b32.xlu0 %v3924, 64
      %v3928 = vpop.permute.xlu0 %3927
      %3931 = vst.msk [vmem:[#allocation4 + $0x38] sm:$0x8] %vm2828, %v3926
      %3932 = vst.msk [vmem:[#allocation4 + $0x48] sm:$0x3] %vm2830, %v3928
      %v3933 = vld [vmem:[#allocation3 + $0x5c] sm:$0xc]
      %v3934 = vld [vmem:[#allocation3 + $0x60] sm:$0x3]
      %v3936 = vshrl.u32 %v3933, 16
      %v3938 = vrot.slane %v3936, 7
      %v3939 = vshll.u32 %v3933, 16
      %v3941 = vor.u32 %v3938, %v3939
      %v3942 = vrot.slane %v3938, 4
      %v3944 = vshrl.u32 %v3934, 16
      %v3946 = vrot.slane %v3944, 7
      %v3947 = vshll.u32 %v3934, 16
      %v3949 = vor.u32 %v3946, %v3947
      %v3950 = vsel %vm2602, %v3942, %v3949
      %3951 = vrot.lane.b32.xlu0 %v3941, 96
      %v3952 = vpop.permute.xlu0 %3951
      %3953 = vrot.lane.b32.xlu0 %v3950, 96
      %v3954 = vpop.permute.xlu0 %3953
      %3957 = vst.msk [vmem:[#allocation4 + $0x38] sm:$0x8] %vm2855, %v3952
      %3958 = vst.msk [vmem:[#allocation4 + $0x48] sm:$0x3] %vm2857, %v3954
      %v3959 = vld [vmem:[#allocation3 + $0x60] sm:$0xe]
      %v3960 = vld [vmem:[#allocation3 + $0x64] sm:$0x1]
      %v3962 = vshrl.u32 %v3959, 16
      %v3964 = vrot.slane %v3962, 6
      %v3965 = vshll.u32 %v3959, 16
      %v3967 = vrot.slane %v3965, 7
      %v3968 = vor.u32 %v3964, %v3967
      %v3969 = vrot.slane %v3968, 4
      %v3971 = vshll.u32 %v3960, 16
      %v3973 = vrot.slane %v3971, 7
      %v3974 = vsel %vm2714, %v3969, %v3973
      %3977 = vst.msk [vmem:[#allocation4 + $0x3c] sm:$0x8] %vm2785, %v3968
      %3978 = vst.msk [vmem:[#allocation4 + $0x4c] sm:$0x3] %vm2787, %v3974
      %v3979 = vld [vmem:[#allocation3 + $0x64] sm:$0xe]
      %v3980 = vld [vmem:[#allocation3 + $0x68] sm:$0x1]
      %v3982 = vshrl.u32 %v3979, 16
      %v3984 = vrot.slane %v3982, 6
      %v3985 = vshll.u32 %v3979, 16
      %v3987 = vrot.slane %v3985, 7
      %v3988 = vor.u32 %v3984, %v3987
      %v3989 = vrot.slane %v3988, 4
      %v3991 = vshll.u32 %v3980, 16
      %v3993 = vrot.slane %v3991, 7
      %v3994 = vsel %vm2714, %v3989, %v3993
      %3995 = vrot.lane.b32.xlu0 %v3988, 32
      %v3996 = vpop.permute.xlu0 %3995
      %3997 = vrot.lane.b32.xlu0 %v3994, 32
      %v3998 = vpop.permute.xlu0 %3997
      %4001 = vst.msk [vmem:[#allocation4 + $0x3c] sm:$0x8] %vm2799, %v3996
      %4002 = vst.msk [vmem:[#allocation4 + $0x4c] sm:$0x3] %vm2801, %v3998
      %v4003 = vld [vmem:[#allocation3 + $0x60] sm:$0xc]
      %v4004 = vld [vmem:[#allocation3 + $0x64] sm:$0x1]
      %v4007 = vrot.slane %v4003, 7
      %v4008 = vrot.slane %v4007, 4
      %v4009 = vrot.slane %v4004, 7
      %v4010 = vsel %vm2654, %v4008, %v4009
      %4011 = vrot.lane.b32.xlu0 %v4007, 64
      %v4012 = vpop.permute.xlu0 %4011
      %4013 = vrot.lane.b32.xlu0 %v4010, 64
      %v4014 = vpop.permute.xlu0 %4013
      %4017 = vst.msk [vmem:[#allocation4 + $0x3c] sm:$0x8] %vm2828, %v4012
      %4018 = vst.msk [vmem:[#allocation4 + $0x4c] sm:$0x3] %vm2830, %v4014
      %v4019 = vld [vmem:[#allocation3 + $0x64] sm:$0xc]
      %v4020 = vld [vmem:[#allocation3 + $0x68] sm:$0x1]
      %v4023 = vrot.slane %v4019, 7
      %v4024 = vrot.slane %v4023, 4
      %v4025 = vrot.slane %v4020, 7
      %v4026 = vsel %vm2654, %v4024, %v4025
      %4027 = vrot.lane.b32.xlu0 %v4023, 96
      %v4028 = vpop.permute.xlu0 %4027
      %4029 = vrot.lane.b32.xlu0 %v4026, 96
      %v4030 = vpop.permute.xlu0 %4029
      %4033 = vst.msk [vmem:[#allocation4 + $0x3c] sm:$0x8] %vm2855, %v4028
      %4034 = vst.msk [vmem:[#allocation4 + $0x4c] sm:$0x3] %vm2857, %v4030
      %v4035 = vld [vmem:[%s3] sm:$0xf]
      %v4036 = vld [vmem:[%s3 + $0x4] sm:$0xf]
      %v4037 = vld [vmem:[%s3 + $0x8] sm:$0xf]
      %v4038 = vld [vmem:[%s3 + $0xc] sm:$0xf]
      %v4039 = vld [vmem:[%s3 + $0x10] sm:$0xf]
      %v4040 = vld [vmem:[%s3 + $0x14] sm:$0xf]
      %v4041 = vld [vmem:[%s3 + $0x18] sm:$0xf]
      %v4042 = vld [vmem:[%s3 + $0x1c] sm:$0xf]
      %v4043 = vld [vmem:[%s3 + $0x20] sm:$0xf]
      %v4044 = vld [vmem:[%s3 + $0x24] sm:$0xf]
      %v4045 = vld [vmem:[%s3 + $0x28] sm:$0xf]
      %v4046 = vld [vmem:[%s3 + $0x2c] sm:$0xf]
      %v4047 = vld [vmem:[%s3 + $0x30] sm:$0xf]
      %v4048 = vld [vmem:[%s3 + $0x34] sm:$0xf]
      %v4049 = vld [vmem:[%s3 + $0x38] sm:$0xf]
      %v4050 = vld [vmem:[%s3 + $0x3c] sm:$0xf]
      %v4051 = vld [vmem:[%s3 + $0x40] sm:$0xf]
      %v4052 = vld [vmem:[%s3 + $0x44] sm:$0xf]
      %v4053 = vld [vmem:[%s3 + $0x48] sm:$0xf]
      %v4054 = vld [vmem:[%s3 + $0x4c] sm:$0xf]
      %v4055 = vld [vmem:[%s3 + $0x50] sm:$0xf]
      %v4056 = vld [vmem:[%s3 + $0x54] sm:$0xf]
      %v4057 = vld [vmem:[%s3 + $0x58] sm:$0xf]
      %v4058 = vld [vmem:[%s3 + $0x5c] sm:$0xf]
      %v4059 = vld [vmem:[%s3 + $0x60] sm:$0xf]
      %v4060 = vld [vmem:[%s3 + $0x64] sm:$0xf]
      %v4061 = vld [vmem:[%s3 + $0x68] sm:$0xf]
      %v4062 = vld [vmem:[%s3 + $0x6c] sm:$0xf]
      %v4063 = vld [vmem:[%s3 + $0x70] sm:$0xf]
      %v4064 = vld [vmem:[%s3 + $0x74] sm:$0xf]
      %v4065 = vld [vmem:[%s3 + $0x78] sm:$0xf]
      %v4066 = vld [vmem:[%s3 + $0x7c] sm:$0xf]
      %v4067 = vld [vmem:[%s3 + $0x80] sm:$0xf]
      %v4068 = vld [vmem:[%s3 + $0x84] sm:$0xf]
      %v4069 = vld [vmem:[%s3 + $0x88] sm:$0xf]
      %v4070 = vld [vmem:[%s3 + $0x8c] sm:$0xf]
      %v4071 = vld [vmem:[%s3 + $0x90] sm:$0xf]
      %v4072 = vld [vmem:[%s3 + $0x94] sm:$0xf]
      %v4073 = vld [vmem:[%s3 + $0x98] sm:$0xf]
      %v4074 = vld [vmem:[%s3 + $0x9c] sm:$0xf]
      %v4075 = vld [vmem:[%s3 + $0xa0] sm:$0xf]
      %v4076 = vld [vmem:[%s3 + $0xa4] sm:$0xf]
      %v4077 = vld [vmem:[%s3 + $0xa8] sm:$0xf]
      %v4078 = vld [vmem:[%s3 + $0xac] sm:$0xf]
      %v4079 = vld [vmem:[%s3 + $0xb0] sm:$0xf]
      %v4080 = vld [vmem:[%s3 + $0xb4] sm:$0xf]
      %v4081 = vld [vmem:[%s3 + $0xb8] sm:$0xf]
      %v4082 = vld [vmem:[%s3 + $0xbc] sm:$0xf]
      %v4083 = vld [vmem:[%s3 + $0xc0] sm:$0xf]
      %v4084 = vld [vmem:[%s3 + $0xc4] sm:$0xf]
      %v4085 = vld [vmem:[%s3 + $0xc8] sm:$0xf]
      %v4086 = vld [vmem:[%s3 + $0xcc] sm:$0xf]
      %v4087 = vld [vmem:[%s3 + $0xd0] sm:$0xf]
      %v4088 = vld [vmem:[%s3 + $0xd4] sm:$0xf]
      %v4089 = vld [vmem:[%s3 + $0xd8] sm:$0xf]
      %v4090 = vld [vmem:[%s3 + $0xdc] sm:$0xf]
      %v4091 = vld [vmem:[%s3 + $0xe0] sm:$0xf]
      %v4092 = vld [vmem:[%s3 + $0xe4] sm:$0xf]
      %v4093 = vld [vmem:[%s3 + $0xe8] sm:$0xf]
      %v4094 = vld [vmem:[%s3 + $0xec] sm:$0xf]
      %v4095 = vld [vmem:[%s3 + $0xf0] sm:$0xf]
      %v4096 = vld [vmem:[%s3 + $0xf4] sm:$0xf]
      %v4097 = vld [vmem:[%s3 + $0xf8] sm:$0xf]
      %v4098 = vld [vmem:[%s3 + $0xfc] sm:$0xf]
      %v4099 = vld [vmem:[%s4] sm:$0x1]
      %v4100 = vld [vmem:[#allocation4] sm:$0xff]
      %v4101 = vld [vmem:[#allocation4 + $0x8] sm:$0xff]
      %v4102 = vld [vmem:[#allocation4 + $0x10] sm:$0xff]
      %v4103 = vld [vmem:[#allocation4 + $0x18] sm:$0xff]
      %v4104 = vld [vmem:[#allocation4 + $0x20] sm:$0xff]
      %v4105 = vld [vmem:[#allocation4 + $0x28] sm:$0xff]
      %v4106 = vld [vmem:[#allocation4 + $0x30] sm:$0xff]
      %v4107 = vld [vmem:[#allocation4 + $0x38] sm:$0xff]
      %v4108 = vld [vmem:[#allocation4 + $0x40] sm:$0x33]
      %v4109 = vld [vmem:[#allocation4 + $0x48] sm:$0x33]
      %v4111 = vlaneseq
      %v4112 = vshrl.u32 %v4111, 7
      %v4113 = vsub.s32 0, %v4112
      %v4114 = vrot.slane %v4099, %v4113
      %v4126 = vunpack.c.l.b16 %v4100
      %v4127 = vunpack.c.h.b16 %v4100
      %v4128 = vunpack.c.l.b16 %v4101
      %v4129 = vunpack.c.h.b16 %v4101
      %v4130 = vunpack.c.l.b16 %v4102
      %v4131 = vunpack.c.h.b16 %v4102
      %v4132 = vunpack.c.l.b16 %v4103
      %v4133 = vunpack.c.h.b16 %v4103
      %v4134 = vunpack.c.l.b16 %v4104
      %v4135 = vunpack.c.h.b16 %v4104
      %v4136 = vunpack.c.l.b16 %v4105
      %v4137 = vunpack.c.h.b16 %v4105
      %v4138 = vunpack.c.l.b16 %v4106
      %v4139 = vunpack.c.h.b16 %v4106
      %v4140 = vunpack.c.l.b16 %v4107
      %v4141 = vunpack.c.h.b16 %v4107
      %v4142 = vunpack.c.l.b16 %v4108
      %v4143 = vunpack.c.h.b16 %v4108
      %v4144 = vunpack.c.l.b16 %v4109
      %v4145 = vunpack.c.h.b16 %v4109
      %v4146 = vpack.c.b16 %v4130, %v4126
      %v4147 = vpack.c.b16 %v4131, %v4127
      %v4148 = vpack.c.b16 %v4132, %v4128
      %v4149 = vpack.c.b16 %v4133, %v4129
      %v4150 = vpack.c.b16 %v4138, %v4134
      %v4151 = vpack.c.b16 %v4139, %v4135
      %v4152 = vpack.c.b16 %v4140, %v4136
      %v4153 = vpack.c.b16 %v4141, %v4137
      %v4154 = vpack.c.b16 %v4142, %v4142
      %v4155 = vpack.c.b16 %v4143, %v4143
      %v4156 = vpack.c.b16 %v4144, %v4144
      %v4157 = vpack.c.b16 %v4145, %v4145
      %v4234 = vunpack.c.l.b16 %v4035
      %v4235 = vunpack.c.l.b16 %v4036
      %v4236 = vunpack.c.l.b16 %v4037
      %v4237 = vunpack.c.l.b16 %v4038
      %v4238 = vunpack.c.l.b16 %v4039
      %v4239 = vunpack.c.l.b16 %v4040
      %v4240 = vunpack.c.l.b16 %v4041
      %v4241 = vunpack.c.l.b16 %v4042
      %v4242 = vunpack.c.l.b16 %v4043
      %v4243 = vunpack.c.l.b16 %v4044
      %v4244 = vunpack.c.l.b16 %v4045
      %v4245 = vunpack.c.l.b16 %v4046
      %v4246 = vunpack.c.l.b16 %v4047
      %v4247 = vunpack.c.l.b16 %v4048
      %v4248 = vunpack.c.l.b16 %v4049
      %v4249 = vunpack.c.l.b16 %v4050
      %v4250 = vunpack.c.l.b16 %v4051
      %v4251 = vunpack.c.l.b16 %v4052
      %v4252 = vunpack.c.l.b16 %v4053
      %v4253 = vunpack.c.l.b16 %v4054
      %v4254 = vunpack.c.l.b16 %v4055
      %v4255 = vunpack.c.l.b16 %v4056
      %v4256 = vunpack.c.l.b16 %v4057
      %v4257 = vunpack.c.l.b16 %v4058
      %v4258 = vunpack.c.l.b16 %v4059
      %v4259 = vunpack.c.l.b16 %v4060
      %v4260 = vunpack.c.l.b16 %v4061
      %v4261 = vunpack.c.l.b16 %v4062
      %v4262 = vunpack.c.l.b16 %v4063
      %v4263 = vunpack.c.l.b16 %v4064
      %v4264 = vunpack.c.l.b16 %v4065
      %v4265 = vunpack.c.l.b16 %v4066
      %v4266 = vunpack.c.l.b16 %v4067
      %v4267 = vunpack.c.l.b16 %v4068
      %v4268 = vunpack.c.l.b16 %v4069
      %v4269 = vunpack.c.l.b16 %v4070
      %v4270 = vunpack.c.l.b16 %v4071
      %v4271 = vunpack.c.l.b16 %v4072
      %v4272 = vunpack.c.l.b16 %v4073
      %v4273 = vunpack.c.l.b16 %v4074
      %v4274 = vunpack.c.l.b16 %v4075
      %v4275 = vunpack.c.l.b16 %v4076
      %v4276 = vunpack.c.l.b16 %v4077
      %v4277 = vunpack.c.l.b16 %v4078
      %v4278 = vunpack.c.l.b16 %v4079
      %v4279 = vunpack.c.l.b16 %v4080
      %v4280 = vunpack.c.l.b16 %v4081
      %v4281 = vunpack.c.l.b16 %v4082
      %v4282 = vunpack.c.l.b16 %v4083
      %v4283 = vunpack.c.l.b16 %v4084
      %v4284 = vunpack.c.l.b16 %v4085
      %v4285 = vunpack.c.l.b16 %v4086
      %v4286 = vunpack.c.l.b16 %v4087
      %v4287 = vunpack.c.l.b16 %v4088
      %v4288 = vunpack.c.l.b16 %v4089
      %v4289 = vunpack.c.l.b16 %v4090
      %v4290 = vunpack.c.l.b16 %v4091
      %v4291 = vunpack.c.l.b16 %v4092
      %v4292 = vunpack.c.l.b16 %v4093
      %v4293 = vunpack.c.l.b16 %v4094
      %v4294 = vunpack.c.l.b16 %v4095
      %v4295 = vunpack.c.l.b16 %v4096
      %v4296 = vunpack.c.l.b16 %v4097
      %v4297 = vunpack.c.l.b16 %v4098
      %v4298 = vpack.c.b16 %v4235, %v4234
      %v4299 = vpack.c.b16 %v4237, %v4236
      %v4300 = vpack.c.b16 %v4239, %v4238
      %v4301 = vpack.c.b16 %v4241, %v4240
      %v4302 = vpack.c.b16 %v4243, %v4242
      %v4303 = vpack.c.b16 %v4245, %v4244
      %v4304 = vpack.c.b16 %v4247, %v4246
      %v4305 = vpack.c.b16 %v4249, %v4248
      %v4306 = vpack.c.b16 %v4251, %v4250
      %v4307 = vpack.c.b16 %v4253, %v4252
      %v4308 = vpack.c.b16 %v4255, %v4254
      %v4309 = vpack.c.b16 %v4257, %v4256
      %v4310 = vpack.c.b16 %v4259, %v4258
      %v4311 = vpack.c.b16 %v4261, %v4260
      %v4312 = vpack.c.b16 %v4263, %v4262
      %v4313 = vpack.c.b16 %v4265, %v4264
      %v4314 = vpack.c.b16 %v4267, %v4266
      %v4315 = vpack.c.b16 %v4269, %v4268
      %v4316 = vpack.c.b16 %v4271, %v4270
      %v4317 = vpack.c.b16 %v4273, %v4272
      %v4318 = vpack.c.b16 %v4275, %v4274
      %v4319 = vpack.c.b16 %v4277, %v4276
      %v4320 = vpack.c.b16 %v4279, %v4278
      %v4321 = vpack.c.b16 %v4281, %v4280
      %v4322 = vpack.c.b16 %v4283, %v4282
      %v4323 = vpack.c.b16 %v4285, %v4284
      %v4324 = vpack.c.b16 %v4287, %v4286
      %v4325 = vpack.c.b16 %v4289, %v4288
      %v4326 = vpack.c.b16 %v4291, %v4290
      %v4327 = vpack.c.b16 %v4293, %v4292
      %v4328 = vpack.c.b16 %v4295, %v4294
      %v4329 = vpack.c.b16 %v4297, %v4296
      %4362 = vmatprep.subr.bf16.mxu0 0
      %4363 = vmatpush1.bf16.msra.mxu0 %v4305
      %4364 = vmatprep.subr.bf16.mxu0 0
      %4365 = vmatpush1.bf16.msra.mxu0 %v4304
      %4366 = vmatprep.subr.bf16.mxu0 0
      %4367 = vmatpush1.bf16.msra.mxu0 %v4303
      %4368 = vmatprep.subr.bf16.mxu0 0
      %4369 = vmatpush1.bf16.msra.mxu0 %v4302
      %4370 = vmatprep.subr.bf16.mxu0 0
      %4371 = vmatpush1.bf16.msra.mxu0 %v4301
      %4372 = vmatprep.subr.bf16.mxu0 0
      %4373 = vmatpush1.bf16.msra.mxu0 %v4300
      %4374 = vmatprep.subr.bf16.mxu0 0
      %4375 = vmatpush1.bf16.msra.mxu0 %v4299
      %4376 = vmatprep.subr.bf16.mxu0 0
      %4377 = vmatpush1.bf16.msra.mxu0 %v4298
      %4378 = vmatprep.subr.bf16.mxu0 0
      %4379 = vmatpush2.bf16.msra.mxu0 %v4313
      %4380 = vmatprep.subr.bf16.mxu0 0
      %4381 = vmatpush2.bf16.msra.mxu0 %v4312
      %4382 = vmatprep.subr.bf16.mxu0 0
      %4383 = vmatpush2.bf16.msra.mxu0 %v4311
      %4384 = vmatprep.subr.bf16.mxu0 0
      %4385 = vmatpush2.bf16.msra.mxu0 %v4310
      %4386 = vmatprep.subr.bf16.mxu0 0
      %4387 = vmatpush2.bf16.msra.mxu0 %v4309
      %4388 = vmatprep.subr.bf16.mxu0 0
      %4389 = vmatpush2.bf16.msra.mxu0 %v4308
      %4390 = vmatprep.subr.bf16.mxu0 0
      %4391 = vmatpush2.bf16.msra.mxu0 %v4307
      %4392 = vmatprep.subr.bf16.mxu0 0
      %4393 = vmatpush2.bf16.msra.mxu0 %v4306
      %4394 = vmatprep.mubr.bf16.mxu0 %v4147
      %4395 = vmatmul.mubr.bf16.gmra.mxu0 %v4146
      %v4396 = vpop.f32.mrf.mxu0
      %v4397 = vadd.f32 %v4114, %v4396
      %v4398 = vpop.f32.mrf.mxu0
      %v4399 = vpop.f32.mrf.mxu0
      %v4400 = vadd.f32 %v4114, %v4399
      %v4401 = vpop.f32.mrf.mxu0
      %4402 = vmatprep.mubr.bf16.mxu0 %v4151
      %4403 = vmatmul.mubr.bf16.gmra.mxu0 %v4150
      %v4404 = vpop.f32.mrf.mxu0
      %v4405 = vadd.f32 %v4114, %v4404
      %v4406 = vpop.f32.mrf.mxu0
      %v4407 = vpop.f32.mrf.mxu0
      %v4408 = vadd.f32 %v4114, %v4407
      %v4409 = vpop.f32.mrf.mxu0
      %4410 = vmatprep.mubr.bf16.mxu0 %v4155
      %4411 = vmatmul.mubr.bf16.gmra.mxu0 %v4154
      %v4412 = vpop.f32.mrf.mxu0
      %v4413 = vadd.f32 %v4114, %v4412
      %v4414 = vpop.f32.mrf.mxu0
      %v4415 = vpop.f32.mrf.mxu0
      %v4416 = vpop.f32.mrf.mxu0
      %4417 = vdwg.mxu0
      %4418 = vmatprep.subr.bf16.mxu0 0
      %4419 = vmatpush1.bf16.msra.mxu0 %v4321
      %4420 = vmatprep.subr.bf16.mxu0 0
      %4421 = vmatpush1.bf16.msra.mxu0 %v4320
      %4422 = vmatprep.subr.bf16.mxu0 0
      %4423 = vmatpush1.bf16.msra.mxu0 %v4319
      %4424 = vmatprep.subr.bf16.mxu0 0
      %4425 = vmatpush1.bf16.msra.mxu0 %v4318
      %4426 = vmatprep.subr.bf16.mxu0 0
      %4427 = vmatpush1.bf16.msra.mxu0 %v4317
      %4428 = vmatprep.subr.bf16.mxu0 0
      %4429 = vmatpush1.bf16.msra.mxu0 %v4316
      %4430 = vmatprep.subr.bf16.mxu0 0
      %4431 = vmatpush1.bf16.msra.mxu0 %v4315
      %4432 = vmatprep.subr.bf16.mxu0 0
      %4433 = vmatpush1.bf16.msra.mxu0 %v4314
      %4434 = vmatprep.subr.bf16.mxu0 0
      %4435 = vmatpush2.bf16.msra.mxu0 %v4329
      %4436 = vmatprep.subr.bf16.mxu0 0
      %4437 = vmatpush2.bf16.msra.mxu0 %v4328
      %4438 = vmatprep.subr.bf16.mxu0 0
      %4439 = vmatpush2.bf16.msra.mxu0 %v4327
      %4440 = vmatprep.subr.bf16.mxu0 0
      %4441 = vmatpush2.bf16.msra.mxu0 %v4326
      %4442 = vmatprep.subr.bf16.mxu0 0
      %4443 = vmatpush2.bf16.msra.mxu0 %v4325
      %4444 = vmatprep.subr.bf16.mxu0 0
      %4445 = vmatpush2.bf16.msra.mxu0 %v4324
      %4446 = vmatprep.subr.bf16.mxu0 0
      %4447 = vmatpush2.bf16.msra.mxu0 %v4323
      %4448 = vmatprep.subr.bf16.mxu0 0
      %4449 = vmatpush2.bf16.msra.mxu0 %v4322
      %4450 = vmatprep.mubr.bf16.mxu0 %v4149
      %4451 = vmatmul.mubr.bf16.gmra.mxu0 %v4148
      %v4452 = vpop.f32.mrf.mxu0
      %v4453 = vadd.f32 %v4397, %v4452
      %v4454 = vpop.f32.mrf.mxu0
      %v4455 = vpop.f32.mrf.mxu0
      %v4456 = vadd.f32 %v4400, %v4455
      %v4457 = vpop.f32.mrf.mxu0
      %4458 = vmatprep.mubr.bf16.mxu0 %v4153
      %4459 = vmatmul.mubr.bf16.gmra.mxu0 %v4152
      %v4460 = vpop.f32.mrf.mxu0
      %v4461 = vadd.f32 %v4405, %v4460
      %v4462 = vpop.f32.mrf.mxu0
      %v4463 = vpop.f32.mrf.mxu0
      %v4464 = vadd.f32 %v4408, %v4463
      %v4465 = vpop.f32.mrf.mxu0
      %4466 = vmatprep.mubr.bf16.mxu0 %v4157
      %4467 = vmatmul.mubr.bf16.gmra.mxu0 %v4156
      %v4468 = vpop.f32.mrf.mxu0
      %v4469 = vadd.f32 %v4413, %v4468
      %v4470 = vpop.f32.mrf.mxu0
      %v4471 = vpop.f32.mrf.mxu0
      %v4472 = vpop.f32.mrf.mxu0
      %4473 = vdwg.mxu0
      %v4474 = vmax.f32 %v4453, 0.0
      %v4475 = vmax.f32 %v4456, 0.0
      %v4476 = vmax.f32 %v4461, 0.0
      %v4477 = vmax.f32 %v4464, 0.0
      %v4478 = vmax.f32 %v4469, 0.0
      %v4479 = vpack.c.bf16 %v4475, %v4474
      %v4480 = vpack.c.bf16 %v4477, %v4476
      %v4481 = vpack.c.bf16 %v4478, %v4478
      %v4485 = vunpack.c.l.b16 %v4479
      %v4486 = vunpack.c.h.b16 %v4479
      %v4487 = vunpack.c.l.b16 %v4480
      %v4488 = vunpack.c.h.b16 %v4480
      %v4489 = vunpack.c.l.b16 %v4481
      %v4490 = vpack.c.b16 %v4485, %v4485
      %v4491 = vpack.c.b16 %v4486, %v4486
      %v4492 = vpack.c.b16 %v4487, %v4487
      %v4493 = vpack.c.b16 %v4488, %v4488
      %v4494 = vpack.c.b16 %v4489, %v4489
      %vm4500 = vcmask 519168
      %4501 = vst.msk [vmem:[#allocation5] sm:$0xf] %vm4500, %v4490
      %4502 = vst.msk [vmem:[#allocation5 + $0x4] sm:$0xf] %vm4500, %v4491
      %4503 = vst.msk [vmem:[#allocation5 + $0x8] sm:$0xf] %vm4500, %v4492
      %4504 = vst.msk [vmem:[#allocation5 + $0xc] sm:$0xf] %vm4500, %v4493
      %4505 = vst.msk [vmem:[#allocation5 + $0x10] sm:$0x3] %vm840, %v4494
      %v4506 = vld [vmem:[#allocation5] sm:$0x3]
      %4507 = vst.msk [vmem:[#allocation6] sm:$0x3] %vm840, %v4506
      %v4508 = vld [vmem:[#allocation5] sm:$0x7]
      %v4510 = vshrl.u32 %v4508, 16
      %v4512 = vrot.slane %v4510, 4
      %v4513 = vshll.u32 %v4508, 16
      %v4515 = vrot.slane %v4513, 5
      %v4516 = vor.u32 %v4512, %v4515
      %v4517 = vrot.slane %v4516, 4
      %4518 = vrot.lane.b32.xlu0 %v4517, 64
      %v4519 = vpop.permute.xlu0 %4518
      %4521 = vst.msk [vmem:[#allocation6] sm:$0x3] %vm857, %v4519
      %v4522 = vld [vmem:[#allocation5] sm:$0x6]
      %v4524 = vrot.slane %v4522, 5
      %v4525 = vrot.slane %v4524, 4
      %4527 = vst.msk [vmem:[#allocation6 + $0x4] sm:$0x3] %vm840, %v4525
      %v4528 = vld [vmem:[#allocation5] sm:$0x8]
      %v4529 = vld [vmem:[#allocation5 + $0x4] sm:$0x1]
      %v4532 = vrot.slane %v4528, 7
      %v4533 = vrot.slane %v4532, 4
      %v4534 = vrot.slane %v4529, 7
      %v4535 = vsel %vm2654, %v4533, %v4534
      %4536 = vrot.lane.b32.xlu0 %v4535, 64
      %v4537 = vpop.permute.xlu0 %4536
      %4539 = vst.msk [vmem:[#allocation6 + $0x4] sm:$0x3] %vm857, %v4537
      %v4540 = vld [vmem:[#allocation5] sm:$0x8]
      %v4541 = vld [vmem:[#allocation5 + $0x4] sm:$0x3]
      %v4543 = vshrl.u32 %v4540, 16
      %v4545 = vrot.slane %v4543, 7
      %v4546 = vrot.slane %v4545, 4
      %v4548 = vshrl.u32 %v4541, 16
      %v4550 = vrot.slane %v4548, 7
      %v4551 = vshll.u32 %v4541, 16
      %v4553 = vor.u32 %v4550, %v4551
      %v4554 = vsel %vm2602, %v4546, %v4553
      %4556 = vst.msk [vmem:[#allocation6 + $0x8] sm:$0x3] %vm840, %v4554
      %v4557 = vld [vmem:[#allocation5 + $0x4] sm:$0x3]
      %4559 = vrot.lane.b32.xlu0 %v4557, 64
      %v4560 = vpop.permute.xlu0 %4559
      %4562 = vst.msk [vmem:[#allocation6 + $0x8] sm:$0x3] %vm857, %v4560
      %v4563 = vld [vmem:[#allocation5 + $0x4] sm:$0xc]
      %v4565 = vrot.slane %v4563, 6
      %v4566 = vrot.slane %v4565, 4
      %4568 = vst.msk [vmem:[#allocation6 + $0xc] sm:$0x3] %vm840, %v4566
      %v4569 = vld [vmem:[#allocation5 + $0x4] sm:$0xc]
      %v4570 = vld [vmem:[#allocation5 + $0x8] sm:$0x1]
      %v4572 = vshrl.u32 %v4569, 16
      %v4574 = vrot.slane %v4572, 6
      %v4575 = vshll.u32 %v4569, 16
      %v4577 = vrot.slane %v4575, 7
      %v4578 = vor.u32 %v4574, %v4577
      %v4579 = vrot.slane %v4578, 4
      %v4581 = vshll.u32 %v4570, 16
      %v4583 = vrot.slane %v4581, 7
      %v4584 = vsel %vm2714, %v4579, %v4583
      %4585 = vrot.lane.b32.xlu0 %v4584, 64
      %v4586 = vpop.permute.xlu0 %4585
      %4588 = vst.msk [vmem:[#allocation6 + $0xc] sm:$0x3] %vm857, %v4586
      %v4589 = vld [vmem:[#allocation5 + $0x4] sm:$0x8]
      %v4590 = vld [vmem:[#allocation5 + $0x8] sm:$0x1]
      %v4593 = vrot.slane %v4589, 7
      %v4594 = vrot.slane %v4593, 4
      %v4595 = vrot.slane %v4590, 7
      %v4596 = vsel %vm2654, %v4594, %v4595
      %4598 = vst.msk [vmem:[#allocation6 + $0x10] sm:$0x3] %vm840, %v4596
      %v4599 = vld [vmem:[#allocation5] sm:$0x8]
      %v4600 = vld [vmem:[#allocation5 + $0x4] sm:$0x1]
      %vm4603 = vcmask 1046532
      %vm4604 = vmor %vm814, %vm4603
      %v4605 = vrot.slane %v4599, 5
      %v4606 = vrot.slane %v4605, 4
      %v4607 = vrot.slane %v4600, 5
      %v4608 = vsel %vm4604, %v4606, %v4607
      %4610 = vst.msk [vmem:[#allocation6] sm:$0xc] %vm930, %v4608
      %v4611 = vld [vmem:[#allocation5] sm:$0x8]
      %v4612 = vld [vmem:[#allocation5 + $0x4] sm:$0x3]
      %vm4613 = vsmask.f32 6416
      %vm4614 = vmor %vm725, %vm4613
      %v4616 = vshrl.u32 %v4611, 16
      %v4618 = vrot.slane %v4616, 5
      %v4619 = vrot.slane %v4618, 4
      %v4621 = vshrl.u32 %v4612, 16
      %v4623 = vrot.slane %v4621, 5
      %v4624 = vshll.u32 %v4612, 16
      %v4626 = vrot.slane %v4624, 6
      %v4627 = vor.u32 %v4623, %v4626
      %v4628 = vsel %vm4614, %v4619, %v4627
      %4629 = vrot.lane.b32.xlu0 %v4628, 64
      %v4630 = vpop.permute.xlu0 %4629
      %4632 = vst.msk [vmem:[#allocation6] sm:$0xc] %vm954, %v4630
      %v4633 = vld [vmem:[#allocation5 + $0x4] sm:$0x3]
      %v4635 = vrot.slane %v4633, 6
      %4637 = vst.msk [vmem:[#allocation6 + $0x4] sm:$0xc] %vm930, %v4635
      %v4638 = vld [vmem:[#allocation5 + $0x4] sm:$0xc]
      %4640 = vrot.lane.b32.xlu0 %v4638, 64
      %v4641 = vpop.permute.xlu0 %4640
      %4643 = vst.msk [vmem:[#allocation6 + $0x4] sm:$0xc] %vm954, %v4641
      %v4644 = vld [vmem:[#allocation5 + $0x4] sm:$0xc]
      %v4645 = vld [vmem:[#allocation5 + $0x8] sm:$0x1]
      %v4647 = vshrl.u32 %v4644, 16
      %v4649 = vrot.slane %v4647, 4
      %v4650 = vshll.u32 %v4644, 16
      %v4652 = vrot.slane %v4650, 5
      %v4653 = vor.u32 %v4649, %v4652
      %v4654 = vrot.slane %v4653, 4
      %v4656 = vshll.u32 %v4645, 16
      %v4658 = vrot.slane %v4656, 5
      %v4659 = vsel %vm2806, %v4654, %v4658
      %4661 = vst.msk [vmem:[#allocation6 + $0x8] sm:$0xc] %vm930, %v4659
      %v4662 = vld [vmem:[#allocation5 + $0x4] sm:$0x8]
      %v4663 = vld [vmem:[#allocation5 + $0x8] sm:$0x1]
      %v4666 = vrot.slane %v4662, 5
      %v4667 = vrot.slane %v4666, 4
      %v4668 = vrot.slane %v4663, 5
      %v4669 = vsel %vm4604, %v4667, %v4668
      %4670 = vrot.lane.b32.xlu0 %v4669, 64
      %v4671 = vpop.permute.xlu0 %4670
      %4673 = vst.msk [vmem:[#allocation6 + $0x8] sm:$0xc] %vm954, %v4671
      %v4674 = vld [vmem:[#allocation5 + $0x8] sm:$0x6]
      %v4676 = vrot.slane %v4674, 7
      %4678 = vst.msk [vmem:[#allocation6 + $0xc] sm:$0xc] %vm930, %v4676
      %v4679 = vld [vmem:[#allocation5 + $0x8] sm:$0xe]
      %v4681 = vshrl.u32 %v4679, 16
      %v4683 = vrot.slane %v4681, 7
      %v4684 = vshll.u32 %v4679, 16
      %v4686 = vor.u32 %v4683, %v4684
      %4687 = vrot.lane.b32.xlu0 %v4686, 64
      %v4688 = vpop.permute.xlu0 %4687
      %4690 = vst.msk [vmem:[#allocation6 + $0xc] sm:$0xc] %vm954, %v4688
      %v4691 = vld [vmem:[#allocation5 + $0x8] sm:$0xc]
      %4692 = vst.msk [vmem:[#allocation6 + $0x10] sm:$0xc] %vm930, %v4691
      %v4693 = vld [vmem:[#allocation5 + $0x4] sm:$0xc]
      %v4695 = vrot.slane %v4693, 6
      %v4696 = vrot.slane %v4695, 4
      %4698 = vst.msk [vmem:[#allocation6 + $0x14] sm:$0x3] %vm840, %v4696
      %v4699 = vld [vmem:[#allocation5 + $0x4] sm:$0xc]
      %v4700 = vld [vmem:[#allocation5 + $0x8] sm:$0x1]
      %v4702 = vshrl.u32 %v4699, 16
      %v4704 = vrot.slane %v4702, 6
      %v4705 = vshll.u32 %v4699, 16
      %v4707 = vrot.slane %v4705, 7
      %v4708 = vor.u32 %v4704, %v4707
      %v4709 = vrot.slane %v4708, 4
      %v4711 = vshll.u32 %v4700, 16
      %v4713 = vrot.slane %v4711, 7
      %v4714 = vsel %vm2714, %v4709, %v4713
      %4715 = vrot.lane.b32.xlu0 %v4714, 64
      %v4716 = vpop.permute.xlu0 %4715
      %4718 = vst.msk [vmem:[#allocation6 + $0x14] sm:$0x3] %vm857, %v4716
      %v4719 = vld [vmem:[#allocation5 + $0x4] sm:$0x8]
      %v4720 = vld [vmem:[#allocation5 + $0x8] sm:$0x1]
      %v4723 = vrot.slane %v4719, 7
      %v4724 = vrot.slane %v4723, 4
      %v4725 = vrot.slane %v4720, 7
      %v4726 = vsel %vm2654, %v4724, %v4725
      %4728 = vst.msk [vmem:[#allocation6 + $0x18] sm:$0x3] %vm840, %v4726
      %v4729 = vld [vmem:[#allocation5 + $0x8] sm:$0x6]
      %v4731 = vrot.slane %v4729, 5
      %v4732 = vrot.slane %v4731, 4
      %4733 = vrot.lane.b32.xlu0 %v4732, 64
      %v4734 = vpop.permute.xlu0 %4733
      %4736 = vst.msk [vmem:[#allocation6 + $0x18] sm:$0x3] %vm857, %v4734
      %v4737 = vld [vmem:[#allocation5 + $0x8] sm:$0xe]
      %v4739 = vshrl.u32 %v4737, 16
      %v4741 = vrot.slane %v4739, 5
      %v4742 = vshll.u32 %v4737, 16
      %v4744 = vrot.slane %v4742, 6
      %v4745 = vor.u32 %v4741, %v4744
      %v4746 = vrot.slane %v4745, 4
      %4748 = vst.msk [vmem:[#allocation6 + $0x1c] sm:$0x3] %vm840, %v4746
      %v4749 = vld [vmem:[#allocation5 + $0x8] sm:$0xc]
      %v4751 = vrot.slane %v4749, 6
      %v4752 = vrot.slane %v4751, 4
      %4753 = vrot.lane.b32.xlu0 %v4752, 64
      %v4754 = vpop.permute.xlu0 %4753
      %4756 = vst.msk [vmem:[#allocation6 + $0x1c] sm:$0x3] %vm857, %v4754
      %v4757 = vld [vmem:[#allocation5 + $0xc] sm:$0x3]
      %4758 = vst.msk [vmem:[#allocation6 + $0x20] sm:$0x3] %vm840, %v4757
      %v4759 = vld [vmem:[#allocation5 + $0xc] sm:$0x7]
      %v4761 = vshrl.u32 %v4759, 16
      %v4763 = vrot.slane %v4761, 4
      %v4764 = vshll.u32 %v4759, 16
      %v4766 = vrot.slane %v4764, 5
      %v4767 = vor.u32 %v4763, %v4766
      %v4768 = vrot.slane %v4767, 4
      %4769 = vrot.lane.b32.xlu0 %v4768, 64
      %v4770 = vpop.permute.xlu0 %4769
      %4772 = vst.msk [vmem:[#allocation6 + $0x20] sm:$0x3] %vm857, %v4770
      %v4773 = vld [vmem:[#allocation5 + $0xc] sm:$0x6]
      %v4775 = vrot.slane %v4773, 5
      %v4776 = vrot.slane %v4775, 4
      %4778 = vst.msk [vmem:[#allocation6 + $0x24] sm:$0x3] %vm840, %v4776
      %v4779 = vld [vmem:[#allocation5 + $0x8] sm:$0x6]
      %v4781 = vrot.slane %v4779, 7
      %4783 = vst.msk [vmem:[#allocation6 + $0x14] sm:$0xc] %vm930, %v4781
      %v4784 = vld [vmem:[#allocation5 + $0x8] sm:$0xe]
      %v4786 = vshrl.u32 %v4784, 16
      %v4788 = vrot.slane %v4786, 7
      %v4789 = vshll.u32 %v4784, 16
      %v4791 = vor.u32 %v4788, %v4789
      %4792 = vrot.lane.b32.xlu0 %v4791, 64
      %v4793 = vpop.permute.xlu0 %4792
      %4795 = vst.msk [vmem:[#allocation6 + $0x14] sm:$0xc] %vm954, %v4793
      %v4796 = vld [vmem:[#allocation5 + $0x8] sm:$0xc]
      %4797 = vst.msk [vmem:[#allocation6 + $0x18] sm:$0xc] %vm930, %v4796
      %v4798 = vld [vmem:[#allocation5 + $0xc] sm:$0x3]
      %v4800 = vrot.slane %v4798, 6
      %4801 = vrot.lane.b32.xlu0 %v4800, 64
      %v4802 = vpop.permute.xlu0 %4801
      %4804 = vst.msk [vmem:[#allocation6 + $0x18] sm:$0xc] %vm954, %v4802
      %v4805 = vld [vmem:[#allocation5 + $0xc] sm:$0x7]
      %v4807 = vshrl.u32 %v4805, 16
      %v4809 = vrot.slane %v4807, 6
      %v4810 = vshll.u32 %v4805, 16
      %v4812 = vrot.slane %v4810, 7
      %v4813 = vor.u32 %v4809, %v4812
      %4815 = vst.msk [vmem:[#allocation6 + $0x1c] sm:$0xc] %vm930, %v4813
      %v4816 = vld [vmem:[#allocation5 + $0xc] sm:$0x6]
      %v4818 = vrot.slane %v4816, 7
      %4819 = vrot.lane.b32.xlu0 %v4818, 64
      %v4820 = vpop.permute.xlu0 %4819
      %4822 = vst.msk [vmem:[#allocation6 + $0x1c] sm:$0xc] %vm954, %v4820
      %v4823 = vld [vmem:[#allocation5 + $0xc] sm:$0x8]
      %v4824 = vld [vmem:[#allocation5 + $0x10] sm:$0x1]
      %v4827 = vrot.slane %v4823, 5
      %v4828 = vrot.slane %v4827, 4
      %v4829 = vrot.slane %v4824, 5
      %v4830 = vsel %vm4604, %v4828, %v4829
      %4832 = vst.msk [vmem:[#allocation6 + $0x20] sm:$0xc] %vm930, %v4830
      %v4833 = vld [vmem:[#allocation5 + $0xc] sm:$0x8]
      %v4834 = vld [vmem:[#allocation5 + $0x10] sm:$0x3]
      %v4836 = vshrl.u32 %v4833, 16
      %v4838 = vrot.slane %v4836, 5
      %v4839 = vrot.slane %v4838, 4
      %v4841 = vshrl.u32 %v4834, 16
      %v4843 = vrot.slane %v4841, 5
      %v4844 = vshll.u32 %v4834, 16
      %v4846 = vrot.slane %v4844, 6
      %v4847 = vor.u32 %v4843, %v4846
      %v4848 = vsel %vm4614, %v4839, %v4847
      %4849 = vrot.lane.b32.xlu0 %v4848, 64
      %v4850 = vpop.permute.xlu0 %4849
      %4852 = vst.msk [vmem:[#allocation6 + $0x20] sm:$0xc] %vm954, %v4850
      %v4853 = vld [vmem:[#allocation5 + $0x10] sm:$0x3]
      %v4855 = vrot.slane %v4853, 6
      %4857 = vst.msk [vmem:[#allocation6 + $0x24] sm:$0xc] %vm930, %v4855
      %v4858 = vld [vmem:[%s5] sm:$0xf]
      %v4859 = vld [vmem:[%s5 + $0x4] sm:$0xf]
      %v4860 = vld [vmem:[%s5 + $0x8] sm:$0xf]
      %v4861 = vld [vmem:[%s5 + $0xc] sm:$0xf]
      %v4862 = vld [vmem:[%s5 + $0x10] sm:$0xf]
      %v4863 = vld [vmem:[%s5 + $0x14] sm:$0xf]
      %v4864 = vld [vmem:[%s5 + $0x18] sm:$0xf]
      %v4865 = vld [vmem:[%s5 + $0x1c] sm:$0xf]
      %v4866 = vld [vmem:[%s5 + $0x20] sm:$0xf]
      %v4867 = vld [vmem:[%s5 + $0x24] sm:$0xf]
      %v4868 = vld [vmem:[%s5 + $0x28] sm:$0xf]
      %v4869 = vld [vmem:[%s5 + $0x2c] sm:$0xf]
      %v4870 = vld [vmem:[%s5 + $0x30] sm:$0xf]
      %v4871 = vld [vmem:[%s5 + $0x34] sm:$0xf]
      %v4872 = vld [vmem:[%s5 + $0x38] sm:$0xf]
      %v4873 = vld [vmem:[%s5 + $0x3c] sm:$0xf]
      %v4874 = vld [vmem:[%s5 + $0x40] sm:$0xf]
      %v4875 = vld [vmem:[%s5 + $0x44] sm:$0xf]
      %v4876 = vld [vmem:[%s5 + $0x48] sm:$0xf]
      %v4877 = vld [vmem:[%s5 + $0x4c] sm:$0xf]
      %v4878 = vld [vmem:[%s5 + $0x50] sm:$0xf]
      %v4879 = vld [vmem:[%s5 + $0x54] sm:$0xf]
      %v4880 = vld [vmem:[%s5 + $0x58] sm:$0xf]
      %v4881 = vld [vmem:[%s5 + $0x5c] sm:$0xf]
      %v4882 = vld [vmem:[%s5 + $0x60] sm:$0xf]
      %v4883 = vld [vmem:[%s5 + $0x64] sm:$0xf]
      %v4884 = vld [vmem:[%s5 + $0x68] sm:$0xf]
      %v4885 = vld [vmem:[%s5 + $0x6c] sm:$0xf]
      %v4886 = vld [vmem:[%s5 + $0x70] sm:$0xf]
      %v4887 = vld [vmem:[%s5 + $0x74] sm:$0xf]
      %v4888 = vld [vmem:[%s5 + $0x78] sm:$0xf]
      %v4889 = vld [vmem:[%s5 + $0x7c] sm:$0xf]
      %v4890 = vld [vmem:[%s5 + $0x80] sm:$0xf]
      %v4891 = vld [vmem:[%s5 + $0x84] sm:$0xf]
      %v4892 = vld [vmem:[%s5 + $0x88] sm:$0xf]
      %v4893 = vld [vmem:[%s5 + $0x8c] sm:$0xf]
      %v4894 = vld [vmem:[%s5 + $0x90] sm:$0xf]
      %v4895 = vld [vmem:[%s5 + $0x94] sm:$0xf]
      %v4896 = vld [vmem:[%s5 + $0x98] sm:$0xf]
      %v4897 = vld [vmem:[%s5 + $0x9c] sm:$0xf]
      %v4898 = vld [vmem:[%s5 + $0xa0] sm:$0xf]
      %v4899 = vld [vmem:[%s5 + $0xa4] sm:$0xf]
      %v4900 = vld [vmem:[%s5 + $0xa8] sm:$0xf]
      %v4901 = vld [vmem:[%s5 + $0xac] sm:$0xf]
      %v4902 = vld [vmem:[%s5 + $0xb0] sm:$0xf]
      %v4903 = vld [vmem:[%s5 + $0xb4] sm:$0xf]
      %v4904 = vld [vmem:[%s5 + $0xb8] sm:$0xf]
      %v4905 = vld [vmem:[%s5 + $0xbc] sm:$0xf]
      %v4906 = vld [vmem:[%s5 + $0xc0] sm:$0xf]
      %v4907 = vld [vmem:[%s5 + $0xc4] sm:$0xf]
      %v4908 = vld [vmem:[%s5 + $0xc8] sm:$0xf]
      %v4909 = vld [vmem:[%s5 + $0xcc] sm:$0xf]
      %v4910 = vld [vmem:[%s5 + $0xd0] sm:$0xf]
      %v4911 = vld [vmem:[%s5 + $0xd4] sm:$0xf]
      %v4912 = vld [vmem:[%s5 + $0xd8] sm:$0xf]
      %v4913 = vld [vmem:[%s5 + $0xdc] sm:$0xf]
      %v4914 = vld [vmem:[%s5 + $0xe0] sm:$0xf]
      %v4915 = vld [vmem:[%s5 + $0xe4] sm:$0xf]
      %v4916 = vld [vmem:[%s5 + $0xe8] sm:$0xf]
      %v4917 = vld [vmem:[%s5 + $0xec] sm:$0xf]
      %v4918 = vld [vmem:[%s5 + $0xf0] sm:$0xf]
      %v4919 = vld [vmem:[%s5 + $0xf4] sm:$0xf]
      %v4920 = vld [vmem:[%s5 + $0xf8] sm:$0xf]
      %v4921 = vld [vmem:[%s5 + $0xfc] sm:$0xf]
      %v4922 = vld [vmem:[%s5 + $0x100] sm:$0xf]
      %v4923 = vld [vmem:[%s5 + $0x104] sm:$0xf]
      %v4924 = vld [vmem:[%s5 + $0x108] sm:$0xf]
      %v4925 = vld [vmem:[%s5 + $0x10c] sm:$0xf]
      %v4926 = vld [vmem:[%s5 + $0x110] sm:$0xf]
      %v4927 = vld [vmem:[%s5 + $0x114] sm:$0xf]
      %v4928 = vld [vmem:[%s5 + $0x118] sm:$0xf]
      %v4929 = vld [vmem:[%s5 + $0x11c] sm:$0xf]
      %v4930 = vld [vmem:[%s6] sm:$0x1]
      %v4931 = vld [vmem:[#allocation6] sm:$0xff]
      %v4932 = vld [vmem:[#allocation6 + $0x8] sm:$0xff]
      %v4933 = vld [vmem:[#allocation6 + $0x10] sm:$0xf]
      %v4934 = vld [vmem:[#allocation6 + $0x14] sm:$0xff]
      %v4935 = vld [vmem:[#allocation6 + $0x1c] sm:$0xff]
      %v4936 = vld [vmem:[#allocation6 + $0x24] sm:$0xf]
      %v4938 = vlaneseq
      %v4939 = vshrl.u32 %v4938, 7
      %v4940 = vsub.s32 0, %v4939
      %v4941 = vrot.slane %v4930, %v4940
      %v4949 = vunpack.c.l.b16 %v4931
      %v4950 = vunpack.c.h.b16 %v4931
      %v4951 = vunpack.c.l.b16 %v4932
      %v4952 = vunpack.c.h.b16 %v4932
      %v4953 = vunpack.c.l.b16 %v4933
      %v4954 = vunpack.c.l.b16 %v4934
      %v4955 = vunpack.c.h.b16 %v4934
      %v4956 = vunpack.c.l.b16 %v4935
      %v4957 = vunpack.c.h.b16 %v4935
      %v4958 = vunpack.c.l.b16 %v4936
      %v4959 = vpack.c.b16 %v4954, %v4949
      %v4960 = vpack.c.b16 %v4955, %v4950
      %v4961 = vpack.c.b16 %v4956, %v4951
      %v4962 = vpack.c.b16 %v4957, %v4952
      %v4963 = vpack.c.b16 %v4958, %v4953
      %v5040 = vunpack.c.l.b16 %v4858
      %v5041 = vunpack.c.l.b16 %v4859
      %v5042 = vunpack.c.l.b16 %v4860
      %v5043 = vunpack.c.l.b16 %v4861
      %v5044 = vunpack.c.l.b16 %v4862
      %v5045 = vunpack.c.l.b16 %v4863
      %v5046 = vunpack.c.l.b16 %v4864
      %v5047 = vunpack.c.l.b16 %v4865
      %v5048 = vunpack.c.l.b16 %v4866
      %v5049 = vunpack.c.l.b16 %v4867
      %v5050 = vunpack.c.l.b16 %v4868
      %v5051 = vunpack.c.l.b16 %v4869
      %v5052 = vunpack.c.l.b16 %v4870
      %v5053 = vunpack.c.l.b16 %v4871
      %v5054 = vunpack.c.l.b16 %v4872
      %v5055 = vunpack.c.l.b16 %v4873
      %v5056 = vunpack.c.l.b16 %v4874
      %v5057 = vunpack.c.l.b16 %v4875
      %v5058 = vunpack.c.l.b16 %v4876
      %v5059 = vunpack.c.l.b16 %v4877
      %v5060 = vunpack.c.l.b16 %v4878
      %v5061 = vunpack.c.l.b16 %v4879
      %v5062 = vunpack.c.l.b16 %v4880
      %v5063 = vunpack.c.l.b16 %v4881
      %v5064 = vunpack.c.l.b16 %v4882
      %v5065 = vunpack.c.l.b16 %v4883
      %v5066 = vunpack.c.l.b16 %v4884
      %v5067 = vunpack.c.l.b16 %v4885
      %v5068 = vunpack.c.l.b16 %v4886
      %v5069 = vunpack.c.l.b16 %v4887
      %v5070 = vunpack.c.l.b16 %v4888
      %v5071 = vunpack.c.l.b16 %v4889
      %v5072 = vunpack.c.l.b16 %v4890
      %v5073 = vunpack.c.l.b16 %v4891
      %v5074 = vunpack.c.l.b16 %v4892
      %v5075 = vunpack.c.l.b16 %v4893
      %v5076 = vunpack.c.l.b16 %v4894
      %v5077 = vunpack.c.l.b16 %v4895
      %v5078 = vunpack.c.l.b16 %v4896
      %v5079 = vunpack.c.l.b16 %v4897
      %v5080 = vunpack.c.l.b16 %v4898
      %v5081 = vunpack.c.l.b16 %v4899
      %v5082 = vunpack.c.l.b16 %v4900
      %v5083 = vunpack.c.l.b16 %v4901
      %v5084 = vunpack.c.l.b16 %v4902
      %v5085 = vunpack.c.l.b16 %v4903
      %v5086 = vunpack.c.l.b16 %v4904
      %v5087 = vunpack.c.l.b16 %v4905
      %v5088 = vunpack.c.l.b16 %v4906
      %v5089 = vunpack.c.l.b16 %v4907
      %v5090 = vunpack.c.l.b16 %v4908
      %v5091 = vunpack.c.l.b16 %v4909
      %v5092 = vunpack.c.l.b16 %v4910
      %v5093 = vunpack.c.l.b16 %v4911
      %v5094 = vunpack.c.l.b16 %v4912
      %v5095 = vunpack.c.l.b16 %v4913
      %v5096 = vunpack.c.l.b16 %v4914
      %v5097 = vunpack.c.l.b16 %v4915
      %v5098 = vunpack.c.l.b16 %v4916
      %v5099 = vunpack.c.l.b16 %v4917
      %v5100 = vunpack.c.l.b16 %v4918
      %v5101 = vunpack.c.l.b16 %v4919
      %v5102 = vunpack.c.l.b16 %v4920
      %v5103 = vunpack.c.l.b16 %v4921
      %v5104 = vunpack.c.l.b16 %v4922
      %v5105 = vunpack.c.l.b16 %v4923
      %v5106 = vunpack.c.l.b16 %v4924
      %v5107 = vunpack.c.l.b16 %v4925
      %v5108 = vunpack.c.l.b16 %v4926
      %v5109 = vunpack.c.l.b16 %v4927
      %v5110 = vunpack.c.l.b16 %v4928
      %v5111 = vunpack.c.l.b16 %v4929
      %v5112 = vpack.c.b16 %v5041, %v5040
      %v5113 = vpack.c.b16 %v5043, %v5042
      %v5114 = vpack.c.b16 %v5045, %v5044
      %v5115 = vpack.c.b16 %v5047, %v5046
      %v5116 = vpack.c.b16 %v5049, %v5048
      %v5117 = vpack.c.b16 %v5051, %v5050
      %v5118 = vpack.c.b16 %v5053, %v5052
      %v5119 = vpack.c.b16 %v5055, %v5054
      %v5120 = vpack.c.b16 %v5057, %v5056
      %v5121 = vpack.c.b16 %v5059, %v5058
      %v5122 = vpack.c.b16 %v5061, %v5060
      %v5123 = vpack.c.b16 %v5063, %v5062
      %v5124 = vpack.c.b16 %v5065, %v5064
      %v5125 = vpack.c.b16 %v5067, %v5066
      %v5126 = vpack.c.b16 %v5069, %v5068
      %v5127 = vpack.c.b16 %v5071, %v5070
      %v5128 = vpack.c.b16 %v5073, %v5072
      %v5129 = vpack.c.b16 %v5075, %v5074
      %v5130 = vpack.c.b16 %v5077, %v5076
      %v5131 = vpack.c.b16 %v5079, %v5078
      %v5132 = vpack.c.b16 %v5081, %v5080
      %v5133 = vpack.c.b16 %v5083, %v5082
      %v5134 = vpack.c.b16 %v5085, %v5084
      %v5135 = vpack.c.b16 %v5087, %v5086
      %v5136 = vpack.c.b16 %v5089, %v5088
      %v5137 = vpack.c.b16 %v5091, %v5090
      %v5138 = vpack.c.b16 %v5093, %v5092
      %v5139 = vpack.c.b16 %v5095, %v5094
      %v5140 = vpack.c.b16 %v5097, %v5096
      %v5141 = vpack.c.b16 %v5099, %v5098
      %v5142 = vpack.c.b16 %v5101, %v5100
      %v5143 = vpack.c.b16 %v5103, %v5102
      %v5144 = vpack.c.b16 %v5105, %v5104
      %v5145 = vpack.c.b16 %v5107, %v5106
      %v5146 = vpack.c.b16 %v5109, %v5108
      %v5147 = vpack.c.b16 %v5111, %v5110
      %vm5184 = vcmask 523264
      %v5186 = vsel %vm5184, %v4963, 0
      %5188 = vmatprep.subr.bf16.mxu0 0
      %5189 = vmatpush1.bf16.msra.mxu0 %v5119
      %5190 = vmatprep.subr.bf16.mxu0 0
      %5191 = vmatpush1.bf16.msra.mxu0 %v5118
      %5192 = vmatprep.subr.bf16.mxu0 0
      %5193 = vmatpush1.bf16.msra.mxu0 %v5117
      %5194 = vmatprep.subr.bf16.mxu0 0
      %5195 = vmatpush1.bf16.msra.mxu0 %v5116
      %5196 = vmatprep.subr.bf16.mxu0 0
      %5197 = vmatpush1.bf16.msra.mxu0 %v5115
      %5198 = vmatprep.subr.bf16.mxu0 0
      %5199 = vmatpush1.bf16.msra.mxu0 %v5114
      %5200 = vmatprep.subr.bf16.mxu0 0
      %5201 = vmatpush1.bf16.msra.mxu0 %v5113
      %5202 = vmatprep.subr.bf16.mxu0 0
      %5203 = vmatpush1.bf16.msra.mxu0 %v5112
      %5204 = vmatprep.subr.bf16.mxu0 0
      %5205 = vmatpush2.bf16.msra.mxu0 %v5127
      %5206 = vmatprep.subr.bf16.mxu0 0
      %5207 = vmatpush2.bf16.msra.mxu0 %v5126
      %5208 = vmatprep.subr.bf16.mxu0 0
      %5209 = vmatpush2.bf16.msra.mxu0 %v5125
      %5210 = vmatprep.subr.bf16.mxu0 0
      %5211 = vmatpush2.bf16.msra.mxu0 %v5124
      %5212 = vmatprep.subr.bf16.mxu0 0
      %5213 = vmatpush2.bf16.msra.mxu0 %v5123
      %5214 = vmatprep.subr.bf16.mxu0 0
      %5215 = vmatpush2.bf16.msra.mxu0 %v5122
      %5216 = vmatprep.subr.bf16.mxu0 0
      %5217 = vmatpush2.bf16.msra.mxu0 %v5121
      %5218 = vmatprep.subr.bf16.mxu0 0
      %5219 = vmatpush2.bf16.msra.mxu0 %v5120
      %5220 = vmatprep.mubr.bf16.mxu0 %v4960
      %5221 = vmatmul.mubr.bf16.gmra.mxu0 %v4959
      %v5222 = vpop.f32.mrf.mxu0
      %v5223 = vadd.f32 %v4941, %v5222
      %v5224 = vpop.f32.mrf.mxu0
      %v5225 = vpop.f32.mrf.mxu0
      %v5226 = vadd.f32 %v4941, %v5225
      %v5227 = vpop.f32.mrf.mxu0
      %5228 = vdwg.mxu0
      %5229 = vmatprep.subr.bf16.mxu0 0
      %5230 = vmatpush1.bf16.msra.mxu0 %v5135
      %5231 = vmatprep.subr.bf16.mxu0 0
      %5232 = vmatpush1.bf16.msra.mxu0 %v5134
      %5233 = vmatprep.subr.bf16.mxu0 0
      %5234 = vmatpush1.bf16.msra.mxu0 %v5133
      %5235 = vmatprep.subr.bf16.mxu0 0
      %5236 = vmatpush1.bf16.msra.mxu0 %v5132
      %5237 = vmatprep.subr.bf16.mxu0 0
      %5238 = vmatpush1.bf16.msra.mxu0 %v5131
      %5239 = vmatprep.subr.bf16.mxu0 0
      %5240 = vmatpush1.bf16.msra.mxu0 %v5130
      %5241 = vmatprep.subr.bf16.mxu0 0
      %5242 = vmatpush1.bf16.msra.mxu0 %v5129
      %5243 = vmatprep.subr.bf16.mxu0 0
      %5244 = vmatpush1.bf16.msra.mxu0 %v5128
      %5245 = vmatprep.subr.bf16.mxu0 0
      %5246 = vmatpush2.bf16.msra.mxu0 %v5143
      %5247 = vmatprep.subr.bf16.mxu0 0
      %5248 = vmatpush2.bf16.msra.mxu0 %v5142
      %5249 = vmatprep.subr.bf16.mxu0 0
      %5250 = vmatpush2.bf16.msra.mxu0 %v5141
      %5251 = vmatprep.subr.bf16.mxu0 0
      %5252 = vmatpush2.bf16.msra.mxu0 %v5140
      %5253 = vmatprep.subr.bf16.mxu0 0
      %5254 = vmatpush2.bf16.msra.mxu0 %v5139
      %5255 = vmatprep.subr.bf16.mxu0 0
      %5256 = vmatpush2.bf16.msra.mxu0 %v5138
      %5257 = vmatprep.subr.bf16.mxu0 0
      %5258 = vmatpush2.bf16.msra.mxu0 %v5137
      %5259 = vmatprep.subr.bf16.mxu0 0
      %5260 = vmatpush2.bf16.msra.mxu0 %v5136
      %5261 = vmatprep.mubr.bf16.mxu0 %v4962
      %5262 = vmatmul.mubr.bf16.gmra.mxu0 %v4961
      %v5263 = vpop.f32.mrf.mxu0
      %v5264 = vadd.f32 %v5223, %v5263
      %v5265 = vpop.f32.mrf.mxu0
      %v5266 = vpop.f32.mrf.mxu0
      %v5267 = vadd.f32 %v5226, %v5266
      %v5268 = vpop.f32.mrf.mxu0
      %5269 = vdwg.mxu0
      %5270 = vmatprep.subr.bf16.mxu0 0
      %5271 = vmatpush1.bf16.msra.mxu0 0
      %5272 = vmatprep.subr.bf16.mxu0 0
      %5273 = vmatpush1.bf16.msra.mxu0 0
      %5274 = vmatprep.subr.bf16.mxu0 0
      %5275 = vmatpush1.bf16.msra.mxu0 0
      %5276 = vmatprep.subr.bf16.mxu0 0
      %5277 = vmatpush1.bf16.msra.mxu0 0
      %5278 = vmatprep.subr.bf16.mxu0 0
      %5279 = vmatpush1.bf16.msra.mxu0 %v5147
      %5280 = vmatprep.subr.bf16.mxu0 0
      %5281 = vmatpush1.bf16.msra.mxu0 %v5146
      %5282 = vmatprep.subr.bf16.mxu0 0
      %5283 = vmatpush1.bf16.msra.mxu0 %v5145
      %5284 = vmatprep.subr.bf16.mxu0 0
      %5285 = vmatpush1.bf16.msra.mxu0 %v5144
      %5286 = vmatprep.subr.bf16.mxu0 0
      %5287 = vmatpush2.bf16.msra.mxu0 0
      %5288 = vmatprep.subr.bf16.mxu0 0
      %5289 = vmatpush2.bf16.msra.mxu0 0
      %5290 = vmatprep.subr.bf16.mxu0 0
      %5291 = vmatpush2.bf16.msra.mxu0 0
      %5292 = vmatprep.subr.bf16.mxu0 0
      %5293 = vmatpush2.bf16.msra.mxu0 0
      %5294 = vmatprep.subr.bf16.mxu0 0
      %5295 = vmatpush2.bf16.msra.mxu0 0
      %5296 = vmatprep.subr.bf16.mxu0 0
      %5297 = vmatpush2.bf16.msra.mxu0 0
      %5298 = vmatprep.subr.bf16.mxu0 0
      %5299 = vmatpush2.bf16.msra.mxu0 0
      %5300 = vmatprep.subr.bf16.mxu0 0
      %5301 = vmatpush2.bf16.msra.mxu0 0
      %5302 = vmatprep.mubr.bf16.mxu0 0
      %5303 = vmatmul.mubr.bf16.gmra.mxu0 %v5186
      %v5304 = vpop.f32.mrf.mxu0
      %v5305 = vadd.f32 %v5264, %v5304
      %v5306 = vpop.f32.mrf.mxu0
      %v5307 = vpop.f32.mrf.mxu0
      %v5308 = vadd.f32 %v5267, %v5307
      %v5309 = vpop.f32.mrf.mxu0
      %5310 = vdwg.mxu0
      %v5311 = vmax.f32 %v5305, 0.0
      %v5312 = vmax.f32 %v5308, 0.0
      %v5313 = vpack.c.bf16 %v5312, %v5311
      %v5315 = vunpack.c.l.b16 %v5313
      %v5316 = vunpack.c.h.b16 %v5313
      %v5317 = vpack.c.b16 %v5315, %v5315
      %v5318 = vpack.c.b16 %v5316, %v5316
      %5321 = vst.msk [vmem:[#allocation7] sm:$0xf] %vm2525, %v5317
      %5322 = vst.msk [vmem:[#allocation7 + $0x4] sm:$0xf] %vm2525, %v5318
      %v5323 = vld [vmem:[#allocation7] sm:$0x1]
      %v5324 = vld [vmem:[#allocation8] sm:$0x1]
      %v5325 = vsel %vm2555, %v5323, %v5324
      %5326 = vst [vmem:[#allocation8] sm:$0x1] %v5325
      %v5327 = vld [vmem:[#allocation7] sm:$0x1]
      %v5330 = vunpack.c.l.s4 1966171168
      %v5331 = vunpack.c.0.s8 %v5330
      %v5332 = vlaneseq
      %v5333 = vshrl.u32 %v5332, 7
      %v5334 = vsub.s32 %v5331, %v5333
      %v5335 = vrot.slane %v5327, %v5334
      %v5337 = vunpack.c.l.s4 1966171168
      %v5338 = vunpack.c.0.s8 %v5337
      %v5339 = vlaneseq
      %v5340 = vshrl.u32 %v5339, 7
      %v5341 = vsub.s32 %v5338, %v5340
      %v5342 = vrot.slane %v5335, %v5341
      %v5344 = vshrl.u32 %v5342, 16
      %v5346 = vrot.slane %v5344, 7
      %v5347 = vrot.slane %v5346, 1
      %5348 = vrot.lane.b32.xlu0 %v5347, 32
      %v5349 = vpop.permute.xlu0 %5348
      %vm5351 = vcmask 516352
      %vm5352 = vmand %vm5351, %vm1141
      %v5353 = vld [vmem:[#allocation8] sm:$0x1]
      %v5354 = vsel %vm5352, %v5349, %v5353
      %5355 = vst [vmem:[#allocation8] sm:$0x1] %v5354
      %v5356 = vld [vmem:[#allocation7] sm:$0x2]
      %v5359 = vunpack.c.l.s4 1966171168
      %v5360 = vunpack.c.0.s8 %v5359
      %v5361 = vlaneseq
      %v5362 = vshrl.u32 %v5361, 7
      %v5363 = vsub.s32 %v5360, %v5362
      %v5364 = vrot.slane %v5356, %v5363
      %v5365 = vcombine.high %v5364, %v5364
      %v5367 = vunpack.c.l.s4 1966171168
      %v5368 = vunpack.c.0.s8 %v5367
      %v5369 = vlaneseq
      %v5370 = vshrl.u32 %v5369, 7
      %v5371 = vsub.s32 %v5368, %v5370
      %v5372 = vrot.slane %v5365, %v5371
      %5373 = vrot.lane.b32.xlu0 %v5372, 64
      %v5374 = vpop.permute.xlu0 %5373
      %vm5376 = vcmask 778752
      %vm5377 = vmand %vm5376, %vm1141
      %v5378 = vld [vmem:[#allocation8] sm:$0x1]
      %v5379 = vsel %vm5377, %v5374, %v5378
      %5380 = vst [vmem:[#allocation8] sm:$0x1] %v5379
      %v5381 = vld [vmem:[#allocation7] sm:$0x2]
      %v5384 = vunpack.c.l.s4 1966171168
      %v5385 = vunpack.c.0.s8 %v5384
      %v5386 = vlaneseq
      %v5387 = vshrl.u32 %v5386, 7
      %v5388 = vsub.s32 %v5385, %v5387
      %v5389 = vrot.slane %v5381, %v5388
      %v5390 = vcombine.high %v5389, %v5389
      %v5392 = vunpack.c.l.s4 1966171168
      %v5393 = vunpack.c.0.s8 %v5392
      %v5394 = vlaneseq
      %v5395 = vshrl.u32 %v5394, 7
      %v5396 = vsub.s32 %v5393, %v5395
      %v5397 = vrot.slane %v5390, %v5396
      %v5399 = vshrl.u32 %v5397, 16
      %v5401 = vrot.slane %v5399, 7
      %v5402 = vrot.slane %v5401, 1
      %5403 = vrot.lane.b32.xlu0 %v5402, 96
      %v5404 = vpop.permute.xlu0 %5403
      %vm5406 = vcmask 1041152
      %vm5407 = vmand %vm5406, %vm1141
      %v5408 = vld [vmem:[#allocation8] sm:$0x1]
      %v5409 = vsel %vm5407, %v5404, %v5408
      %5410 = vst [vmem:[#allocation8] sm:$0x1] %v5409
      %v5411 = vld [vmem:[#allocation7] sm:$0x4]
      %v5414 = vunpack.c.l.s4 1966171168
      %v5415 = vunpack.c.0.s8 %v5414
      %v5416 = vlaneseq
      %v5417 = vshrl.u32 %v5416, 7
      %v5418 = vsub.s32 %v5415, %v5417
      %v5419 = vrot.slane %v5411, %v5418
      %v5421 = vunpack.c.l.s4 1966171168
      %v5422 = vunpack.c.0.s8 %v5421
      %v5423 = vlaneseq
      %v5424 = vshrl.u32 %v5423, 7
      %v5425 = vsub.s32 %v5422, %v5424
      %v5426 = vrot.slane %v5419, %v5425
      %v5427 = vcombine.high %v5426, %v5426
      %v5429 = vld [vmem:[#allocation8 + $0x1] sm:$0x1]
      %v5430 = vsel %vm2555, %v5427, %v5429
      %5431 = vst [vmem:[#allocation8 + $0x1] sm:$0x1] %v5430
      %v5432 = vld [vmem:[#allocation7] sm:$0x4]
      %v5435 = vunpack.c.l.s4 1966171168
      %v5436 = vunpack.c.0.s8 %v5435
      %v5437 = vlaneseq
      %v5438 = vshrl.u32 %v5437, 7
      %v5439 = vsub.s32 %v5436, %v5438
      %v5440 = vrot.slane %v5432, %v5439
      %v5442 = vunpack.c.l.s4 1966171168
      %v5443 = vunpack.c.0.s8 %v5442
      %v5444 = vlaneseq
      %v5445 = vshrl.u32 %v5444, 7
      %v5446 = vsub.s32 %v5443, %v5445
      %v5447 = vrot.slane %v5440, %v5446
      %v5448 = vcombine.high %v5447, %v5447
      %v5450 = vshrl.u32 %v5448, 16
      %v5452 = vrot.slane %v5450, 7
      %v5453 = vrot.slane %v5452, 1
      %5454 = vrot.lane.b32.xlu0 %v5453, 32
      %v5455 = vpop.permute.xlu0 %5454
      %v5457 = vld [vmem:[#allocation8 + $0x1] sm:$0x1]
      %v5458 = vsel %vm5352, %v5455, %v5457
      %5459 = vst [vmem:[#allocation8 + $0x1] sm:$0x1] %v5458
      %v5460 = vld [vmem:[#allocation7] sm:$0x8]
      %v5463 = vunpack.c.l.s4 1966171168
      %v5464 = vunpack.c.0.s8 %v5463
      %v5465 = vlaneseq
      %v5466 = vshrl.u32 %v5465, 7
      %v5467 = vsub.s32 %v5464, %v5466
      %v5468 = vrot.slane %v5460, %v5467
      %v5469 = vcombine.high %v5468, %v5468
      %v5471 = vunpack.c.l.s4 1966171168
      %v5472 = vunpack.c.0.s8 %v5471
      %v5473 = vlaneseq
      %v5474 = vshrl.u32 %v5473, 7
      %v5475 = vsub.s32 %v5472, %v5474
      %v5476 = vrot.slane %v5469, %v5475
      %v5477 = vcombine.high %v5476, %v5476
      %5478 = vrot.lane.b32.xlu0 %v5477, 64
      %v5479 = vpop.permute.xlu0 %5478
      %v5481 = vld [vmem:[#allocation8 + $0x1] sm:$0x1]
      %v5482 = vsel %vm5377, %v5479, %v5481
      %5483 = vst [vmem:[#allocation8 + $0x1] sm:$0x1] %v5482
      %v5484 = vld [vmem:[#allocation7] sm:$0x8]
      %v5487 = vunpack.c.l.s4 1966171168
      %v5488 = vunpack.c.0.s8 %v5487
      %v5489 = vlaneseq
      %v5490 = vshrl.u32 %v5489, 7
      %v5491 = vsub.s32 %v5488, %v5490
      %v5492 = vrot.slane %v5484, %v5491
      %v5493 = vcombine.high %v5492, %v5492
      %v5495 = vunpack.c.l.s4 1966171168
      %v5496 = vunpack.c.0.s8 %v5495
      %v5497 = vlaneseq
      %v5498 = vshrl.u32 %v5497, 7
      %v5499 = vsub.s32 %v5496, %v5498
      %v5500 = vrot.slane %v5493, %v5499
      %v5501 = vcombine.high %v5500, %v5500
      %v5503 = vshrl.u32 %v5501, 16
      %v5505 = vrot.slane %v5503, 7
      %v5506 = vrot.slane %v5505, 1
      %5507 = vrot.lane.b32.xlu0 %v5506, 96
      %v5508 = vpop.permute.xlu0 %5507
      %v5510 = vld [vmem:[#allocation8 + $0x1] sm:$0x1]
      %v5511 = vsel %vm5407, %v5508, %v5510
      %5512 = vst [vmem:[#allocation8 + $0x1] sm:$0x1] %v5511
      %v5513 = vld [vmem:[#allocation7 + $0x4] sm:$0x1]
      %v5514 = vld [vmem:[#allocation8 + $0x2] sm:$0x1]
      %v5515 = vsel %vm2555, %v5513, %v5514
      %5516 = vst [vmem:[#allocation8 + $0x2] sm:$0x1] %v5515
      %v5517 = vld [vmem:[#allocation7 + $0x4] sm:$0x1]
      %v5520 = vunpack.c.l.s4 1966171168
      %v5521 = vunpack.c.0.s8 %v5520
      %v5522 = vlaneseq
      %v5523 = vshrl.u32 %v5522, 7
      %v5524 = vsub.s32 %v5521, %v5523
      %v5525 = vrot.slane %v5517, %v5524
      %v5527 = vunpack.c.l.s4 1966171168
      %v5528 = vunpack.c.0.s8 %v5527
      %v5529 = vlaneseq
      %v5530 = vshrl.u32 %v5529, 7
      %v5531 = vsub.s32 %v5528, %v5530
      %v5532 = vrot.slane %v5525, %v5531
      %v5534 = vshrl.u32 %v5532, 16
      %v5536 = vrot.slane %v5534, 7
      %v5537 = vrot.slane %v5536, 1
      %5538 = vrot.lane.b32.xlu0 %v5537, 32
      %v5539 = vpop.permute.xlu0 %5538
      %v5541 = vld [vmem:[#allocation8 + $0x2] sm:$0x1]
      %v5542 = vsel %vm5352, %v5539, %v5541
      %5543 = vst [vmem:[#allocation8 + $0x2] sm:$0x1] %v5542
      %v5544 = vld [vmem:[#allocation7 + $0x4] sm:$0x2]
      %v5547 = vunpack.c.l.s4 1966171168
      %v5548 = vunpack.c.0.s8 %v5547
      %v5549 = vlaneseq
      %v5550 = vshrl.u32 %v5549, 7
      %v5551 = vsub.s32 %v5548, %v5550
      %v5552 = vrot.slane %v5544, %v5551
      %v5553 = vcombine.high %v5552, %v5552
      %v5555 = vunpack.c.l.s4 1966171168
      %v5556 = vunpack.c.0.s8 %v5555
      %v5557 = vlaneseq
      %v5558 = vshrl.u32 %v5557, 7
      %v5559 = vsub.s32 %v5556, %v5558
      %v5560 = vrot.slane %v5553, %v5559
      %5561 = vrot.lane.b32.xlu0 %v5560, 64
      %v5562 = vpop.permute.xlu0 %5561
      %v5564 = vld [vmem:[#allocation8 + $0x2] sm:$0x1]
      %v5565 = vsel %vm5377, %v5562, %v5564
      %5566 = vst [vmem:[#allocation8 + $0x2] sm:$0x1] %v5565
      %v5567 = vld [vmem:[#allocation7 + $0x4] sm:$0x2]
      %v5570 = vunpack.c.l.s4 1966171168
      %v5571 = vunpack.c.0.s8 %v5570
      %v5572 = vlaneseq
      %v5573 = vshrl.u32 %v5572, 7
      %v5574 = vsub.s32 %v5571, %v5573
      %v5575 = vrot.slane %v5567, %v5574
      %v5576 = vcombine.high %v5575, %v5575
      %v5578 = vunpack.c.l.s4 1966171168
      %v5579 = vunpack.c.0.s8 %v5578
      %v5580 = vlaneseq
      %v5581 = vshrl.u32 %v5580, 7
      %v5582 = vsub.s32 %v5579, %v5581
      %v5583 = vrot.slane %v5576, %v5582
      %v5585 = vshrl.u32 %v5583, 16
      %v5587 = vrot.slane %v5585, 7
      %v5588 = vrot.slane %v5587, 1
      %5589 = vrot.lane.b32.xlu0 %v5588, 96
      %v5590 = vpop.permute.xlu0 %5589
      %v5592 = vld [vmem:[#allocation8 + $0x2] sm:$0x1]
      %v5593 = vsel %vm5407, %v5590, %v5592
      %5594 = vst [vmem:[#allocation8 + $0x2] sm:$0x1] %v5593
      %v5595 = vld [vmem:[#allocation7 + $0x4] sm:$0x4]
      %v5598 = vunpack.c.l.s4 1966171168
      %v5599 = vunpack.c.0.s8 %v5598
      %v5600 = vlaneseq
      %v5601 = vshrl.u32 %v5600, 7
      %v5602 = vsub.s32 %v5599, %v5601
      %v5603 = vrot.slane %v5595, %v5602
      %v5605 = vunpack.c.l.s4 1966171168
      %v5606 = vunpack.c.0.s8 %v5605
      %v5607 = vlaneseq
      %v5608 = vshrl.u32 %v5607, 7
      %v5609 = vsub.s32 %v5606, %v5608
      %v5610 = vrot.slane %v5603, %v5609
      %v5611 = vcombine.high %v5610, %v5610
      %v5613 = vld [vmem:[#allocation8 + $0x3] sm:$0x1]
      %v5614 = vsel %vm2555, %v5611, %v5613
      %5615 = vst [vmem:[#allocation8 + $0x3] sm:$0x1] %v5614
      %v5616 = vld [vmem:[#allocation7 + $0x4] sm:$0x4]
      %v5619 = vunpack.c.l.s4 1966171168
      %v5620 = vunpack.c.0.s8 %v5619
      %v5621 = vlaneseq
      %v5622 = vshrl.u32 %v5621, 7
      %v5623 = vsub.s32 %v5620, %v5622
      %v5624 = vrot.slane %v5616, %v5623
      %v5626 = vunpack.c.l.s4 1966171168
      %v5627 = vunpack.c.0.s8 %v5626
      %v5628 = vlaneseq
      %v5629 = vshrl.u32 %v5628, 7
      %v5630 = vsub.s32 %v5627, %v5629
      %v5631 = vrot.slane %v5624, %v5630
      %v5632 = vcombine.high %v5631, %v5631
      %v5634 = vshrl.u32 %v5632, 16
      %v5636 = vrot.slane %v5634, 7
      %v5637 = vrot.slane %v5636, 1
      %5638 = vrot.lane.b32.xlu0 %v5637, 32
      %v5639 = vpop.permute.xlu0 %5638
      %v5641 = vld [vmem:[#allocation8 + $0x3] sm:$0x1]
      %v5642 = vsel %vm5352, %v5639, %v5641
      %5643 = vst [vmem:[#allocation8 + $0x3] sm:$0x1] %v5642
      %v5644 = vld [vmem:[#allocation7 + $0x4] sm:$0x8]
      %v5647 = vunpack.c.l.s4 1966171168
      %v5648 = vunpack.c.0.s8 %v5647
      %v5649 = vlaneseq
      %v5650 = vshrl.u32 %v5649, 7
      %v5651 = vsub.s32 %v5648, %v5650
      %v5652 = vrot.slane %v5644, %v5651
      %v5653 = vcombine.high %v5652, %v5652
      %v5655 = vunpack.c.l.s4 1966171168
      %v5656 = vunpack.c.0.s8 %v5655
      %v5657 = vlaneseq
      %v5658 = vshrl.u32 %v5657, 7
      %v5659 = vsub.s32 %v5656, %v5658
      %v5660 = vrot.slane %v5653, %v5659
      %v5661 = vcombine.high %v5660, %v5660
      %5662 = vrot.lane.b32.xlu0 %v5661, 64
      %v5663 = vpop.permute.xlu0 %5662
      %v5665 = vld [vmem:[#allocation8 + $0x3] sm:$0x1]
      %v5666 = vsel %vm5377, %v5663, %v5665
      %5667 = vst [vmem:[#allocation8 + $0x3] sm:$0x1] %v5666
      %v5668 = vld [vmem:[#allocation7 + $0x4] sm:$0x8]
      %v5671 = vunpack.c.l.s4 1966171168
      %v5672 = vunpack.c.0.s8 %v5671
      %v5673 = vlaneseq
      %v5674 = vshrl.u32 %v5673, 7
      %v5675 = vsub.s32 %v5672, %v5674
      %v5676 = vrot.slane %v5668, %v5675
      %v5677 = vcombine.high %v5676, %v5676
      %v5679 = vunpack.c.l.s4 1966171168
      %v5680 = vunpack.c.0.s8 %v5679
      %v5681 = vlaneseq
      %v5682 = vshrl.u32 %v5681, 7
      %v5683 = vsub.s32 %v5680, %v5682
      %v5684 = vrot.slane %v5677, %v5683
      %v5685 = vcombine.high %v5684, %v5684
      %v5687 = vshrl.u32 %v5685, 16
      %v5689 = vrot.slane %v5687, 7
      %v5690 = vrot.slane %v5689, 1
      %5691 = vrot.lane.b32.xlu0 %v5690, 96
      %v5692 = vpop.permute.xlu0 %5691
      %v5694 = vld [vmem:[#allocation8 + $0x3] sm:$0x1]
      %v5695 = vsel %vm5407, %v5692, %v5694
      %5696 = vst [vmem:[#allocation8 + $0x3] sm:$0x1] %v5695
      %v5697 = vld [vmem:[#allocation8] sm:$0xf]
      %v5698 = vld [vmem:[%s7] sm:$0xff]
      %v5699 = vld [vmem:[%s7 + $0x8] sm:$0xff]
      %v5700 = vld [vmem:[%s7 + $0x10] sm:$0xff]
      %v5701 = vld [vmem:[%s7 + $0x18] sm:$0xff]
      %v5702 = vld [vmem:[%s7 + $0x20] sm:$0xff]
      %v5703 = vld [vmem:[%s7 + $0x28] sm:$0xff]
      %v5704 = vld [vmem:[%s7 + $0x30] sm:$0xff]
      %v5705 = vld [vmem:[%s7 + $0x38] sm:$0xff]
      %v5706 = vld [vmem:[%s7 + $0x40] sm:$0xff]
      %v5707 = vld [vmem:[%s7 + $0x48] sm:$0xff]
      %v5708 = vld [vmem:[%s7 + $0x50] sm:$0xff]
      %v5709 = vld [vmem:[%s7 + $0x58] sm:$0xff]
      %v5710 = vld [vmem:[%s7 + $0x60] sm:$0xff]
      %v5711 = vld [vmem:[%s7 + $0x68] sm:$0xff]
      %v5712 = vld [vmem:[%s7 + $0x70] sm:$0xff]
      %v5713 = vld [vmem:[%s7 + $0x78] sm:$0xff]
      %v5714 = vld [vmem:[%s7 + $0x80] sm:$0xff]
      %v5715 = vld [vmem:[%s7 + $0x88] sm:$0xff]
      %v5716 = vld [vmem:[%s7 + $0x90] sm:$0xff]
      %v5717 = vld [vmem:[%s7 + $0x98] sm:$0xff]
      %v5718 = vld [vmem:[%s7 + $0xa0] sm:$0xff]
      %v5719 = vld [vmem:[%s7 + $0xa8] sm:$0xff]
      %v5720 = vld [vmem:[%s7 + $0xb0] sm:$0xff]
      %v5721 = vld [vmem:[%s7 + $0xb8] sm:$0xff]
      %v5722 = vld [vmem:[%s7 + $0xc0] sm:$0xff]
      %v5723 = vld [vmem:[%s7 + $0xc8] sm:$0xff]
      %v5724 = vld [vmem:[%s7 + $0xd0] sm:$0xff]
      %v5725 = vld [vmem:[%s7 + $0xd8] sm:$0xff]
      %v5726 = vld [vmem:[%s7 + $0xe0] sm:$0xff]
      %v5727 = vld [vmem:[%s7 + $0xe8] sm:$0xff]
      %v5728 = vld [vmem:[%s7 + $0xf0] sm:$0xff]
      %v5729 = vld [vmem:[%s7 + $0xf8] sm:$0xff]
      %v5730 = vld [vmem:[%s7 + $0x100] sm:$0xff]
      %v5731 = vld [vmem:[%s7 + $0x108] sm:$0xff]
      %v5732 = vld [vmem:[%s7 + $0x110] sm:$0xff]
      %v5733 = vld [vmem:[%s7 + $0x118] sm:$0xff]
      %v5734 = vld [vmem:[%s7 + $0x120] sm:$0xff]
      %v5735 = vld [vmem:[%s7 + $0x128] sm:$0xff]
      %v5736 = vld [vmem:[%s7 + $0x130] sm:$0xff]
      %v5737 = vld [vmem:[%s7 + $0x138] sm:$0xff]
      %v5738 = vld [vmem:[%s7 + $0x140] sm:$0xff]
      %v5739 = vld [vmem:[%s7 + $0x148] sm:$0xff]
      %v5740 = vld [vmem:[%s7 + $0x150] sm:$0xff]
      %v5741 = vld [vmem:[%s7 + $0x158] sm:$0xff]
      %v5742 = vld [vmem:[%s7 + $0x160] sm:$0xff]
      %v5743 = vld [vmem:[%s7 + $0x168] sm:$0xff]
      %v5744 = vld [vmem:[%s7 + $0x170] sm:$0xff]
      %v5745 = vld [vmem:[%s7 + $0x178] sm:$0xff]
      %v5746 = vld [vmem:[%s7 + $0x180] sm:$0xff]
      %v5747 = vld [vmem:[%s7 + $0x188] sm:$0xff]
      %v5748 = vld [vmem:[%s7 + $0x190] sm:$0xff]
      %v5749 = vld [vmem:[%s7 + $0x198] sm:$0xff]
      %v5750 = vld [vmem:[%s7 + $0x1a0] sm:$0xff]
      %v5751 = vld [vmem:[%s7 + $0x1a8] sm:$0xff]
      %v5752 = vld [vmem:[%s7 + $0x1b0] sm:$0xff]
      %v5753 = vld [vmem:[%s7 + $0x1b8] sm:$0xff]
      %v5754 = vld [vmem:[%s7 + $0x1c0] sm:$0xff]
      %v5755 = vld [vmem:[%s7 + $0x1c8] sm:$0xff]
      %v5756 = vld [vmem:[%s7 + $0x1d0] sm:$0xff]
      %v5757 = vld [vmem:[%s7 + $0x1d8] sm:$0xff]
      %v5758 = vld [vmem:[%s7 + $0x1e0] sm:$0xff]
      %v5759 = vld [vmem:[%s7 + $0x1e8] sm:$0xff]
      %v5760 = vld [vmem:[%s7 + $0x1f0] sm:$0xff]
      %v5761 = vld [vmem:[%s7 + $0x1f8] sm:$0xff]
      %v5762 = vld [vmem:[%s7 + $0x200] sm:$0xff]
      %v5763 = vld [vmem:[%s7 + $0x208] sm:$0xff]
      %v5764 = vld [vmem:[%s7 + $0x210] sm:$0xff]
      %v5765 = vld [vmem:[%s7 + $0x218] sm:$0xff]
      %v5766 = vld [vmem:[%s7 + $0x220] sm:$0xff]
      %v5767 = vld [vmem:[%s7 + $0x228] sm:$0xff]
      %v5768 = vld [vmem:[%s7 + $0x230] sm:$0xff]
      %v5769 = vld [vmem:[%s7 + $0x238] sm:$0xff]
      %v5770 = vld [vmem:[%s7 + $0x240] sm:$0xff]
      %v5771 = vld [vmem:[%s7 + $0x248] sm:$0xff]
      %v5772 = vld [vmem:[%s7 + $0x250] sm:$0xff]
      %v5773 = vld [vmem:[%s7 + $0x258] sm:$0xff]
      %v5774 = vld [vmem:[%s7 + $0x260] sm:$0xff]
      %v5775 = vld [vmem:[%s7 + $0x268] sm:$0xff]
      %v5776 = vld [vmem:[%s7 + $0x270] sm:$0xff]
      %v5777 = vld [vmem:[%s7 + $0x278] sm:$0xff]
      %v5778 = vld [vmem:[%s7 + $0x280] sm:$0xff]
      %v5779 = vld [vmem:[%s7 + $0x288] sm:$0xff]
      %v5780 = vld [vmem:[%s7 + $0x290] sm:$0xff]
      %v5781 = vld [vmem:[%s7 + $0x298] sm:$0xff]
      %v5782 = vld [vmem:[%s7 + $0x2a0] sm:$0xff]
      %v5783 = vld [vmem:[%s7 + $0x2a8] sm:$0xff]
      %v5784 = vld [vmem:[%s7 + $0x2b0] sm:$0xff]
      %v5785 = vld [vmem:[%s7 + $0x2b8] sm:$0xff]
      %v5786 = vld [vmem:[%s7 + $0x2c0] sm:$0xff]
      %v5787 = vld [vmem:[%s7 + $0x2c8] sm:$0xff]
      %v5788 = vld [vmem:[%s7 + $0x2d0] sm:$0xff]
      %v5789 = vld [vmem:[%s7 + $0x2d8] sm:$0xff]
      %v5790 = vld [vmem:[%s7 + $0x2e0] sm:$0xff]
      %v5791 = vld [vmem:[%s7 + $0x2e8] sm:$0xff]
      %v5792 = vld [vmem:[%s7 + $0x2f0] sm:$0xff]
      %v5793 = vld [vmem:[%s7 + $0x2f8] sm:$0xff]
      %v5794 = vld [vmem:[%s7 + $0x300] sm:$0xff]
      %v5795 = vld [vmem:[%s7 + $0x308] sm:$0xff]
      %v5796 = vld [vmem:[%s7 + $0x310] sm:$0xff]
      %v5797 = vld [vmem:[%s7 + $0x318] sm:$0xff]
      %v5798 = vld [vmem:[%s7 + $0x320] sm:$0xff]
      %v5799 = vld [vmem:[%s7 + $0x328] sm:$0xff]
      %v5800 = vld [vmem:[%s7 + $0x330] sm:$0xff]
      %v5801 = vld [vmem:[%s7 + $0x338] sm:$0xff]
      %v5802 = vld [vmem:[%s7 + $0x340] sm:$0xff]
      %v5803 = vld [vmem:[%s7 + $0x348] sm:$0xff]
      %v5804 = vld [vmem:[%s7 + $0x350] sm:$0xff]
      %v5805 = vld [vmem:[%s7 + $0x358] sm:$0xff]
      %v5806 = vld [vmem:[%s7 + $0x360] sm:$0xff]
      %v5807 = vld [vmem:[%s7 + $0x368] sm:$0xff]
      %v5808 = vld [vmem:[%s7 + $0x370] sm:$0xff]
      %v5809 = vld [vmem:[%s7 + $0x378] sm:$0xff]
      %v5810 = vld [vmem:[%s7 + $0x380] sm:$0xff]
      %v5811 = vld [vmem:[%s7 + $0x388] sm:$0xff]
      %v5812 = vld [vmem:[%s7 + $0x390] sm:$0xff]
      %v5813 = vld [vmem:[%s7 + $0x398] sm:$0xff]
      %v5814 = vld [vmem:[%s7 + $0x3a0] sm:$0xff]
      %v5815 = vld [vmem:[%s7 + $0x3a8] sm:$0xff]
      %v5816 = vld [vmem:[%s7 + $0x3b0] sm:$0xff]
      %v5817 = vld [vmem:[%s7 + $0x3b8] sm:$0xff]
      %v5818 = vld [vmem:[%s7 + $0x3c0] sm:$0xff]
      %v5819 = vld [vmem:[%s7 + $0x3c8] sm:$0xff]
      %v5820 = vld [vmem:[%s7 + $0x3d0] sm:$0xff]
      %v5821 = vld [vmem:[%s7 + $0x3d8] sm:$0xff]
      %v5822 = vld [vmem:[%s7 + $0x3e0] sm:$0xff]
      %v5823 = vld [vmem:[%s7 + $0x3e8] sm:$0xff]
      %v5824 = vld [vmem:[%s7 + $0x3f0] sm:$0xff]
      %v5825 = vld [vmem:[%s7 + $0x3f8] sm:$0xff]
      %v5826 = vld [vmem:[%s8] sm:$0xf]
      %v5829 = vunpack.c.l.s4 1966171168
      %v5830 = vunpack.c.0.s8 %v5829
      %v5831 = vlaneseq
      %v5832 = vshrl.u32 %v5831, 7
      %v5833 = vsub.s32 %v5830, %v5832
      %v5834 = vrot.slane %v5697, %v5833
      %v5835 = vcombine.high %v5834, %v5834
      %v5837 = vunpack.c.l.s4 1966171168
      %v5838 = vunpack.c.0.s8 %v5837
      %v5839 = vlaneseq
      %v5840 = vshrl.u32 %v5839, 7
      %v5841 = vsub.s32 %v5838, %v5840
      %v5842 = vrot.slane %v5834, %v5841
      %v5844 = vunpack.c.l.s4 1966171168
      %v5845 = vunpack.c.0.s8 %v5844
      %v5846 = vlaneseq
      %v5847 = vshrl.u32 %v5846, 7
      %v5848 = vsub.s32 %v5845, %v5847
      %v5849 = vrot.slane %v5835, %v5848
      %v5850 = vcombine.high %v5842, %v5842
      %v5851 = vcombine.high %v5849, %v5849
      %v5984 = vunpack.c.l.b16 %v5698
      %v5985 = vunpack.c.h.b16 %v5698
      %v5986 = vunpack.c.l.b16 %v5699
      %v5987 = vunpack.c.h.b16 %v5699
      %v5988 = vunpack.c.l.b16 %v5700
      %v5989 = vunpack.c.h.b16 %v5700
      %v5990 = vunpack.c.l.b16 %v5701
      %v5991 = vunpack.c.h.b16 %v5701
      %v5992 = vunpack.c.l.b16 %v5702
      %v5993 = vunpack.c.h.b16 %v5702
      %v5994 = vunpack.c.l.b16 %v5703
      %v5995 = vunpack.c.h.b16 %v5703
      %v5996 = vunpack.c.l.b16 %v5704
      %v5997 = vunpack.c.h.b16 %v5704
      %v5998 = vunpack.c.l.b16 %v5705
      %v5999 = vunpack.c.h.b16 %v5705
      %v6000 = vunpack.c.l.b16 %v5706
      %v6001 = vunpack.c.h.b16 %v5706
      %v6002 = vunpack.c.l.b16 %v5707
      %v6003 = vunpack.c.h.b16 %v5707
      %v6004 = vunpack.c.l.b16 %v5708
      %v6005 = vunpack.c.h.b16 %v5708
      %v6006 = vunpack.c.l.b16 %v5709
      %v6007 = vunpack.c.h.b16 %v5709
      %v6008 = vunpack.c.l.b16 %v5710
      %v6009 = vunpack.c.h.b16 %v5710
      %v6010 = vunpack.c.l.b16 %v5711
      %v6011 = vunpack.c.h.b16 %v5711
      %v6012 = vunpack.c.l.b16 %v5712
      %v6013 = vunpack.c.h.b16 %v5712
      %v6014 = vunpack.c.l.b16 %v5713
      %v6015 = vunpack.c.h.b16 %v5713
      %v6016 = vunpack.c.l.b16 %v5714
      %v6017 = vunpack.c.h.b16 %v5714
      %v6018 = vunpack.c.l.b16 %v5715
      %v6019 = vunpack.c.h.b16 %v5715
      %v6020 = vunpack.c.l.b16 %v5716
      %v6021 = vunpack.c.h.b16 %v5716
      %v6022 = vunpack.c.l.b16 %v5717
      %v6023 = vunpack.c.h.b16 %v5717
      %v6024 = vunpack.c.l.b16 %v5718
      %v6025 = vunpack.c.h.b16 %v5718
      %v6026 = vunpack.c.l.b16 %v5719
      %v6027 = vunpack.c.h.b16 %v5719
      %v6028 = vunpack.c.l.b16 %v5720
      %v6029 = vunpack.c.h.b16 %v5720
      %v6030 = vunpack.c.l.b16 %v5721
      %v6031 = vunpack.c.h.b16 %v5721
      %v6032 = vunpack.c.l.b16 %v5722
      %v6033 = vunpack.c.h.b16 %v5722
      %v6034 = vunpack.c.l.b16 %v5723
      %v6035 = vunpack.c.h.b16 %v5723
      %v6036 = vunpack.c.l.b16 %v5724
      %v6037 = vunpack.c.h.b16 %v5724
      %v6038 = vunpack.c.l.b16 %v5725
      %v6039 = vunpack.c.h.b16 %v5725
      %v6040 = vunpack.c.l.b16 %v5726
      %v6041 = vunpack.c.h.b16 %v5726
      %v6042 = vunpack.c.l.b16 %v5727
      %v6043 = vunpack.c.h.b16 %v5727
      %v6044 = vunpack.c.l.b16 %v5728
      %v6045 = vunpack.c.h.b16 %v5728
      %v6046 = vunpack.c.l.b16 %v5729
      %v6047 = vunpack.c.h.b16 %v5729
      %v6048 = vunpack.c.l.b16 %v5730
      %v6049 = vunpack.c.h.b16 %v5730
      %v6050 = vunpack.c.l.b16 %v5731
      %v6051 = vunpack.c.h.b16 %v5731
      %v6052 = vunpack.c.l.b16 %v5732
      %v6053 = vunpack.c.h.b16 %v5732
      %v6054 = vunpack.c.l.b16 %v5733
      %v6055 = vunpack.c.h.b16 %v5733
      %v6056 = vunpack.c.l.b16 %v5734
      %v6057 = vunpack.c.h.b16 %v5734
      %v6058 = vunpack.c.l.b16 %v5735
      %v6059 = vunpack.c.h.b16 %v5735
      %v6060 = vunpack.c.l.b16 %v5736
      %v6061 = vunpack.c.h.b16 %v5736
      %v6062 = vunpack.c.l.b16 %v5737
      %v6063 = vunpack.c.h.b16 %v5737
      %v6064 = vunpack.c.l.b16 %v5738
      %v6065 = vunpack.c.h.b16 %v5738
      %v6066 = vunpack.c.l.b16 %v5739
      %v6067 = vunpack.c.h.b16 %v5739
      %v6068 = vunpack.c.l.b16 %v5740
      %v6069 = vunpack.c.h.b16 %v5740
      %v6070 = vunpack.c.l.b16 %v5741
      %v6071 = vunpack.c.h.b16 %v5741
      %v6072 = vunpack.c.l.b16 %v5742
      %v6073 = vunpack.c.h.b16 %v5742
      %v6074 = vunpack.c.l.b16 %v5743
      %v6075 = vunpack.c.h.b16 %v5743
      %v6076 = vunpack.c.l.b16 %v5744
      %v6077 = vunpack.c.h.b16 %v5744
      %v6078 = vunpack.c.l.b16 %v5745
      %v6079 = vunpack.c.h.b16 %v5745
      %v6080 = vunpack.c.l.b16 %v5746
      %v6081 = vunpack.c.h.b16 %v5746
      %v6082 = vunpack.c.l.b16 %v5747
      %v6083 = vunpack.c.h.b16 %v5747
      %v6084 = vunpack.c.l.b16 %v5748
      %v6085 = vunpack.c.h.b16 %v5748
      %v6086 = vunpack.c.l.b16 %v5749
      %v6087 = vunpack.c.h.b16 %v5749
      %v6088 = vunpack.c.l.b16 %v5750
      %v6089 = vunpack.c.h.b16 %v5750
      %v6090 = vunpack.c.l.b16 %v5751
      %v6091 = vunpack.c.h.b16 %v5751
      %v6092 = vunpack.c.l.b16 %v5752
      %v6093 = vunpack.c.h.b16 %v5752
      %v6094 = vunpack.c.l.b16 %v5753
      %v6095 = vunpack.c.h.b16 %v5753
      %v6096 = vunpack.c.l.b16 %v5754
      %v6097 = vunpack.c.h.b16 %v5754
      %v6098 = vunpack.c.l.b16 %v5755
      %v6099 = vunpack.c.h.b16 %v5755
      %v6100 = vunpack.c.l.b16 %v5756
      %v6101 = vunpack.c.h.b16 %v5756
      %v6102 = vunpack.c.l.b16 %v5757
      %v6103 = vunpack.c.h.b16 %v5757
      %v6104 = vunpack.c.l.b16 %v5758
      %v6105 = vunpack.c.h.b16 %v5758
      %v6106 = vunpack.c.l.b16 %v5759
      %v6107 = vunpack.c.h.b16 %v5759
      %v6108 = vunpack.c.l.b16 %v5760
      %v6109 = vunpack.c.h.b16 %v5760
      %v6110 = vunpack.c.l.b16 %v5761
      %v6111 = vunpack.c.h.b16 %v5761
      %v6112 = vunpack.c.l.b16 %v5762
      %v6113 = vunpack.c.h.b16 %v5762
      %v6114 = vunpack.c.l.b16 %v5763
      %v6115 = vunpack.c.h.b16 %v5763
      %v6116 = vunpack.c.l.b16 %v5764
      %v6117 = vunpack.c.h.b16 %v5764
      %v6118 = vunpack.c.l.b16 %v5765
      %v6119 = vunpack.c.h.b16 %v5765
      %v6120 = vunpack.c.l.b16 %v5766
      %v6121 = vunpack.c.h.b16 %v5766
      %v6122 = vunpack.c.l.b16 %v5767
      %v6123 = vunpack.c.h.b16 %v5767
      %v6124 = vunpack.c.l.b16 %v5768
      %v6125 = vunpack.c.h.b16 %v5768
      %v6126 = vunpack.c.l.b16 %v5769
      %v6127 = vunpack.c.h.b16 %v5769
      %v6128 = vunpack.c.l.b16 %v5770
      %v6129 = vunpack.c.h.b16 %v5770
      %v6130 = vunpack.c.l.b16 %v5771
      %v6131 = vunpack.c.h.b16 %v5771
      %v6132 = vunpack.c.l.b16 %v5772
      %v6133 = vunpack.c.h.b16 %v5772
      %v6134 = vunpack.c.l.b16 %v5773
      %v6135 = vunpack.c.h.b16 %v5773
      %v6136 = vunpack.c.l.b16 %v5774
      %v6137 = vunpack.c.h.b16 %v5774
      %v6138 = vunpack.c.l.b16 %v5775
      %v6139 = vunpack.c.h.b16 %v5775
      %v6140 = vunpack.c.l.b16 %v5776
      %v6141 = vunpack.c.h.b16 %v5776
      %v6142 = vunpack.c.l.b16 %v5777
      %v6143 = vunpack.c.h.b16 %v5777
      %v6144 = vunpack.c.l.b16 %v5778
      %v6145 = vunpack.c.h.b16 %v5778
      %v6146 = vunpack.c.l.b16 %v5779
      %v6147 = vunpack.c.h.b16 %v5779
      %v6148 = vunpack.c.l.b16 %v5780
      %v6149 = vunpack.c.h.b16 %v5780
      %v6150 = vunpack.c.l.b16 %v5781
      %v6151 = vunpack.c.h.b16 %v5781
      %v6152 = vunpack.c.l.b16 %v5782
      %v6153 = vunpack.c.h.b16 %v5782
      %v6154 = vunpack.c.l.b16 %v5783
      %v6155 = vunpack.c.h.b16 %v5783
      %v6156 = vunpack.c.l.b16 %v5784
      %v6157 = vunpack.c.h.b16 %v5784
      %v6158 = vunpack.c.l.b16 %v5785
      %v6159 = vunpack.c.h.b16 %v5785
      %v6160 = vunpack.c.l.b16 %v5786
      %v6161 = vunpack.c.h.b16 %v5786
      %v6162 = vunpack.c.l.b16 %v5787
      %v6163 = vunpack.c.h.b16 %v5787
      %v6164 = vunpack.c.l.b16 %v5788
      %v6165 = vunpack.c.h.b16 %v5788
      %v6166 = vunpack.c.l.b16 %v5789
      %v6167 = vunpack.c.h.b16 %v5789
      %v6168 = vunpack.c.l.b16 %v5790
      %v6169 = vunpack.c.h.b16 %v5790
      %v6170 = vunpack.c.l.b16 %v5791
      %v6171 = vunpack.c.h.b16 %v5791
      %v6172 = vunpack.c.l.b16 %v5792
      %v6173 = vunpack.c.h.b16 %v5792
      %v6174 = vunpack.c.l.b16 %v5793
      %v6175 = vunpack.c.h.b16 %v5793
      %v6176 = vunpack.c.l.b16 %v5794
      %v6177 = vunpack.c.h.b16 %v5794
      %v6178 = vunpack.c.l.b16 %v5795
      %v6179 = vunpack.c.h.b16 %v5795
      %v6180 = vunpack.c.l.b16 %v5796
      %v6181 = vunpack.c.h.b16 %v5796
      %v6182 = vunpack.c.l.b16 %v5797
      %v6183 = vunpack.c.h.b16 %v5797
      %v6184 = vunpack.c.l.b16 %v5798
      %v6185 = vunpack.c.h.b16 %v5798
      %v6186 = vunpack.c.l.b16 %v5799
      %v6187 = vunpack.c.h.b16 %v5799
      %v6188 = vunpack.c.l.b16 %v5800
      %v6189 = vunpack.c.h.b16 %v5800
      %v6190 = vunpack.c.l.b16 %v5801
      %v6191 = vunpack.c.h.b16 %v5801
      %v6192 = vunpack.c.l.b16 %v5802
      %v6193 = vunpack.c.h.b16 %v5802
      %v6194 = vunpack.c.l.b16 %v5803
      %v6195 = vunpack.c.h.b16 %v5803
      %v6196 = vunpack.c.l.b16 %v5804
      %v6197 = vunpack.c.h.b16 %v5804
      %v6198 = vunpack.c.l.b16 %v5805
      %v6199 = vunpack.c.h.b16 %v5805
      %v6200 = vunpack.c.l.b16 %v5806
      %v6201 = vunpack.c.h.b16 %v5806
      %v6202 = vunpack.c.l.b16 %v5807
      %v6203 = vunpack.c.h.b16 %v5807
      %v6204 = vunpack.c.l.b16 %v5808
      %v6205 = vunpack.c.h.b16 %v5808
      %v6206 = vunpack.c.l.b16 %v5809
      %v6207 = vunpack.c.h.b16 %v5809
      %v6208 = vunpack.c.l.b16 %v5810
      %v6209 = vunpack.c.h.b16 %v5810
      %v6210 = vunpack.c.l.b16 %v5811
      %v6211 = vunpack.c.h.b16 %v5811
      %v6212 = vunpack.c.l.b16 %v5812
      %v6213 = vunpack.c.h.b16 %v5812
      %v6214 = vunpack.c.l.b16 %v5813
      %v6215 = vunpack.c.h.b16 %v5813
      %v6216 = vunpack.c.l.b16 %v5814
      %v6217 = vunpack.c.h.b16 %v5814
      %v6218 = vunpack.c.l.b16 %v5815
      %v6219 = vunpack.c.h.b16 %v5815
      %v6220 = vunpack.c.l.b16 %v5816
      %v6221 = vunpack.c.h.b16 %v5816
      %v6222 = vunpack.c.l.b16 %v5817
      %v6223 = vunpack.c.h.b16 %v5817
      %v6224 = vunpack.c.l.b16 %v5818
      %v6225 = vunpack.c.h.b16 %v5818
      %v6226 = vunpack.c.l.b16 %v5819
      %v6227 = vunpack.c.h.b16 %v5819
      %v6228 = vunpack.c.l.b16 %v5820
      %v6229 = vunpack.c.h.b16 %v5820
      %v6230 = vunpack.c.l.b16 %v5821
      %v6231 = vunpack.c.h.b16 %v5821
      %v6232 = vunpack.c.l.b16 %v5822
      %v6233 = vunpack.c.h.b16 %v5822
      %v6234 = vunpack.c.l.b16 %v5823
      %v6235 = vunpack.c.h.b16 %v5823
      %v6236 = vunpack.c.l.b16 %v5824
      %v6237 = vunpack.c.h.b16 %v5824
      %v6238 = vunpack.c.l.b16 %v5825
      %v6239 = vunpack.c.h.b16 %v5825
      %v6240 = vpack.c.b16 %v5988, %v5984
      %v6241 = vpack.c.b16 %v5989, %v5985
      %v6242 = vpack.c.b16 %v5990, %v5986
      %v6243 = vpack.c.b16 %v5991, %v5987
      %v6244 = vpack.c.b16 %v5996, %v5992
      %v6245 = vpack.c.b16 %v5997, %v5993
      %v6246 = vpack.c.b16 %v5998, %v5994
      %v6247 = vpack.c.b16 %v5999, %v5995
      %v6248 = vpack.c.b16 %v6004, %v6000
      %v6249 = vpack.c.b16 %v6005, %v6001
      %v6250 = vpack.c.b16 %v6006, %v6002
      %v6251 = vpack.c.b16 %v6007, %v6003
      %v6252 = vpack.c.b16 %v6012, %v6008
      %v6253 = vpack.c.b16 %v6013, %v6009
      %v6254 = vpack.c.b16 %v6014, %v6010
      %v6255 = vpack.c.b16 %v6015, %v6011
      %v6256 = vpack.c.b16 %v6020, %v6016
      %v6257 = vpack.c.b16 %v6021, %v6017
      %v6258 = vpack.c.b16 %v6022, %v6018
      %v6259 = vpack.c.b16 %v6023, %v6019
      %v6260 = vpack.c.b16 %v6028, %v6024
      %v6261 = vpack.c.b16 %v6029, %v6025
      %v6262 = vpack.c.b16 %v6030, %v6026
      %v6263 = vpack.c.b16 %v6031, %v6027
      %v6264 = vpack.c.b16 %v6036, %v6032
      %v6265 = vpack.c.b16 %v6037, %v6033
      %v6266 = vpack.c.b16 %v6038, %v6034
      %v6267 = vpack.c.b16 %v6039, %v6035
      %v6268 = vpack.c.b16 %v6044, %v6040
      %v6269 = vpack.c.b16 %v6045, %v6041
      %v6270 = vpack.c.b16 %v6046, %v6042
      %v6271 = vpack.c.b16 %v6047, %v6043
      %v6272 = vpack.c.b16 %v6052, %v6048
      %v6273 = vpack.c.b16 %v6053, %v6049
      %v6274 = vpack.c.b16 %v6054, %v6050
      %v6275 = vpack.c.b16 %v6055, %v6051
      %v6276 = vpack.c.b16 %v6060, %v6056
      %v6277 = vpack.c.b16 %v6061, %v6057
      %v6278 = vpack.c.b16 %v6062, %v6058
      %v6279 = vpack.c.b16 %v6063, %v6059
      %v6280 = vpack.c.b16 %v6068, %v6064
      %v6281 = vpack.c.b16 %v6069, %v6065
      %v6282 = vpack.c.b16 %v6070, %v6066
      %v6283 = vpack.c.b16 %v6071, %v6067
      %v6284 = vpack.c.b16 %v6076, %v6072
      %v6285 = vpack.c.b16 %v6077, %v6073
      %v6286 = vpack.c.b16 %v6078, %v6074
      %v6287 = vpack.c.b16 %v6079, %v6075
      %v6288 = vpack.c.b16 %v6084, %v6080
      %v6289 = vpack.c.b16 %v6085, %v6081
      %v6290 = vpack.c.b16 %v6086, %v6082
      %v6291 = vpack.c.b16 %v6087, %v6083
      %v6292 = vpack.c.b16 %v6092, %v6088
      %v6293 = vpack.c.b16 %v6093, %v6089
      %v6294 = vpack.c.b16 %v6094, %v6090
      %v6295 = vpack.c.b16 %v6095, %v6091
      %v6296 = vpack.c.b16 %v6100, %v6096
      %v6297 = vpack.c.b16 %v6101, %v6097
      %v6298 = vpack.c.b16 %v6102, %v6098
      %v6299 = vpack.c.b16 %v6103, %v6099
      %v6300 = vpack.c.b16 %v6108, %v6104
      %v6301 = vpack.c.b16 %v6109, %v6105
      %v6302 = vpack.c.b16 %v6110, %v6106
      %v6303 = vpack.c.b16 %v6111, %v6107
      %v6304 = vpack.c.b16 %v6116, %v6112
      %v6305 = vpack.c.b16 %v6117, %v6113
      %v6306 = vpack.c.b16 %v6118, %v6114
      %v6307 = vpack.c.b16 %v6119, %v6115
      %v6308 = vpack.c.b16 %v6124, %v6120
      %v6309 = vpack.c.b16 %v6125, %v6121
      %v6310 = vpack.c.b16 %v6126, %v6122
      %v6311 = vpack.c.b16 %v6127, %v6123
      %v6312 = vpack.c.b16 %v6132, %v6128
      %v6313 = vpack.c.b16 %v6133, %v6129
      %v6314 = vpack.c.b16 %v6134, %v6130
      %v6315 = vpack.c.b16 %v6135, %v6131
      %v6316 = vpack.c.b16 %v6140, %v6136
      %v6317 = vpack.c.b16 %v6141, %v6137
      %v6318 = vpack.c.b16 %v6142, %v6138
      %v6319 = vpack.c.b16 %v6143, %v6139
      %v6320 = vpack.c.b16 %v6148, %v6144
      %v6321 = vpack.c.b16 %v6149, %v6145
      %v6322 = vpack.c.b16 %v6150, %v6146
      %v6323 = vpack.c.b16 %v6151, %v6147
      %v6324 = vpack.c.b16 %v6156, %v6152
      %v6325 = vpack.c.b16 %v6157, %v6153
      %v6326 = vpack.c.b16 %v6158, %v6154
      %v6327 = vpack.c.b16 %v6159, %v6155
      %v6328 = vpack.c.b16 %v6164, %v6160
      %v6329 = vpack.c.b16 %v6165, %v6161
      %v6330 = vpack.c.b16 %v6166, %v6162
      %v6331 = vpack.c.b16 %v6167, %v6163
      %v6332 = vpack.c.b16 %v6172, %v6168
      %v6333 = vpack.c.b16 %v6173, %v6169
      %v6334 = vpack.c.b16 %v6174, %v6170
      %v6335 = vpack.c.b16 %v6175, %v6171
      %v6336 = vpack.c.b16 %v6180, %v6176
      %v6337 = vpack.c.b16 %v6181, %v6177
      %v6338 = vpack.c.b16 %v6182, %v6178
      %v6339 = vpack.c.b16 %v6183, %v6179
      %v6340 = vpack.c.b16 %v6188, %v6184
      %v6341 = vpack.c.b16 %v6189, %v6185
      %v6342 = vpack.c.b16 %v6190, %v6186
      %v6343 = vpack.c.b16 %v6191, %v6187
      %v6344 = vpack.c.b16 %v6196, %v6192
      %v6345 = vpack.c.b16 %v6197, %v6193
      %v6346 = vpack.c.b16 %v6198, %v6194
      %v6347 = vpack.c.b16 %v6199, %v6195
      %v6348 = vpack.c.b16 %v6204, %v6200
      %v6349 = vpack.c.b16 %v6205, %v6201
      %v6350 = vpack.c.b16 %v6206, %v6202
      %v6351 = vpack.c.b16 %v6207, %v6203
      %v6352 = vpack.c.b16 %v6212, %v6208
      %v6353 = vpack.c.b16 %v6213, %v6209
      %v6354 = vpack.c.b16 %v6214, %v6210
      %v6355 = vpack.c.b16 %v6215, %v6211
      %v6356 = vpack.c.b16 %v6220, %v6216
      %v6357 = vpack.c.b16 %v6221, %v6217
      %v6358 = vpack.c.b16 %v6222, %v6218
      %v6359 = vpack.c.b16 %v6223, %v6219
      %v6360 = vpack.c.b16 %v6228, %v6224
      %v6361 = vpack.c.b16 %v6229, %v6225
      %v6362 = vpack.c.b16 %v6230, %v6226
      %v6363 = vpack.c.b16 %v6231, %v6227
      %v6364 = vpack.c.b16 %v6236, %v6232
      %v6365 = vpack.c.b16 %v6237, %v6233
      %v6366 = vpack.c.b16 %v6238, %v6234
      %v6367 = vpack.c.b16 %v6239, %v6235
      %v6497 = vlaneseq
      %v6498 = vshrl.u32 %v6497, 7
      %v6499 = vsub.s32 0, %v6498
      %v6500 = vrot.slane %v5826, %v6499
      %v6501 = vlaneseq
      %v6502 = vshrl.u32 %v6501, 7
      %v6503 = vsub.s32 1, %v6502
      %v6504 = vrot.slane %v5826, %v6503
      %v6505 = vlaneseq
      %v6506 = vshrl.u32 %v6505, 7
      %v6507 = vsub.s32 2, %v6506
      %v6508 = vrot.slane %v5826, %v6507
      %v6509 = vlaneseq
      %v6510 = vshrl.u32 %v6509, 7
      %v6511 = vsub.s32 3, %v6510
      %v6512 = vrot.slane %v5826, %v6511
      %6517 = vmatprep.subr.bf16.mxu0 %v6269
      %6518 = vmatpush1.bf16.msra.mxu0 %v6268
      %6519 = vmatprep.subr.bf16.mxu0 %v6265
      %6520 = vmatpush1.bf16.msra.mxu0 %v6264
      %6521 = vmatprep.subr.bf16.mxu0 %v6261
      %6522 = vmatpush1.bf16.msra.mxu0 %v6260
      %6523 = vmatprep.subr.bf16.mxu0 %v6257
      %6524 = vmatpush1.bf16.msra.mxu0 %v6256
      %6525 = vmatprep.subr.bf16.mxu0 %v6253
      %6526 = vmatpush1.bf16.msra.mxu0 %v6252
      %6527 = vmatprep.subr.bf16.mxu0 %v6249
      %6528 = vmatpush1.bf16.msra.mxu0 %v6248
      %6529 = vmatprep.subr.bf16.mxu0 %v6245
      %6530 = vmatpush1.bf16.msra.mxu0 %v6244
      %6531 = vmatprep.subr.bf16.mxu0 %v6241
      %6532 = vmatpush1.bf16.msra.mxu0 %v6240
      %6533 = vmatprep.subr.bf16.mxu0 %v6301
      %6534 = vmatpush2.bf16.msra.mxu0 %v6300
      %6535 = vmatprep.subr.bf16.mxu0 %v6297
      %6536 = vmatpush2.bf16.msra.mxu0 %v6296
      %6537 = vmatprep.subr.bf16.mxu0 %v6293
      %6538 = vmatpush2.bf16.msra.mxu0 %v6292
      %6539 = vmatprep.subr.bf16.mxu0 %v6289
      %6540 = vmatpush2.bf16.msra.mxu0 %v6288
      %6541 = vmatprep.subr.bf16.mxu0 %v6285
      %6542 = vmatpush2.bf16.msra.mxu0 %v6284
      %6543 = vmatprep.subr.bf16.mxu0 %v6281
      %6544 = vmatpush2.bf16.msra.mxu0 %v6280
      %6545 = vmatprep.subr.bf16.mxu0 %v6277
      %6546 = vmatpush2.bf16.msra.mxu0 %v6276
      %6547 = vmatprep.subr.bf16.mxu0 %v6273
      %6548 = vmatpush2.bf16.msra.mxu0 %v6272
      %6549 = vmatprep.mubr.bf16.mxu0 %v5849
      %6550 = vmatmul.mubr.bf16.gmra.mxu0 %v5842
      %v6551 = vpop.f32.mrf.mxu0
      %v6552 = vadd.f32 %v6500, %v6551
      %v6553 = vpop.f32.mrf.mxu0
      %v6554 = vadd.f32 %v6504, %v6553
      %v6555 = vpop.f32.mrf.mxu0
      %v6556 = vpop.f32.mrf.mxu0
      %6557 = vdwg.mxu0
      %6558 = vmatprep.subr.bf16.mxu0 %v6333
      %6559 = vmatpush1.bf16.msra.mxu0 %v6332
      %6560 = vmatprep.subr.bf16.mxu0 %v6329
      %6561 = vmatpush1.bf16.msra.mxu0 %v6328
      %6562 = vmatprep.subr.bf16.mxu0 %v6325
      %6563 = vmatpush1.bf16.msra.mxu0 %v6324
      %6564 = vmatprep.subr.bf16.mxu0 %v6321
      %6565 = vmatpush1.bf16.msra.mxu0 %v6320
      %6566 = vmatprep.subr.bf16.mxu0 %v6317
      %6567 = vmatpush1.bf16.msra.mxu0 %v6316
      %6568 = vmatprep.subr.bf16.mxu0 %v6313
      %6569 = vmatpush1.bf16.msra.mxu0 %v6312
      %6570 = vmatprep.subr.bf16.mxu0 %v6309
      %6571 = vmatpush1.bf16.msra.mxu0 %v6308
      %6572 = vmatprep.subr.bf16.mxu0 %v6305
      %6573 = vmatpush1.bf16.msra.mxu0 %v6304
      %6574 = vmatprep.subr.bf16.mxu0 %v6365
      %6575 = vmatpush2.bf16.msra.mxu0 %v6364
      %6576 = vmatprep.subr.bf16.mxu0 %v6361
      %6577 = vmatpush2.bf16.msra.mxu0 %v6360
      %6578 = vmatprep.subr.bf16.mxu0 %v6357
      %6579 = vmatpush2.bf16.msra.mxu0 %v6356
      %6580 = vmatprep.subr.bf16.mxu0 %v6353
      %6581 = vmatpush2.bf16.msra.mxu0 %v6352
      %6582 = vmatprep.subr.bf16.mxu0 %v6349
      %6583 = vmatpush2.bf16.msra.mxu0 %v6348
      %6584 = vmatprep.subr.bf16.mxu0 %v6345
      %6585 = vmatpush2.bf16.msra.mxu0 %v6344
      %6586 = vmatprep.subr.bf16.mxu0 %v6341
      %6587 = vmatpush2.bf16.msra.mxu0 %v6340
      %6588 = vmatprep.subr.bf16.mxu0 %v6337
      %6589 = vmatpush2.bf16.msra.mxu0 %v6336
      %6590 = vmatprep.mubr.bf16.mxu0 %v5851
      %6591 = vmatmul.mubr.bf16.gmra.mxu0 %v5850
      %v6592 = vpop.f32.mrf.mxu0
      %v6593 = vadd.f32 %v6552, %v6592
      %v6594 = vpop.f32.mrf.mxu0
      %v6595 = vadd.f32 %v6554, %v6594
      %v6596 = vpop.f32.mrf.mxu0
      %v6597 = vpop.f32.mrf.mxu0
      %6598 = vdwg.mxu0
      %6599 = vmatprep.subr.bf16.mxu0 %v6271
      %6600 = vmatpush1.bf16.msra.mxu0 %v6270
      %6601 = vmatprep.subr.bf16.mxu0 %v6267
      %6602 = vmatpush1.bf16.msra.mxu0 %v6266
      %6603 = vmatprep.subr.bf16.mxu0 %v6263
      %6604 = vmatpush1.bf16.msra.mxu0 %v6262
      %6605 = vmatprep.subr.bf16.mxu0 %v6259
      %6606 = vmatpush1.bf16.msra.mxu0 %v6258
      %6607 = vmatprep.subr.bf16.mxu0 %v6255
      %6608 = vmatpush1.bf16.msra.mxu0 %v6254
      %6609 = vmatprep.subr.bf16.mxu0 %v6251
      %6610 = vmatpush1.bf16.msra.mxu0 %v6250
      %6611 = vmatprep.subr.bf16.mxu0 %v6247
      %6612 = vmatpush1.bf16.msra.mxu0 %v6246
      %6613 = vmatprep.subr.bf16.mxu0 %v6243
      %6614 = vmatpush1.bf16.msra.mxu0 %v6242
      %6615 = vmatprep.subr.bf16.mxu0 %v6303
      %6616 = vmatpush2.bf16.msra.mxu0 %v6302
      %6617 = vmatprep.subr.bf16.mxu0 %v6299
      %6618 = vmatpush2.bf16.msra.mxu0 %v6298
      %6619 = vmatprep.subr.bf16.mxu0 %v6295
      %6620 = vmatpush2.bf16.msra.mxu0 %v6294
      %6621 = vmatprep.subr.bf16.mxu0 %v6291
      %6622 = vmatpush2.bf16.msra.mxu0 %v6290
      %6623 = vmatprep.subr.bf16.mxu0 %v6287
      %6624 = vmatpush2.bf16.msra.mxu0 %v6286
      %6625 = vmatprep.subr.bf16.mxu0 %v6283
      %6626 = vmatpush2.bf16.msra.mxu0 %v6282
      %6627 = vmatprep.subr.bf16.mxu0 %v6279
      %6628 = vmatpush2.bf16.msra.mxu0 %v6278
      %6629 = vmatprep.subr.bf16.mxu0 %v6275
      %6630 = vmatpush2.bf16.msra.mxu0 %v6274
      %6631 = vmatprep.mubr.bf16.mxu0 %v5849
      %6632 = vmatmul.mubr.bf16.gmra.mxu0 %v5842
      %v6633 = vpop.f32.mrf.mxu0
      %v6634 = vadd.f32 %v6508, %v6633
      %v6635 = vpop.f32.mrf.mxu0
      %v6636 = vadd.f32 %v6512, %v6635
      %v6637 = vpop.f32.mrf.mxu0
      %v6638 = vpop.f32.mrf.mxu0
      %6639 = vdwg.mxu0
      %6640 = vmatprep.subr.bf16.mxu0 %v6335
      %6641 = vmatpush1.bf16.msra.mxu0 %v6334
      %6642 = vmatprep.subr.bf16.mxu0 %v6331
      %6643 = vmatpush1.bf16.msra.mxu0 %v6330
      %6644 = vmatprep.subr.bf16.mxu0 %v6327
      %6645 = vmatpush1.bf16.msra.mxu0 %v6326
      %6646 = vmatprep.subr.bf16.mxu0 %v6323
      %6647 = vmatpush1.bf16.msra.mxu0 %v6322
      %6648 = vmatprep.subr.bf16.mxu0 %v6319
      %6649 = vmatpush1.bf16.msra.mxu0 %v6318
      %6650 = vmatprep.subr.bf16.mxu0 %v6315
      %6651 = vmatpush1.bf16.msra.mxu0 %v6314
      %6652 = vmatprep.subr.bf16.mxu0 %v6311
      %6653 = vmatpush1.bf16.msra.mxu0 %v6310
      %6654 = vmatprep.subr.bf16.mxu0 %v6307
      %6655 = vmatpush1.bf16.msra.mxu0 %v6306
      %6656 = vmatprep.subr.bf16.mxu0 %v6367
      %6657 = vmatpush2.bf16.msra.mxu0 %v6366
      %6658 = vmatprep.subr.bf16.mxu0 %v6363
      %6659 = vmatpush2.bf16.msra.mxu0 %v6362
      %6660 = vmatprep.subr.bf16.mxu0 %v6359
      %6661 = vmatpush2.bf16.msra.mxu0 %v6358
      %6662 = vmatprep.subr.bf16.mxu0 %v6355
      %6663 = vmatpush2.bf16.msra.mxu0 %v6354
      %6664 = vmatprep.subr.bf16.mxu0 %v6351
      %6665 = vmatpush2.bf16.msra.mxu0 %v6350
      %6666 = vmatprep.subr.bf16.mxu0 %v6347
      %6667 = vmatpush2.bf16.msra.mxu0 %v6346
      %6668 = vmatprep.subr.bf16.mxu0 %v6343
      %6669 = vmatpush2.bf16.msra.mxu0 %v6342
      %6670 = vmatprep.subr.bf16.mxu0 %v6339
      %6671 = vmatpush2.bf16.msra.mxu0 %v6338
      %6672 = vmatprep.mubr.bf16.mxu0 %v5851
      %6673 = vmatmul.mubr.bf16.gmra.mxu0 %v5850
      %v6674 = vpop.f32.mrf.mxu0
      %v6675 = vadd.f32 %v6634, %v6674
      %v6676 = vpop.f32.mrf.mxu0
      %v6677 = vadd.f32 %v6636, %v6676
      %v6678 = vpop.f32.mrf.mxu0
      %v6679 = vpop.f32.mrf.mxu0
      %6680 = vdwg.mxu0
      %v6681 = vmax.f32 %v6593, 0.0
      %v6682 = vmax.f32 %v6595, 0.0
      %v6683 = vmax.f32 %v6675, 0.0
      %v6684 = vmax.f32 %v6677, 0.0
      %v6689 = vcombine.low %v6681, %v6682
      %v6690 = vcombine.low %v6683, %v6684
      %v6692 = vunpack.c.l.s4 1966171168
      %v6693 = vunpack.c.0.s8 %v6692
      %v6694 = vlaneseq
      %v6695 = vshrl.u32 %v6694, 7
      %v6696 = vsub.s32 %v6693, %v6695
      %v6697 = vrot.slane %v6689, %v6696
      %v6699 = vunpack.c.l.s4 1966171168
      %v6700 = vunpack.c.0.s8 %v6699
      %v6701 = vlaneseq
      %v6702 = vshrl.u32 %v6701, 7
      %v6703 = vsub.s32 %v6700, %v6702
      %v6704 = vrot.slane %v6690, %v6703
      %v6705 = vcombine.low %v6697, %v6704
      %v6707 = vunpack.c.l.s4 1966171168
      %v6708 = vunpack.c.0.s8 %v6707
      %v6709 = vlaneseq
      %v6710 = vshrl.u32 %v6709, 7
      %v6711 = vsub.s32 %v6708, %v6710
      %v6712 = vrot.slane %v6705, %v6711
      %v6714 = vlaneseq
      %vm6715 = vcmp.ge.s32.totalorder %v6714, 0
      %vm6716 = vcmp.lt.s32.totalorder %v6714, 512
      %vm6717 = vmand %vm6715, %vm6716
      %6718 = vst.msk [vmem:[%s528] sm:$0xf] %vm6717, %v6712
      %v6719 = vpack.c.bf16 %v6681, %v6681
      %v6720 = vpack.c.bf16 %v6682, %v6682
      %v6721 = vpack.c.bf16 %v6683, %v6683
      %v6722 = vpack.c.bf16 %v6684, %v6684
      %v6723 = vld [vmem:[%s9] sm:$0xf]
      %v6724 = vld [vmem:[%s9 + $0x4] sm:$0xf]
      %v6725 = vld [vmem:[%s9 + $0x8] sm:$0xf]
      %v6726 = vld [vmem:[%s9 + $0xc] sm:$0xf]
      %v6727 = vld [vmem:[%s9 + $0x10] sm:$0xf]
      %v6728 = vld [vmem:[%s9 + $0x14] sm:$0xf]
      %v6729 = vld [vmem:[%s9 + $0x18] sm:$0xf]
      %v6730 = vld [vmem:[%s9 + $0x1c] sm:$0xf]
      %v6731 = vld [vmem:[%s9 + $0x20] sm:$0xf]
      %v6732 = vld [vmem:[%s9 + $0x24] sm:$0xf]
      %v6733 = vld [vmem:[%s9 + $0x28] sm:$0xf]
      %v6734 = vld [vmem:[%s9 + $0x2c] sm:$0xf]
      %v6735 = vld [vmem:[%s9 + $0x30] sm:$0xf]
      %v6736 = vld [vmem:[%s9 + $0x34] sm:$0xf]
      %v6737 = vld [vmem:[%s9 + $0x38] sm:$0xf]
      %v6738 = vld [vmem:[%s9 + $0x3c] sm:$0xf]
      %v6739 = vld [vmem:[%s9 + $0x40] sm:$0xf]
      %v6740 = vld [vmem:[%s9 + $0x44] sm:$0xf]
      %v6741 = vld [vmem:[%s9 + $0x48] sm:$0xf]
      %v6742 = vld [vmem:[%s9 + $0x4c] sm:$0xf]
      %v6743 = vld [vmem:[%s9 + $0x50] sm:$0xf]
      %v6744 = vld [vmem:[%s9 + $0x54] sm:$0xf]
      %v6745 = vld [vmem:[%s9 + $0x58] sm:$0xf]
      %v6746 = vld [vmem:[%s9 + $0x5c] sm:$0xf]
      %v6747 = vld [vmem:[%s9 + $0x60] sm:$0xf]
      %v6748 = vld [vmem:[%s9 + $0x64] sm:$0xf]
      %v6749 = vld [vmem:[%s9 + $0x68] sm:$0xf]
      %v6750 = vld [vmem:[%s9 + $0x6c] sm:$0xf]
      %v6751 = vld [vmem:[%s9 + $0x70] sm:$0xf]
      %v6752 = vld [vmem:[%s9 + $0x74] sm:$0xf]
      %v6753 = vld [vmem:[%s9 + $0x78] sm:$0xf]
      %v6754 = vld [vmem:[%s9 + $0x7c] sm:$0xf]
      %v6755 = vld [vmem:[%s9 + $0x80] sm:$0xf]
      %v6756 = vld [vmem:[%s9 + $0x84] sm:$0xf]
      %v6757 = vld [vmem:[%s9 + $0x88] sm:$0xf]
      %v6758 = vld [vmem:[%s9 + $0x8c] sm:$0xf]
      %v6759 = vld [vmem:[%s9 + $0x90] sm:$0xf]
      %v6760 = vld [vmem:[%s9 + $0x94] sm:$0xf]
      %v6761 = vld [vmem:[%s9 + $0x98] sm:$0xf]
      %v6762 = vld [vmem:[%s9 + $0x9c] sm:$0xf]
      %v6763 = vld [vmem:[%s9 + $0xa0] sm:$0xf]
      %v6764 = vld [vmem:[%s9 + $0xa4] sm:$0xf]
      %v6765 = vld [vmem:[%s9 + $0xa8] sm:$0xf]
      %v6766 = vld [vmem:[%s9 + $0xac] sm:$0xf]
      %v6767 = vld [vmem:[%s9 + $0xb0] sm:$0xf]
      %v6768 = vld [vmem:[%s9 + $0xb4] sm:$0xf]
      %v6769 = vld [vmem:[%s9 + $0xb8] sm:$0xf]
      %v6770 = vld [vmem:[%s9 + $0xbc] sm:$0xf]
      %v6771 = vld [vmem:[%s9 + $0xc0] sm:$0xf]
      %v6772 = vld [vmem:[%s9 + $0xc4] sm:$0xf]
      %v6773 = vld [vmem:[%s9 + $0xc8] sm:$0xf]
      %v6774 = vld [vmem:[%s9 + $0xcc] sm:$0xf]
      %v6775 = vld [vmem:[%s9 + $0xd0] sm:$0xf]
      %v6776 = vld [vmem:[%s9 + $0xd4] sm:$0xf]
      %v6777 = vld [vmem:[%s9 + $0xd8] sm:$0xf]
      %v6778 = vld [vmem:[%s9 + $0xdc] sm:$0xf]
      %v6779 = vld [vmem:[%s9 + $0xe0] sm:$0xf]
      %v6780 = vld [vmem:[%s9 + $0xe4] sm:$0xf]
      %v6781 = vld [vmem:[%s9 + $0xe8] sm:$0xf]
      %v6782 = vld [vmem:[%s9 + $0xec] sm:$0xf]
      %v6783 = vld [vmem:[%s9 + $0xf0] sm:$0xf]
      %v6784 = vld [vmem:[%s9 + $0xf4] sm:$0xf]
      %v6785 = vld [vmem:[%s9 + $0xf8] sm:$0xf]
      %v6786 = vld [vmem:[%s9 + $0xfc] sm:$0xf]
      %v6787 = vld [vmem:[%s10] sm:$0x1]
      %v6852 = vunpack.c.l.b16 %v6723
      %v6853 = vunpack.c.l.b16 %v6724
      %v6854 = vunpack.c.l.b16 %v6725
      %v6855 = vunpack.c.l.b16 %v6726
      %v6856 = vunpack.c.l.b16 %v6727
      %v6857 = vunpack.c.l.b16 %v6728
      %v6858 = vunpack.c.l.b16 %v6729
      %v6859 = vunpack.c.l.b16 %v6730
      %v6860 = vunpack.c.l.b16 %v6731
      %v6861 = vunpack.c.l.b16 %v6732
      %v6862 = vunpack.c.l.b16 %v6733
      %v6863 = vunpack.c.l.b16 %v6734
      %v6864 = vunpack.c.l.b16 %v6735
      %v6865 = vunpack.c.l.b16 %v6736
      %v6866 = vunpack.c.l.b16 %v6737
      %v6867 = vunpack.c.l.b16 %v6738
      %v6868 = vunpack.c.l.b16 %v6739
      %v6869 = vunpack.c.l.b16 %v6740
      %v6870 = vunpack.c.l.b16 %v6741
      %v6871 = vunpack.c.l.b16 %v6742
      %v6872 = vunpack.c.l.b16 %v6743
      %v6873 = vunpack.c.l.b16 %v6744
      %v6874 = vunpack.c.l.b16 %v6745
      %v6875 = vunpack.c.l.b16 %v6746
      %v6876 = vunpack.c.l.b16 %v6747
      %v6877 = vunpack.c.l.b16 %v6748
      %v6878 = vunpack.c.l.b16 %v6749
      %v6879 = vunpack.c.l.b16 %v6750
      %v6880 = vunpack.c.l.b16 %v6751
      %v6881 = vunpack.c.l.b16 %v6752
      %v6882 = vunpack.c.l.b16 %v6753
      %v6883 = vunpack.c.l.b16 %v6754
      %v6884 = vunpack.c.l.b16 %v6755
      %v6885 = vunpack.c.l.b16 %v6756
      %v6886 = vunpack.c.l.b16 %v6757
      %v6887 = vunpack.c.l.b16 %v6758
      %v6888 = vunpack.c.l.b16 %v6759
      %v6889 = vunpack.c.l.b16 %v6760
      %v6890 = vunpack.c.l.b16 %v6761
      %v6891 = vunpack.c.l.b16 %v6762
      %v6892 = vunpack.c.l.b16 %v6763
      %v6893 = vunpack.c.l.b16 %v6764
      %v6894 = vunpack.c.l.b16 %v6765
      %v6895 = vunpack.c.l.b16 %v6766
      %v6896 = vunpack.c.l.b16 %v6767
      %v6897 = vunpack.c.l.b16 %v6768
      %v6898 = vunpack.c.l.b16 %v6769
      %v6899 = vunpack.c.l.b16 %v6770
      %v6900 = vunpack.c.l.b16 %v6771
      %v6901 = vunpack.c.l.b16 %v6772
      %v6902 = vunpack.c.l.b16 %v6773
      %v6903 = vunpack.c.l.b16 %v6774
      %v6904 = vunpack.c.l.b16 %v6775
      %v6905 = vunpack.c.l.b16 %v6776
      %v6906 = vunpack.c.l.b16 %v6777
      %v6907 = vunpack.c.l.b16 %v6778
      %v6908 = vunpack.c.l.b16 %v6779
      %v6909 = vunpack.c.l.b16 %v6780
      %v6910 = vunpack.c.l.b16 %v6781
      %v6911 = vunpack.c.l.b16 %v6782
      %v6912 = vunpack.c.l.b16 %v6783
      %v6913 = vunpack.c.l.b16 %v6784
      %v6914 = vunpack.c.l.b16 %v6785
      %v6915 = vunpack.c.l.b16 %v6786
      %v6916 = vpack.c.b16 %v6853, %v6852
      %v6917 = vpack.c.b16 %v6855, %v6854
      %v6918 = vpack.c.b16 %v6857, %v6856
      %v6919 = vpack.c.b16 %v6859, %v6858
      %v6920 = vpack.c.b16 %v6861, %v6860
      %v6921 = vpack.c.b16 %v6863, %v6862
      %v6922 = vpack.c.b16 %v6865, %v6864
      %v6923 = vpack.c.b16 %v6867, %v6866
      %v6924 = vpack.c.b16 %v6869, %v6868
      %v6925 = vpack.c.b16 %v6871, %v6870
      %v6926 = vpack.c.b16 %v6873, %v6872
      %v6927 = vpack.c.b16 %v6875, %v6874
      %v6928 = vpack.c.b16 %v6877, %v6876
      %v6929 = vpack.c.b16 %v6879, %v6878
      %v6930 = vpack.c.b16 %v6881, %v6880
      %v6931 = vpack.c.b16 %v6883, %v6882
      %v6932 = vpack.c.b16 %v6885, %v6884
      %v6933 = vpack.c.b16 %v6887, %v6886
      %v6934 = vpack.c.b16 %v6889, %v6888
      %v6935 = vpack.c.b16 %v6891, %v6890
      %v6936 = vpack.c.b16 %v6893, %v6892
      %v6937 = vpack.c.b16 %v6895, %v6894
      %v6938 = vpack.c.b16 %v6897, %v6896
      %v6939 = vpack.c.b16 %v6899, %v6898
      %v6940 = vpack.c.b16 %v6901, %v6900
      %v6941 = vpack.c.b16 %v6903, %v6902
      %v6942 = vpack.c.b16 %v6905, %v6904
      %v6943 = vpack.c.b16 %v6907, %v6906
      %v6944 = vpack.c.b16 %v6909, %v6908
      %v6945 = vpack.c.b16 %v6911, %v6910
      %v6946 = vpack.c.b16 %v6913, %v6912
      %v6947 = vpack.c.b16 %v6915, %v6914
      %6980 = vmatprep.subr.bf16.mxu0 0
      %6981 = vmatpush1.bf16.msra.mxu0 %v6923
      %6982 = vmatprep.subr.bf16.mxu0 0
      %6983 = vmatpush1.bf16.msra.mxu0 %v6922
      %6984 = vmatprep.subr.bf16.mxu0 0
      %6985 = vmatpush1.bf16.msra.mxu0 %v6921
      %6986 = vmatprep.subr.bf16.mxu0 0
      %6987 = vmatpush1.bf16.msra.mxu0 %v6920
      %6988 = vmatprep.subr.bf16.mxu0 0
      %6989 = vmatpush1.bf16.msra.mxu0 %v6919
      %6990 = vmatprep.subr.bf16.mxu0 0
      %6991 = vmatpush1.bf16.msra.mxu0 %v6918
      %6992 = vmatprep.subr.bf16.mxu0 0
      %6993 = vmatpush1.bf16.msra.mxu0 %v6917
      %6994 = vmatprep.subr.bf16.mxu0 0
      %6995 = vmatpush1.bf16.msra.mxu0 %v6916
      %6996 = vmatprep.subr.bf16.mxu0 0
      %6997 = vmatpush2.bf16.msra.mxu0 %v6931
      %6998 = vmatprep.subr.bf16.mxu0 0
      %6999 = vmatpush2.bf16.msra.mxu0 %v6930
      %7000 = vmatprep.subr.bf16.mxu0 0
      %7001 = vmatpush2.bf16.msra.mxu0 %v6929
      %7002 = vmatprep.subr.bf16.mxu0 0
      %7003 = vmatpush2.bf16.msra.mxu0 %v6928
      %7004 = vmatprep.subr.bf16.mxu0 0
      %7005 = vmatpush2.bf16.msra.mxu0 %v6927
      %7006 = vmatprep.subr.bf16.mxu0 0
      %7007 = vmatpush2.bf16.msra.mxu0 %v6926
      %7008 = vmatprep.subr.bf16.mxu0 0
      %7009 = vmatpush2.bf16.msra.mxu0 %v6925
      %7010 = vmatprep.subr.bf16.mxu0 0
      %7011 = vmatpush2.bf16.msra.mxu0 %v6924
      %7012 = vmatprep.mubr.bf16.mxu0 %v6720
      %7013 = vmatmul.mubr.bf16.gmra.mxu0 %v6719
      %v7014 = vpop.f32.mrf.mxu0
      %v7015 = vadd.f32 %v6787, %v7014
      %v7016 = vpop.f32.mrf.mxu0
      %v7017 = vpop.f32.mrf.mxu0
      %v7018 = vpop.f32.mrf.mxu0
      %7019 = vdwg.mxu0
      %7020 = vmatprep.subr.bf16.mxu0 0
      %7021 = vmatpush1.bf16.msra.mxu0 %v6939
      %7022 = vmatprep.subr.bf16.mxu0 0
      %7023 = vmatpush1.bf16.msra.mxu0 %v6938
      %7024 = vmatprep.subr.bf16.mxu0 0
      %7025 = vmatpush1.bf16.msra.mxu0 %v6937
      %7026 = vmatprep.subr.bf16.mxu0 0
      %7027 = vmatpush1.bf16.msra.mxu0 %v6936
      %7028 = vmatprep.subr.bf16.mxu0 0
      %7029 = vmatpush1.bf16.msra.mxu0 %v6935
      %7030 = vmatprep.subr.bf16.mxu0 0
      %7031 = vmatpush1.bf16.msra.mxu0 %v6934
      %7032 = vmatprep.subr.bf16.mxu0 0
      %7033 = vmatpush1.bf16.msra.mxu0 %v6933
      %7034 = vmatprep.subr.bf16.mxu0 0
      %7035 = vmatpush1.bf16.msra.mxu0 %v6932
      %7036 = vmatprep.subr.bf16.mxu0 0
      %7037 = vmatpush2.bf16.msra.mxu0 %v6947
      %7038 = vmatprep.subr.bf16.mxu0 0
      %7039 = vmatpush2.bf16.msra.mxu0 %v6946
      %7040 = vmatprep.subr.bf16.mxu0 0
      %7041 = vmatpush2.bf16.msra.mxu0 %v6945
      %7042 = vmatprep.subr.bf16.mxu0 0
      %7043 = vmatpush2.bf16.msra.mxu0 %v6944
      %7044 = vmatprep.subr.bf16.mxu0 0
      %7045 = vmatpush2.bf16.msra.mxu0 %v6943
      %7046 = vmatprep.subr.bf16.mxu0 0
      %7047 = vmatpush2.bf16.msra.mxu0 %v6942
      %7048 = vmatprep.subr.bf16.mxu0 0
      %7049 = vmatpush2.bf16.msra.mxu0 %v6941
      %7050 = vmatprep.subr.bf16.mxu0 0
      %7051 = vmatpush2.bf16.msra.mxu0 %v6940
      %7052 = vmatprep.mubr.bf16.mxu0 %v6722
      %7053 = vmatmul.mubr.bf16.gmra.mxu0 %v6721
      %v7054 = vpop.f32.mrf.mxu0
      %v7055 = vadd.f32 %v7015, %v7054
      %v7056 = vpop.f32.mrf.mxu0
      %v7057 = vpop.f32.mrf.mxu0
      %v7058 = vpop.f32.mrf.mxu0
      %7059 = vdwg.mxu0
      %v7060 = vpack.c.bf16 %v7055, %v7055
      %v7061 = vld [vmem:[%s11] sm:$0xf]
      %v7062 = vld [vmem:[%s11 + $0x4] sm:$0xf]
      %v7063 = vld [vmem:[%s11 + $0x8] sm:$0xf]
      %v7064 = vld [vmem:[%s11 + $0xc] sm:$0xf]
      %v7065 = vld [vmem:[%s11 + $0x10] sm:$0xf]
      %v7066 = vld [vmem:[%s11 + $0x14] sm:$0xf]
      %v7067 = vld [vmem:[%s11 + $0x18] sm:$0x1]
      %v7068 = vld [vmem:[%s12] sm:$0x1]
      %v7076 = vunpack.c.l.b16 %v7061
      %v7077 = vunpack.c.l.b16 %v7062
      %v7078 = vunpack.c.l.b16 %v7063
      %v7079 = vunpack.c.l.b16 %v7064
      %v7080 = vunpack.c.l.b16 %v7065
      %v7081 = vunpack.c.l.b16 %v7066
      %v7082 = vunpack.c.l.b16 %v7067
      %v7083 = vpack.c.b16 %v7077, %v7076
      %v7084 = vpack.c.b16 %v7079, %v7078
      %v7085 = vpack.c.b16 %v7081, %v7080
      %v7086 = vpack.c.b16 %v7082, %v7082
      %vm7090 = vcmask 408576
      %v7092 = vsel %vm7090, %v7060, 0
      %vm7094 = vcmask 1040384
      %v7096 = vsel %vm7094, %v7086, 0
      %7098 = vmatprep.subr.bf16.mxu0 0
      %7099 = vmatpush1.bf16.msra.mxu0 0
      %7100 = vmatprep.subr.bf16.mxu0 0
      %7101 = vmatpush1.bf16.msra.mxu0 0
      %7102 = vmatprep.subr.bf16.mxu0 0
      %7103 = vmatpush1.bf16.msra.mxu0 0
      %7104 = vmatprep.subr.bf16.mxu0 0
      %7105 = vmatpush1.bf16.msra.mxu0 0
      %7106 = vmatprep.subr.bf16.mxu0 0
      %7107 = vmatpush1.bf16.msra.mxu0 %v7096
      %7108 = vmatprep.subr.bf16.mxu0 0
      %7109 = vmatpush1.bf16.msra.mxu0 %v7085
      %7110 = vmatprep.subr.bf16.mxu0 0
      %7111 = vmatpush1.bf16.msra.mxu0 %v7084
      %7112 = vmatprep.subr.bf16.mxu0 0
      %7113 = vmatpush1.bf16.msra.mxu0 %v7083
      %7114 = vmatprep.subr.bf16.mxu0 0
      %7115 = vmatpush2.bf16.msra.mxu0 0
      %7116 = vmatprep.subr.bf16.mxu0 0
      %7117 = vmatpush2.bf16.msra.mxu0 0
      %7118 = vmatprep.subr.bf16.mxu0 0
      %7119 = vmatpush2.bf16.msra.mxu0 0
      %7120 = vmatprep.subr.bf16.mxu0 0
      %7121 = vmatpush2.bf16.msra.mxu0 0
      %7122 = vmatprep.subr.bf16.mxu0 0
      %7123 = vmatpush2.bf16.msra.mxu0 0
      %7124 = vmatprep.subr.bf16.mxu0 0
      %7125 = vmatpush2.bf16.msra.mxu0 0
      %7126 = vmatprep.subr.bf16.mxu0 0
      %7127 = vmatpush2.bf16.msra.mxu0 0
      %7128 = vmatprep.subr.bf16.mxu0 0
      %7129 = vmatpush2.bf16.msra.mxu0 0
      %7130 = vmatprep.mubr.bf16.mxu0 0
      %7131 = vmatmul.mubr.bf16.gmra.mxu0 %v7092
      %v7132 = vpop.f32.mrf.mxu0
      %v7133 = vadd.f32 %v7068, %v7132
      %v7134 = vpop.f32.mrf.mxu0
      %v7135 = vpop.f32.mrf.mxu0
      %v7136 = vpop.f32.mrf.mxu0
      %7137 = vdwg.mxu0
      %v7138 = vld [vmem:[%s13] sm:$0xf]
      %v7139 = vld [vmem:[%s13 + $0x4] sm:$0xf]
      %v7140 = vld [vmem:[%s13 + $0x8] sm:$0xf]
      %v7141 = vld [vmem:[%s13 + $0xc] sm:$0xf]
      %v7142 = vld [vmem:[%s13 + $0x10] sm:$0xf]
      %v7143 = vld [vmem:[%s13 + $0x14] sm:$0xf]
      %v7144 = vld [vmem:[%s13 + $0x18] sm:$0x1]
      %v7145 = vld [vmem:[%s14] sm:$0x1]
      %v7153 = vunpack.c.l.b16 %v7138
      %v7154 = vunpack.c.l.b16 %v7139
      %v7155 = vunpack.c.l.b16 %v7140
      %v7156 = vunpack.c.l.b16 %v7141
      %v7157 = vunpack.c.l.b16 %v7142
      %v7158 = vunpack.c.l.b16 %v7143
      %v7159 = vunpack.c.l.b16 %v7144
      %v7160 = vpack.c.b16 %v7154, %v7153
      %v7161 = vpack.c.b16 %v7156, %v7155
      %v7162 = vpack.c.b16 %v7158, %v7157
      %v7163 = vpack.c.b16 %v7159, %v7159
      %v7168 = vsel %vm7094, %v7163, 0
      %7170 = vmatprep.subr.bf16.mxu0 0
      %7171 = vmatpush1.bf16.msra.mxu0 0
      %7172 = vmatprep.subr.bf16.mxu0 0
      %7173 = vmatpush1.bf16.msra.mxu0 0
      %7174 = vmatprep.subr.bf16.mxu0 0
      %7175 = vmatpush1.bf16.msra.mxu0 0
      %7176 = vmatprep.subr.bf16.mxu0 0
      %7177 = vmatpush1.bf16.msra.mxu0 0
      %7178 = vmatprep.subr.bf16.mxu0 0
      %7179 = vmatpush1.bf16.msra.mxu0 %v7168
      %7180 = vmatprep.subr.bf16.mxu0 0
      %7181 = vmatpush1.bf16.msra.mxu0 %v7162
      %7182 = vmatprep.subr.bf16.mxu0 0
      %7183 = vmatpush1.bf16.msra.mxu0 %v7161
      %7184 = vmatprep.subr.bf16.mxu0 0
      %7185 = vmatpush1.bf16.msra.mxu0 %v7160
      %7186 = vmatprep.subr.bf16.mxu0 0
      %7187 = vmatpush2.bf16.msra.mxu0 0
      %7188 = vmatprep.subr.bf16.mxu0 0
      %7189 = vmatpush2.bf16.msra.mxu0 0
      %7190 = vmatprep.subr.bf16.mxu0 0
      %7191 = vmatpush2.bf16.msra.mxu0 0
      %7192 = vmatprep.subr.bf16.mxu0 0
      %7193 = vmatpush2.bf16.msra.mxu0 0
      %7194 = vmatprep.subr.bf16.mxu0 0
      %7195 = vmatpush2.bf16.msra.mxu0 0
      %7196 = vmatprep.subr.bf16.mxu0 0
      %7197 = vmatpush2.bf16.msra.mxu0 0
      %7198 = vmatprep.subr.bf16.mxu0 0
      %7199 = vmatpush2.bf16.msra.mxu0 0
      %7200 = vmatprep.subr.bf16.mxu0 0
      %7201 = vmatpush2.bf16.msra.mxu0 0
      %7202 = vmatprep.mubr.bf16.mxu0 0
      %7203 = vmatmul.mubr.bf16.gmra.mxu0 %v7092
      %v7204 = vpop.f32.mrf.mxu0
      %v7205 = vadd.f32 %v7145, %v7204
      %v7206 = vpop.f32.mrf.mxu0
      %v7207 = vpop.f32.mrf.mxu0
      %v7208 = vpop.f32.mrf.mxu0
      %7209 = vdwg.mxu0
      %vm7210 = vcmask 401408
      %v7211 = vsel %vm7210, %v7133, -inf
      %7212 = vmax.xlane.f32.xlu0 %v7211
      %v7213 = vpop.xlane.xlu0 %7212
      %v7214 = vsub.f32 %v7133, %v7213
      %v7215 = vmul.f32 %v7214, 1.442695
      %v7216 = vpow.pop %v7215
      %v7217 = vmul.f32 %v7216, %v7205
      %v7218 = vsel %vm7210, %v7217, 0.0
      %7219 = vadd.xlane.f32.xlu0 %v7218
      %v7220 = vpop.xlane.xlu0 %7219
      %v7221 = vsel %vm7210, %v7216, 0.0
      %7222 = vadd.xlane.f32.xlu0 %v7221
      %v7223 = vpop.xlane.xlu0 %7222
      %v7224 = vrcp.pop %v7223
      %v7225 = vmul.f32 %v7220, %v7224
      %vm7226 = vcmask 0
      %7227 = vst.msk [vmem:[%s524] sm:$0x1] %vm7226, %v7225
      %p7228 = scmp.lt.s32.totalorder %s28, 1
      %s7229 = scalar_select %p7228, %s28, 1
      %s7230 = scalar_lea.vmem %s15, %s7229
      %p7231 = scmp.lt.s32.totalorder %s28, 1
      %s7232 = scalar_select %p7231, %s28, 1
      %s7233 = smul.addr %s7232, 4
      %s7234 = scalar_lea.vmem %s16, %s7233
      // Predicated region
      $region81: #{cnn_base_forward.1} parent=79 // pred_check
        %p7235 = pneg %p366
      $region82: #{cnn_base_forward.1} parent=79 // pred_check_branch
        %7237 = sbr.rel (%p7235) target = $region84
      $region83: #{cnn_base_forward.1} parent=79 // pred_region
        _
      $region84: #{cnn_base_forward.1} parent=79 // pred_fallthru
        _
      // Predicated region
      $region85: #{cnn_base_forward.1} parent=79 // pred_check
        %p7238 = pneg %p392
      $region86: #{cnn_base_forward.1} parent=79 // pred_check_branch
        %7240 = sbr.rel (%p7238) target = $region88
      $region87: #{cnn_base_forward.1} parent=79 // pred_region
        _
      $region88: #{cnn_base_forward.1} parent=79 // pred_fallthru
        _
    $region80: #{cnn_base_forward.1} parent=5 // pred_fallthru
      _
    %p7241 = scmp.le.s32.totalorder 2, %s23
    // Predicated region
    $region89: #{cnn_base_forward.1} parent=5 // pred_check
      %p7242 = pneg %p7241
    $region90: #{cnn_base_forward.1} parent=5 // pred_check_branch
      %7244 = sbr.rel (%p7242) target = $region92
    $region91: #{cnn_base_forward.1} parent=5 // pred_region
      %s7245 = ssub.s32 %s23, 2
      // Predicated region
      $region93: #{cnn_base_forward.1} parent=91 // pred_check
        %p7246 = pneg %p372
      $region94: #{cnn_base_forward.1} parent=91 // pred_check_branch
        %7248 = sbr.rel (%p7246) target = $region96
      $region95: #{cnn_base_forward.1} parent=91 // pred_region
        %p7249 = scmp.lt.s32.totalorder %s29, 1
        %s7250 = scalar_select %p7249, %s29, 1
        %s7251 = scalar_lea.vmem %s15, %s7250
      $region96: #{cnn_base_forward.1} parent=91 // pred_fallthru
        _
      // Predicated region
      $region97: #{cnn_base_forward.1} parent=91 // pred_check
        %p7252 = pneg %p398
      $region98: #{cnn_base_forward.1} parent=91 // pred_check_branch
        %7254 = sbr.rel (%p7252) target = $region100
      $region99: #{cnn_base_forward.1} parent=91 // pred_region
        %p7255 = scmp.lt.s32.totalorder %s29, 1
        %s7256 = scalar_select %p7255, %s29, 1
        %s7257 = smul.addr %s7256, 4
        %s7258 = scalar_lea.vmem %s16, %s7257
      $region100: #{cnn_base_forward.1} parent=91 // pred_fallthru
        _
    $region92: #{cnn_base_forward.1} parent=5 // pred_fallthru
      _
  $region6: #{cnn_base_forward.1} parent=0 // loop_footer
    %s27 = sadd.s32 1, %s23
  $region7: #{cnn_base_forward.1} parent=0 // loop_footer_branch
    %22 = sbr.rel target = $region3
  $region8: #{cnn_base_forward.1} parent=0 // loop_exit
    _

</llo_original>
